<compile_context>
chip_gen: v7x
topology: tpu7x:2x2x1
jax: 0.10.0
libtpu: 0.0.40
codegen_flags: <defaults>
</compile_context>

<pallas_src>
from functools import partial

import jax
import jax.numpy as jnp
from jax.experimental import pallas as pl
from jax.experimental.pallas import tpu as pltpu

LEAKY_SLOPE = 0.01
BN_EPS = 1e-5


# --------------------------------------------------------------------------
# In-kernel helpers
# --------------------------------------------------------------------------
def _leaky(x):
    return jnp.where(x >= 0, x, LEAKY_SLOPE * x)


def _conv3x3_taps(xpad, w_ref, H, W):
    """3x3 'same' conv as 9 accumulated MXU matmuls over shifted windows.

    xpad : (H+2, W+2, Cin) bf16 value (already zero-padded spatially)
    w_ref: (9, Cin, Cout) bf16 ref, tap index = kh*3 + kw
    returns (H*W, Cout) float32
    """
    Cin = xpad.shape[-1]
    Cout = w_ref.shape[-1]
    acc = jnp.zeros((H * W, Cout), jnp.float32)
    for dh in range(3):
        for dw in range(3):
            win = xpad[dh:dh + H, dw:dw + W, :].reshape(H * W, Cin)
            acc = acc + jnp.dot(win, w_ref[dh * 3 + dw],
                                preferred_element_type=jnp.float32)
    return acc


# --------------------------------------------------------------------------
# Fused Group_1 kernel (one batch element per grid step)
# --------------------------------------------------------------------------
def _group1_kernel(xpad_ref, w0_ref, w1_ref, w2_ref,
                   t0_ref, s1_ref, t1_ref, s2_ref, t2_ref,
                   o_ref,
                   y0_ref, y1_ref, y3_ref, hm_ref, *, H, W):
    Cp = o_ref.shape[-1]
    Hh, Wh = H // 2, W // 2

    # ---- Group_1.conv: Conv2d + bias (Dropout = identity in eval mode) ----
    x = xpad_ref[0]                                          # (H+2, W+2, Cin) bf16
    acc0 = _conv3x3_taps(x, w0_ref, H, W) + t0_ref[...]      # (H*W, Cp) f32

    # Keep y0 (residual source + conv1 input) in a spatially padded f32 scratch.
    y0_ref[...] = jnp.zeros_like(y0_ref)
    y0_ref[pl.ds(1, H), pl.ds(1, W), :] = acc0.reshape(H, W, Cp)

    # ---- ResBlk.model1: Conv + Dropout(id) + BatchNorm(eval) + LeakyReLU ----
    y0p = y0_ref[...]                                        # (H+2, W+2, Cp) f32
    acc1 = _conv3x3_taps(y0p.astype(jnp.bfloat16), w1_ref, H, W)
    acc1 = _leaky(acc1 * s1_ref[...] + t1_ref[...])

    y1_ref[...] = jnp.zeros_like(y1_ref)
    y1_ref[pl.ds(1, H), pl.ds(1, W), :] = acc1.reshape(H, W, Cp)

    # ---- ResBlk.model2: Conv + Dropout(id) + BatchNorm(eval), then identity
    #      skip (ch_in == ch_out) and LeakyReLU ----
    acc2 = _conv3x3_taps(y1_ref[...].astype(jnp.bfloat16), w2_ref, H, W)
    acc2 = acc2 * s2_ref[...] + t2_ref[...]
    acc2 = acc2 + y0p[1:H + 1, 1:W + 1, :].reshape(H * W, Cp)  # residual (f32)
    acc2 = _leaky(acc2)

    # ---- fused MaxPool2d(2, 2): write only the pooled block to HBM ----
    y3_ref[...] = acc2.reshape(H, W, Cp)
    hm_ref[...] = jnp.maximum(y3_ref[pl.ds(0, Hh, stride=2), :, :],
                              y3_ref[pl.ds(1, Hh, stride=2), :, :])
    o_ref[0] = jnp.maximum(hm_ref[:, pl.ds(0, Wh, stride=2), :],
                           hm_ref[:, pl.ds(1, Wh, stride=2), :]).astype(o_ref.dtype)


# --------------------------------------------------------------------------
# Wrapper: host-side prep (padding, weight layout, BN/bias folding)
# --------------------------------------------------------------------------
def _round_up(x, m):
    return (x + m - 1) // m * m


def group1_forward(x_nchw, p):
    x = jnp.transpose(x_nchw, (0, 2, 3, 1)).astype(jnp.float32)   # NCHW -> NHWC
    N, H, W, Cin = x.shape
    Cout = p["w0"].shape[-1]
    assert H % 2 == 0 and W % 2 == 0
    Cp = _round_up(Cout, 128)          # lane-dense matmul / store width
    Hh, Wh = H // 2, W // 2

    # Zero-pad spatially, cast MXU operand to bf16 (f32 accumulate in-kernel).
    xpad = jnp.pad(x, ((0, 0), (1, 1), (1, 1), (0, 0))).astype(jnp.bfloat16)

    def prep_w(w_hwio, cin_p, cout_p):
        kh, kw, ci, co = w_hwio.shape
        w9 = w_hwio.reshape(kh * kw, ci, co)
        w9 = jnp.pad(w9, ((0, 0), (0, cin_p - ci), (0, cout_p - co)))
        return w9.astype(jnp.bfloat16)

    w0 = prep_w(p["w0"], Cin, Cp)      # (9, Cin, Cp)
    w1 = prep_w(p["w1"], Cp, Cp)       # (9, Cp, Cp)
    w2 = prep_w(p["w2"], Cp, Cp)       # (9, Cp, Cp)

    def padc(v):
        return jnp.pad(v, (0, Cp - v.shape[0])).reshape(1, Cp).astype(jnp.float32)

    # Fold conv bias into eval-mode BN affine: (conv + b)*s + t = conv*s + (t + b*s)
    t0 = padc(p["b0"])                                             # conv0: bias only
    s1v = p["bn1_gamma"] * jax.lax.rsqrt(p["bn1_var"] + BN_EPS)
    t1v = p["bn1_beta"] - p["bn1_mean"] * s1v + p["b1"] * s1v
    s2v = p["bn2_gamma"] * jax.lax.rsqrt(p["bn2_var"] + BN_EPS)
    t2v = p["bn2_beta"] - p["bn2_mean"] * s2v + p["b2"] * s2v
    s1, t1, s2, t2 = padc(s1v), padc(t1v), padc(s2v), padc(t2v)

    kernel = partial(_group1_kernel, H=H, W=W)
    vec_spec = pl.BlockSpec((1, Cp), lambda n: (0, 0))

    out = pl.pallas_call(
        kernel,
        out_shape=jax.ShapeDtypeStruct((N, Hh, Wh, Cp), jnp.float32),
        grid=(N,),
        in_specs=[
            pl.BlockSpec((1, H + 2, W + 2, Cin), lambda n: (n, 0, 0, 0)),
            pl.BlockSpec((9, Cin, Cp), lambda n: (0, 0, 0)),
            pl.BlockSpec((9, Cp, Cp), lambda n: (0, 0, 0)),
            pl.BlockSpec((9, Cp, Cp), lambda n: (0, 0, 0)),
            vec_spec, vec_spec, vec_spec, vec_spec, vec_spec,
        ],
        out_specs=pl.BlockSpec((1, Hh, Wh, Cp), lambda n: (n, 0, 0, 0)),
        scratch_shapes=[
            pltpu.VMEM((H + 2, W + 2, Cp), jnp.float32),   # y0 (padded; residual)
            pltpu.VMEM((H + 2, W + 2, Cp), jnp.float32),   # y1 (padded)
            pltpu.VMEM((H, W, Cp), jnp.float32),           # pre-pool activation
            pltpu.VMEM((Hh, W, Cp), jnp.float32),          # row-pooled intermediate
        ],
        compiler_params=pltpu.CompilerParams(
            dimension_semantics=("parallel",)),
    )(xpad, w0, w1, w2, t0, s1, t1, s2, t2)

    out = out[..., :Cout]                                  # drop channel padding
    return jnp.transpose(out, (0, 3, 1, 2))                # NHWC -> NCHW


# --------------------------------------------------------------------------
# Deterministic parameter init (shapes per the module __init__)
# --------------------------------------------------------------------------
def init_params(key, ch_in, ch_out):
    ks = jax.random.split(key, 14)

    def uinit(k, shape, fan_in):
        bound = 1.0 / jnp.sqrt(jnp.float32(fan_in))
        return jax.random.uniform(k, shape, jnp.float32, -bound, bound)

    p = {
        # weights stored HWIO: (kh, kw, Cin, Cout)
        "w0": uinit(ks[0], (3, 3, ch_in, ch_out), 9 * ch_in),
        "b0": uinit(ks[1], (ch_out,), 9 * ch_in),
        "w1": uinit(ks[2], (3, 3, ch_out, ch_out), 9 * ch_out),
        "b1": uinit(ks[3], (ch_out,), 9 * ch_out),
        "w2": uinit(ks[4], (3, 3, ch_out, ch_out), 9 * ch_out),
        "b2": uinit(ks[5], (ch_out,), 9 * ch_out),
        "bn1_gamma": 1.0 + 0.1 * jax.random.normal(ks[6], (ch_out,), jnp.float32),
        "bn1_beta": 0.1 * jax.random.normal(ks[7], (ch_out,), jnp.float32),
        "bn1_mean": 0.1 * jax.random.normal(ks[8], (ch_out,), jnp.float32),
        "bn1_var": 1.0 + 0.1 * jnp.abs(jax.random.normal(ks[9], (ch_out,), jnp.float32)),
        "bn2_gamma": 1.0 + 0.1 * jax.random.normal(ks[10], (ch_out,), jnp.float32),
        "bn2_beta": 0.1 * jax.random.normal(ks[11], (ch_out,), jnp.float32),
        "bn2_mean": 0.1 * jax.random.normal(ks[12], (ch_out,), jnp.float32),
        "bn2_var": 1.0 + 0.1 * jnp.abs(jax.random.normal(ks[13], (ch_out,), jnp.float32)),
    }
    return p


if __name__ == "__main__":
    key = jax.random.PRNGKey(0)
    k_x, k_p = jax.random.split(key)

    N, CH_IN, CH_OUT, H, W = 2, 4, 8, 16, 16
    x = jax.random.normal(k_x, (N, CH_IN, H, W), jnp.float32)     # NCHW like PyTorch
    params = init_params(k_p, CH_IN, CH_OUT)

    out = group1_forward(x, params)
    out = jax.block_until_ready(out)
    assert out.shape == (N, CH_OUT, H // 2, W // 2), out.shape
    assert jnp.all(jnp.isfinite(out))
    print("KERNEL_OK")
</pallas_src>

<mosaic_0001>
module attributes {stable_mosaic.version = 11 : i64} {
  func.func @_group1_kernel(%arg0: i32, %arg1: memref<1x18x18x4xbf16, #tpu.memory_space<vmem>>, %arg2: memref<9x4x128xbf16, #tpu.memory_space<vmem>>, %arg3: memref<9x128x128xbf16, #tpu.memory_space<vmem>>, %arg4: memref<9x128x128xbf16, #tpu.memory_space<vmem>>, %arg5: memref<1x128xf32, #tpu.memory_space<vmem>>, %arg6: memref<1x128xf32, #tpu.memory_space<vmem>>, %arg7: memref<1x128xf32, #tpu.memory_space<vmem>>, %arg8: memref<1x128xf32, #tpu.memory_space<vmem>>, %arg9: memref<1x128xf32, #tpu.memory_space<vmem>>, %arg10: memref<1x8x8x128xf32, #tpu.memory_space<vmem>>, %arg11: memref<18x18x128xf32, #tpu.memory_space<vmem>>, %arg12: memref<18x18x128xf32, #tpu.memory_space<vmem>>, %arg13: memref<16x16x128xf32, #tpu.memory_space<vmem>>, %arg14: memref<8x16x128xf32, #tpu.memory_space<vmem>>) attributes {dimension_semantics = [#tpu.dimension_semantics<parallel>], iteration_bounds = array<i64: 2>, scalar_prefetch = 0 : i64, scratch_operands = 4 : i64, tpu.core_type = #tpu.core_type<tc>, window_params = [{transform_indices = @transform_0, window_bounds = array<i64: 1, 18, 18, 4>}, {pipeline_mode = #tpu.pipeline_mode<synchronous>, transform_indices = @transform_1, window_bounds = array<i64: 9, 4, 128>}, {pipeline_mode = #tpu.pipeline_mode<synchronous>, transform_indices = @transform_2, window_bounds = array<i64: 9, 128, 128>}, {pipeline_mode = #tpu.pipeline_mode<synchronous>, transform_indices = @transform_3, window_bounds = array<i64: 9, 128, 128>}, {pipeline_mode = #tpu.pipeline_mode<synchronous>, transform_indices = @transform_4, window_bounds = array<i64: 1, 128>}, {pipeline_mode = #tpu.pipeline_mode<synchronous>, transform_indices = @transform_5, window_bounds = array<i64: 1, 128>}, {pipeline_mode = #tpu.pipeline_mode<synchronous>, transform_indices = @transform_6, window_bounds = array<i64: 1, 128>}, {pipeline_mode = #tpu.pipeline_mode<synchronous>, transform_indices = @transform_7, window_bounds = array<i64: 1, 128>}, {pipeline_mode = #tpu.pipeline_mode<synchronous>, transform_indices = @transform_8, window_bounds = array<i64: 1, 128>}, {transform_indices = @transform_9, window_bounds = array<i64: 1, 8, 8, 128>}]} {
    %c0 = arith.constant 0 : index
    %c0_0 = arith.constant 0 : index
    %c0_1 = arith.constant 0 : index
    %c0_2 = arith.constant 0 : index
    %0 = vector.load %arg1[%c0, %c0_0, %c0_1, %c0_2] : memref<1x18x18x4xbf16, #tpu.memory_space<vmem>>, vector<1x18x18x4xbf16>
    %1 = vector.shape_cast %0 : vector<1x18x18x4xbf16> to vector<18x18x4xbf16>
    %cst = arith.constant 0.000000e+00 : f32
    %2 = vector.broadcast %cst : f32 to vector<256x128xf32>
    %3 = vector.extract_strided_slice %1 {offsets = [0, 0, 0], sizes = [16, 16, 4], strides = [1, 1, 1]} : vector<18x18x4xbf16> to vector<16x16x4xbf16>
    %4 = vector.shape_cast %3 : vector<16x16x4xbf16> to vector<256x4xbf16>
    %c0_3 = arith.constant 0 : index
    %c0_4 = arith.constant 0 : index
    %c0_5 = arith.constant 0 : index
    %5 = vector.load %arg2[%c0_3, %c0_4, %c0_5] : memref<9x4x128xbf16, #tpu.memory_space<vmem>>, vector<1x4x128xbf16>
    %6 = vector.shape_cast %5 : vector<1x4x128xbf16> to vector<4x128xbf16>
    %cst_6 = arith.constant dense<0.000000e+00> : vector<256x128xf32>
    %7 = tpu.matmul %4, %6, %cst_6 {dimension_numbers = #tpu.dot_dimension_numbers<[1], [0], [0], [1], [0, 0, 1, 1], [], []>} : vector<256x4xbf16>, vector<4x128xbf16>, vector<256x128xf32> -> vector<256x128xf32>
    %8 = arith.addf %2, %7 : vector<256x128xf32>
    %9 = vector.extract_strided_slice %1 {offsets = [0, 1, 0], sizes = [16, 16, 4], strides = [1, 1, 1]} : vector<18x18x4xbf16> to vector<16x16x4xbf16>
    %10 = vector.shape_cast %9 : vector<16x16x4xbf16> to vector<256x4xbf16>
    %c1 = arith.constant 1 : index
    %c0_7 = arith.constant 0 : index
    %c0_8 = arith.constant 0 : index
    %11 = vector.load %arg2[%c1, %c0_7, %c0_8] : memref<9x4x128xbf16, #tpu.memory_space<vmem>>, vector<1x4x128xbf16>
    %12 = vector.shape_cast %11 : vector<1x4x128xbf16> to vector<4x128xbf16>
    %cst_9 = arith.constant dense<0.000000e+00> : vector<256x128xf32>
    %13 = tpu.matmul %10, %12, %cst_9 {dimension_numbers = #tpu.dot_dimension_numbers<[1], [0], [0], [1], [0, 0, 1, 1], [], []>} : vector<256x4xbf16>, vector<4x128xbf16>, vector<256x128xf32> -> vector<256x128xf32>
    %14 = arith.addf %8, %13 : vector<256x128xf32>
    %15 = vector.extract_strided_slice %1 {offsets = [0, 2, 0], sizes = [16, 16, 4], strides = [1, 1, 1]} : vector<18x18x4xbf16> to vector<16x16x4xbf16>
    %16 = vector.shape_cast %15 : vector<16x16x4xbf16> to vector<256x4xbf16>
    %c2 = arith.constant 2 : index
    %c0_10 = arith.constant 0 : index
    %c0_11 = arith.constant 0 : index
    %17 = vector.load %arg2[%c2, %c0_10, %c0_11] : memref<9x4x128xbf16, #tpu.memory_space<vmem>>, vector<1x4x128xbf16>
    %18 = vector.shape_cast %17 : vector<1x4x128xbf16> to vector<4x128xbf16>
    %cst_12 = arith.constant dense<0.000000e+00> : vector<256x128xf32>
    %19 = tpu.matmul %16, %18, %cst_12 {dimension_numbers = #tpu.dot_dimension_numbers<[1], [0], [0], [1], [0, 0, 1, 1], [], []>} : vector<256x4xbf16>, vector<4x128xbf16>, vector<256x128xf32> -> vector<256x128xf32>
    %20 = arith.addf %14, %19 : vector<256x128xf32>
    %21 = vector.extract_strided_slice %1 {offsets = [1, 0, 0], sizes = [16, 16, 4], strides = [1, 1, 1]} : vector<18x18x4xbf16> to vector<16x16x4xbf16>
    %22 = vector.shape_cast %21 : vector<16x16x4xbf16> to vector<256x4xbf16>
    %c3 = arith.constant 3 : index
    %c0_13 = arith.constant 0 : index
    %c0_14 = arith.constant 0 : index
    %23 = vector.load %arg2[%c3, %c0_13, %c0_14] : memref<9x4x128xbf16, #tpu.memory_space<vmem>>, vector<1x4x128xbf16>
    %24 = vector.shape_cast %23 : vector<1x4x128xbf16> to vector<4x128xbf16>
    %cst_15 = arith.constant dense<0.000000e+00> : vector<256x128xf32>
    %25 = tpu.matmul %22, %24, %cst_15 {dimension_numbers = #tpu.dot_dimension_numbers<[1], [0], [0], [1], [0, 0, 1, 1], [], []>} : vector<256x4xbf16>, vector<4x128xbf16>, vector<256x128xf32> -> vector<256x128xf32>
    %26 = arith.addf %20, %25 : vector<256x128xf32>
    %27 = vector.extract_strided_slice %1 {offsets = [1, 1, 0], sizes = [16, 16, 4], strides = [1, 1, 1]} : vector<18x18x4xbf16> to vector<16x16x4xbf16>
    %28 = vector.shape_cast %27 : vector<16x16x4xbf16> to vector<256x4xbf16>
    %c4 = arith.constant 4 : index
    %c0_16 = arith.constant 0 : index
    %c0_17 = arith.constant 0 : index
    %29 = vector.load %arg2[%c4, %c0_16, %c0_17] : memref<9x4x128xbf16, #tpu.memory_space<vmem>>, vector<1x4x128xbf16>
    %30 = vector.shape_cast %29 : vector<1x4x128xbf16> to vector<4x128xbf16>
    %cst_18 = arith.constant dense<0.000000e+00> : vector<256x128xf32>
    %31 = tpu.matmul %28, %30, %cst_18 {dimension_numbers = #tpu.dot_dimension_numbers<[1], [0], [0], [1], [0, 0, 1, 1], [], []>} : vector<256x4xbf16>, vector<4x128xbf16>, vector<256x128xf32> -> vector<256x128xf32>
    %32 = arith.addf %26, %31 : vector<256x128xf32>
    %33 = vector.extract_strided_slice %1 {offsets = [1, 2, 0], sizes = [16, 16, 4], strides = [1, 1, 1]} : vector<18x18x4xbf16> to vector<16x16x4xbf16>
    %34 = vector.shape_cast %33 : vector<16x16x4xbf16> to vector<256x4xbf16>
    %c5 = arith.constant 5 : index
    %c0_19 = arith.constant 0 : index
    %c0_20 = arith.constant 0 : index
    %35 = vector.load %arg2[%c5, %c0_19, %c0_20] : memref<9x4x128xbf16, #tpu.memory_space<vmem>>, vector<1x4x128xbf16>
    %36 = vector.shape_cast %35 : vector<1x4x128xbf16> to vector<4x128xbf16>
    %cst_21 = arith.constant dense<0.000000e+00> : vector<256x128xf32>
    %37 = tpu.matmul %34, %36, %cst_21 {dimension_numbers = #tpu.dot_dimension_numbers<[1], [0], [0], [1], [0, 0, 1, 1], [], []>} : vector<256x4xbf16>, vector<4x128xbf16>, vector<256x128xf32> -> vector<256x128xf32>
    %38 = arith.addf %32, %37 : vector<256x128xf32>
    %39 = vector.extract_strided_slice %1 {offsets = [2, 0, 0], sizes = [16, 16, 4], strides = [1, 1, 1]} : vector<18x18x4xbf16> to vector<16x16x4xbf16>
    %40 = vector.shape_cast %39 : vector<16x16x4xbf16> to vector<256x4xbf16>
    %c6 = arith.constant 6 : index
    %c0_22 = arith.constant 0 : index
    %c0_23 = arith.constant 0 : index
    %41 = vector.load %arg2[%c6, %c0_22, %c0_23] : memref<9x4x128xbf16, #tpu.memory_space<vmem>>, vector<1x4x128xbf16>
    %42 = vector.shape_cast %41 : vector<1x4x128xbf16> to vector<4x128xbf16>
    %cst_24 = arith.constant dense<0.000000e+00> : vector<256x128xf32>
    %43 = tpu.matmul %40, %42, %cst_24 {dimension_numbers = #tpu.dot_dimension_numbers<[1], [0], [0], [1], [0, 0, 1, 1], [], []>} : vector<256x4xbf16>, vector<4x128xbf16>, vector<256x128xf32> -> vector<256x128xf32>
    %44 = arith.addf %38, %43 : vector<256x128xf32>
    %45 = vector.extract_strided_slice %1 {offsets = [2, 1, 0], sizes = [16, 16, 4], strides = [1, 1, 1]} : vector<18x18x4xbf16> to vector<16x16x4xbf16>
    %46 = vector.shape_cast %45 : vector<16x16x4xbf16> to vector<256x4xbf16>
    %c7 = arith.constant 7 : index
    %c0_25 = arith.constant 0 : index
    %c0_26 = arith.constant 0 : index
    %47 = vector.load %arg2[%c7, %c0_25, %c0_26] : memref<9x4x128xbf16, #tpu.memory_space<vmem>>, vector<1x4x128xbf16>
    %48 = vector.shape_cast %47 : vector<1x4x128xbf16> to vector<4x128xbf16>
    %cst_27 = arith.constant dense<0.000000e+00> : vector<256x128xf32>
    %49 = tpu.matmul %46, %48, %cst_27 {dimension_numbers = #tpu.dot_dimension_numbers<[1], [0], [0], [1], [0, 0, 1, 1], [], []>} : vector<256x4xbf16>, vector<4x128xbf16>, vector<256x128xf32> -> vector<256x128xf32>
    %50 = arith.addf %44, %49 : vector<256x128xf32>
    %51 = vector.extract_strided_slice %1 {offsets = [2, 2, 0], sizes = [16, 16, 4], strides = [1, 1, 1]} : vector<18x18x4xbf16> to vector<16x16x4xbf16>
    %52 = vector.shape_cast %51 : vector<16x16x4xbf16> to vector<256x4xbf16>
    %c8 = arith.constant 8 : index
    %c0_28 = arith.constant 0 : index
    %c0_29 = arith.constant 0 : index
    %53 = vector.load %arg2[%c8, %c0_28, %c0_29] : memref<9x4x128xbf16, #tpu.memory_space<vmem>>, vector<1x4x128xbf16>
    %54 = vector.shape_cast %53 : vector<1x4x128xbf16> to vector<4x128xbf16>
    %cst_30 = arith.constant dense<0.000000e+00> : vector<256x128xf32>
    %55 = tpu.matmul %52, %54, %cst_30 {dimension_numbers = #tpu.dot_dimension_numbers<[1], [0], [0], [1], [0, 0, 1, 1], [], []>} : vector<256x4xbf16>, vector<4x128xbf16>, vector<256x128xf32> -> vector<256x128xf32>
    %56 = arith.addf %50, %55 : vector<256x128xf32>
    %c0_31 = arith.constant 0 : index
    %c0_32 = arith.constant 0 : index
    %57 = vector.load %arg5[%c0_31, %c0_32] : memref<1x128xf32, #tpu.memory_space<vmem>>, vector<1x128xf32>
    %58 = vector.broadcast %57 : vector<1x128xf32> to vector<256x128xf32>
    %59 = arith.addf %56, %58 : vector<256x128xf32>
    %cst_33 = arith.constant 0.000000e+00 : f32
    %60 = vector.broadcast %cst_33 : f32 to vector<18x18x128xf32>
    %c0_34 = arith.constant 0 : index
    %c0_35 = arith.constant 0 : index
    %c0_36 = arith.constant 0 : index
    %61 = vector.load %arg11[%c0_34, %c0_35, %c0_36] : memref<18x18x128xf32, #tpu.memory_space<vmem>>, vector<18x18x128xf32>
    tpu.vector_store %arg11[%c0_34, %c0_35, %c0_36], %60 {strides = array<i32>} : memref<18x18x128xf32, #tpu.memory_space<vmem>>, vector<18x18x128xf32>,
    %62 = vector.shape_cast %59 : vector<256x128xf32> to vector<16x16x128xf32>
    %c1_37 = arith.constant 1 : index
    %c1_38 = arith.constant 1 : index
    %c0_39 = arith.constant 0 : index
    %63 = vector.load %arg11[%c1_37, %c1_38, %c0_39] : memref<18x18x128xf32, #tpu.memory_space<vmem>>, vector<16x16x128xf32>
    tpu.vector_store %arg11[%c1_37, %c1_38, %c0_39], %62 {strides = array<i32>} : memref<18x18x128xf32, #tpu.memory_space<vmem>>, vector<16x16x128xf32>,
    %c0_40 = arith.constant 0 : index
    %c0_41 = arith.constant 0 : index
    %c0_42 = arith.constant 0 : index
    %64 = vector.load %arg11[%c0_40, %c0_41, %c0_42] : memref<18x18x128xf32, #tpu.memory_space<vmem>>, vector<18x18x128xf32>
    %65 = arith.truncf %64 : vector<18x18x128xf32> to vector<18x18x128xbf16>
    %cst_43 = arith.constant 0.000000e+00 : f32
    %66 = vector.broadcast %cst_43 : f32 to vector<256x128xf32>
    %67 = vector.extract_strided_slice %65 {offsets = [0, 0, 0], sizes = [16, 16, 128], strides = [1, 1, 1]} : vector<18x18x128xbf16> to vector<16x16x128xbf16>
    %68 = vector.shape_cast %67 : vector<16x16x128xbf16> to vector<256x128xbf16>
    %c0_44 = arith.constant 0 : index
    %c0_45 = arith.constant 0 : index
    %c0_46 = arith.constant 0 : index
    %69 = vector.load %arg3[%c0_44, %c0_45, %c0_46] : memref<9x128x128xbf16, #tpu.memory_space<vmem>>, vector<1x128x128xbf16>
    %70 = vector.shape_cast %69 : vector<1x128x128xbf16> to vector<128x128xbf16>
    %cst_47 = arith.constant dense<0.000000e+00> : vector<256x128xf32>
    %71 = tpu.matmul %68, %70, %cst_47 {dimension_numbers = #tpu.dot_dimension_numbers<[1], [0], [0], [1], [0, 0, 1, 1], [], []>} : vector<256x128xbf16>, vector<128x128xbf16>, vector<256x128xf32> -> vector<256x128xf32>
    %72 = arith.addf %66, %71 : vector<256x128xf32>
    %73 = vector.extract_strided_slice %65 {offsets = [0, 1, 0], sizes = [16, 16, 128], strides = [1, 1, 1]} : vector<18x18x128xbf16> to vector<16x16x128xbf16>
    %74 = vector.shape_cast %73 : vector<16x16x128xbf16> to vector<256x128xbf16>
    %c1_48 = arith.constant 1 : index
    %c0_49 = arith.constant 0 : index
    %c0_50 = arith.constant 0 : index
    %75 = vector.load %arg3[%c1_48, %c0_49, %c0_50] : memref<9x128x128xbf16, #tpu.memory_space<vmem>>, vector<1x128x128xbf16>
    %76 = vector.shape_cast %75 : vector<1x128x128xbf16> to vector<128x128xbf16>
    %cst_51 = arith.constant dense<0.000000e+00> : vector<256x128xf32>
    %77 = tpu.matmul %74, %76, %cst_51 {dimension_numbers = #tpu.dot_dimension_numbers<[1], [0], [0], [1], [0, 0, 1, 1], [], []>} : vector<256x128xbf16>, vector<128x128xbf16>, vector<256x128xf32> -> vector<256x128xf32>
    %78 = arith.addf %72, %77 : vector<256x128xf32>
    %79 = vector.extract_strided_slice %65 {offsets = [0, 2, 0], sizes = [16, 16, 128], strides = [1, 1, 1]} : vector<18x18x128xbf16> to vector<16x16x128xbf16>
    %80 = vector.shape_cast %79 : vector<16x16x128xbf16> to vector<256x128xbf16>
    %c2_52 = arith.constant 2 : index
    %c0_53 = arith.constant 0 : index
    %c0_54 = arith.constant 0 : index
    %81 = vector.load %arg3[%c2_52, %c0_53, %c0_54] : memref<9x128x128xbf16, #tpu.memory_space<vmem>>, vector<1x128x128xbf16>
    %82 = vector.shape_cast %81 : vector<1x128x128xbf16> to vector<128x128xbf16>
    %cst_55 = arith.constant dense<0.000000e+00> : vector<256x128xf32>
    %83 = tpu.matmul %80, %82, %cst_55 {dimension_numbers = #tpu.dot_dimension_numbers<[1], [0], [0], [1], [0, 0, 1, 1], [], []>} : vector<256x128xbf16>, vector<128x128xbf16>, vector<256x128xf32> -> vector<256x128xf32>
    %84 = arith.addf %78, %83 : vector<256x128xf32>
    %85 = vector.extract_strided_slice %65 {offsets = [1, 0, 0], sizes = [16, 16, 128], strides = [1, 1, 1]} : vector<18x18x128xbf16> to vector<16x16x128xbf16>
    %86 = vector.shape_cast %85 : vector<16x16x128xbf16> to vector<256x128xbf16>
    %c3_56 = arith.constant 3 : index
    %c0_57 = arith.constant 0 : index
    %c0_58 = arith.constant 0 : index
    %87 = vector.load %arg3[%c3_56, %c0_57, %c0_58] : memref<9x128x128xbf16, #tpu.memory_space<vmem>>, vector<1x128x128xbf16>
    %88 = vector.shape_cast %87 : vector<1x128x128xbf16> to vector<128x128xbf16>
    %cst_59 = arith.constant dense<0.000000e+00> : vector<256x128xf32>
    %89 = tpu.matmul %86, %88, %cst_59 {dimension_numbers = #tpu.dot_dimension_numbers<[1], [0], [0], [1], [0, 0, 1, 1], [], []>} : vector<256x128xbf16>, vector<128x128xbf16>, vector<256x128xf32> -> vector<256x128xf32>
    %90 = arith.addf %84, %89 : vector<256x128xf32>
    %91 = vector.extract_strided_slice %65 {offsets = [1, 1, 0], sizes = [16, 16, 128], strides = [1, 1, 1]} : vector<18x18x128xbf16> to vector<16x16x128xbf16>
    %92 = vector.shape_cast %91 : vector<16x16x128xbf16> to vector<256x128xbf16>
    %c4_60 = arith.constant 4 : index
    %c0_61 = arith.constant 0 : index
    %c0_62 = arith.constant 0 : index
    %93 = vector.load %arg3[%c4_60, %c0_61, %c0_62] : memref<9x128x128xbf16, #tpu.memory_space<vmem>>, vector<1x128x128xbf16>
    %94 = vector.shape_cast %93 : vector<1x128x128xbf16> to vector<128x128xbf16>
    %cst_63 = arith.constant dense<0.000000e+00> : vector<256x128xf32>
    %95 = tpu.matmul %92, %94, %cst_63 {dimension_numbers = #tpu.dot_dimension_numbers<[1], [0], [0], [1], [0, 0, 1, 1], [], []>} : vector<256x128xbf16>, vector<128x128xbf16>, vector<256x128xf32> -> vector<256x128xf32>
    %96 = arith.addf %90, %95 : vector<256x128xf32>
    %97 = vector.extract_strided_slice %65 {offsets = [1, 2, 0], sizes = [16, 16, 128], strides = [1, 1, 1]} : vector<18x18x128xbf16> to vector<16x16x128xbf16>
    %98 = vector.shape_cast %97 : vector<16x16x128xbf16> to vector<256x128xbf16>
    %c5_64 = arith.constant 5 : index
    %c0_65 = arith.constant 0 : index
    %c0_66 = arith.constant 0 : index
    %99 = vector.load %arg3[%c5_64, %c0_65, %c0_66] : memref<9x128x128xbf16, #tpu.memory_space<vmem>>, vector<1x128x128xbf16>
    %100 = vector.shape_cast %99 : vector<1x128x128xbf16> to vector<128x128xbf16>
    %cst_67 = arith.constant dense<0.000000e+00> : vector<256x128xf32>
    %101 = tpu.matmul %98, %100, %cst_67 {dimension_numbers = #tpu.dot_dimension_numbers<[1], [0], [0], [1], [0, 0, 1, 1], [], []>} : vector<256x128xbf16>, vector<128x128xbf16>, vector<256x128xf32> -> vector<256x128xf32>
    %102 = arith.addf %96, %101 : vector<256x128xf32>
    %103 = vector.extract_strided_slice %65 {offsets = [2, 0, 0], sizes = [16, 16, 128], strides = [1, 1, 1]} : vector<18x18x128xbf16> to vector<16x16x128xbf16>
    %104 = vector.shape_cast %103 : vector<16x16x128xbf16> to vector<256x128xbf16>
    %c6_68 = arith.constant 6 : index
    %c0_69 = arith.constant 0 : index
    %c0_70 = arith.constant 0 : index
    %105 = vector.load %arg3[%c6_68, %c0_69, %c0_70] : memref<9x128x128xbf16, #tpu.memory_space<vmem>>, vector<1x128x128xbf16>
    %106 = vector.shape_cast %105 : vector<1x128x128xbf16> to vector<128x128xbf16>
    %cst_71 = arith.constant dense<0.000000e+00> : vector<256x128xf32>
    %107 = tpu.matmul %104, %106, %cst_71 {dimension_numbers = #tpu.dot_dimension_numbers<[1], [0], [0], [1], [0, 0, 1, 1], [], []>} : vector<256x128xbf16>, vector<128x128xbf16>, vector<256x128xf32> -> vector<256x128xf32>
    %108 = arith.addf %102, %107 : vector<256x128xf32>
    %109 = vector.extract_strided_slice %65 {offsets = [2, 1, 0], sizes = [16, 16, 128], strides = [1, 1, 1]} : vector<18x18x128xbf16> to vector<16x16x128xbf16>
    %110 = vector.shape_cast %109 : vector<16x16x128xbf16> to vector<256x128xbf16>
    %c7_72 = arith.constant 7 : index
    %c0_73 = arith.constant 0 : index
    %c0_74 = arith.constant 0 : index
    %111 = vector.load %arg3[%c7_72, %c0_73, %c0_74] : memref<9x128x128xbf16, #tpu.memory_space<vmem>>, vector<1x128x128xbf16>
    %112 = vector.shape_cast %111 : vector<1x128x128xbf16> to vector<128x128xbf16>
    %cst_75 = arith.constant dense<0.000000e+00> : vector<256x128xf32>
    %113 = tpu.matmul %110, %112, %cst_75 {dimension_numbers = #tpu.dot_dimension_numbers<[1], [0], [0], [1], [0, 0, 1, 1], [], []>} : vector<256x128xbf16>, vector<128x128xbf16>, vector<256x128xf32> -> vector<256x128xf32>
    %114 = arith.addf %108, %113 : vector<256x128xf32>
    %115 = vector.extract_strided_slice %65 {offsets = [2, 2, 0], sizes = [16, 16, 128], strides = [1, 1, 1]} : vector<18x18x128xbf16> to vector<16x16x128xbf16>
    %116 = vector.shape_cast %115 : vector<16x16x128xbf16> to vector<256x128xbf16>
    %c8_76 = arith.constant 8 : index
    %c0_77 = arith.constant 0 : index
    %c0_78 = arith.constant 0 : index
    %117 = vector.load %arg3[%c8_76, %c0_77, %c0_78] : memref<9x128x128xbf16, #tpu.memory_space<vmem>>, vector<1x128x128xbf16>
    %118 = vector.shape_cast %117 : vector<1x128x128xbf16> to vector<128x128xbf16>
    %cst_79 = arith.constant dense<0.000000e+00> : vector<256x128xf32>
    %119 = tpu.matmul %116, %118, %cst_79 {dimension_numbers = #tpu.dot_dimension_numbers<[1], [0], [0], [1], [0, 0, 1, 1], [], []>} : vector<256x128xbf16>, vector<128x128xbf16>, vector<256x128xf32> -> vector<256x128xf32>
    %120 = arith.addf %114, %119 : vector<256x128xf32>
    %c0_80 = arith.constant 0 : index
    %c0_81 = arith.constant 0 : index
    %121 = vector.load %arg6[%c0_80, %c0_81] : memref<1x128xf32, #tpu.memory_space<vmem>>, vector<1x128xf32>
    %122 = vector.broadcast %121 : vector<1x128xf32> to vector<256x128xf32>
    %123 = arith.mulf %120, %122 : vector<256x128xf32>
    %c0_82 = arith.constant 0 : index
    %c0_83 = arith.constant 0 : index
    %124 = vector.load %arg7[%c0_82, %c0_83] : memref<1x128xf32, #tpu.memory_space<vmem>>, vector<1x128xf32>
    %125 = vector.broadcast %124 : vector<1x128xf32> to vector<256x128xf32>
    %126 = arith.addf %123, %125 : vector<256x128xf32>
    %cst_84 = arith.constant 0.000000e+00 : f32
    %127 = vector.broadcast %cst_84 : f32 to vector<256x128xf32>
    %128 = arith.cmpf oge, %126, %127 : vector<256x128xf32>
    %cst_85 = arith.constant 0.00999999977 : f32
    %129 = vector.broadcast %cst_85 : f32 to vector<256x128xf32>
    %130 = arith.mulf %129, %126 : vector<256x128xf32>
    %131 = arith.select %128, %126, %130 : vector<256x128xi1>, vector<256x128xf32>
    %cst_86 = arith.constant 0.000000e+00 : f32
    %132 = vector.broadcast %cst_86 : f32 to vector<18x18x128xf32>
    %c0_87 = arith.constant 0 : index
    %c0_88 = arith.constant 0 : index
    %c0_89 = arith.constant 0 : index
    %133 = vector.load %arg12[%c0_87, %c0_88, %c0_89] : memref<18x18x128xf32, #tpu.memory_space<vmem>>, vector<18x18x128xf32>
    tpu.vector_store %arg12[%c0_87, %c0_88, %c0_89], %132 {strides = array<i32>} : memref<18x18x128xf32, #tpu.memory_space<vmem>>, vector<18x18x128xf32>,
    %134 = vector.shape_cast %131 : vector<256x128xf32> to vector<16x16x128xf32>
    %c1_90 = arith.constant 1 : index
    %c1_91 = arith.constant 1 : index
    %c0_92 = arith.constant 0 : index
    %135 = vector.load %arg12[%c1_90, %c1_91, %c0_92] : memref<18x18x128xf32, #tpu.memory_space<vmem>>, vector<16x16x128xf32>
    tpu.vector_store %arg12[%c1_90, %c1_91, %c0_92], %134 {strides = array<i32>} : memref<18x18x128xf32, #tpu.memory_space<vmem>>, vector<16x16x128xf32>,
    %c0_93 = arith.constant 0 : index
    %c0_94 = arith.constant 0 : index
    %c0_95 = arith.constant 0 : index
    %136 = vector.load %arg12[%c0_93, %c0_94, %c0_95] : memref<18x18x128xf32, #tpu.memory_space<vmem>>, vector<18x18x128xf32>
    %137 = arith.truncf %136 : vector<18x18x128xf32> to vector<18x18x128xbf16>
    %cst_96 = arith.constant 0.000000e+00 : f32
    %138 = vector.broadcast %cst_96 : f32 to vector<256x128xf32>
    %139 = vector.extract_strided_slice %137 {offsets = [0, 0, 0], sizes = [16, 16, 128], strides = [1, 1, 1]} : vector<18x18x128xbf16> to vector<16x16x128xbf16>
    %140 = vector.shape_cast %139 : vector<16x16x128xbf16> to vector<256x128xbf16>
    %c0_97 = arith.constant 0 : index
    %c0_98 = arith.constant 0 : index
    %c0_99 = arith.constant 0 : index
    %141 = vector.load %arg4[%c0_97, %c0_98, %c0_99] : memref<9x128x128xbf16, #tpu.memory_space<vmem>>, vector<1x128x128xbf16>
    %142 = vector.shape_cast %141 : vector<1x128x128xbf16> to vector<128x128xbf16>
    %cst_100 = arith.constant dense<0.000000e+00> : vector<256x128xf32>
    %143 = tpu.matmul %140, %142, %cst_100 {dimension_numbers = #tpu.dot_dimension_numbers<[1], [0], [0], [1], [0, 0, 1, 1], [], []>} : vector<256x128xbf16>, vector<128x128xbf16>, vector<256x128xf32> -> vector<256x128xf32>
    %144 = arith.addf %138, %143 : vector<256x128xf32>
    %145 = vector.extract_strided_slice %137 {offsets = [0, 1, 0], sizes = [16, 16, 128], strides = [1, 1, 1]} : vector<18x18x128xbf16> to vector<16x16x128xbf16>
    %146 = vector.shape_cast %145 : vector<16x16x128xbf16> to vector<256x128xbf16>
    %c1_101 = arith.constant 1 : index
    %c0_102 = arith.constant 0 : index
    %c0_103 = arith.constant 0 : index
    %147 = vector.load %arg4[%c1_101, %c0_102, %c0_103] : memref<9x128x128xbf16, #tpu.memory_space<vmem>>, vector<1x128x128xbf16>
    %148 = vector.shape_cast %147 : vector<1x128x128xbf16> to vector<128x128xbf16>
    %cst_104 = arith.constant dense<0.000000e+00> : vector<256x128xf32>
    %149 = tpu.matmul %146, %148, %cst_104 {dimension_numbers = #tpu.dot_dimension_numbers<[1], [0], [0], [1], [0, 0, 1, 1], [], []>} : vector<256x128xbf16>, vector<128x128xbf16>, vector<256x128xf32> -> vector<256x128xf32>
    %150 = arith.addf %144, %149 : vector<256x128xf32>
    %151 = vector.extract_strided_slice %137 {offsets = [0, 2, 0], sizes = [16, 16, 128], strides = [1, 1, 1]} : vector<18x18x128xbf16> to vector<16x16x128xbf16>
    %152 = vector.shape_cast %151 : vector<16x16x128xbf16> to vector<256x128xbf16>
    %c2_105 = arith.constant 2 : index
    %c0_106 = arith.constant 0 : index
    %c0_107 = arith.constant 0 : index
    %153 = vector.load %arg4[%c2_105, %c0_106, %c0_107] : memref<9x128x128xbf16, #tpu.memory_space<vmem>>, vector<1x128x128xbf16>
    %154 = vector.shape_cast %153 : vector<1x128x128xbf16> to vector<128x128xbf16>
    %cst_108 = arith.constant dense<0.000000e+00> : vector<256x128xf32>
    %155 = tpu.matmul %152, %154, %cst_108 {dimension_numbers = #tpu.dot_dimension_numbers<[1], [0], [0], [1], [0, 0, 1, 1], [], []>} : vector<256x128xbf16>, vector<128x128xbf16>, vector<256x128xf32> -> vector<256x128xf32>
    %156 = arith.addf %150, %155 : vector<256x128xf32>
    %157 = vector.extract_strided_slice %137 {offsets = [1, 0, 0], sizes = [16, 16, 128], strides = [1, 1, 1]} : vector<18x18x128xbf16> to vector<16x16x128xbf16>
    %158 = vector.shape_cast %157 : vector<16x16x128xbf16> to vector<256x128xbf16>
    %c3_109 = arith.constant 3 : index
    %c0_110 = arith.constant 0 : index
    %c0_111 = arith.constant 0 : index
    %159 = vector.load %arg4[%c3_109, %c0_110, %c0_111] : memref<9x128x128xbf16, #tpu.memory_space<vmem>>, vector<1x128x128xbf16>
    %160 = vector.shape_cast %159 : vector<1x128x128xbf16> to vector<128x128xbf16>
    %cst_112 = arith.constant dense<0.000000e+00> : vector<256x128xf32>
    %161 = tpu.matmul %158, %160, %cst_112 {dimension_numbers = #tpu.dot_dimension_numbers<[1], [0], [0], [1], [0, 0, 1, 1], [], []>} : vector<256x128xbf16>, vector<128x128xbf16>, vector<256x128xf32> -> vector<256x128xf32>
    %162 = arith.addf %156, %161 : vector<256x128xf32>
    %163 = vector.extract_strided_slice %137 {offsets = [1, 1, 0], sizes = [16, 16, 128], strides = [1, 1, 1]} : vector<18x18x128xbf16> to vector<16x16x128xbf16>
    %164 = vector.shape_cast %163 : vector<16x16x128xbf16> to vector<256x128xbf16>
    %c4_113 = arith.constant 4 : index
    %c0_114 = arith.constant 0 : index
    %c0_115 = arith.constant 0 : index
    %165 = vector.load %arg4[%c4_113, %c0_114, %c0_115] : memref<9x128x128xbf16, #tpu.memory_space<vmem>>, vector<1x128x128xbf16>
    %166 = vector.shape_cast %165 : vector<1x128x128xbf16> to vector<128x128xbf16>
    %cst_116 = arith.constant dense<0.000000e+00> : vector<256x128xf32>
    %167 = tpu.matmul %164, %166, %cst_116 {dimension_numbers = #tpu.dot_dimension_numbers<[1], [0], [0], [1], [0, 0, 1, 1], [], []>} : vector<256x128xbf16>, vector<128x128xbf16>, vector<256x128xf32> -> vector<256x128xf32>
    %168 = arith.addf %162, %167 : vector<256x128xf32>
    %169 = vector.extract_strided_slice %137 {offsets = [1, 2, 0], sizes = [16, 16, 128], strides = [1, 1, 1]} : vector<18x18x128xbf16> to vector<16x16x128xbf16>
    %170 = vector.shape_cast %169 : vector<16x16x128xbf16> to vector<256x128xbf16>
    %c5_117 = arith.constant 5 : index
    %c0_118 = arith.constant 0 : index
    %c0_119 = arith.constant 0 : index
    %171 = vector.load %arg4[%c5_117, %c0_118, %c0_119] : memref<9x128x128xbf16, #tpu.memory_space<vmem>>, vector<1x128x128xbf16>
    %172 = vector.shape_cast %171 : vector<1x128x128xbf16> to vector<128x128xbf16>
    %cst_120 = arith.constant dense<0.000000e+00> : vector<256x128xf32>
    %173 = tpu.matmul %170, %172, %cst_120 {dimension_numbers = #tpu.dot_dimension_numbers<[1], [0], [0], [1], [0, 0, 1, 1], [], []>} : vector<256x128xbf16>, vector<128x128xbf16>, vector<256x128xf32> -> vector<256x128xf32>
    %174 = arith.addf %168, %173 : vector<256x128xf32>
    %175 = vector.extract_strided_slice %137 {offsets = [2, 0, 0], sizes = [16, 16, 128], strides = [1, 1, 1]} : vector<18x18x128xbf16> to vector<16x16x128xbf16>
    %176 = vector.shape_cast %175 : vector<16x16x128xbf16> to vector<256x128xbf16>
    %c6_121 = arith.constant 6 : index
    %c0_122 = arith.constant 0 : index
    %c0_123 = arith.constant 0 : index
    %177 = vector.load %arg4[%c6_121, %c0_122, %c0_123] : memref<9x128x128xbf16, #tpu.memory_space<vmem>>, vector<1x128x128xbf16>
    %178 = vector.shape_cast %177 : vector<1x128x128xbf16> to vector<128x128xbf16>
    %cst_124 = arith.constant dense<0.000000e+00> : vector<256x128xf32>
    %179 = tpu.matmul %176, %178, %cst_124 {dimension_numbers = #tpu.dot_dimension_numbers<[1], [0], [0], [1], [0, 0, 1, 1], [], []>} : vector<256x128xbf16>, vector<128x128xbf16>, vector<256x128xf32> -> vector<256x128xf32>
    %180 = arith.addf %174, %179 : vector<256x128xf32>
    %181 = vector.extract_strided_slice %137 {offsets = [2, 1, 0], sizes = [16, 16, 128], strides = [1, 1, 1]} : vector<18x18x128xbf16> to vector<16x16x128xbf16>
    %182 = vector.shape_cast %181 : vector<16x16x128xbf16> to vector<256x128xbf16>
    %c7_125 = arith.constant 7 : index
    %c0_126 = arith.constant 0 : index
    %c0_127 = arith.constant 0 : index
    %183 = vector.load %arg4[%c7_125, %c0_126, %c0_127] : memref<9x128x128xbf16, #tpu.memory_space<vmem>>, vector<1x128x128xbf16>
    %184 = vector.shape_cast %183 : vector<1x128x128xbf16> to vector<128x128xbf16>
    %cst_128 = arith.constant dense<0.000000e+00> : vector<256x128xf32>
    %185 = tpu.matmul %182, %184, %cst_128 {dimension_numbers = #tpu.dot_dimension_numbers<[1], [0], [0], [1], [0, 0, 1, 1], [], []>} : vector<256x128xbf16>, vector<128x128xbf16>, vector<256x128xf32> -> vector<256x128xf32>
    %186 = arith.addf %180, %185 : vector<256x128xf32>
    %187 = vector.extract_strided_slice %137 {offsets = [2, 2, 0], sizes = [16, 16, 128], strides = [1, 1, 1]} : vector<18x18x128xbf16> to vector<16x16x128xbf16>
    %188 = vector.shape_cast %187 : vector<16x16x128xbf16> to vector<256x128xbf16>
    %c8_129 = arith.constant 8 : index
    %c0_130 = arith.constant 0 : index
    %c0_131 = arith.constant 0 : index
    %189 = vector.load %arg4[%c8_129, %c0_130, %c0_131] : memref<9x128x128xbf16, #tpu.memory_space<vmem>>, vector<1x128x128xbf16>
    %190 = vector.shape_cast %189 : vector<1x128x128xbf16> to vector<128x128xbf16>
    %cst_132 = arith.constant dense<0.000000e+00> : vector<256x128xf32>
    %191 = tpu.matmul %188, %190, %cst_132 {dimension_numbers = #tpu.dot_dimension_numbers<[1], [0], [0], [1], [0, 0, 1, 1], [], []>} : vector<256x128xbf16>, vector<128x128xbf16>, vector<256x128xf32> -> vector<256x128xf32>
    %192 = arith.addf %186, %191 : vector<256x128xf32>
    %c0_133 = arith.constant 0 : index
    %c0_134 = arith.constant 0 : index
    %193 = vector.load %arg8[%c0_133, %c0_134] : memref<1x128xf32, #tpu.memory_space<vmem>>, vector<1x128xf32>
    %194 = vector.broadcast %193 : vector<1x128xf32> to vector<256x128xf32>
    %195 = arith.mulf %192, %194 : vector<256x128xf32>
    %c0_135 = arith.constant 0 : index
    %c0_136 = arith.constant 0 : index
    %196 = vector.load %arg9[%c0_135, %c0_136] : memref<1x128xf32, #tpu.memory_space<vmem>>, vector<1x128xf32>
    %197 = vector.broadcast %196 : vector<1x128xf32> to vector<256x128xf32>
    %198 = arith.addf %195, %197 : vector<256x128xf32>
    %199 = vector.extract_strided_slice %64 {offsets = [1, 1, 0], sizes = [16, 16, 128], strides = [1, 1, 1]} : vector<18x18x128xf32> to vector<16x16x128xf32>
    %200 = vector.shape_cast %199 : vector<16x16x128xf32> to vector<256x128xf32>
    %201 = arith.addf %198, %200 : vector<256x128xf32>
    %cst_137 = arith.constant 0.000000e+00 : f32
    %202 = vector.broadcast %cst_137 : f32 to vector<256x128xf32>
    %203 = arith.cmpf oge, %201, %202 : vector<256x128xf32>
    %cst_138 = arith.constant 0.00999999977 : f32
    %204 = vector.broadcast %cst_138 : f32 to vector<256x128xf32>
    %205 = arith.mulf %204, %201 : vector<256x128xf32>
    %206 = arith.select %203, %201, %205 : vector<256x128xi1>, vector<256x128xf32>
    %207 = vector.shape_cast %206 : vector<256x128xf32> to vector<16x16x128xf32>
    %c0_139 = arith.constant 0 : index
    %c0_140 = arith.constant 0 : index
    %c0_141 = arith.constant 0 : index
    %208 = vector.load %arg13[%c0_139, %c0_140, %c0_141] : memref<16x16x128xf32, #tpu.memory_space<vmem>>, vector<16x16x128xf32>
    tpu.vector_store %arg13[%c0_139, %c0_140, %c0_141], %207 {strides = array<i32>} : memref<16x16x128xf32, #tpu.memory_space<vmem>>, vector<16x16x128xf32>,
    %c0_142 = arith.constant 0 : index
    %c0_143 = arith.constant 0 : index
    %c0_144 = arith.constant 0 : index
    %209 = tpu.strided_load %arg13[%c0_142, %c0_143, %c0_144] {strides = array<i32: 2, 1, 1>} : memref<16x16x128xf32, #tpu.memory_space<vmem>>, vector<8x16x128xf32>
    %c1_145 = arith.constant 1 : index
    %c0_146 = arith.constant 0 : index
    %c0_147 = arith.constant 0 : index
    %210 = tpu.strided_load %arg13[%c1_145, %c0_146, %c0_147] {strides = array<i32: 2, 1, 1>} : memref<16x16x128xf32, #tpu.memory_space<vmem>>, vector<8x16x128xf32>
    %211 = arith.maximumf %209, %210 : vector<8x16x128xf32>
    %c0_148 = arith.constant 0 : index
    %c0_149 = arith.constant 0 : index
    %c0_150 = arith.constant 0 : index
    %212 = vector.load %arg14[%c0_148, %c0_149, %c0_150] : memref<8x16x128xf32, #tpu.memory_space<vmem>>, vector<8x16x128xf32>
    tpu.vector_store %arg14[%c0_148, %c0_149, %c0_150], %211 {strides = array<i32>} : memref<8x16x128xf32, #tpu.memory_space<vmem>>, vector<8x16x128xf32>,
    %c0_151 = arith.constant 0 : index
    %c0_152 = arith.constant 0 : index
    %c0_153 = arith.constant 0 : index
    %213 = tpu.strided_load %arg14[%c0_151, %c0_152, %c0_153] {strides = array<i32: 1, 2, 1>} : memref<8x16x128xf32, #tpu.memory_space<vmem>>, vector<8x8x128xf32>
    %c0_154 = arith.constant 0 : index
    %c1_155 = arith.constant 1 : index
    %c0_156 = arith.constant 0 : index
    %214 = tpu.strided_load %arg14[%c0_154, %c1_155, %c0_156] {strides = array<i32: 1, 2, 1>} : memref<8x16x128xf32, #tpu.memory_space<vmem>>, vector<8x8x128xf32>
    %215 = arith.maximumf %213, %214 : vector<8x8x128xf32>
    %c0_157 = arith.constant 0 : index
    %c0_158 = arith.constant 0 : index
    %c0_159 = arith.constant 0 : index
    %c0_160 = arith.constant 0 : index
    %216 = vector.load %arg10[%c0_157, %c0_158, %c0_159, %c0_160] : memref<1x8x8x128xf32, #tpu.memory_space<vmem>>, vector<1x8x8x128xf32>
    %217 = vector.shape_cast %216 : vector<1x8x8x128xf32> to vector<8x8x128xf32>
    %218 = vector.shape_cast %215 : vector<8x8x128xf32> to vector<1x8x8x128xf32>
    tpu.vector_store %arg10[%c0_157, %c0_158, %c0_159, %c0_160], %218 {strides = array<i32>} : memref<1x8x8x128xf32, #tpu.memory_space<vmem>>, vector<1x8x8x128xf32>,
    return
  }
  func.func @transform_0(%arg0: i32) -> (i32, i32, i32, i32) {
    %c0_i32 = arith.constant 0 : i32
    %c0_i32_0 = arith.constant 0 : i32
    %c0_i32_1 = arith.constant 0 : i32
    %c0_i32_2 = arith.constant 0 : i32
    return %arg0, %c0_i32, %c0_i32_0, %c0_i32_1 : i32, i32, i32, i32
  }
  func.func @transform_1(%arg0: i32) -> (i32, i32, i32) {
    %c0_i32 = arith.constant 0 : i32
    %c0_i32_0 = arith.constant 0 : i32
    %c0_i32_1 = arith.constant 0 : i32
    %c0_i32_2 = arith.constant 0 : i32
    return %c0_i32, %c0_i32_0, %c0_i32_1 : i32, i32, i32
  }
  func.func @transform_2(%arg0: i32) -> (i32, i32, i32) {
    %c0_i32 = arith.constant 0 : i32
    %c0_i32_0 = arith.constant 0 : i32
    %c0_i32_1 = arith.constant 0 : i32
    %c0_i32_2 = arith.constant 0 : i32
    return %c0_i32, %c0_i32_0, %c0_i32_1 : i32, i32, i32
  }
  func.func @transform_3(%arg0: i32) -> (i32, i32, i32) {
    %c0_i32 = arith.constant 0 : i32
    %c0_i32_0 = arith.constant 0 : i32
    %c0_i32_1 = arith.constant 0 : i32
    %c0_i32_2 = arith.constant 0 : i32
    return %c0_i32, %c0_i32_0, %c0_i32_1 : i32, i32, i32
  }
  func.func @transform_4(%arg0: i32) -> (i32, i32) {
    %c0_i32 = arith.constant 0 : i32
    %c0_i32_0 = arith.constant 0 : i32
    %c0_i32_1 = arith.constant 0 : i32
    return %c0_i32, %c0_i32_0 : i32, i32
  }
  func.func @transform_5(%arg0: i32) -> (i32, i32) {
    %c0_i32 = arith.constant 0 : i32
    %c0_i32_0 = arith.constant 0 : i32
    %c0_i32_1 = arith.constant 0 : i32
    return %c0_i32, %c0_i32_0 : i32, i32
  }
  func.func @transform_6(%arg0: i32) -> (i32, i32) {
    %c0_i32 = arith.constant 0 : i32
    %c0_i32_0 = arith.constant 0 : i32
    %c0_i32_1 = arith.constant 0 : i32
    return %c0_i32, %c0_i32_0 : i32, i32
  }
  func.func @transform_7(%arg0: i32) -> (i32, i32) {
    %c0_i32 = arith.constant 0 : i32
    %c0_i32_0 = arith.constant 0 : i32
    %c0_i32_1 = arith.constant 0 : i32
    return %c0_i32, %c0_i32_0 : i32, i32
  }
  func.func @transform_8(%arg0: i32) -> (i32, i32) {
    %c0_i32 = arith.constant 0 : i32
    %c0_i32_0 = arith.constant 0 : i32
    %c0_i32_1 = arith.constant 0 : i32
    return %c0_i32, %c0_i32_0 : i32, i32
  }
  func.func @transform_9(%arg0: i32) -> (i32, i32, i32, i32) {
    %c0_i32 = arith.constant 0 : i32
    %c0_i32_0 = arith.constant 0 : i32
    %c0_i32_1 = arith.constant 0 : i32
    %c0_i32_2 = arith.constant 0 : i32
    return %arg0, %c0_i32, %c0_i32_0, %c0_i32_1 : i32, i32, i32, i32
  }
}

</mosaic_0001>

<llo_original>
// kernel: tpu_custom_call.1
$region0: #{tpu_custom_call.1}
  #allocation0 [shape = 'u32[]', space=smem, size = 0x4, offset = 0x4, fixed_abs, tag = 'smem constant byte address 0x4 - core index']
  #allocation1 [shape = 'u32[144,128]{1,0:T(1,128)}', space=vmem, size = 0x12000, scoped, tag = 'internal scratch']
  #allocation2 [shape = 'f32[18,18,128]{2,1,0:T(8,128)}', space=vmem, size = 0x36000, scoped, tag = 'scratch operand']
  #allocation3 [shape = 'f32[18,18,128]{2,1,0:T(8,128)}', space=vmem, size = 0x36000, scoped, tag = 'scratch operand']
  #allocation4 [shape = 'f32[16,16,128]{2,1,0:T(8,128)}', space=vmem, size = 0x20000, scoped, tag = 'scratch operand']
  #allocation5 [shape = 'f32[8,16,128]{2,1,0:T(8,128)}', space=vmem, size = 0x10000, scoped, tag = 'scratch operand']
  %s0 = inlined_call_operand.vmem [shape: bf16[2,18,18,4], index: 0, kind: input, shape index: {}]
  %s1 = inlined_call_operand.vmem [shape: bf16[9,4,128], index: 1, kind: input, shape index: {}]
  %s2 = inlined_call_operand.hbm [shape: bf16[9,128,128], index: 2, kind: input, shape index: {}]
  %s3 = inlined_call_operand.hbm [shape: bf16[9,128,128], index: 3, kind: input, shape index: {}]
  %s4 = inlined_call_operand.vmem [shape: f32[1,128], index: 4, kind: input, shape index: {}]
  %s5 = inlined_call_operand.vmem [shape: f32[1,128], index: 5, kind: input, shape index: {}]
  %s6 = inlined_call_operand.vmem [shape: f32[1,128], index: 6, kind: input, shape index: {}]
  %s7 = inlined_call_operand.vmem [shape: f32[1,128], index: 7, kind: input, shape index: {}]
  %s8 = inlined_call_operand.vmem [shape: f32[1,128], index: 8, kind: input, shape index: {}]
  %s9 = inlined_call_operand.hbm [shape: f32[2,8,8,128], index: 9, kind: output, shape index: {}]
  %s10 = sld [smem:[#allocation0]]
  $region77: #{tpu_custom_call.1} parent=0
    _
  %s12 = ssub.s32 1, %s10
  %s13 = scalar_select 0, %s12, %s10
  $region1: #{tpu_custom_call.1} parent=0
    #allocation6 [shape = 'u8[294912]{0}', space=vmem, size = 0x48000, scoped, tag = 'input window, operand 2, single buffered']
    #allocation7 [shape = 's32[2]{0}', space=sflag, size = 0x8, scoped, tag = 'scoped memory for tpu_custom_call.1']
    #allocation8 [shape = 's32[2]{0}', space=sflag, size = 0x8, scoped, tag = 'scoped memory for tpu_custom_call.1']
    #allocation9 [shape = 'u8[294912]{0}', space=vmem, size = 0x48000, scoped, tag = 'input window, operand 3, single buffered']
    #allocation10 [shape = 's32[1]{0}', space=sflag, size = 0x4, scoped, tag = 'scoped memory for tpu_custom_call.1']
    #allocation11 [shape = 'u8[65536]{0}', space=vmem, size = 0x10000, scoped, tag = 'output window, operand 0']
    %14 = vsyncpa [#allocation7], 0
    %15 = vsyncpa [#allocation10], 0
    %16 = vsyncpa [#allocation8], 0
    %s17 = scalar_lea.sflag [#allocation8], 1
    %18 = vsyncpa %s17, 0
    loop: start=0, step=1, limit=4
    $region2: #{tpu_custom_call.1} parent=1 // loop_pre_header
      _
    $region3: #{tpu_custom_call.1} parent=1 // loop_header
      %s20 = sphi 0, %s24
      %p21 = scmp.ge.s32.totalorder %s20, 4
      %s30 = sphi 0, %s32
      %s33 = sphi 0, %s30
      %s34 = sphi 0, %s33
      %s50 = sphi 0, %s34
      %s54 = sphi 0, %s54
      %s56 = sphi 0, %s54
      %s57 = sphi 0, %s56
      %s71 = sphi 0, %s57
      %s75 = sphi 0, %s75
      %s77 = sphi 0, %s75
      %s78 = sphi 0, %s77
      %s92 = sphi 0, %s78
      %s96 = sphi 0, %s96
      %s98 = sphi 0, %s96
      %s99 = sphi 0, %s98
      %s113 = sphi 0, %s99
      %s117 = sphi 0, %s117
      %s119 = sphi 0, %s117
      %s120 = sphi 0, %s119
      %s134 = sphi 0, %s120
      %s138 = sphi 0, %s138
      %s140 = sphi 0, %s138
      %s141 = sphi 0, %s140
      %s155 = sphi 0, %s141
      %s159 = sphi 0, %s159
      %s161 = sphi 0, %s159
      %s162 = sphi 0, %s161
      %s176 = sphi 0, %s162
      %s180 = sphi 0, %s180
      %s182 = sphi 0, %s180
      %s183 = sphi 0, %s182
      %s197 = sphi 0, %s183
      %s201 = sphi 0, %s201
      %s203 = sphi 0, %s201
      %s204 = sphi 0, %s203
      %s218 = sphi 0, %s204
      %s224 = sphi 0, %s226
      %s227 = sphi 0, %s224
      %s228 = sphi 0, %s227
      %s244 = sphi 0, %s228
    $region4: #{tpu_custom_call.1} parent=1 // loop_header_branch
      %23 = sbr.rel (%p21) target = $region8
    $region5: #{tpu_custom_call.1} parent=1 // loop_body
      %s25 = ssub.s32 %s20, 1
      %s26 = ssub.s32 %s20, 2
      %s27 = sadd.s32 %s20, 1
      %s28 = ssub.s32 %s20, %s27
      %p29 = scmp.eq.s32.totalorder %s28, 0
      %s31 = sadd.s32 %s30, 1
      %s32 = scalar_select %p29, %s30, %s31
      %p35 = pneg %p29
      %p36 = scmp.eq.s32.totalorder %s20, 1
      %p37 = por %p35, %p36
      %p38 = scmp.ne.s32.totalorder %s30, %s33
      %p39 = scmp.eq.s32.totalorder %s20, 0
      %p40 = por %p38, %p39
      %p41 = scmp.ne.s32.totalorder %s30, %s33
      %p42 = scmp.eq.s32.totalorder %s25, 1
      %p43 = por %p41, %p42
      %p44 = scmp.ne.s32.totalorder %s33, %s34
      %p45 = scmp.eq.s32.totalorder %s25, 0
      %p46 = por %p44, %p45
      %p47 = scmp.ne.s32.totalorder %s33, %s34
      %p48 = scmp.eq.s32.totalorder %s26, 1
      %p49 = por %p47, %p48
      %p51 = scmp.ne.s32.totalorder %s34, %s50
      %p52 = scmp.eq.s32.totalorder %s26, 0
      %p53 = por %p51, %p52
      %s55 = sadd.s32 %s54, 1
      %p58 = scmp.eq.s32.totalorder %s20, 1
      %p59 = scmp.ne.s32.totalorder %s54, %s56
      %p60 = scmp.eq.s32.totalorder %s20, 0
      %p61 = por %p59, %p60
      %p62 = scmp.ne.s32.totalorder %s54, %s56
      %p63 = scmp.eq.s32.totalorder %s25, 1
      %p64 = por %p62, %p63
      %p65 = scmp.ne.s32.totalorder %s56, %s57
      %p66 = scmp.eq.s32.totalorder %s25, 0
      %p67 = por %p65, %p66
      %p68 = scmp.ne.s32.totalorder %s56, %s57
      %p69 = scmp.eq.s32.totalorder %s26, 1
      %p70 = por %p68, %p69
      %p72 = scmp.ne.s32.totalorder %s57, %s71
      %p73 = scmp.eq.s32.totalorder %s26, 0
      %p74 = por %p72, %p73
      %s76 = sadd.s32 %s75, 1
      %p79 = scmp.eq.s32.totalorder %s20, 1
      %p80 = scmp.ne.s32.totalorder %s75, %s77
      %p81 = scmp.eq.s32.totalorder %s20, 0
      %p82 = por %p80, %p81
      %p83 = scmp.ne.s32.totalorder %s75, %s77
      %p84 = scmp.eq.s32.totalorder %s25, 1
      %p85 = por %p83, %p84
      %p86 = scmp.ne.s32.totalorder %s77, %s78
      %p87 = scmp.eq.s32.totalorder %s25, 0
      %p88 = por %p86, %p87
      %p89 = scmp.ne.s32.totalorder %s77, %s78
      %p90 = scmp.eq.s32.totalorder %s26, 1
      %p91 = por %p89, %p90
      %p93 = scmp.ne.s32.totalorder %s78, %s92
      %p94 = scmp.eq.s32.totalorder %s26, 0
      %p95 = por %p93, %p94
      %s97 = sadd.s32 %s96, 1
      %p100 = scmp.eq.s32.totalorder %s20, 1
      %p101 = scmp.ne.s32.totalorder %s96, %s98
      %p102 = scmp.eq.s32.totalorder %s20, 0
      %p103 = por %p101, %p102
      %p104 = scmp.ne.s32.totalorder %s96, %s98
      %p105 = scmp.eq.s32.totalorder %s25, 1
      %p106 = por %p104, %p105
      %p107 = scmp.ne.s32.totalorder %s98, %s99
      %p108 = scmp.eq.s32.totalorder %s25, 0
      %p109 = por %p107, %p108
      %p110 = scmp.ne.s32.totalorder %s98, %s99
      %p111 = scmp.eq.s32.totalorder %s26, 1
      %p112 = por %p110, %p111
      %p114 = scmp.ne.s32.totalorder %s99, %s113
      %p115 = scmp.eq.s32.totalorder %s26, 0
      %p116 = por %p114, %p115
      %s118 = sadd.s32 %s117, 1
      %p121 = scmp.eq.s32.totalorder %s20, 1
      %p122 = scmp.ne.s32.totalorder %s117, %s119
      %p123 = scmp.eq.s32.totalorder %s20, 0
      %p124 = por %p122, %p123
      %p125 = scmp.ne.s32.totalorder %s117, %s119
      %p126 = scmp.eq.s32.totalorder %s25, 1
      %p127 = por %p125, %p126
      %p128 = scmp.ne.s32.totalorder %s119, %s120
      %p129 = scmp.eq.s32.totalorder %s25, 0
      %p130 = por %p128, %p129
      %p131 = scmp.ne.s32.totalorder %s119, %s120
      %p132 = scmp.eq.s32.totalorder %s26, 1
      %p133 = por %p131, %p132
      %p135 = scmp.ne.s32.totalorder %s120, %s134
      %p136 = scmp.eq.s32.totalorder %s26, 0
      %p137 = por %p135, %p136
      %s139 = sadd.s32 %s138, 1
      %p142 = scmp.eq.s32.totalorder %s20, 1
      %p143 = scmp.ne.s32.totalorder %s138, %s140
      %p144 = scmp.eq.s32.totalorder %s20, 0
      %p145 = por %p143, %p144
      %p146 = scmp.ne.s32.totalorder %s138, %s140
      %p147 = scmp.eq.s32.totalorder %s25, 1
      %p148 = por %p146, %p147
      %p149 = scmp.ne.s32.totalorder %s140, %s141
      %p150 = scmp.eq.s32.totalorder %s25, 0
      %p151 = por %p149, %p150
      %p152 = scmp.ne.s32.totalorder %s140, %s141
      %p153 = scmp.eq.s32.totalorder %s26, 1
      %p154 = por %p152, %p153
      %p156 = scmp.ne.s32.totalorder %s141, %s155
      %p157 = scmp.eq.s32.totalorder %s26, 0
      %p158 = por %p156, %p157
      %s160 = sadd.s32 %s159, 1
      %p163 = scmp.eq.s32.totalorder %s20, 1
      %p164 = scmp.ne.s32.totalorder %s159, %s161
      %p165 = scmp.eq.s32.totalorder %s20, 0
      %p166 = por %p164, %p165
      %p167 = scmp.ne.s32.totalorder %s159, %s161
      %p168 = scmp.eq.s32.totalorder %s25, 1
      %p169 = por %p167, %p168
      %p170 = scmp.ne.s32.totalorder %s161, %s162
      %p171 = scmp.eq.s32.totalorder %s25, 0
      %p172 = por %p170, %p171
      %p173 = scmp.ne.s32.totalorder %s161, %s162
      %p174 = scmp.eq.s32.totalorder %s26, 1
      %p175 = por %p173, %p174
      %p177 = scmp.ne.s32.totalorder %s162, %s176
      %p178 = scmp.eq.s32.totalorder %s26, 0
      %p179 = por %p177, %p178
      %s181 = sadd.s32 %s180, 1
      %p184 = scmp.eq.s32.totalorder %s20, 1
      %p185 = scmp.ne.s32.totalorder %s180, %s182
      %p186 = scmp.eq.s32.totalorder %s20, 0
      %p187 = por %p185, %p186
      %p188 = scmp.ne.s32.totalorder %s180, %s182
      %p189 = scmp.eq.s32.totalorder %s25, 1
      %p190 = por %p188, %p189
      %p191 = scmp.ne.s32.totalorder %s182, %s183
      %p192 = scmp.eq.s32.totalorder %s25, 0
      %p193 = por %p191, %p192
      %p194 = scmp.ne.s32.totalorder %s182, %s183
      %p195 = scmp.eq.s32.totalorder %s26, 1
      %p196 = por %p194, %p195
      %p198 = scmp.ne.s32.totalorder %s183, %s197
      %p199 = scmp.eq.s32.totalorder %s26, 0
      %p200 = por %p198, %p199
      %s202 = sadd.s32 %s201, 1
      %p205 = scmp.eq.s32.totalorder %s20, 1
      %p206 = scmp.ne.s32.totalorder %s201, %s203
      %p207 = scmp.eq.s32.totalorder %s20, 0
      %p208 = por %p206, %p207
      %p209 = scmp.ne.s32.totalorder %s201, %s203
      %p210 = scmp.eq.s32.totalorder %s25, 1
      %p211 = por %p209, %p210
      %p212 = scmp.ne.s32.totalorder %s203, %s204
      %p213 = scmp.eq.s32.totalorder %s25, 0
      %p214 = por %p212, %p213
      %p215 = scmp.ne.s32.totalorder %s203, %s204
      %p216 = scmp.eq.s32.totalorder %s26, 1
      %p217 = por %p215, %p216
      %p219 = scmp.ne.s32.totalorder %s204, %s218
      %p220 = scmp.eq.s32.totalorder %s26, 0
      %p221 = por %p219, %p220
      %s222 = ssub.s32 %s20, %s27
      %p223 = scmp.eq.s32.totalorder %s222, 0
      %s225 = sadd.s32 %s224, 1
      %s226 = scalar_select %p223, %s224, %s225
      %p229 = pneg %p223
      %p230 = scmp.eq.s32.totalorder %s20, 1
      %p231 = por %p229, %p230
      %p232 = scmp.ne.s32.totalorder %s224, %s227
      %p233 = scmp.eq.s32.totalorder %s20, 0
      %p234 = por %p232, %p233
      %p235 = scmp.ne.s32.totalorder %s224, %s227
      %p236 = scmp.eq.s32.totalorder %s25, 1
      %p237 = por %p235, %p236
      %p238 = scmp.ne.s32.totalorder %s227, %s228
      %p239 = scmp.eq.s32.totalorder %s25, 0
      %p240 = por %p238, %p239
      %p241 = scmp.ne.s32.totalorder %s227, %s228
      %p242 = scmp.eq.s32.totalorder %s26, 1
      %p243 = por %p241, %p242
      %p245 = scmp.ne.s32.totalorder %s228, %s244
      %p246 = scmp.eq.s32.totalorder %s26, 0
      %p247 = por %p245, %p246
      %p248 = scmp.le.s32.totalorder 1, %s20
      %p249 = scmp.lt.s32.totalorder %s20, 3
      %p250 = pnand %p248, %p249
      %p251 = pneg %p250
      // Predicated region
      $region9: #{tpu_custom_call.1} parent=5 // pred_check
        _
      $region10: #{tpu_custom_call.1} parent=5 // pred_check_branch
        %253 = sbr.rel (%p250) target = $region12
      $region11: #{tpu_custom_call.1} parent=5 // pred_region
        %s254 = ssub.s32 %s20, 1
        // Predicated region
        $region13: #{tpu_custom_call.1} parent=11 // pred_check
          %p255 = pneg %p67
        $region14: #{tpu_custom_call.1} parent=11 // pred_check_branch
          %257 = sbr.rel (%p255) target = $region16
        $region15: #{tpu_custom_call.1} parent=11 // pred_region
          _
        $region16: #{tpu_custom_call.1} parent=11 // pred_fallthru
          _
        // Predicated region
        $region17: #{tpu_custom_call.1} parent=11 // pred_check
          %p258 = pneg %p88
        $region18: #{tpu_custom_call.1} parent=11 // pred_check_branch
          %260 = sbr.rel (%p258) target = $region20
        $region19: #{tpu_custom_call.1} parent=11 // pred_region
          %s262 = ssub.s32 9216, 9216
          %263 = vsyncadd [#allocation7], %s262
          %s264 = sshll.u32 [#allocation6], 4
          %s265 = int_to_ptr.vmem [resolvable:$true] %s264
          %270 = dma.hbm_to_vmem [thread:$0]  %s2, 9216, %s265, [#allocation7], 64, 64, 4
        $region20: #{tpu_custom_call.1} parent=11 // pred_fallthru
          _
        // Predicated region
        $region21: #{tpu_custom_call.1} parent=11 // pred_check
          %p271 = pneg %p109
        $region22: #{tpu_custom_call.1} parent=11 // pred_check_branch
          %273 = sbr.rel (%p271) target = $region24
        $region23: #{tpu_custom_call.1} parent=11 // pred_region
          %s275 = ssub.s32 9216, 9216
          %276 = vsyncadd [#allocation10], %s275
          %s277 = sshll.u32 [#allocation9], 4
          %s278 = int_to_ptr.vmem [resolvable:$true] %s277
          %283 = dma.hbm_to_vmem [thread:$0]  %s3, 9216, %s278, [#allocation10], 64, 64, 4
        $region24: #{tpu_custom_call.1} parent=11 // pred_fallthru
          _
        // Predicated region
        $region25: #{tpu_custom_call.1} parent=11 // pred_check
          %p284 = pneg %p130
        $region26: #{tpu_custom_call.1} parent=11 // pred_check_branch
          %286 = sbr.rel (%p284) target = $region28
        $region27: #{tpu_custom_call.1} parent=11 // pred_region
          _
        $region28: #{tpu_custom_call.1} parent=11 // pred_fallthru
          _
        // Predicated region
        $region29: #{tpu_custom_call.1} parent=11 // pred_check
          %p287 = pneg %p151
        $region30: #{tpu_custom_call.1} parent=11 // pred_check_branch
          %289 = sbr.rel (%p287) target = $region32
        $region31: #{tpu_custom_call.1} parent=11 // pred_region
          _
        $region32: #{tpu_custom_call.1} parent=11 // pred_fallthru
          _
        // Predicated region
        $region33: #{tpu_custom_call.1} parent=11 // pred_check
          %p290 = pneg %p172
        $region34: #{tpu_custom_call.1} parent=11 // pred_check_branch
          %292 = sbr.rel (%p290) target = $region36
        $region35: #{tpu_custom_call.1} parent=11 // pred_region
          _
        $region36: #{tpu_custom_call.1} parent=11 // pred_fallthru
          _
        // Predicated region
        $region37: #{tpu_custom_call.1} parent=11 // pred_check
          %p293 = pneg %p193
        $region38: #{tpu_custom_call.1} parent=11 // pred_check_branch
          %295 = sbr.rel (%p293) target = $region40
        $region39: #{tpu_custom_call.1} parent=11 // pred_region
          _
        $region40: #{tpu_custom_call.1} parent=11 // pred_fallthru
          _
        // Predicated region
        $region41: #{tpu_custom_call.1} parent=11 // pred_check
          %p296 = pneg %p214
        $region42: #{tpu_custom_call.1} parent=11 // pred_check_branch
          %298 = sbr.rel (%p296) target = $region44
        $region43: #{tpu_custom_call.1} parent=11 // pred_region
          _
        $region44: #{tpu_custom_call.1} parent=11 // pred_fallthru
          _
      $region12: #{tpu_custom_call.1} parent=5 // pred_fallthru
        _
      %p299 = scmp.lt.s32.totalorder %s20, 2
      // Predicated region
      $region45: #{tpu_custom_call.1} parent=5 // pred_check
        %p300 = pneg %p299
      $region46: #{tpu_custom_call.1} parent=5 // pred_check_branch
        %302 = sbr.rel (%p300) target = $region48
      $region47: #{tpu_custom_call.1} parent=5 // pred_region
        // Predicated region
        $region49: #{tpu_custom_call.1} parent=47 // pred_check
          %p303 = pneg %p40
        $region50: #{tpu_custom_call.1} parent=47 // pred_check_branch
          %305 = sbr.rel (%p303) target = $region52
        $region51: #{tpu_custom_call.1} parent=47 // pred_region
          %p306 = scmp.lt.s32.totalorder %s20, 1
          %s307 = scalar_select %p306, %s20, 1
          %s308 = smul.addr %s307, 54
          %s309 = smul.addr %s308, 4
          %s310 = scalar_lea.vmem %s0, %s309
        $region52: #{tpu_custom_call.1} parent=47 // pred_fallthru
          _
      $region48: #{tpu_custom_call.1} parent=5 // pred_fallthru
        _
      %p311 = scmp.le.s32.totalorder 1, %s20
      %p312 = scmp.lt.s32.totalorder %s20, 3
      %p313 = pnand %p311, %p312
      %p314 = pneg %p313
      // Predicated region
      $region53: #{tpu_custom_call.1} parent=5 // pred_check
        _
      $region54: #{tpu_custom_call.1} parent=5 // pred_check_branch
        %316 = sbr.rel (%p313) target = $region56
      $region55: #{tpu_custom_call.1} parent=5 // pred_region
        %s317 = ssub.s32 %s20, 1
        // Predicated region
        $region57: #{tpu_custom_call.1} parent=55 // pred_check
          %p318 = pneg %p88
        $region58: #{tpu_custom_call.1} parent=55 // pred_check_branch
          %320 = sbr.rel (%p318) target = $region60
        $region59: #{tpu_custom_call.1} parent=55 // pred_region
          %321 = dma.done [#allocation7], 9216
        $region60: #{tpu_custom_call.1} parent=55 // pred_fallthru
          _
        // Predicated region
        $region61: #{tpu_custom_call.1} parent=55 // pred_check
          %p322 = pneg %p109
        $region62: #{tpu_custom_call.1} parent=55 // pred_check_branch
          %324 = sbr.rel (%p322) target = $region64
        $region63: #{tpu_custom_call.1} parent=55 // pred_region
          %325 = dma.done [#allocation10], 9216
        $region64: #{tpu_custom_call.1} parent=55 // pred_fallthru
          _
        %p326 = scmp.lt.s32.totalorder %s25, 1
        %s327 = scalar_select %p326, %s25, 1
        %s328 = smul.addr %s327, 54
        %s329 = smul.addr %s328, 4
        %s330 = scalar_lea.vmem %s0, %s329
        %p331 = pneg %p46
        %p332 = pneg %p43
        %p333 = pneg %p67
        %p334 = pneg %p64
        %p335 = pneg %p88
        %p336 = pneg %p85
        %p337 = pneg %p109
        %p338 = pneg %p106
        %p339 = pneg %p130
        %p340 = pneg %p127
        %p341 = pneg %p151
        %p342 = pneg %p148
        %p343 = pneg %p172
        %p344 = pneg %p169
        %p345 = pneg %p193
        %p346 = pneg %p190
        %p347 = pneg %p214
        %p348 = pneg %p211
        %p349 = pneg %p240
        %p350 = pneg %p237
        %s351 = sand.u32 %s227, 1
        %s352 = scalar_lea.sflag [#allocation8], %s351
        %s353 = sand.u32 %s227, 1
        %s354 = smul.addr %s353, 64
        %s355 = scalar_lea.vmem [#allocation11], %s354
        %p356 = scmp.lt.s32.totalorder %s25, 1
        %s357 = scalar_select %p356, %s25, 1
        %s358 = smul.addr %s357, 54
        %s359 = smul.addr %s358, 4
        %s360 = scalar_lea.vmem %s0, %s359
        %v362 = vld [vmem:[%s360] sm:$0xf]
        %v363 = vld [vmem:[%s360 + $0x4] sm:$0xf]
        %v364 = vld [vmem:[%s360 + $0x8] sm:$0x1]
        %v365 = vld [vmem:[%s360 + $0xc] sm:$0xf]
        %v366 = vld [vmem:[%s360 + $0x10] sm:$0xf]
        %v367 = vld [vmem:[%s360 + $0x14] sm:$0x1]
        %v368 = vld [vmem:[%s360 + $0x18] sm:$0xf]
        %v369 = vld [vmem:[%s360 + $0x1c] sm:$0xf]
        %v370 = vld [vmem:[%s360 + $0x20] sm:$0x1]
        %v371 = vld [vmem:[%s360 + $0x24] sm:$0xf]
        %v372 = vld [vmem:[%s360 + $0x28] sm:$0xf]
        %v373 = vld [vmem:[%s360 + $0x2c] sm:$0x1]
        %v374 = vld [vmem:[%s360 + $0x30] sm:$0xf]
        %v375 = vld [vmem:[%s360 + $0x34] sm:$0xf]
        %v376 = vld [vmem:[%s360 + $0x38] sm:$0x1]
        %v377 = vld [vmem:[%s360 + $0x3c] sm:$0xf]
        %v378 = vld [vmem:[%s360 + $0x40] sm:$0xf]
        %v379 = vld [vmem:[%s360 + $0x44] sm:$0x1]
        %v380 = vld [vmem:[%s360 + $0x48] sm:$0xf]
        %v381 = vld [vmem:[%s360 + $0x4c] sm:$0xf]
        %v382 = vld [vmem:[%s360 + $0x50] sm:$0x1]
        %v383 = vld [vmem:[%s360 + $0x54] sm:$0xf]
        %v384 = vld [vmem:[%s360 + $0x58] sm:$0xf]
        %v385 = vld [vmem:[%s360 + $0x5c] sm:$0x1]
        %v386 = vld [vmem:[%s360 + $0x60] sm:$0xf]
        %v387 = vld [vmem:[%s360 + $0x64] sm:$0xf]
        %v388 = vld [vmem:[%s360 + $0x68] sm:$0x1]
        %v389 = vld [vmem:[%s360 + $0x6c] sm:$0xf]
        %v390 = vld [vmem:[%s360 + $0x70] sm:$0xf]
        %v391 = vld [vmem:[%s360 + $0x74] sm:$0x1]
        %v392 = vld [vmem:[%s360 + $0x78] sm:$0xf]
        %v393 = vld [vmem:[%s360 + $0x7c] sm:$0xf]
        %v394 = vld [vmem:[%s360 + $0x80] sm:$0x1]
        %v395 = vld [vmem:[%s360 + $0x84] sm:$0xf]
        %v396 = vld [vmem:[%s360 + $0x88] sm:$0xf]
        %v397 = vld [vmem:[%s360 + $0x8c] sm:$0x1]
        %v398 = vld [vmem:[%s360 + $0x90] sm:$0xf]
        %v399 = vld [vmem:[%s360 + $0x94] sm:$0xf]
        %v400 = vld [vmem:[%s360 + $0x98] sm:$0x1]
        %v401 = vld [vmem:[%s360 + $0x9c] sm:$0xf]
        %v402 = vld [vmem:[%s360 + $0xa0] sm:$0xf]
        %v403 = vld [vmem:[%s360 + $0xa4] sm:$0x1]
        %v404 = vld [vmem:[%s360 + $0xa8] sm:$0xf]
        %v405 = vld [vmem:[%s360 + $0xac] sm:$0xf]
        %v406 = vld [vmem:[%s360 + $0xb0] sm:$0x1]
        %v407 = vld [vmem:[%s360 + $0xb4] sm:$0xf]
        %v408 = vld [vmem:[%s360 + $0xb8] sm:$0xf]
        %v409 = vld [vmem:[%s360 + $0xbc] sm:$0x1]
        %v410 = vld [vmem:[%s360 + $0xc0] sm:$0xf]
        %v411 = vld [vmem:[%s360 + $0xc4] sm:$0xf]
        %v412 = vld [vmem:[%s360 + $0xc8] sm:$0x1]
        %v413 = vld [vmem:[%s360 + $0xcc] sm:$0xf]
        %v414 = vld [vmem:[%s360 + $0xd0] sm:$0xf]
        %v415 = vld [vmem:[%s360 + $0xd4] sm:$0x1]
        %v416 = vld [vmem:[%s1] sm:$0x3]
        %vm417 = vsmask.f32 3328
        %vm418 = vsmask.f32 7440
        %vm419 = vmor %vm417, %vm418
        %v421 = vshrl.u32 %v362, 16
        %v423 = vrot.slane %v421, 4
        %v424 = vshll.u32 %v362, 16
        %v426 = vrot.slane %v424, 5
        %v427 = vor.u32 %v423, %v426
        %v428 = vrot.slane %v427, 4
        %v430 = vshll.u32 %v363, 16
        %v432 = vrot.slane %v430, 5
        %v433 = vsel %vm419, %v428, %v432
        %v434 = vshrl.u32 %v363, 16
        %v436 = vrot.slane %v434, 4
        %v437 = vor.u32 %v436, %v432
        %v438 = vrot.slane %v437, 4
        %v440 = vshll.u32 %v364, 16
        %v442 = vrot.slane %v440, 5
        %v443 = vsel %vm419, %v438, %v442
        %v445 = vshrl.u32 %v365, 16
        %v447 = vrot.slane %v445, 4
        %v448 = vshll.u32 %v365, 16
        %v450 = vrot.slane %v448, 5
        %v451 = vor.u32 %v447, %v450
        %v452 = vrot.slane %v451, 4
        %v454 = vshll.u32 %v366, 16
        %v456 = vrot.slane %v454, 5
        %v457 = vsel %vm419, %v452, %v456
        %v458 = vshrl.u32 %v366, 16
        %v460 = vrot.slane %v458, 4
        %v461 = vor.u32 %v460, %v456
        %v462 = vrot.slane %v461, 4
        %v464 = vshll.u32 %v367, 16
        %v466 = vrot.slane %v464, 5
        %v467 = vsel %vm419, %v462, %v466
        %v469 = vshrl.u32 %v368, 16
        %v471 = vrot.slane %v469, 4
        %v472 = vshll.u32 %v368, 16
        %v474 = vrot.slane %v472, 5
        %v475 = vor.u32 %v471, %v474
        %v476 = vrot.slane %v475, 4
        %v478 = vshll.u32 %v369, 16
        %v480 = vrot.slane %v478, 5
        %v481 = vsel %vm419, %v476, %v480
        %v482 = vshrl.u32 %v369, 16
        %v484 = vrot.slane %v482, 4
        %v485 = vor.u32 %v484, %v480
        %v486 = vrot.slane %v485, 4
        %v488 = vshll.u32 %v370, 16
        %v490 = vrot.slane %v488, 5
        %v491 = vsel %vm419, %v486, %v490
        %v493 = vshrl.u32 %v371, 16
        %v495 = vrot.slane %v493, 4
        %v496 = vshll.u32 %v371, 16
        %v498 = vrot.slane %v496, 5
        %v499 = vor.u32 %v495, %v498
        %v500 = vrot.slane %v499, 4
        %v502 = vshll.u32 %v372, 16
        %v504 = vrot.slane %v502, 5
        %v505 = vsel %vm419, %v500, %v504
        %v506 = vshrl.u32 %v372, 16
        %v508 = vrot.slane %v506, 4
        %v509 = vor.u32 %v508, %v504
        %v510 = vrot.slane %v509, 4
        %v512 = vshll.u32 %v373, 16
        %v514 = vrot.slane %v512, 5
        %v515 = vsel %vm419, %v510, %v514
        %v517 = vshrl.u32 %v374, 16
        %v519 = vrot.slane %v517, 4
        %v520 = vshll.u32 %v374, 16
        %v522 = vrot.slane %v520, 5
        %v523 = vor.u32 %v519, %v522
        %v524 = vrot.slane %v523, 4
        %v526 = vshll.u32 %v375, 16
        %v528 = vrot.slane %v526, 5
        %v529 = vsel %vm419, %v524, %v528
        %v530 = vshrl.u32 %v375, 16
        %v532 = vrot.slane %v530, 4
        %v533 = vor.u32 %v532, %v528
        %v534 = vrot.slane %v533, 4
        %v536 = vshll.u32 %v376, 16
        %v538 = vrot.slane %v536, 5
        %v539 = vsel %vm419, %v534, %v538
        %v541 = vshrl.u32 %v377, 16
        %v543 = vrot.slane %v541, 4
        %v544 = vshll.u32 %v377, 16
        %v546 = vrot.slane %v544, 5
        %v547 = vor.u32 %v543, %v546
        %v548 = vrot.slane %v547, 4
        %v550 = vshll.u32 %v378, 16
        %v552 = vrot.slane %v550, 5
        %v553 = vsel %vm419, %v548, %v552
        %v554 = vshrl.u32 %v378, 16
        %v556 = vrot.slane %v554, 4
        %v557 = vor.u32 %v556, %v552
        %v558 = vrot.slane %v557, 4
        %v560 = vshll.u32 %v379, 16
        %v562 = vrot.slane %v560, 5
        %v563 = vsel %vm419, %v558, %v562
        %v565 = vshrl.u32 %v380, 16
        %v567 = vrot.slane %v565, 4
        %v568 = vshll.u32 %v380, 16
        %v570 = vrot.slane %v568, 5
        %v571 = vor.u32 %v567, %v570
        %v572 = vrot.slane %v571, 4
        %v574 = vshll.u32 %v381, 16
        %v576 = vrot.slane %v574, 5
        %v577 = vsel %vm419, %v572, %v576
        %v578 = vshrl.u32 %v381, 16
        %v580 = vrot.slane %v578, 4
        %v581 = vor.u32 %v580, %v576
        %v582 = vrot.slane %v581, 4
        %v584 = vshll.u32 %v382, 16
        %v586 = vrot.slane %v584, 5
        %v587 = vsel %vm419, %v582, %v586
        %v589 = vshrl.u32 %v383, 16
        %v591 = vrot.slane %v589, 4
        %v592 = vshll.u32 %v383, 16
        %v594 = vrot.slane %v592, 5
        %v595 = vor.u32 %v591, %v594
        %v596 = vrot.slane %v595, 4
        %v598 = vshll.u32 %v384, 16
        %v600 = vrot.slane %v598, 5
        %v601 = vsel %vm419, %v596, %v600
        %v602 = vshrl.u32 %v384, 16
        %v604 = vrot.slane %v602, 4
        %v605 = vor.u32 %v604, %v600
        %v606 = vrot.slane %v605, 4
        %v608 = vshll.u32 %v385, 16
        %v610 = vrot.slane %v608, 5
        %v611 = vsel %vm419, %v606, %v610
        %v613 = vshrl.u32 %v386, 16
        %v615 = vrot.slane %v613, 4
        %v616 = vshll.u32 %v386, 16
        %v618 = vrot.slane %v616, 5
        %v619 = vor.u32 %v615, %v618
        %v620 = vrot.slane %v619, 4
        %v622 = vshll.u32 %v387, 16
        %v624 = vrot.slane %v622, 5
        %v625 = vsel %vm419, %v620, %v624
        %v626 = vshrl.u32 %v387, 16
        %v628 = vrot.slane %v626, 4
        %v629 = vor.u32 %v628, %v624
        %v630 = vrot.slane %v629, 4
        %v632 = vshll.u32 %v388, 16
        %v634 = vrot.slane %v632, 5
        %v635 = vsel %vm419, %v630, %v634
        %v637 = vshrl.u32 %v389, 16
        %v639 = vrot.slane %v637, 4
        %v640 = vshll.u32 %v389, 16
        %v642 = vrot.slane %v640, 5
        %v643 = vor.u32 %v639, %v642
        %v644 = vrot.slane %v643, 4
        %v646 = vshll.u32 %v390, 16
        %v648 = vrot.slane %v646, 5
        %v649 = vsel %vm419, %v644, %v648
        %v650 = vshrl.u32 %v390, 16
        %v652 = vrot.slane %v650, 4
        %v653 = vor.u32 %v652, %v648
        %v654 = vrot.slane %v653, 4
        %v656 = vshll.u32 %v391, 16
        %v658 = vrot.slane %v656, 5
        %v659 = vsel %vm419, %v654, %v658
        %v661 = vshrl.u32 %v392, 16
        %v663 = vrot.slane %v661, 4
        %v664 = vshll.u32 %v392, 16
        %v666 = vrot.slane %v664, 5
        %v667 = vor.u32 %v663, %v666
        %v668 = vrot.slane %v667, 4
        %v670 = vshll.u32 %v393, 16
        %v672 = vrot.slane %v670, 5
        %v673 = vsel %vm419, %v668, %v672
        %v674 = vshrl.u32 %v393, 16
        %v676 = vrot.slane %v674, 4
        %v677 = vor.u32 %v676, %v672
        %v678 = vrot.slane %v677, 4
        %v680 = vshll.u32 %v394, 16
        %v682 = vrot.slane %v680, 5
        %v683 = vsel %vm419, %v678, %v682
        %v685 = vshrl.u32 %v395, 16
        %v687 = vrot.slane %v685, 4
        %v688 = vshll.u32 %v395, 16
        %v690 = vrot.slane %v688, 5
        %v691 = vor.u32 %v687, %v690
        %v692 = vrot.slane %v691, 4
        %v694 = vshll.u32 %v396, 16
        %v696 = vrot.slane %v694, 5
        %v697 = vsel %vm419, %v692, %v696
        %v698 = vshrl.u32 %v396, 16
        %v700 = vrot.slane %v698, 4
        %v701 = vor.u32 %v700, %v696
        %v702 = vrot.slane %v701, 4
        %v704 = vshll.u32 %v397, 16
        %v706 = vrot.slane %v704, 5
        %v707 = vsel %vm419, %v702, %v706
        %v709 = vshrl.u32 %v398, 16
        %v711 = vrot.slane %v709, 4
        %v712 = vshll.u32 %v398, 16
        %v714 = vrot.slane %v712, 5
        %v715 = vor.u32 %v711, %v714
        %v716 = vrot.slane %v715, 4
        %v718 = vshll.u32 %v399, 16
        %v720 = vrot.slane %v718, 5
        %v721 = vsel %vm419, %v716, %v720
        %v722 = vshrl.u32 %v399, 16
        %v724 = vrot.slane %v722, 4
        %v725 = vor.u32 %v724, %v720
        %v726 = vrot.slane %v725, 4
        %v728 = vshll.u32 %v400, 16
        %v730 = vrot.slane %v728, 5
        %v731 = vsel %vm419, %v726, %v730
        %v733 = vshrl.u32 %v401, 16
        %v735 = vrot.slane %v733, 4
        %v736 = vshll.u32 %v401, 16
        %v738 = vrot.slane %v736, 5
        %v739 = vor.u32 %v735, %v738
        %v740 = vrot.slane %v739, 4
        %v742 = vshll.u32 %v402, 16
        %v744 = vrot.slane %v742, 5
        %v745 = vsel %vm419, %v740, %v744
        %v746 = vshrl.u32 %v402, 16
        %v748 = vrot.slane %v746, 4
        %v749 = vor.u32 %v748, %v744
        %v750 = vrot.slane %v749, 4
        %v752 = vshll.u32 %v403, 16
        %v754 = vrot.slane %v752, 5
        %v755 = vsel %vm419, %v750, %v754
        %v757 = vshrl.u32 %v404, 16
        %v759 = vrot.slane %v757, 4
        %v760 = vshll.u32 %v404, 16
        %v762 = vrot.slane %v760, 5
        %v763 = vor.u32 %v759, %v762
        %v764 = vrot.slane %v763, 4
        %v766 = vshll.u32 %v405, 16
        %v768 = vrot.slane %v766, 5
        %v769 = vsel %vm419, %v764, %v768
        %v770 = vshrl.u32 %v405, 16
        %v772 = vrot.slane %v770, 4
        %v773 = vor.u32 %v772, %v768
        %v774 = vrot.slane %v773, 4
        %v776 = vshll.u32 %v406, 16
        %v778 = vrot.slane %v776, 5
        %v779 = vsel %vm419, %v774, %v778
        %v781 = vshrl.u32 %v407, 16
        %v783 = vrot.slane %v781, 4
        %v784 = vshll.u32 %v407, 16
        %v786 = vrot.slane %v784, 5
        %v787 = vor.u32 %v783, %v786
        %v788 = vrot.slane %v787, 4
        %v790 = vshll.u32 %v408, 16
        %v792 = vrot.slane %v790, 5
        %v793 = vsel %vm419, %v788, %v792
        %v794 = vshrl.u32 %v408, 16
        %v796 = vrot.slane %v794, 4
        %v797 = vor.u32 %v796, %v792
        %v798 = vrot.slane %v797, 4
        %v800 = vshll.u32 %v409, 16
        %v802 = vrot.slane %v800, 5
        %v803 = vsel %vm419, %v798, %v802
        %s804 = scalar_lea.vmem %s1, 2
        %v805 = vld [vmem:[%s804] sm:$0x3]
        %v806 = vunpack.c.l.b16 %v433
        %v807 = vunpack.c.l.b16 %v443
        %v808 = vunpack.c.l.b16 %v457
        %v809 = vunpack.c.l.b16 %v467
        %v810 = vunpack.c.l.b16 %v481
        %v811 = vunpack.c.l.b16 %v491
        %v812 = vunpack.c.l.b16 %v505
        %v813 = vunpack.c.l.b16 %v515
        %v814 = vunpack.c.l.b16 %v529
        %v815 = vunpack.c.l.b16 %v539
        %v816 = vunpack.c.l.b16 %v553
        %v817 = vunpack.c.l.b16 %v563
        %v818 = vunpack.c.l.b16 %v577
        %v819 = vunpack.c.l.b16 %v587
        %v820 = vunpack.c.l.b16 %v601
        %v821 = vunpack.c.l.b16 %v611
        %v822 = vunpack.c.l.b16 %v625
        %v823 = vunpack.c.l.b16 %v635
        %v824 = vunpack.c.l.b16 %v649
        %v825 = vunpack.c.l.b16 %v659
        %v826 = vunpack.c.l.b16 %v673
        %v827 = vunpack.c.l.b16 %v683
        %v828 = vunpack.c.l.b16 %v697
        %v829 = vunpack.c.l.b16 %v707
        %v830 = vunpack.c.l.b16 %v721
        %v831 = vunpack.c.l.b16 %v731
        %v832 = vunpack.c.l.b16 %v745
        %v833 = vunpack.c.l.b16 %v755
        %v834 = vunpack.c.l.b16 %v769
        %v835 = vunpack.c.l.b16 %v779
        %v836 = vunpack.c.l.b16 %v793
        %v837 = vunpack.c.l.b16 %v803
        %v838 = vpack.c.b16 %v807, %v806
        %v839 = vpack.c.b16 %v809, %v808
        %v840 = vpack.c.b16 %v811, %v810
        %v841 = vpack.c.b16 %v813, %v812
        %v842 = vpack.c.b16 %v815, %v814
        %v843 = vpack.c.b16 %v817, %v816
        %v844 = vpack.c.b16 %v819, %v818
        %v845 = vpack.c.b16 %v821, %v820
        %v846 = vpack.c.b16 %v823, %v822
        %v847 = vpack.c.b16 %v825, %v824
        %v848 = vpack.c.b16 %v827, %v826
        %v849 = vpack.c.b16 %v829, %v828
        %v850 = vpack.c.b16 %v831, %v830
        %v851 = vpack.c.b16 %v833, %v832
        %v852 = vpack.c.b16 %v835, %v834
        %v853 = vpack.c.b16 %v837, %v836
        %vm854 = vcmask 31744
        %v856 = vsel %vm854, %v838, 0
        %v859 = vsel %vm854, %v839, 0
        %v862 = vsel %vm854, %v840, 0
        %v865 = vsel %vm854, %v841, 0
        %v868 = vsel %vm854, %v842, 0
        %v871 = vsel %vm854, %v843, 0
        %v874 = vsel %vm854, %v844, 0
        %v877 = vsel %vm854, %v845, 0
        %v880 = vsel %vm854, %v846, 0
        %v883 = vsel %vm854, %v847, 0
        %v886 = vsel %vm854, %v848, 0
        %v889 = vsel %vm854, %v849, 0
        %v892 = vsel %vm854, %v850, 0
        %v895 = vsel %vm854, %v851, 0
        %v898 = vsel %vm854, %v852, 0
        %v901 = vsel %vm854, %v853, 0
        %vm903 = vcmask 1041408
        %v905 = vsel %vm903, %v805, 0
        %907 = vmatprep.subr.bf16.mxu0 0
        %908 = vmatpush1.bf16.msra.mxu0 %v905
        %909 = vmatprep.subr.bf16.mxu0 0
        %910 = vmatpush1.bf16.msra.mxu0 0
        %911 = vmatprep.subr.bf16.mxu0 0
        %912 = vmatpush1.bf16.msra.mxu0 0
        %913 = vmatprep.subr.bf16.mxu0 0
        %914 = vmatpush1.bf16.msra.mxu0 0
        %915 = vmatprep.subr.bf16.mxu0 0
        %916 = vmatpush1.bf16.msra.mxu0 0
        %917 = vmatprep.subr.bf16.mxu0 0
        %918 = vmatpush1.bf16.msra.mxu0 0
        %919 = vmatprep.subr.bf16.mxu0 0
        %920 = vmatpush1.bf16.msra.mxu0 0
        %921 = vmatprep.subr.bf16.mxu0 0
        %922 = vmatpush1.bf16.msra.mxu0 0
        %923 = vmatprep.subr.bf16.mxu0 0
        %924 = vmatpush1.bf16.msra.mxu0 0
        %925 = vmatprep.subr.bf16.mxu0 0
        %926 = vmatpush1.bf16.msra.mxu0 0
        %927 = vmatprep.subr.bf16.mxu0 0
        %928 = vmatpush1.bf16.msra.mxu0 0
        %929 = vmatprep.subr.bf16.mxu0 0
        %930 = vmatpush1.bf16.msra.mxu0 0
        %931 = vmatprep.subr.bf16.mxu0 0
        %932 = vmatpush1.bf16.msra.mxu0 0
        %933 = vmatprep.subr.bf16.mxu0 0
        %934 = vmatpush1.bf16.msra.mxu0 0
        %935 = vmatprep.subr.bf16.mxu0 0
        %936 = vmatpush1.bf16.msra.mxu0 0
        %937 = vmatprep.subr.bf16.mxu0 0
        %938 = vmatpush1.bf16.msra.mxu0 0
        %939 = vmatprep.mubr.bf16.mxu0 0
        %940 = vmatmul.mubr.bf16.gmra.mrb[0].mxu0 %v856
        %v941 = vpop.f32.mrb[0].mxu0
        %v942 = vadd.f32 0.0, %v941
        %v943 = vpop.f32.mrb[0].mxu0
        %v944 = vpop.f32.mrb[0].mxu0
        %v945 = vadd.f32 0.0, %v944
        %v946 = vpop.f32.mrb[0].mxu0
        %947 = vmatprep.mubr.bf16.mxu0 0
        %948 = vmatmul.mubr.bf16.gmra.mrb[0].mxu0 %v859
        %v949 = vpop.f32.mrb[0].mxu0
        %v950 = vadd.f32 0.0, %v949
        %v951 = vpop.f32.mrb[0].mxu0
        %v952 = vpop.f32.mrb[0].mxu0
        %v953 = vadd.f32 0.0, %v952
        %v954 = vpop.f32.mrb[0].mxu0
        %955 = vmatprep.mubr.bf16.mxu0 0
        %956 = vmatmul.mubr.bf16.gmra.mrb[0].mxu0 %v862
        %v957 = vpop.f32.mrb[0].mxu0
        %v958 = vadd.f32 0.0, %v957
        %v959 = vpop.f32.mrb[0].mxu0
        %v960 = vpop.f32.mrb[0].mxu0
        %v961 = vadd.f32 0.0, %v960
        %v962 = vpop.f32.mrb[0].mxu0
        %963 = vmatprep.mubr.bf16.mxu0 0
        %964 = vmatmul.mubr.bf16.gmra.mrb[0].mxu0 %v865
        %v965 = vpop.f32.mrb[0].mxu0
        %v966 = vadd.f32 0.0, %v965
        %v967 = vpop.f32.mrb[0].mxu0
        %v968 = vpop.f32.mrb[0].mxu0
        %v969 = vadd.f32 0.0, %v968
        %v970 = vpop.f32.mrb[0].mxu0
        %971 = vmatprep.mubr.bf16.mxu0 0
        %972 = vmatmul.mubr.bf16.gmra.mrb[0].mxu0 %v868
        %v973 = vpop.f32.mrb[0].mxu0
        %v974 = vadd.f32 0.0, %v973
        %v975 = vpop.f32.mrb[0].mxu0
        %v976 = vpop.f32.mrb[0].mxu0
        %v977 = vadd.f32 0.0, %v976
        %v978 = vpop.f32.mrb[0].mxu0
        %979 = vmatprep.mubr.bf16.mxu0 0
        %980 = vmatmul.mubr.bf16.gmra.mrb[0].mxu0 %v871
        %v981 = vpop.f32.mrb[0].mxu0
        %v982 = vadd.f32 0.0, %v981
        %v983 = vpop.f32.mrb[0].mxu0
        %v984 = vpop.f32.mrb[0].mxu0
        %v985 = vadd.f32 0.0, %v984
        %v986 = vpop.f32.mrb[0].mxu0
        %987 = vmatprep.mubr.bf16.mxu0 0
        %988 = vmatmul.mubr.bf16.gmra.mrb[0].mxu0 %v874
        %v989 = vpop.f32.mrb[0].mxu0
        %v990 = vadd.f32 0.0, %v989
        %v991 = vpop.f32.mrb[0].mxu0
        %v992 = vpop.f32.mrb[0].mxu0
        %v993 = vadd.f32 0.0, %v992
        %v994 = vpop.f32.mrb[0].mxu0
        %995 = vmatprep.mubr.bf16.mxu0 0
        %996 = vmatmul.mubr.bf16.gmra.mrb[0].mxu0 %v877
        %v997 = vpop.f32.mrb[0].mxu0
        %v998 = vadd.f32 0.0, %v997
        %v999 = vpop.f32.mrb[0].mxu0
        %v1000 = vpop.f32.mrb[0].mxu0
        %v1001 = vadd.f32 0.0, %v1000
        %v1002 = vpop.f32.mrb[0].mxu0
        %1003 = vmatprep.mubr.bf16.mxu0 0
        %1004 = vmatmul.mubr.bf16.gmra.mrb[0].mxu0 %v880
        %v1005 = vpop.f32.mrb[0].mxu0
        %v1006 = vadd.f32 0.0, %v1005
        %v1007 = vpop.f32.mrb[0].mxu0
        %v1008 = vpop.f32.mrb[0].mxu0
        %v1009 = vadd.f32 0.0, %v1008
        %v1010 = vpop.f32.mrb[0].mxu0
        %1011 = vmatprep.mubr.bf16.mxu0 0
        %1012 = vmatmul.mubr.bf16.gmra.mrb[0].mxu0 %v883
        %v1013 = vpop.f32.mrb[0].mxu0
        %v1014 = vadd.f32 0.0, %v1013
        %v1015 = vpop.f32.mrb[0].mxu0
        %v1016 = vpop.f32.mrb[0].mxu0
        %v1017 = vadd.f32 0.0, %v1016
        %v1018 = vpop.f32.mrb[0].mxu0
        %1019 = vmatprep.mubr.bf16.mxu0 0
        %1020 = vmatmul.mubr.bf16.gmra.mrb[0].mxu0 %v886
        %v1021 = vpop.f32.mrb[0].mxu0
        %v1022 = vadd.f32 0.0, %v1021
        %v1023 = vpop.f32.mrb[0].mxu0
        %v1024 = vpop.f32.mrb[0].mxu0
        %v1025 = vadd.f32 0.0, %v1024
        %v1026 = vpop.f32.mrb[0].mxu0
        %1027 = vmatprep.mubr.bf16.mxu0 0
        %1028 = vmatmul.mubr.bf16.gmra.mrb[0].mxu0 %v889
        %v1029 = vpop.f32.mrb[0].mxu0
        %v1030 = vadd.f32 0.0, %v1029
        %v1031 = vpop.f32.mrb[0].mxu0
        %v1032 = vpop.f32.mrb[0].mxu0
        %v1033 = vadd.f32 0.0, %v1032
        %v1034 = vpop.f32.mrb[0].mxu0
        %1035 = vmatprep.mubr.bf16.mxu0 0
        %1036 = vmatmul.mubr.bf16.gmra.mrb[0].mxu0 %v892
        %v1037 = vpop.f32.mrb[0].mxu0
        %v1038 = vadd.f32 0.0, %v1037
        %v1039 = vpop.f32.mrb[0].mxu0
        %v1040 = vpop.f32.mrb[0].mxu0
        %v1041 = vadd.f32 0.0, %v1040
        %v1042 = vpop.f32.mrb[0].mxu0
        %1043 = vmatprep.mubr.bf16.mxu0 0
        %1044 = vmatmul.mubr.bf16.gmra.mrb[0].mxu0 %v895
        %v1045 = vpop.f32.mrb[0].mxu0
        %v1046 = vadd.f32 0.0, %v1045
        %v1047 = vpop.f32.mrb[0].mxu0
        %v1048 = vpop.f32.mrb[0].mxu0
        %v1049 = vadd.f32 0.0, %v1048
        %v1050 = vpop.f32.mrb[0].mxu0
        %1051 = vmatprep.mubr.bf16.mxu0 0
        %1052 = vmatmul.mubr.bf16.gmra.mrb[0].mxu0 %v898
        %v1053 = vpop.f32.mrb[0].mxu0
        %v1054 = vadd.f32 0.0, %v1053
        %v1055 = vpop.f32.mrb[0].mxu0
        %v1056 = vpop.f32.mrb[0].mxu0
        %v1057 = vadd.f32 0.0, %v1056
        %v1058 = vpop.f32.mrb[0].mxu0
        %1059 = vmatprep.mubr.bf16.mxu0 0
        %1060 = vmatmul.mubr.bf16.gmra.mrb[0].mxu0 %v901
        %v1061 = vpop.f32.mrb[0].mxu0
        %v1062 = vadd.f32 0.0, %v1061
        %v1063 = vpop.f32.mrb[0].mxu0
        %v1064 = vpop.f32.mrb[0].mxu0
        %v1065 = vadd.f32 0.0, %v1064
        %v1066 = vpop.f32.mrb[0].mxu0
        %1067 = vdwg.mxu0
        %v1100 = vunpack.c.l.b16 %v362
        %v1101 = vunpack.c.l.b16 %v363
        %v1102 = vunpack.c.l.b16 %v365
        %v1103 = vunpack.c.l.b16 %v366
        %v1104 = vunpack.c.l.b16 %v368
        %v1105 = vunpack.c.l.b16 %v369
        %v1106 = vunpack.c.l.b16 %v371
        %v1107 = vunpack.c.l.b16 %v372
        %v1108 = vunpack.c.l.b16 %v374
        %v1109 = vunpack.c.l.b16 %v375
        %v1110 = vunpack.c.l.b16 %v377
        %v1111 = vunpack.c.l.b16 %v378
        %v1112 = vunpack.c.l.b16 %v380
        %v1113 = vunpack.c.l.b16 %v381
        %v1114 = vunpack.c.l.b16 %v383
        %v1115 = vunpack.c.l.b16 %v384
        %v1116 = vunpack.c.l.b16 %v386
        %v1117 = vunpack.c.l.b16 %v387
        %v1118 = vunpack.c.l.b16 %v389
        %v1119 = vunpack.c.l.b16 %v390
        %v1120 = vunpack.c.l.b16 %v392
        %v1121 = vunpack.c.l.b16 %v393
        %v1122 = vunpack.c.l.b16 %v395
        %v1123 = vunpack.c.l.b16 %v396
        %v1124 = vunpack.c.l.b16 %v398
        %v1125 = vunpack.c.l.b16 %v399
        %v1126 = vunpack.c.l.b16 %v401
        %v1127 = vunpack.c.l.b16 %v402
        %v1128 = vunpack.c.l.b16 %v404
        %v1129 = vunpack.c.l.b16 %v405
        %v1130 = vunpack.c.l.b16 %v407
        %v1131 = vunpack.c.l.b16 %v408
        %v1132 = vpack.c.b16 %v1101, %v1100
        %v1133 = vpack.c.b16 %v1103, %v1102
        %v1134 = vpack.c.b16 %v1105, %v1104
        %v1135 = vpack.c.b16 %v1107, %v1106
        %v1136 = vpack.c.b16 %v1109, %v1108
        %v1137 = vpack.c.b16 %v1111, %v1110
        %v1138 = vpack.c.b16 %v1113, %v1112
        %v1139 = vpack.c.b16 %v1115, %v1114
        %v1140 = vpack.c.b16 %v1117, %v1116
        %v1141 = vpack.c.b16 %v1119, %v1118
        %v1142 = vpack.c.b16 %v1121, %v1120
        %v1143 = vpack.c.b16 %v1123, %v1122
        %v1144 = vpack.c.b16 %v1125, %v1124
        %v1145 = vpack.c.b16 %v1127, %v1126
        %v1146 = vpack.c.b16 %v1129, %v1128
        %v1147 = vpack.c.b16 %v1131, %v1130
        %v1149 = vsel %vm854, %v1132, 0
        %v1152 = vsel %vm854, %v1133, 0
        %v1155 = vsel %vm854, %v1134, 0
        %v1158 = vsel %vm854, %v1135, 0
        %v1161 = vsel %vm854, %v1136, 0
        %v1164 = vsel %vm854, %v1137, 0
        %v1167 = vsel %vm854, %v1138, 0
        %v1170 = vsel %vm854, %v1139, 0
        %v1173 = vsel %vm854, %v1140, 0
        %v1176 = vsel %vm854, %v1141, 0
        %v1179 = vsel %vm854, %v1142, 0
        %v1182 = vsel %vm854, %v1143, 0
        %v1185 = vsel %vm854, %v1144, 0
        %v1188 = vsel %vm854, %v1145, 0
        %v1191 = vsel %vm854, %v1146, 0
        %v1194 = vsel %vm854, %v1147, 0
        %v1197 = vsel %vm903, %v416, 0
        %1199 = vmatprep.subr.bf16.mxu0 0
        %1200 = vmatpush1.bf16.msra.mxu0 %v1197
        %1201 = vmatprep.subr.bf16.mxu0 0
        %1202 = vmatpush1.bf16.msra.mxu0 0
        %1203 = vmatprep.subr.bf16.mxu0 0
        %1204 = vmatpush1.bf16.msra.mxu0 0
        %1205 = vmatprep.subr.bf16.mxu0 0
        %1206 = vmatpush1.bf16.msra.mxu0 0
        %1207 = vmatprep.subr.bf16.mxu0 0
        %1208 = vmatpush1.bf16.msra.mxu0 0
        %1209 = vmatprep.subr.bf16.mxu0 0
        %1210 = vmatpush1.bf16.msra.mxu0 0
        %1211 = vmatprep.subr.bf16.mxu0 0
        %1212 = vmatpush1.bf16.msra.mxu0 0
        %1213 = vmatprep.subr.bf16.mxu0 0
        %1214 = vmatpush1.bf16.msra.mxu0 0
        %1215 = vmatprep.subr.bf16.mxu0 0
        %1216 = vmatpush1.bf16.msra.mxu0 0
        %1217 = vmatprep.subr.bf16.mxu0 0
        %1218 = vmatpush1.bf16.msra.mxu0 0
        %1219 = vmatprep.subr.bf16.mxu0 0
        %1220 = vmatpush1.bf16.msra.mxu0 0
        %1221 = vmatprep.subr.bf16.mxu0 0
        %1222 = vmatpush1.bf16.msra.mxu0 0
        %1223 = vmatprep.subr.bf16.mxu0 0
        %1224 = vmatpush1.bf16.msra.mxu0 0
        %1225 = vmatprep.subr.bf16.mxu0 0
        %1226 = vmatpush1.bf16.msra.mxu0 0
        %1227 = vmatprep.subr.bf16.mxu0 0
        %1228 = vmatpush1.bf16.msra.mxu0 0
        %1229 = vmatprep.subr.bf16.mxu0 0
        %1230 = vmatpush1.bf16.msra.mxu0 0
        %1231 = vmatprep.mubr.bf16.mxu0 0
        %1232 = vmatmul.mubr.bf16.gmra.mrb[0].mxu0 %v1149
        %v1233 = vpop.f32.mrb[0].mxu0
        %v1234 = vadd.f32 %v942, %v1233
        %v1235 = vpop.f32.mrb[0].mxu0
        %v1236 = vpop.f32.mrb[0].mxu0
        %v1237 = vadd.f32 %v945, %v1236
        %v1238 = vpop.f32.mrb[0].mxu0
        %1239 = vmatprep.mubr.bf16.mxu0 0
        %1240 = vmatmul.mubr.bf16.gmra.mrb[0].mxu0 %v1152
        %v1241 = vpop.f32.mrb[0].mxu0
        %v1242 = vadd.f32 %v950, %v1241
        %v1243 = vpop.f32.mrb[0].mxu0
        %v1244 = vpop.f32.mrb[0].mxu0
        %v1245 = vadd.f32 %v953, %v1244
        %v1246 = vpop.f32.mrb[0].mxu0
        %1247 = vmatprep.mubr.bf16.mxu0 0
        %1248 = vmatmul.mubr.bf16.gmra.mrb[0].mxu0 %v1155
        %v1249 = vpop.f32.mrb[0].mxu0
        %v1250 = vadd.f32 %v958, %v1249
        %v1251 = vpop.f32.mrb[0].mxu0
        %v1252 = vpop.f32.mrb[0].mxu0
        %v1253 = vadd.f32 %v961, %v1252
        %v1254 = vpop.f32.mrb[0].mxu0
        %1255 = vmatprep.mubr.bf16.mxu0 0
        %1256 = vmatmul.mubr.bf16.gmra.mrb[0].mxu0 %v1158
        %v1257 = vpop.f32.mrb[0].mxu0
        %v1258 = vadd.f32 %v966, %v1257
        %v1259 = vpop.f32.mrb[0].mxu0
        %v1260 = vpop.f32.mrb[0].mxu0
        %v1261 = vadd.f32 %v969, %v1260
        %v1262 = vpop.f32.mrb[0].mxu0
        %1263 = vmatprep.mubr.bf16.mxu0 0
        %1264 = vmatmul.mubr.bf16.gmra.mrb[0].mxu0 %v1161
        %v1265 = vpop.f32.mrb[0].mxu0
        %v1266 = vadd.f32 %v974, %v1265
        %v1267 = vpop.f32.mrb[0].mxu0
        %v1268 = vpop.f32.mrb[0].mxu0
        %v1269 = vadd.f32 %v977, %v1268
        %v1270 = vpop.f32.mrb[0].mxu0
        %1271 = vmatprep.mubr.bf16.mxu0 0
        %1272 = vmatmul.mubr.bf16.gmra.mrb[0].mxu0 %v1164
        %v1273 = vpop.f32.mrb[0].mxu0
        %v1274 = vadd.f32 %v982, %v1273
        %v1275 = vpop.f32.mrb[0].mxu0
        %v1276 = vpop.f32.mrb[0].mxu0
        %v1277 = vadd.f32 %v985, %v1276
        %v1278 = vpop.f32.mrb[0].mxu0
        %1279 = vmatprep.mubr.bf16.mxu0 0
        %1280 = vmatmul.mubr.bf16.gmra.mrb[0].mxu0 %v1167
        %v1281 = vpop.f32.mrb[0].mxu0
        %v1282 = vadd.f32 %v990, %v1281
        %v1283 = vpop.f32.mrb[0].mxu0
        %v1284 = vpop.f32.mrb[0].mxu0
        %v1285 = vadd.f32 %v993, %v1284
        %v1286 = vpop.f32.mrb[0].mxu0
        %1287 = vmatprep.mubr.bf16.mxu0 0
        %1288 = vmatmul.mubr.bf16.gmra.mrb[0].mxu0 %v1170
        %v1289 = vpop.f32.mrb[0].mxu0
        %v1290 = vadd.f32 %v998, %v1289
        %v1291 = vpop.f32.mrb[0].mxu0
        %v1292 = vpop.f32.mrb[0].mxu0
        %v1293 = vadd.f32 %v1001, %v1292
        %v1294 = vpop.f32.mrb[0].mxu0
        %1295 = vmatprep.mubr.bf16.mxu0 0
        %1296 = vmatmul.mubr.bf16.gmra.mrb[0].mxu0 %v1173
        %v1297 = vpop.f32.mrb[0].mxu0
        %v1298 = vadd.f32 %v1006, %v1297
        %v1299 = vpop.f32.mrb[0].mxu0
        %v1300 = vpop.f32.mrb[0].mxu0
        %v1301 = vadd.f32 %v1009, %v1300
        %v1302 = vpop.f32.mrb[0].mxu0
        %1303 = vmatprep.mubr.bf16.mxu0 0
        %1304 = vmatmul.mubr.bf16.gmra.mrb[0].mxu0 %v1176
        %v1305 = vpop.f32.mrb[0].mxu0
        %v1306 = vadd.f32 %v1014, %v1305
        %v1307 = vpop.f32.mrb[0].mxu0
        %v1308 = vpop.f32.mrb[0].mxu0
        %v1309 = vadd.f32 %v1017, %v1308
        %v1310 = vpop.f32.mrb[0].mxu0
        %1311 = vmatprep.mubr.bf16.mxu0 0
        %1312 = vmatmul.mubr.bf16.gmra.mrb[0].mxu0 %v1179
        %v1313 = vpop.f32.mrb[0].mxu0
        %v1314 = vadd.f32 %v1022, %v1313
        %v1315 = vpop.f32.mrb[0].mxu0
        %v1316 = vpop.f32.mrb[0].mxu0
        %v1317 = vadd.f32 %v1025, %v1316
        %v1318 = vpop.f32.mrb[0].mxu0
        %1319 = vmatprep.mubr.bf16.mxu0 0
        %1320 = vmatmul.mubr.bf16.gmra.mrb[0].mxu0 %v1182
        %v1321 = vpop.f32.mrb[0].mxu0
        %v1322 = vadd.f32 %v1030, %v1321
        %v1323 = vpop.f32.mrb[0].mxu0
        %v1324 = vpop.f32.mrb[0].mxu0
        %v1325 = vadd.f32 %v1033, %v1324
        %v1326 = vpop.f32.mrb[0].mxu0
        %1327 = vmatprep.mubr.bf16.mxu0 0
        %1328 = vmatmul.mubr.bf16.gmra.mrb[0].mxu0 %v1185
        %v1329 = vpop.f32.mrb[0].mxu0
        %v1330 = vadd.f32 %v1038, %v1329
        %v1331 = vpop.f32.mrb[0].mxu0
        %v1332 = vpop.f32.mrb[0].mxu0
        %v1333 = vadd.f32 %v1041, %v1332
        %v1334 = vpop.f32.mrb[0].mxu0
        %1335 = vmatprep.mubr.bf16.mxu0 0
        %1336 = vmatmul.mubr.bf16.gmra.mrb[0].mxu0 %v1188
        %v1337 = vpop.f32.mrb[0].mxu0
        %v1338 = vadd.f32 %v1046, %v1337
        %v1339 = vpop.f32.mrb[0].mxu0
        %v1340 = vpop.f32.mrb[0].mxu0
        %v1341 = vadd.f32 %v1049, %v1340
        %v1342 = vpop.f32.mrb[0].mxu0
        %1343 = vmatprep.mubr.bf16.mxu0 0
        %1344 = vmatmul.mubr.bf16.gmra.mrb[0].mxu0 %v1191
        %v1345 = vpop.f32.mrb[0].mxu0
        %v1346 = vadd.f32 %v1054, %v1345
        %v1347 = vpop.f32.mrb[0].mxu0
        %v1348 = vpop.f32.mrb[0].mxu0
        %v1349 = vadd.f32 %v1057, %v1348
        %v1350 = vpop.f32.mrb[0].mxu0
        %1351 = vmatprep.mubr.bf16.mxu0 0
        %1352 = vmatmul.mubr.bf16.gmra.mrb[0].mxu0 %v1194
        %v1353 = vpop.f32.mrb[0].mxu0
        %v1354 = vadd.f32 %v1062, %v1353
        %v1355 = vpop.f32.mrb[0].mxu0
        %v1356 = vpop.f32.mrb[0].mxu0
        %v1357 = vadd.f32 %v1065, %v1356
        %v1358 = vpop.f32.mrb[0].mxu0
        %1359 = vdwg.mxu0
        %vm1376 = vcmask 1042432
        %vm1377 = vcmask 1046532
        %vm1378 = vmor %vm1376, %vm1377
        %v1379 = vrot.slane %v362, 5
        %v1380 = vrot.slane %v1379, 4
        %v1381 = vrot.slane %v363, 5
        %v1382 = vsel %vm1378, %v1380, %v1381
        %v1383 = vrot.slane %v1381, 4
        %v1384 = vrot.slane %v364, 5
        %v1385 = vsel %vm1378, %v1383, %v1384
        %v1386 = vrot.slane %v365, 5
        %v1387 = vrot.slane %v1386, 4
        %v1388 = vrot.slane %v366, 5
        %v1389 = vsel %vm1378, %v1387, %v1388
        %v1390 = vrot.slane %v1388, 4
        %v1391 = vrot.slane %v367, 5
        %v1392 = vsel %vm1378, %v1390, %v1391
        %v1393 = vrot.slane %v368, 5
        %v1394 = vrot.slane %v1393, 4
        %v1395 = vrot.slane %v369, 5
        %v1396 = vsel %vm1378, %v1394, %v1395
        %v1397 = vrot.slane %v1395, 4
        %v1398 = vrot.slane %v370, 5
        %v1399 = vsel %vm1378, %v1397, %v1398
        %v1400 = vrot.slane %v371, 5
        %v1401 = vrot.slane %v1400, 4
        %v1402 = vrot.slane %v372, 5
        %v1403 = vsel %vm1378, %v1401, %v1402
        %v1404 = vrot.slane %v1402, 4
        %v1405 = vrot.slane %v373, 5
        %v1406 = vsel %vm1378, %v1404, %v1405
        %v1407 = vrot.slane %v374, 5
        %v1408 = vrot.slane %v1407, 4
        %v1409 = vrot.slane %v375, 5
        %v1410 = vsel %vm1378, %v1408, %v1409
        %v1411 = vrot.slane %v1409, 4
        %v1412 = vrot.slane %v376, 5
        %v1413 = vsel %vm1378, %v1411, %v1412
        %v1414 = vrot.slane %v377, 5
        %v1415 = vrot.slane %v1414, 4
        %v1416 = vrot.slane %v378, 5
        %v1417 = vsel %vm1378, %v1415, %v1416
        %v1418 = vrot.slane %v1416, 4
        %v1419 = vrot.slane %v379, 5
        %v1420 = vsel %vm1378, %v1418, %v1419
        %v1421 = vrot.slane %v380, 5
        %v1422 = vrot.slane %v1421, 4
        %v1423 = vrot.slane %v381, 5
        %v1424 = vsel %vm1378, %v1422, %v1423
        %v1425 = vrot.slane %v1423, 4
        %v1426 = vrot.slane %v382, 5
        %v1427 = vsel %vm1378, %v1425, %v1426
        %v1428 = vrot.slane %v383, 5
        %v1429 = vrot.slane %v1428, 4
        %v1430 = vrot.slane %v384, 5
        %v1431 = vsel %vm1378, %v1429, %v1430
        %v1432 = vrot.slane %v1430, 4
        %v1433 = vrot.slane %v385, 5
        %v1434 = vsel %vm1378, %v1432, %v1433
        %v1435 = vrot.slane %v386, 5
        %v1436 = vrot.slane %v1435, 4
        %v1437 = vrot.slane %v387, 5
        %v1438 = vsel %vm1378, %v1436, %v1437
        %v1439 = vrot.slane %v1437, 4
        %v1440 = vrot.slane %v388, 5
        %v1441 = vsel %vm1378, %v1439, %v1440
        %v1442 = vrot.slane %v389, 5
        %v1443 = vrot.slane %v1442, 4
        %v1444 = vrot.slane %v390, 5
        %v1445 = vsel %vm1378, %v1443, %v1444
        %v1446 = vrot.slane %v1444, 4
        %v1447 = vrot.slane %v391, 5
        %v1448 = vsel %vm1378, %v1446, %v1447
        %v1449 = vrot.slane %v392, 5
        %v1450 = vrot.slane %v1449, 4
        %v1451 = vrot.slane %v393, 5
        %v1452 = vsel %vm1378, %v1450, %v1451
        %v1453 = vrot.slane %v1451, 4
        %v1454 = vrot.slane %v394, 5
        %v1455 = vsel %vm1378, %v1453, %v1454
        %v1456 = vrot.slane %v395, 5
        %v1457 = vrot.slane %v1456, 4
        %v1458 = vrot.slane %v396, 5
        %v1459 = vsel %vm1378, %v1457, %v1458
        %v1460 = vrot.slane %v1458, 4
        %v1461 = vrot.slane %v397, 5
        %v1462 = vsel %vm1378, %v1460, %v1461
        %v1463 = vrot.slane %v398, 5
        %v1464 = vrot.slane %v1463, 4
        %v1465 = vrot.slane %v399, 5
        %v1466 = vsel %vm1378, %v1464, %v1465
        %v1467 = vrot.slane %v1465, 4
        %v1468 = vrot.slane %v400, 5
        %v1469 = vsel %vm1378, %v1467, %v1468
        %v1470 = vrot.slane %v401, 5
        %v1471 = vrot.slane %v1470, 4
        %v1472 = vrot.slane %v402, 5
        %v1473 = vsel %vm1378, %v1471, %v1472
        %v1474 = vrot.slane %v1472, 4
        %v1475 = vrot.slane %v403, 5
        %v1476 = vsel %vm1378, %v1474, %v1475
        %v1477 = vrot.slane %v404, 5
        %v1478 = vrot.slane %v1477, 4
        %v1479 = vrot.slane %v405, 5
        %v1480 = vsel %vm1378, %v1478, %v1479
        %v1481 = vrot.slane %v1479, 4
        %v1482 = vrot.slane %v406, 5
        %v1483 = vsel %vm1378, %v1481, %v1482
        %v1484 = vrot.slane %v407, 5
        %v1485 = vrot.slane %v1484, 4
        %v1486 = vrot.slane %v408, 5
        %v1487 = vsel %vm1378, %v1485, %v1486
        %v1488 = vrot.slane %v1486, 4
        %v1489 = vrot.slane %v409, 5
        %v1490 = vsel %vm1378, %v1488, %v1489
        %s1491 = scalar_lea.vmem %s1, 4
        %v1492 = vld [vmem:[%s1491] sm:$0x3]
        %v1493 = vunpack.c.l.b16 %v1382
        %v1494 = vunpack.c.l.b16 %v1385
        %v1495 = vunpack.c.l.b16 %v1389
        %v1496 = vunpack.c.l.b16 %v1392
        %v1497 = vunpack.c.l.b16 %v1396
        %v1498 = vunpack.c.l.b16 %v1399
        %v1499 = vunpack.c.l.b16 %v1403
        %v1500 = vunpack.c.l.b16 %v1406
        %v1501 = vunpack.c.l.b16 %v1410
        %v1502 = vunpack.c.l.b16 %v1413
        %v1503 = vunpack.c.l.b16 %v1417
        %v1504 = vunpack.c.l.b16 %v1420
        %v1505 = vunpack.c.l.b16 %v1424
        %v1506 = vunpack.c.l.b16 %v1427
        %v1507 = vunpack.c.l.b16 %v1431
        %v1508 = vunpack.c.l.b16 %v1434
        %v1509 = vunpack.c.l.b16 %v1438
        %v1510 = vunpack.c.l.b16 %v1441
        %v1511 = vunpack.c.l.b16 %v1445
        %v1512 = vunpack.c.l.b16 %v1448
        %v1513 = vunpack.c.l.b16 %v1452
        %v1514 = vunpack.c.l.b16 %v1455
        %v1515 = vunpack.c.l.b16 %v1459
        %v1516 = vunpack.c.l.b16 %v1462
        %v1517 = vunpack.c.l.b16 %v1466
        %v1518 = vunpack.c.l.b16 %v1469
        %v1519 = vunpack.c.l.b16 %v1473
        %v1520 = vunpack.c.l.b16 %v1476
        %v1521 = vunpack.c.l.b16 %v1480
        %v1522 = vunpack.c.l.b16 %v1483
        %v1523 = vunpack.c.l.b16 %v1487
        %v1524 = vunpack.c.l.b16 %v1490
        %v1525 = vpack.c.b16 %v1494, %v1493
        %v1526 = vpack.c.b16 %v1496, %v1495
        %v1527 = vpack.c.b16 %v1498, %v1497
        %v1528 = vpack.c.b16 %v1500, %v1499
        %v1529 = vpack.c.b16 %v1502, %v1501
        %v1530 = vpack.c.b16 %v1504, %v1503
        %v1531 = vpack.c.b16 %v1506, %v1505
        %v1532 = vpack.c.b16 %v1508, %v1507
        %v1533 = vpack.c.b16 %v1510, %v1509
        %v1534 = vpack.c.b16 %v1512, %v1511
        %v1535 = vpack.c.b16 %v1514, %v1513
        %v1536 = vpack.c.b16 %v1516, %v1515
        %v1537 = vpack.c.b16 %v1518, %v1517
        %v1538 = vpack.c.b16 %v1520, %v1519
        %v1539 = vpack.c.b16 %v1522, %v1521
        %v1540 = vpack.c.b16 %v1524, %v1523
        %v1542 = vsel %vm854, %v1525, 0
        %v1545 = vsel %vm854, %v1526, 0
        %v1548 = vsel %vm854, %v1527, 0
        %v1551 = vsel %vm854, %v1528, 0
        %v1554 = vsel %vm854, %v1529, 0
        %v1557 = vsel %vm854, %v1530, 0
        %v1560 = vsel %vm854, %v1531, 0
        %v1563 = vsel %vm854, %v1532, 0
        %v1566 = vsel %vm854, %v1533, 0
        %v1569 = vsel %vm854, %v1534, 0
        %v1572 = vsel %vm854, %v1535, 0
        %v1575 = vsel %vm854, %v1536, 0
        %v1578 = vsel %vm854, %v1537, 0
        %v1581 = vsel %vm854, %v1538, 0
        %v1584 = vsel %vm854, %v1539, 0
        %v1587 = vsel %vm854, %v1540, 0
        %v1590 = vsel %vm903, %v1492, 0
        %1592 = vmatprep.subr.bf16.mxu0 0
        %1593 = vmatpush1.bf16.msra.mxu0 %v1590
        %1594 = vmatprep.subr.bf16.mxu0 0
        %1595 = vmatpush1.bf16.msra.mxu0 0
        %1596 = vmatprep.subr.bf16.mxu0 0
        %1597 = vmatpush1.bf16.msra.mxu0 0
        %1598 = vmatprep.subr.bf16.mxu0 0
        %1599 = vmatpush1.bf16.msra.mxu0 0
        %1600 = vmatprep.subr.bf16.mxu0 0
        %1601 = vmatpush1.bf16.msra.mxu0 0
        %1602 = vmatprep.subr.bf16.mxu0 0
        %1603 = vmatpush1.bf16.msra.mxu0 0
        %1604 = vmatprep.subr.bf16.mxu0 0
        %1605 = vmatpush1.bf16.msra.mxu0 0
        %1606 = vmatprep.subr.bf16.mxu0 0
        %1607 = vmatpush1.bf16.msra.mxu0 0
        %1608 = vmatprep.subr.bf16.mxu0 0
        %1609 = vmatpush1.bf16.msra.mxu0 0
        %1610 = vmatprep.subr.bf16.mxu0 0
        %1611 = vmatpush1.bf16.msra.mxu0 0
        %1612 = vmatprep.subr.bf16.mxu0 0
        %1613 = vmatpush1.bf16.msra.mxu0 0
        %1614 = vmatprep.subr.bf16.mxu0 0
        %1615 = vmatpush1.bf16.msra.mxu0 0
        %1616 = vmatprep.subr.bf16.mxu0 0
        %1617 = vmatpush1.bf16.msra.mxu0 0
        %1618 = vmatprep.subr.bf16.mxu0 0
        %1619 = vmatpush1.bf16.msra.mxu0 0
        %1620 = vmatprep.subr.bf16.mxu0 0
        %1621 = vmatpush1.bf16.msra.mxu0 0
        %1622 = vmatprep.subr.bf16.mxu0 0
        %1623 = vmatpush1.bf16.msra.mxu0 0
        %1624 = vmatprep.mubr.bf16.mxu0 0
        %1625 = vmatmul.mubr.bf16.gmra.mrb[0].mxu0 %v1542
        %v1626 = vpop.f32.mrb[0].mxu0
        %v1627 = vadd.f32 0.0, %v1626
        %v1628 = vpop.f32.mrb[0].mxu0
        %v1629 = vpop.f32.mrb[0].mxu0
        %v1630 = vadd.f32 0.0, %v1629
        %v1631 = vpop.f32.mrb[0].mxu0
        %1632 = vmatprep.mubr.bf16.mxu0 0
        %1633 = vmatmul.mubr.bf16.gmra.mrb[0].mxu0 %v1545
        %v1634 = vpop.f32.mrb[0].mxu0
        %v1635 = vadd.f32 0.0, %v1634
        %v1636 = vpop.f32.mrb[0].mxu0
        %v1637 = vpop.f32.mrb[0].mxu0
        %v1638 = vadd.f32 0.0, %v1637
        %v1639 = vpop.f32.mrb[0].mxu0
        %1640 = vmatprep.mubr.bf16.mxu0 0
        %1641 = vmatmul.mubr.bf16.gmra.mrb[0].mxu0 %v1548
        %v1642 = vpop.f32.mrb[0].mxu0
        %v1643 = vadd.f32 0.0, %v1642
        %v1644 = vpop.f32.mrb[0].mxu0
        %v1645 = vpop.f32.mrb[0].mxu0
        %v1646 = vadd.f32 0.0, %v1645
        %v1647 = vpop.f32.mrb[0].mxu0
        %1648 = vmatprep.mubr.bf16.mxu0 0
        %1649 = vmatmul.mubr.bf16.gmra.mrb[0].mxu0 %v1551
        %v1650 = vpop.f32.mrb[0].mxu0
        %v1651 = vadd.f32 0.0, %v1650
        %v1652 = vpop.f32.mrb[0].mxu0
        %v1653 = vpop.f32.mrb[0].mxu0
        %v1654 = vadd.f32 0.0, %v1653
        %v1655 = vpop.f32.mrb[0].mxu0
        %1656 = vmatprep.mubr.bf16.mxu0 0
        %1657 = vmatmul.mubr.bf16.gmra.mrb[0].mxu0 %v1554
        %v1658 = vpop.f32.mrb[0].mxu0
        %v1659 = vadd.f32 0.0, %v1658
        %v1660 = vpop.f32.mrb[0].mxu0
        %v1661 = vpop.f32.mrb[0].mxu0
        %v1662 = vadd.f32 0.0, %v1661
        %v1663 = vpop.f32.mrb[0].mxu0
        %1664 = vmatprep.mubr.bf16.mxu0 0
        %1665 = vmatmul.mubr.bf16.gmra.mrb[0].mxu0 %v1557
        %v1666 = vpop.f32.mrb[0].mxu0
        %v1667 = vadd.f32 0.0, %v1666
        %v1668 = vpop.f32.mrb[0].mxu0
        %v1669 = vpop.f32.mrb[0].mxu0
        %v1670 = vadd.f32 0.0, %v1669
        %v1671 = vpop.f32.mrb[0].mxu0
        %1672 = vmatprep.mubr.bf16.mxu0 0
        %1673 = vmatmul.mubr.bf16.gmra.mrb[0].mxu0 %v1560
        %v1674 = vpop.f32.mrb[0].mxu0
        %v1675 = vadd.f32 0.0, %v1674
        %v1676 = vpop.f32.mrb[0].mxu0
        %v1677 = vpop.f32.mrb[0].mxu0
        %v1678 = vadd.f32 0.0, %v1677
        %v1679 = vpop.f32.mrb[0].mxu0
        %1680 = vmatprep.mubr.bf16.mxu0 0
        %1681 = vmatmul.mubr.bf16.gmra.mrb[0].mxu0 %v1563
        %v1682 = vpop.f32.mrb[0].mxu0
        %v1683 = vadd.f32 0.0, %v1682
        %v1684 = vpop.f32.mrb[0].mxu0
        %v1685 = vpop.f32.mrb[0].mxu0
        %v1686 = vadd.f32 0.0, %v1685
        %v1687 = vpop.f32.mrb[0].mxu0
        %1688 = vmatprep.mubr.bf16.mxu0 0
        %1689 = vmatmul.mubr.bf16.gmra.mrb[0].mxu0 %v1566
        %v1690 = vpop.f32.mrb[0].mxu0
        %v1691 = vadd.f32 0.0, %v1690
        %v1692 = vpop.f32.mrb[0].mxu0
        %v1693 = vpop.f32.mrb[0].mxu0
        %v1694 = vadd.f32 0.0, %v1693
        %v1695 = vpop.f32.mrb[0].mxu0
        %1696 = vmatprep.mubr.bf16.mxu0 0
        %1697 = vmatmul.mubr.bf16.gmra.mrb[0].mxu0 %v1569
        %v1698 = vpop.f32.mrb[0].mxu0
        %v1699 = vadd.f32 0.0, %v1698
        %v1700 = vpop.f32.mrb[0].mxu0
        %v1701 = vpop.f32.mrb[0].mxu0
        %v1702 = vadd.f32 0.0, %v1701
        %v1703 = vpop.f32.mrb[0].mxu0
        %1704 = vmatprep.mubr.bf16.mxu0 0
        %1705 = vmatmul.mubr.bf16.gmra.mrb[0].mxu0 %v1572
        %v1706 = vpop.f32.mrb[0].mxu0
        %v1707 = vadd.f32 0.0, %v1706
        %v1708 = vpop.f32.mrb[0].mxu0
        %v1709 = vpop.f32.mrb[0].mxu0
        %v1710 = vadd.f32 0.0, %v1709
        %v1711 = vpop.f32.mrb[0].mxu0
        %1712 = vmatprep.mubr.bf16.mxu0 0
        %1713 = vmatmul.mubr.bf16.gmra.mrb[0].mxu0 %v1575
        %v1714 = vpop.f32.mrb[0].mxu0
        %v1715 = vadd.f32 0.0, %v1714
        %v1716 = vpop.f32.mrb[0].mxu0
        %v1717 = vpop.f32.mrb[0].mxu0
        %v1718 = vadd.f32 0.0, %v1717
        %v1719 = vpop.f32.mrb[0].mxu0
        %1720 = vmatprep.mubr.bf16.mxu0 0
        %1721 = vmatmul.mubr.bf16.gmra.mrb[0].mxu0 %v1578
        %v1722 = vpop.f32.mrb[0].mxu0
        %v1723 = vadd.f32 0.0, %v1722
        %v1724 = vpop.f32.mrb[0].mxu0
        %v1725 = vpop.f32.mrb[0].mxu0
        %v1726 = vadd.f32 0.0, %v1725
        %v1727 = vpop.f32.mrb[0].mxu0
        %1728 = vmatprep.mubr.bf16.mxu0 0
        %1729 = vmatmul.mubr.bf16.gmra.mrb[0].mxu0 %v1581
        %v1730 = vpop.f32.mrb[0].mxu0
        %v1731 = vadd.f32 0.0, %v1730
        %v1732 = vpop.f32.mrb[0].mxu0
        %v1733 = vpop.f32.mrb[0].mxu0
        %v1734 = vadd.f32 0.0, %v1733
        %v1735 = vpop.f32.mrb[0].mxu0
        %1736 = vmatprep.mubr.bf16.mxu0 0
        %1737 = vmatmul.mubr.bf16.gmra.mrb[0].mxu0 %v1584
        %v1738 = vpop.f32.mrb[0].mxu0
        %v1739 = vadd.f32 0.0, %v1738
        %v1740 = vpop.f32.mrb[0].mxu0
        %v1741 = vpop.f32.mrb[0].mxu0
        %v1742 = vadd.f32 0.0, %v1741
        %v1743 = vpop.f32.mrb[0].mxu0
        %1744 = vmatprep.mubr.bf16.mxu0 0
        %1745 = vmatmul.mubr.bf16.gmra.mrb[0].mxu0 %v1587
        %v1746 = vpop.f32.mrb[0].mxu0
        %v1747 = vadd.f32 0.0, %v1746
        %v1748 = vpop.f32.mrb[0].mxu0
        %v1749 = vpop.f32.mrb[0].mxu0
        %v1750 = vadd.f32 0.0, %v1749
        %v1751 = vpop.f32.mrb[0].mxu0
        %1752 = vdwg.mxu0
        %v1753 = vadd.f32 %v1234, %v1627
        %v1754 = vadd.f32 %v1237, %v1630
        %v1755 = vadd.f32 %v1242, %v1635
        %v1756 = vadd.f32 %v1245, %v1638
        %v1757 = vadd.f32 %v1250, %v1643
        %v1758 = vadd.f32 %v1253, %v1646
        %v1759 = vadd.f32 %v1258, %v1651
        %v1760 = vadd.f32 %v1261, %v1654
        %v1761 = vadd.f32 %v1266, %v1659
        %v1762 = vadd.f32 %v1269, %v1662
        %v1763 = vadd.f32 %v1274, %v1667
        %v1764 = vadd.f32 %v1277, %v1670
        %v1765 = vadd.f32 %v1282, %v1675
        %v1766 = vadd.f32 %v1285, %v1678
        %v1767 = vadd.f32 %v1290, %v1683
        %v1768 = vadd.f32 %v1293, %v1686
        %v1769 = vadd.f32 %v1298, %v1691
        %v1770 = vadd.f32 %v1301, %v1694
        %v1771 = vadd.f32 %v1306, %v1699
        %v1772 = vadd.f32 %v1309, %v1702
        %v1773 = vadd.f32 %v1314, %v1707
        %v1774 = vadd.f32 %v1317, %v1710
        %v1775 = vadd.f32 %v1322, %v1715
        %v1776 = vadd.f32 %v1325, %v1718
        %v1777 = vadd.f32 %v1330, %v1723
        %v1778 = vadd.f32 %v1333, %v1726
        %v1779 = vadd.f32 %v1338, %v1731
        %v1780 = vadd.f32 %v1341, %v1734
        %v1781 = vadd.f32 %v1346, %v1739
        %v1782 = vadd.f32 %v1349, %v1742
        %v1783 = vadd.f32 %v1354, %v1747
        %v1784 = vadd.f32 %v1357, %v1750
        %s1785 = scalar_lea.vmem %s1, 6
        %v1786 = vld [vmem:[%s1785] sm:$0x3]
        %v1789 = vunpack.c.l.b16 %v410
        %v1790 = vunpack.c.l.b16 %v411
        %v1791 = vpack.c.b16 %v1790, %v1789
        %v1793 = vsel %vm854, %v1791, 0
        %v1796 = vsel %vm903, %v1786, 0
        %1798 = vmatprep.subr.bf16.mxu0 0
        %1799 = vmatpush1.bf16.msra.mxu0 %v1796
        %1800 = vmatprep.subr.bf16.mxu0 0
        %1801 = vmatpush1.bf16.msra.mxu0 0
        %1802 = vmatprep.subr.bf16.mxu0 0
        %1803 = vmatpush1.bf16.msra.mxu0 0
        %1804 = vmatprep.subr.bf16.mxu0 0
        %1805 = vmatpush1.bf16.msra.mxu0 0
        %1806 = vmatprep.subr.bf16.mxu0 0
        %1807 = vmatpush1.bf16.msra.mxu0 0
        %1808 = vmatprep.subr.bf16.mxu0 0
        %1809 = vmatpush1.bf16.msra.mxu0 0
        %1810 = vmatprep.subr.bf16.mxu0 0
        %1811 = vmatpush1.bf16.msra.mxu0 0
        %1812 = vmatprep.subr.bf16.mxu0 0
        %1813 = vmatpush1.bf16.msra.mxu0 0
        %1814 = vmatprep.subr.bf16.mxu0 0
        %1815 = vmatpush1.bf16.msra.mxu0 0
        %1816 = vmatprep.subr.bf16.mxu0 0
        %1817 = vmatpush1.bf16.msra.mxu0 0
        %1818 = vmatprep.subr.bf16.mxu0 0
        %1819 = vmatpush1.bf16.msra.mxu0 0
        %1820 = vmatprep.subr.bf16.mxu0 0
        %1821 = vmatpush1.bf16.msra.mxu0 0
        %1822 = vmatprep.subr.bf16.mxu0 0
        %1823 = vmatpush1.bf16.msra.mxu0 0
        %1824 = vmatprep.subr.bf16.mxu0 0
        %1825 = vmatpush1.bf16.msra.mxu0 0
        %1826 = vmatprep.subr.bf16.mxu0 0
        %1827 = vmatpush1.bf16.msra.mxu0 0
        %1828 = vmatprep.subr.bf16.mxu0 0
        %1829 = vmatpush1.bf16.msra.mxu0 0
        %1830 = vmatprep.mubr.bf16.mxu0 0
        %1831 = vmatmul.mubr.bf16.gmra.mrb[0].mxu0 %v1152
        %v1832 = vpop.f32.mrb[0].mxu0
        %v1833 = vadd.f32 0.0, %v1832
        %v1834 = vpop.f32.mrb[0].mxu0
        %v1835 = vpop.f32.mrb[0].mxu0
        %v1836 = vadd.f32 0.0, %v1835
        %v1837 = vpop.f32.mrb[0].mxu0
        %1838 = vmatprep.mubr.bf16.mxu0 0
        %1839 = vmatmul.mubr.bf16.gmra.mrb[0].mxu0 %v1155
        %v1840 = vpop.f32.mrb[0].mxu0
        %v1841 = vadd.f32 0.0, %v1840
        %v1842 = vpop.f32.mrb[0].mxu0
        %v1843 = vpop.f32.mrb[0].mxu0
        %v1844 = vadd.f32 0.0, %v1843
        %v1845 = vpop.f32.mrb[0].mxu0
        %1846 = vmatprep.mubr.bf16.mxu0 0
        %1847 = vmatmul.mubr.bf16.gmra.mrb[0].mxu0 %v1158
        %v1848 = vpop.f32.mrb[0].mxu0
        %v1849 = vadd.f32 0.0, %v1848
        %v1850 = vpop.f32.mrb[0].mxu0
        %v1851 = vpop.f32.mrb[0].mxu0
        %v1852 = vadd.f32 0.0, %v1851
        %v1853 = vpop.f32.mrb[0].mxu0
        %1854 = vmatprep.mubr.bf16.mxu0 0
        %1855 = vmatmul.mubr.bf16.gmra.mrb[0].mxu0 %v1161
        %v1856 = vpop.f32.mrb[0].mxu0
        %v1857 = vadd.f32 0.0, %v1856
        %v1858 = vpop.f32.mrb[0].mxu0
        %v1859 = vpop.f32.mrb[0].mxu0
        %v1860 = vadd.f32 0.0, %v1859
        %v1861 = vpop.f32.mrb[0].mxu0
        %1862 = vmatprep.mubr.bf16.mxu0 0
        %1863 = vmatmul.mubr.bf16.gmra.mrb[0].mxu0 %v1164
        %v1864 = vpop.f32.mrb[0].mxu0
        %v1865 = vadd.f32 0.0, %v1864
        %v1866 = vpop.f32.mrb[0].mxu0
        %v1867 = vpop.f32.mrb[0].mxu0
        %v1868 = vadd.f32 0.0, %v1867
        %v1869 = vpop.f32.mrb[0].mxu0
        %1870 = vmatprep.mubr.bf16.mxu0 0
        %1871 = vmatmul.mubr.bf16.gmra.mrb[0].mxu0 %v1167
        %v1872 = vpop.f32.mrb[0].mxu0
        %v1873 = vadd.f32 0.0, %v1872
        %v1874 = vpop.f32.mrb[0].mxu0
        %v1875 = vpop.f32.mrb[0].mxu0
        %v1876 = vadd.f32 0.0, %v1875
        %v1877 = vpop.f32.mrb[0].mxu0
        %1878 = vmatprep.mubr.bf16.mxu0 0
        %1879 = vmatmul.mubr.bf16.gmra.mrb[0].mxu0 %v1170
        %v1880 = vpop.f32.mrb[0].mxu0
        %v1881 = vadd.f32 0.0, %v1880
        %v1882 = vpop.f32.mrb[0].mxu0
        %v1883 = vpop.f32.mrb[0].mxu0
        %v1884 = vadd.f32 0.0, %v1883
        %v1885 = vpop.f32.mrb[0].mxu0
        %1886 = vmatprep.mubr.bf16.mxu0 0
        %1887 = vmatmul.mubr.bf16.gmra.mrb[0].mxu0 %v1173
        %v1888 = vpop.f32.mrb[0].mxu0
        %v1889 = vadd.f32 0.0, %v1888
        %v1890 = vpop.f32.mrb[0].mxu0
        %v1891 = vpop.f32.mrb[0].mxu0
        %v1892 = vadd.f32 0.0, %v1891
        %v1893 = vpop.f32.mrb[0].mxu0
        %1894 = vmatprep.mubr.bf16.mxu0 0
        %1895 = vmatmul.mubr.bf16.gmra.mrb[0].mxu0 %v1176
        %v1896 = vpop.f32.mrb[0].mxu0
        %v1897 = vadd.f32 0.0, %v1896
        %v1898 = vpop.f32.mrb[0].mxu0
        %v1899 = vpop.f32.mrb[0].mxu0
        %v1900 = vadd.f32 0.0, %v1899
        %v1901 = vpop.f32.mrb[0].mxu0
        %1902 = vmatprep.mubr.bf16.mxu0 0
        %1903 = vmatmul.mubr.bf16.gmra.mrb[0].mxu0 %v1179
        %v1904 = vpop.f32.mrb[0].mxu0
        %v1905 = vadd.f32 0.0, %v1904
        %v1906 = vpop.f32.mrb[0].mxu0
        %v1907 = vpop.f32.mrb[0].mxu0
        %v1908 = vadd.f32 0.0, %v1907
        %v1909 = vpop.f32.mrb[0].mxu0
        %1910 = vmatprep.mubr.bf16.mxu0 0
        %1911 = vmatmul.mubr.bf16.gmra.mrb[0].mxu0 %v1182
        %v1912 = vpop.f32.mrb[0].mxu0
        %v1913 = vadd.f32 0.0, %v1912
        %v1914 = vpop.f32.mrb[0].mxu0
        %v1915 = vpop.f32.mrb[0].mxu0
        %v1916 = vadd.f32 0.0, %v1915
        %v1917 = vpop.f32.mrb[0].mxu0
        %1918 = vmatprep.mubr.bf16.mxu0 0
        %1919 = vmatmul.mubr.bf16.gmra.mrb[0].mxu0 %v1185
        %v1920 = vpop.f32.mrb[0].mxu0
        %v1921 = vadd.f32 0.0, %v1920
        %v1922 = vpop.f32.mrb[0].mxu0
        %v1923 = vpop.f32.mrb[0].mxu0
        %v1924 = vadd.f32 0.0, %v1923
        %v1925 = vpop.f32.mrb[0].mxu0
        %1926 = vmatprep.mubr.bf16.mxu0 0
        %1927 = vmatmul.mubr.bf16.gmra.mrb[0].mxu0 %v1188
        %v1928 = vpop.f32.mrb[0].mxu0
        %v1929 = vadd.f32 0.0, %v1928
        %v1930 = vpop.f32.mrb[0].mxu0
        %v1931 = vpop.f32.mrb[0].mxu0
        %v1932 = vadd.f32 0.0, %v1931
        %v1933 = vpop.f32.mrb[0].mxu0
        %1934 = vmatprep.mubr.bf16.mxu0 0
        %1935 = vmatmul.mubr.bf16.gmra.mrb[0].mxu0 %v1191
        %v1936 = vpop.f32.mrb[0].mxu0
        %v1937 = vadd.f32 0.0, %v1936
        %v1938 = vpop.f32.mrb[0].mxu0
        %v1939 = vpop.f32.mrb[0].mxu0
        %v1940 = vadd.f32 0.0, %v1939
        %v1941 = vpop.f32.mrb[0].mxu0
        %1942 = vmatprep.mubr.bf16.mxu0 0
        %1943 = vmatmul.mubr.bf16.gmra.mrb[0].mxu0 %v1194
        %v1944 = vpop.f32.mrb[0].mxu0
        %v1945 = vadd.f32 0.0, %v1944
        %v1946 = vpop.f32.mrb[0].mxu0
        %v1947 = vpop.f32.mrb[0].mxu0
        %v1948 = vadd.f32 0.0, %v1947
        %v1949 = vpop.f32.mrb[0].mxu0
        %1950 = vmatprep.mubr.bf16.mxu0 0
        %1951 = vmatmul.mubr.bf16.gmra.mrb[0].mxu0 %v1793
        %v1952 = vpop.f32.mrb[0].mxu0
        %v1953 = vadd.f32 0.0, %v1952
        %v1954 = vpop.f32.mrb[0].mxu0
        %v1955 = vpop.f32.mrb[0].mxu0
        %v1956 = vadd.f32 0.0, %v1955
        %v1957 = vpop.f32.mrb[0].mxu0
        %1958 = vdwg.mxu0
        %v1959 = vadd.f32 %v1753, %v1833
        %v1960 = vadd.f32 %v1754, %v1836
        %v1961 = vadd.f32 %v1755, %v1841
        %v1962 = vadd.f32 %v1756, %v1844
        %v1963 = vadd.f32 %v1757, %v1849
        %v1964 = vadd.f32 %v1758, %v1852
        %v1965 = vadd.f32 %v1759, %v1857
        %v1966 = vadd.f32 %v1760, %v1860
        %v1967 = vadd.f32 %v1761, %v1865
        %v1968 = vadd.f32 %v1762, %v1868
        %v1969 = vadd.f32 %v1763, %v1873
        %v1970 = vadd.f32 %v1764, %v1876
        %v1971 = vadd.f32 %v1765, %v1881
        %v1972 = vadd.f32 %v1766, %v1884
        %v1973 = vadd.f32 %v1767, %v1889
        %v1974 = vadd.f32 %v1768, %v1892
        %v1975 = vadd.f32 %v1769, %v1897
        %v1976 = vadd.f32 %v1770, %v1900
        %v1977 = vadd.f32 %v1771, %v1905
        %v1978 = vadd.f32 %v1772, %v1908
        %v1979 = vadd.f32 %v1773, %v1913
        %v1980 = vadd.f32 %v1774, %v1916
        %v1981 = vadd.f32 %v1775, %v1921
        %v1982 = vadd.f32 %v1776, %v1924
        %v1983 = vadd.f32 %v1777, %v1929
        %v1984 = vadd.f32 %v1778, %v1932
        %v1985 = vadd.f32 %v1779, %v1937
        %v1986 = vadd.f32 %v1780, %v1940
        %v1987 = vadd.f32 %v1781, %v1945
        %v1988 = vadd.f32 %v1782, %v1948
        %v1989 = vadd.f32 %v1783, %v1953
        %v1990 = vadd.f32 %v1784, %v1956
        %v1992 = vshrl.u32 %v410, 16
        %v1994 = vrot.slane %v1992, 4
        %v1995 = vshll.u32 %v410, 16
        %v1997 = vrot.slane %v1995, 5
        %v1998 = vor.u32 %v1994, %v1997
        %v1999 = vrot.slane %v1998, 4
        %v2001 = vshll.u32 %v411, 16
        %v2003 = vrot.slane %v2001, 5
        %v2004 = vsel %vm419, %v1999, %v2003
        %v2005 = vshrl.u32 %v411, 16
        %v2007 = vrot.slane %v2005, 4
        %v2008 = vor.u32 %v2007, %v2003
        %v2009 = vrot.slane %v2008, 4
        %v2011 = vshll.u32 %v412, 16
        %v2013 = vrot.slane %v2011, 5
        %v2014 = vsel %vm419, %v2009, %v2013
        %s2015 = scalar_lea.vmem %s1, 8
        %v2016 = vld [vmem:[%s2015] sm:$0x3]
        %v2017 = vunpack.c.l.b16 %v2004
        %v2018 = vunpack.c.l.b16 %v2014
        %v2019 = vpack.c.b16 %v2018, %v2017
        %v2021 = vsel %vm854, %v2019, 0
        %v2024 = vsel %vm903, %v2016, 0
        %2026 = vmatprep.subr.bf16.mxu0 0
        %2027 = vmatpush1.bf16.msra.mxu0 %v2024
        %2028 = vmatprep.subr.bf16.mxu0 0
        %2029 = vmatpush1.bf16.msra.mxu0 0
        %2030 = vmatprep.subr.bf16.mxu0 0
        %2031 = vmatpush1.bf16.msra.mxu0 0
        %2032 = vmatprep.subr.bf16.mxu0 0
        %2033 = vmatpush1.bf16.msra.mxu0 0
        %2034 = vmatprep.subr.bf16.mxu0 0
        %2035 = vmatpush1.bf16.msra.mxu0 0
        %2036 = vmatprep.subr.bf16.mxu0 0
        %2037 = vmatpush1.bf16.msra.mxu0 0
        %2038 = vmatprep.subr.bf16.mxu0 0
        %2039 = vmatpush1.bf16.msra.mxu0 0
        %2040 = vmatprep.subr.bf16.mxu0 0
        %2041 = vmatpush1.bf16.msra.mxu0 0
        %2042 = vmatprep.subr.bf16.mxu0 0
        %2043 = vmatpush1.bf16.msra.mxu0 0
        %2044 = vmatprep.subr.bf16.mxu0 0
        %2045 = vmatpush1.bf16.msra.mxu0 0
        %2046 = vmatprep.subr.bf16.mxu0 0
        %2047 = vmatpush1.bf16.msra.mxu0 0
        %2048 = vmatprep.subr.bf16.mxu0 0
        %2049 = vmatpush1.bf16.msra.mxu0 0
        %2050 = vmatprep.subr.bf16.mxu0 0
        %2051 = vmatpush1.bf16.msra.mxu0 0
        %2052 = vmatprep.subr.bf16.mxu0 0
        %2053 = vmatpush1.bf16.msra.mxu0 0
        %2054 = vmatprep.subr.bf16.mxu0 0
        %2055 = vmatpush1.bf16.msra.mxu0 0
        %2056 = vmatprep.subr.bf16.mxu0 0
        %2057 = vmatpush1.bf16.msra.mxu0 0
        %2058 = vmatprep.mubr.bf16.mxu0 0
        %2059 = vmatmul.mubr.bf16.gmra.mrb[0].mxu0 %v859
        %v2060 = vpop.f32.mrb[0].mxu0
        %v2061 = vadd.f32 0.0, %v2060
        %v2062 = vpop.f32.mrb[0].mxu0
        %v2063 = vpop.f32.mrb[0].mxu0
        %v2064 = vadd.f32 0.0, %v2063
        %v2065 = vpop.f32.mrb[0].mxu0
        %2066 = vmatprep.mubr.bf16.mxu0 0
        %2067 = vmatmul.mubr.bf16.gmra.mrb[0].mxu0 %v862
        %v2068 = vpop.f32.mrb[0].mxu0
        %v2069 = vadd.f32 0.0, %v2068
        %v2070 = vpop.f32.mrb[0].mxu0
        %v2071 = vpop.f32.mrb[0].mxu0
        %v2072 = vadd.f32 0.0, %v2071
        %v2073 = vpop.f32.mrb[0].mxu0
        %2074 = vmatprep.mubr.bf16.mxu0 0
        %2075 = vmatmul.mubr.bf16.gmra.mrb[0].mxu0 %v865
        %v2076 = vpop.f32.mrb[0].mxu0
        %v2077 = vadd.f32 0.0, %v2076
        %v2078 = vpop.f32.mrb[0].mxu0
        %v2079 = vpop.f32.mrb[0].mxu0
        %v2080 = vadd.f32 0.0, %v2079
        %v2081 = vpop.f32.mrb[0].mxu0
        %2082 = vmatprep.mubr.bf16.mxu0 0
        %2083 = vmatmul.mubr.bf16.gmra.mrb[0].mxu0 %v868
        %v2084 = vpop.f32.mrb[0].mxu0
        %v2085 = vadd.f32 0.0, %v2084
        %v2086 = vpop.f32.mrb[0].mxu0
        %v2087 = vpop.f32.mrb[0].mxu0
        %v2088 = vadd.f32 0.0, %v2087
        %v2089 = vpop.f32.mrb[0].mxu0
        %2090 = vmatprep.mubr.bf16.mxu0 0
        %2091 = vmatmul.mubr.bf16.gmra.mrb[0].mxu0 %v871
        %v2092 = vpop.f32.mrb[0].mxu0
        %v2093 = vadd.f32 0.0, %v2092
        %v2094 = vpop.f32.mrb[0].mxu0
        %v2095 = vpop.f32.mrb[0].mxu0
        %v2096 = vadd.f32 0.0, %v2095
        %v2097 = vpop.f32.mrb[0].mxu0
        %2098 = vmatprep.mubr.bf16.mxu0 0
        %2099 = vmatmul.mubr.bf16.gmra.mrb[0].mxu0 %v874
        %v2100 = vpop.f32.mrb[0].mxu0
        %v2101 = vadd.f32 0.0, %v2100
        %v2102 = vpop.f32.mrb[0].mxu0
        %v2103 = vpop.f32.mrb[0].mxu0
        %v2104 = vadd.f32 0.0, %v2103
        %v2105 = vpop.f32.mrb[0].mxu0
        %2106 = vmatprep.mubr.bf16.mxu0 0
        %2107 = vmatmul.mubr.bf16.gmra.mrb[0].mxu0 %v877
        %v2108 = vpop.f32.mrb[0].mxu0
        %v2109 = vadd.f32 0.0, %v2108
        %v2110 = vpop.f32.mrb[0].mxu0
        %v2111 = vpop.f32.mrb[0].mxu0
        %v2112 = vadd.f32 0.0, %v2111
        %v2113 = vpop.f32.mrb[0].mxu0
        %2114 = vmatprep.mubr.bf16.mxu0 0
        %2115 = vmatmul.mubr.bf16.gmra.mrb[0].mxu0 %v880
        %v2116 = vpop.f32.mrb[0].mxu0
        %v2117 = vadd.f32 0.0, %v2116
        %v2118 = vpop.f32.mrb[0].mxu0
        %v2119 = vpop.f32.mrb[0].mxu0
        %v2120 = vadd.f32 0.0, %v2119
        %v2121 = vpop.f32.mrb[0].mxu0
        %2122 = vmatprep.mubr.bf16.mxu0 0
        %2123 = vmatmul.mubr.bf16.gmra.mrb[0].mxu0 %v883
        %v2124 = vpop.f32.mrb[0].mxu0
        %v2125 = vadd.f32 0.0, %v2124
        %v2126 = vpop.f32.mrb[0].mxu0
        %v2127 = vpop.f32.mrb[0].mxu0
        %v2128 = vadd.f32 0.0, %v2127
        %v2129 = vpop.f32.mrb[0].mxu0
        %2130 = vmatprep.mubr.bf16.mxu0 0
        %2131 = vmatmul.mubr.bf16.gmra.mrb[0].mxu0 %v886
        %v2132 = vpop.f32.mrb[0].mxu0
        %v2133 = vadd.f32 0.0, %v2132
        %v2134 = vpop.f32.mrb[0].mxu0
        %v2135 = vpop.f32.mrb[0].mxu0
        %v2136 = vadd.f32 0.0, %v2135
        %v2137 = vpop.f32.mrb[0].mxu0
        %2138 = vmatprep.mubr.bf16.mxu0 0
        %2139 = vmatmul.mubr.bf16.gmra.mrb[0].mxu0 %v889
        %v2140 = vpop.f32.mrb[0].mxu0
        %v2141 = vadd.f32 0.0, %v2140
        %v2142 = vpop.f32.mrb[0].mxu0
        %v2143 = vpop.f32.mrb[0].mxu0
        %v2144 = vadd.f32 0.0, %v2143
        %v2145 = vpop.f32.mrb[0].mxu0
        %2146 = vmatprep.mubr.bf16.mxu0 0
        %2147 = vmatmul.mubr.bf16.gmra.mrb[0].mxu0 %v892
        %v2148 = vpop.f32.mrb[0].mxu0
        %v2149 = vadd.f32 0.0, %v2148
        %v2150 = vpop.f32.mrb[0].mxu0
        %v2151 = vpop.f32.mrb[0].mxu0
        %v2152 = vadd.f32 0.0, %v2151
        %v2153 = vpop.f32.mrb[0].mxu0
        %2154 = vmatprep.mubr.bf16.mxu0 0
        %2155 = vmatmul.mubr.bf16.gmra.mrb[0].mxu0 %v895
        %v2156 = vpop.f32.mrb[0].mxu0
        %v2157 = vadd.f32 0.0, %v2156
        %v2158 = vpop.f32.mrb[0].mxu0
        %v2159 = vpop.f32.mrb[0].mxu0
        %v2160 = vadd.f32 0.0, %v2159
        %v2161 = vpop.f32.mrb[0].mxu0
        %2162 = vmatprep.mubr.bf16.mxu0 0
        %2163 = vmatmul.mubr.bf16.gmra.mrb[0].mxu0 %v898
        %v2164 = vpop.f32.mrb[0].mxu0
        %v2165 = vadd.f32 0.0, %v2164
        %v2166 = vpop.f32.mrb[0].mxu0
        %v2167 = vpop.f32.mrb[0].mxu0
        %v2168 = vadd.f32 0.0, %v2167
        %v2169 = vpop.f32.mrb[0].mxu0
        %2170 = vmatprep.mubr.bf16.mxu0 0
        %2171 = vmatmul.mubr.bf16.gmra.mrb[0].mxu0 %v901
        %v2172 = vpop.f32.mrb[0].mxu0
        %v2173 = vadd.f32 0.0, %v2172
        %v2174 = vpop.f32.mrb[0].mxu0
        %v2175 = vpop.f32.mrb[0].mxu0
        %v2176 = vadd.f32 0.0, %v2175
        %v2177 = vpop.f32.mrb[0].mxu0
        %2178 = vmatprep.mubr.bf16.mxu0 0
        %2179 = vmatmul.mubr.bf16.gmra.mrb[0].mxu0 %v2021
        %v2180 = vpop.f32.mrb[0].mxu0
        %v2181 = vadd.f32 0.0, %v2180
        %v2182 = vpop.f32.mrb[0].mxu0
        %v2183 = vpop.f32.mrb[0].mxu0
        %v2184 = vadd.f32 0.0, %v2183
        %v2185 = vpop.f32.mrb[0].mxu0
        %2186 = vdwg.mxu0
        %v2187 = vadd.f32 %v1959, %v2061
        %v2188 = vadd.f32 %v1960, %v2064
        %v2189 = vadd.f32 %v1961, %v2069
        %v2190 = vadd.f32 %v1962, %v2072
        %v2191 = vadd.f32 %v1963, %v2077
        %v2192 = vadd.f32 %v1964, %v2080
        %v2193 = vadd.f32 %v1965, %v2085
        %v2194 = vadd.f32 %v1966, %v2088
        %v2195 = vadd.f32 %v1967, %v2093
        %v2196 = vadd.f32 %v1968, %v2096
        %v2197 = vadd.f32 %v1969, %v2101
        %v2198 = vadd.f32 %v1970, %v2104
        %v2199 = vadd.f32 %v1971, %v2109
        %v2200 = vadd.f32 %v1972, %v2112
        %v2201 = vadd.f32 %v1973, %v2117
        %v2202 = vadd.f32 %v1974, %v2120
        %v2203 = vadd.f32 %v1975, %v2125
        %v2204 = vadd.f32 %v1976, %v2128
        %v2205 = vadd.f32 %v1977, %v2133
        %v2206 = vadd.f32 %v1978, %v2136
        %v2207 = vadd.f32 %v1979, %v2141
        %v2208 = vadd.f32 %v1980, %v2144
        %v2209 = vadd.f32 %v1981, %v2149
        %v2210 = vadd.f32 %v1982, %v2152
        %v2211 = vadd.f32 %v1983, %v2157
        %v2212 = vadd.f32 %v1984, %v2160
        %v2213 = vadd.f32 %v1985, %v2165
        %v2214 = vadd.f32 %v1986, %v2168
        %v2215 = vadd.f32 %v1987, %v2173
        %v2216 = vadd.f32 %v1988, %v2176
        %v2217 = vadd.f32 %v1989, %v2181
        %v2218 = vadd.f32 %v1990, %v2184
        %v2220 = vrot.slane %v410, 5
        %v2221 = vrot.slane %v2220, 4
        %v2222 = vrot.slane %v411, 5
        %v2223 = vsel %vm1378, %v2221, %v2222
        %v2224 = vrot.slane %v2222, 4
        %v2225 = vrot.slane %v412, 5
        %v2226 = vsel %vm1378, %v2224, %v2225
        %s2227 = scalar_lea.vmem %s1, 10
        %v2228 = vld [vmem:[%s2227] sm:$0x3]
        %v2229 = vunpack.c.l.b16 %v2223
        %v2230 = vunpack.c.l.b16 %v2226
        %v2231 = vpack.c.b16 %v2230, %v2229
        %v2233 = vsel %vm854, %v2231, 0
        %v2236 = vsel %vm903, %v2228, 0
        %2238 = vmatprep.subr.bf16.mxu0 0
        %2239 = vmatpush1.bf16.msra.mxu0 %v2236
        %2240 = vmatprep.subr.bf16.mxu0 0
        %2241 = vmatpush1.bf16.msra.mxu0 0
        %2242 = vmatprep.subr.bf16.mxu0 0
        %2243 = vmatpush1.bf16.msra.mxu0 0
        %2244 = vmatprep.subr.bf16.mxu0 0
        %2245 = vmatpush1.bf16.msra.mxu0 0
        %2246 = vmatprep.subr.bf16.mxu0 0
        %2247 = vmatpush1.bf16.msra.mxu0 0
        %2248 = vmatprep.subr.bf16.mxu0 0
        %2249 = vmatpush1.bf16.msra.mxu0 0
        %2250 = vmatprep.subr.bf16.mxu0 0
        %2251 = vmatpush1.bf16.msra.mxu0 0
        %2252 = vmatprep.subr.bf16.mxu0 0
        %2253 = vmatpush1.bf16.msra.mxu0 0
        %2254 = vmatprep.subr.bf16.mxu0 0
        %2255 = vmatpush1.bf16.msra.mxu0 0
        %2256 = vmatprep.subr.bf16.mxu0 0
        %2257 = vmatpush1.bf16.msra.mxu0 0
        %2258 = vmatprep.subr.bf16.mxu0 0
        %2259 = vmatpush1.bf16.msra.mxu0 0
        %2260 = vmatprep.subr.bf16.mxu0 0
        %2261 = vmatpush1.bf16.msra.mxu0 0
        %2262 = vmatprep.subr.bf16.mxu0 0
        %2263 = vmatpush1.bf16.msra.mxu0 0
        %2264 = vmatprep.subr.bf16.mxu0 0
        %2265 = vmatpush1.bf16.msra.mxu0 0
        %2266 = vmatprep.subr.bf16.mxu0 0
        %2267 = vmatpush1.bf16.msra.mxu0 0
        %2268 = vmatprep.subr.bf16.mxu0 0
        %2269 = vmatpush1.bf16.msra.mxu0 0
        %2270 = vmatprep.mubr.bf16.mxu0 0
        %2271 = vmatmul.mubr.bf16.gmra.mrb[0].mxu0 %v1545
        %v2272 = vpop.f32.mrb[0].mxu0
        %v2273 = vadd.f32 0.0, %v2272
        %v2274 = vpop.f32.mrb[0].mxu0
        %v2275 = vpop.f32.mrb[0].mxu0
        %v2276 = vadd.f32 0.0, %v2275
        %v2277 = vpop.f32.mrb[0].mxu0
        %2278 = vmatprep.mubr.bf16.mxu0 0
        %2279 = vmatmul.mubr.bf16.gmra.mrb[0].mxu0 %v1548
        %v2280 = vpop.f32.mrb[0].mxu0
        %v2281 = vadd.f32 0.0, %v2280
        %v2282 = vpop.f32.mrb[0].mxu0
        %v2283 = vpop.f32.mrb[0].mxu0
        %v2284 = vadd.f32 0.0, %v2283
        %v2285 = vpop.f32.mrb[0].mxu0
        %2286 = vmatprep.mubr.bf16.mxu0 0
        %2287 = vmatmul.mubr.bf16.gmra.mrb[0].mxu0 %v1551
        %v2288 = vpop.f32.mrb[0].mxu0
        %v2289 = vadd.f32 0.0, %v2288
        %v2290 = vpop.f32.mrb[0].mxu0
        %v2291 = vpop.f32.mrb[0].mxu0
        %v2292 = vadd.f32 0.0, %v2291
        %v2293 = vpop.f32.mrb[0].mxu0
        %2294 = vmatprep.mubr.bf16.mxu0 0
        %2295 = vmatmul.mubr.bf16.gmra.mrb[0].mxu0 %v1554
        %v2296 = vpop.f32.mrb[0].mxu0
        %v2297 = vadd.f32 0.0, %v2296
        %v2298 = vpop.f32.mrb[0].mxu0
        %v2299 = vpop.f32.mrb[0].mxu0
        %v2300 = vadd.f32 0.0, %v2299
        %v2301 = vpop.f32.mrb[0].mxu0
        %2302 = vmatprep.mubr.bf16.mxu0 0
        %2303 = vmatmul.mubr.bf16.gmra.mrb[0].mxu0 %v1557
        %v2304 = vpop.f32.mrb[0].mxu0
        %v2305 = vadd.f32 0.0, %v2304
        %v2306 = vpop.f32.mrb[0].mxu0
        %v2307 = vpop.f32.mrb[0].mxu0
        %v2308 = vadd.f32 0.0, %v2307
        %v2309 = vpop.f32.mrb[0].mxu0
        %2310 = vmatprep.mubr.bf16.mxu0 0
        %2311 = vmatmul.mubr.bf16.gmra.mrb[0].mxu0 %v1560
        %v2312 = vpop.f32.mrb[0].mxu0
        %v2313 = vadd.f32 0.0, %v2312
        %v2314 = vpop.f32.mrb[0].mxu0
        %v2315 = vpop.f32.mrb[0].mxu0
        %v2316 = vadd.f32 0.0, %v2315
        %v2317 = vpop.f32.mrb[0].mxu0
        %2318 = vmatprep.mubr.bf16.mxu0 0
        %2319 = vmatmul.mubr.bf16.gmra.mrb[0].mxu0 %v1563
        %v2320 = vpop.f32.mrb[0].mxu0
        %v2321 = vadd.f32 0.0, %v2320
        %v2322 = vpop.f32.mrb[0].mxu0
        %v2323 = vpop.f32.mrb[0].mxu0
        %v2324 = vadd.f32 0.0, %v2323
        %v2325 = vpop.f32.mrb[0].mxu0
        %2326 = vmatprep.mubr.bf16.mxu0 0
        %2327 = vmatmul.mubr.bf16.gmra.mrb[0].mxu0 %v1566
        %v2328 = vpop.f32.mrb[0].mxu0
        %v2329 = vadd.f32 0.0, %v2328
        %v2330 = vpop.f32.mrb[0].mxu0
        %v2331 = vpop.f32.mrb[0].mxu0
        %v2332 = vadd.f32 0.0, %v2331
        %v2333 = vpop.f32.mrb[0].mxu0
        %2334 = vmatprep.mubr.bf16.mxu0 0
        %2335 = vmatmul.mubr.bf16.gmra.mrb[0].mxu0 %v1569
        %v2336 = vpop.f32.mrb[0].mxu0
        %v2337 = vadd.f32 0.0, %v2336
        %v2338 = vpop.f32.mrb[0].mxu0
        %v2339 = vpop.f32.mrb[0].mxu0
        %v2340 = vadd.f32 0.0, %v2339
        %v2341 = vpop.f32.mrb[0].mxu0
        %2342 = vmatprep.mubr.bf16.mxu0 0
        %2343 = vmatmul.mubr.bf16.gmra.mrb[0].mxu0 %v1572
        %v2344 = vpop.f32.mrb[0].mxu0
        %v2345 = vadd.f32 0.0, %v2344
        %v2346 = vpop.f32.mrb[0].mxu0
        %v2347 = vpop.f32.mrb[0].mxu0
        %v2348 = vadd.f32 0.0, %v2347
        %v2349 = vpop.f32.mrb[0].mxu0
        %2350 = vmatprep.mubr.bf16.mxu0 0
        %2351 = vmatmul.mubr.bf16.gmra.mrb[0].mxu0 %v1575
        %v2352 = vpop.f32.mrb[0].mxu0
        %v2353 = vadd.f32 0.0, %v2352
        %v2354 = vpop.f32.mrb[0].mxu0
        %v2355 = vpop.f32.mrb[0].mxu0
        %v2356 = vadd.f32 0.0, %v2355
        %v2357 = vpop.f32.mrb[0].mxu0
        %2358 = vmatprep.mubr.bf16.mxu0 0
        %2359 = vmatmul.mubr.bf16.gmra.mrb[0].mxu0 %v1578
        %v2360 = vpop.f32.mrb[0].mxu0
        %v2361 = vadd.f32 0.0, %v2360
        %v2362 = vpop.f32.mrb[0].mxu0
        %v2363 = vpop.f32.mrb[0].mxu0
        %v2364 = vadd.f32 0.0, %v2363
        %v2365 = vpop.f32.mrb[0].mxu0
        %2366 = vmatprep.mubr.bf16.mxu0 0
        %2367 = vmatmul.mubr.bf16.gmra.mrb[0].mxu0 %v1581
        %v2368 = vpop.f32.mrb[0].mxu0
        %v2369 = vadd.f32 0.0, %v2368
        %v2370 = vpop.f32.mrb[0].mxu0
        %v2371 = vpop.f32.mrb[0].mxu0
        %v2372 = vadd.f32 0.0, %v2371
        %v2373 = vpop.f32.mrb[0].mxu0
        %2374 = vmatprep.mubr.bf16.mxu0 0
        %2375 = vmatmul.mubr.bf16.gmra.mrb[0].mxu0 %v1584
        %v2376 = vpop.f32.mrb[0].mxu0
        %v2377 = vadd.f32 0.0, %v2376
        %v2378 = vpop.f32.mrb[0].mxu0
        %v2379 = vpop.f32.mrb[0].mxu0
        %v2380 = vadd.f32 0.0, %v2379
        %v2381 = vpop.f32.mrb[0].mxu0
        %2382 = vmatprep.mubr.bf16.mxu0 0
        %2383 = vmatmul.mubr.bf16.gmra.mrb[0].mxu0 %v1587
        %v2384 = vpop.f32.mrb[0].mxu0
        %v2385 = vadd.f32 0.0, %v2384
        %v2386 = vpop.f32.mrb[0].mxu0
        %v2387 = vpop.f32.mrb[0].mxu0
        %v2388 = vadd.f32 0.0, %v2387
        %v2389 = vpop.f32.mrb[0].mxu0
        %2390 = vmatprep.mubr.bf16.mxu0 0
        %2391 = vmatmul.mubr.bf16.gmra.mrb[0].mxu0 %v2233
        %v2392 = vpop.f32.mrb[0].mxu0
        %v2393 = vadd.f32 0.0, %v2392
        %v2394 = vpop.f32.mrb[0].mxu0
        %v2395 = vpop.f32.mrb[0].mxu0
        %v2396 = vadd.f32 0.0, %v2395
        %v2397 = vpop.f32.mrb[0].mxu0
        %2398 = vdwg.mxu0
        %v2399 = vadd.f32 %v2187, %v2273
        %v2400 = vadd.f32 %v2188, %v2276
        %v2401 = vadd.f32 %v2189, %v2281
        %v2402 = vadd.f32 %v2190, %v2284
        %v2403 = vadd.f32 %v2191, %v2289
        %v2404 = vadd.f32 %v2192, %v2292
        %v2405 = vadd.f32 %v2193, %v2297
        %v2406 = vadd.f32 %v2194, %v2300
        %v2407 = vadd.f32 %v2195, %v2305
        %v2408 = vadd.f32 %v2196, %v2308
        %v2409 = vadd.f32 %v2197, %v2313
        %v2410 = vadd.f32 %v2198, %v2316
        %v2411 = vadd.f32 %v2199, %v2321
        %v2412 = vadd.f32 %v2200, %v2324
        %v2413 = vadd.f32 %v2201, %v2329
        %v2414 = vadd.f32 %v2202, %v2332
        %v2415 = vadd.f32 %v2203, %v2337
        %v2416 = vadd.f32 %v2204, %v2340
        %v2417 = vadd.f32 %v2205, %v2345
        %v2418 = vadd.f32 %v2206, %v2348
        %v2419 = vadd.f32 %v2207, %v2353
        %v2420 = vadd.f32 %v2208, %v2356
        %v2421 = vadd.f32 %v2209, %v2361
        %v2422 = vadd.f32 %v2210, %v2364
        %v2423 = vadd.f32 %v2211, %v2369
        %v2424 = vadd.f32 %v2212, %v2372
        %v2425 = vadd.f32 %v2213, %v2377
        %v2426 = vadd.f32 %v2214, %v2380
        %v2427 = vadd.f32 %v2215, %v2385
        %v2428 = vadd.f32 %v2216, %v2388
        %v2429 = vadd.f32 %v2217, %v2393
        %v2430 = vadd.f32 %v2218, %v2396
        %s2431 = scalar_lea.vmem %s1, 12
        %v2432 = vld [vmem:[%s2431] sm:$0x3]
        %v2435 = vunpack.c.l.b16 %v413
        %v2436 = vunpack.c.l.b16 %v414
        %v2437 = vpack.c.b16 %v2436, %v2435
        %v2439 = vsel %vm854, %v2437, 0
        %v2442 = vsel %vm903, %v2432, 0
        %2444 = vmatprep.subr.bf16.mxu0 0
        %2445 = vmatpush1.bf16.msra.mxu0 %v2442
        %2446 = vmatprep.subr.bf16.mxu0 0
        %2447 = vmatpush1.bf16.msra.mxu0 0
        %2448 = vmatprep.subr.bf16.mxu0 0
        %2449 = vmatpush1.bf16.msra.mxu0 0
        %2450 = vmatprep.subr.bf16.mxu0 0
        %2451 = vmatpush1.bf16.msra.mxu0 0
        %2452 = vmatprep.subr.bf16.mxu0 0
        %2453 = vmatpush1.bf16.msra.mxu0 0
        %2454 = vmatprep.subr.bf16.mxu0 0
        %2455 = vmatpush1.bf16.msra.mxu0 0
        %2456 = vmatprep.subr.bf16.mxu0 0
        %2457 = vmatpush1.bf16.msra.mxu0 0
        %2458 = vmatprep.subr.bf16.mxu0 0
        %2459 = vmatpush1.bf16.msra.mxu0 0
        %2460 = vmatprep.subr.bf16.mxu0 0
        %2461 = vmatpush1.bf16.msra.mxu0 0
        %2462 = vmatprep.subr.bf16.mxu0 0
        %2463 = vmatpush1.bf16.msra.mxu0 0
        %2464 = vmatprep.subr.bf16.mxu0 0
        %2465 = vmatpush1.bf16.msra.mxu0 0
        %2466 = vmatprep.subr.bf16.mxu0 0
        %2467 = vmatpush1.bf16.msra.mxu0 0
        %2468 = vmatprep.subr.bf16.mxu0 0
        %2469 = vmatpush1.bf16.msra.mxu0 0
        %2470 = vmatprep.subr.bf16.mxu0 0
        %2471 = vmatpush1.bf16.msra.mxu0 0
        %2472 = vmatprep.subr.bf16.mxu0 0
        %2473 = vmatpush1.bf16.msra.mxu0 0
        %2474 = vmatprep.subr.bf16.mxu0 0
        %2475 = vmatpush1.bf16.msra.mxu0 0
        %2476 = vmatprep.mubr.bf16.mxu0 0
        %2477 = vmatmul.mubr.bf16.gmra.mrb[0].mxu0 %v1155
        %v2478 = vpop.f32.mrb[0].mxu0
        %v2479 = vadd.f32 0.0, %v2478
        %v2480 = vpop.f32.mrb[0].mxu0
        %v2481 = vpop.f32.mrb[0].mxu0
        %v2482 = vadd.f32 0.0, %v2481
        %v2483 = vpop.f32.mrb[0].mxu0
        %2484 = vmatprep.mubr.bf16.mxu0 0
        %2485 = vmatmul.mubr.bf16.gmra.mrb[0].mxu0 %v1158
        %v2486 = vpop.f32.mrb[0].mxu0
        %v2487 = vadd.f32 0.0, %v2486
        %v2488 = vpop.f32.mrb[0].mxu0
        %v2489 = vpop.f32.mrb[0].mxu0
        %v2490 = vadd.f32 0.0, %v2489
        %v2491 = vpop.f32.mrb[0].mxu0
        %2492 = vmatprep.mubr.bf16.mxu0 0
        %2493 = vmatmul.mubr.bf16.gmra.mrb[0].mxu0 %v1161
        %v2494 = vpop.f32.mrb[0].mxu0
        %v2495 = vadd.f32 0.0, %v2494
        %v2496 = vpop.f32.mrb[0].mxu0
        %v2497 = vpop.f32.mrb[0].mxu0
        %v2498 = vadd.f32 0.0, %v2497
        %v2499 = vpop.f32.mrb[0].mxu0
        %2500 = vmatprep.mubr.bf16.mxu0 0
        %2501 = vmatmul.mubr.bf16.gmra.mrb[0].mxu0 %v1164
        %v2502 = vpop.f32.mrb[0].mxu0
        %v2503 = vadd.f32 0.0, %v2502
        %v2504 = vpop.f32.mrb[0].mxu0
        %v2505 = vpop.f32.mrb[0].mxu0
        %v2506 = vadd.f32 0.0, %v2505
        %v2507 = vpop.f32.mrb[0].mxu0
        %2508 = vmatprep.mubr.bf16.mxu0 0
        %2509 = vmatmul.mubr.bf16.gmra.mrb[0].mxu0 %v1167
        %v2510 = vpop.f32.mrb[0].mxu0
        %v2511 = vadd.f32 0.0, %v2510
        %v2512 = vpop.f32.mrb[0].mxu0
        %v2513 = vpop.f32.mrb[0].mxu0
        %v2514 = vadd.f32 0.0, %v2513
        %v2515 = vpop.f32.mrb[0].mxu0
        %2516 = vmatprep.mubr.bf16.mxu0 0
        %2517 = vmatmul.mubr.bf16.gmra.mrb[0].mxu0 %v1170
        %v2518 = vpop.f32.mrb[0].mxu0
        %v2519 = vadd.f32 0.0, %v2518
        %v2520 = vpop.f32.mrb[0].mxu0
        %v2521 = vpop.f32.mrb[0].mxu0
        %v2522 = vadd.f32 0.0, %v2521
        %v2523 = vpop.f32.mrb[0].mxu0
        %2524 = vmatprep.mubr.bf16.mxu0 0
        %2525 = vmatmul.mubr.bf16.gmra.mrb[0].mxu0 %v1173
        %v2526 = vpop.f32.mrb[0].mxu0
        %v2527 = vadd.f32 0.0, %v2526
        %v2528 = vpop.f32.mrb[0].mxu0
        %v2529 = vpop.f32.mrb[0].mxu0
        %v2530 = vadd.f32 0.0, %v2529
        %v2531 = vpop.f32.mrb[0].mxu0
        %2532 = vmatprep.mubr.bf16.mxu0 0
        %2533 = vmatmul.mubr.bf16.gmra.mrb[0].mxu0 %v1176
        %v2534 = vpop.f32.mrb[0].mxu0
        %v2535 = vadd.f32 0.0, %v2534
        %v2536 = vpop.f32.mrb[0].mxu0
        %v2537 = vpop.f32.mrb[0].mxu0
        %v2538 = vadd.f32 0.0, %v2537
        %v2539 = vpop.f32.mrb[0].mxu0
        %2540 = vmatprep.mubr.bf16.mxu0 0
        %2541 = vmatmul.mubr.bf16.gmra.mrb[0].mxu0 %v1179
        %v2542 = vpop.f32.mrb[0].mxu0
        %v2543 = vadd.f32 0.0, %v2542
        %v2544 = vpop.f32.mrb[0].mxu0
        %v2545 = vpop.f32.mrb[0].mxu0
        %v2546 = vadd.f32 0.0, %v2545
        %v2547 = vpop.f32.mrb[0].mxu0
        %2548 = vmatprep.mubr.bf16.mxu0 0
        %2549 = vmatmul.mubr.bf16.gmra.mrb[0].mxu0 %v1182
        %v2550 = vpop.f32.mrb[0].mxu0
        %v2551 = vadd.f32 0.0, %v2550
        %v2552 = vpop.f32.mrb[0].mxu0
        %v2553 = vpop.f32.mrb[0].mxu0
        %v2554 = vadd.f32 0.0, %v2553
        %v2555 = vpop.f32.mrb[0].mxu0
        %2556 = vmatprep.mubr.bf16.mxu0 0
        %2557 = vmatmul.mubr.bf16.gmra.mrb[0].mxu0 %v1185
        %v2558 = vpop.f32.mrb[0].mxu0
        %v2559 = vadd.f32 0.0, %v2558
        %v2560 = vpop.f32.mrb[0].mxu0
        %v2561 = vpop.f32.mrb[0].mxu0
        %v2562 = vadd.f32 0.0, %v2561
        %v2563 = vpop.f32.mrb[0].mxu0
        %2564 = vmatprep.mubr.bf16.mxu0 0
        %2565 = vmatmul.mubr.bf16.gmra.mrb[0].mxu0 %v1188
        %v2566 = vpop.f32.mrb[0].mxu0
        %v2567 = vadd.f32 0.0, %v2566
        %v2568 = vpop.f32.mrb[0].mxu0
        %v2569 = vpop.f32.mrb[0].mxu0
        %v2570 = vadd.f32 0.0, %v2569
        %v2571 = vpop.f32.mrb[0].mxu0
        %2572 = vmatprep.mubr.bf16.mxu0 0
        %2573 = vmatmul.mubr.bf16.gmra.mrb[0].mxu0 %v1191
        %v2574 = vpop.f32.mrb[0].mxu0
        %v2575 = vadd.f32 0.0, %v2574
        %v2576 = vpop.f32.mrb[0].mxu0
        %v2577 = vpop.f32.mrb[0].mxu0
        %v2578 = vadd.f32 0.0, %v2577
        %v2579 = vpop.f32.mrb[0].mxu0
        %2580 = vmatprep.mubr.bf16.mxu0 0
        %2581 = vmatmul.mubr.bf16.gmra.mrb[0].mxu0 %v1194
        %v2582 = vpop.f32.mrb[0].mxu0
        %v2583 = vadd.f32 0.0, %v2582
        %v2584 = vpop.f32.mrb[0].mxu0
        %v2585 = vpop.f32.mrb[0].mxu0
        %v2586 = vadd.f32 0.0, %v2585
        %v2587 = vpop.f32.mrb[0].mxu0
        %2588 = vmatprep.mubr.bf16.mxu0 0
        %2589 = vmatmul.mubr.bf16.gmra.mrb[0].mxu0 %v1793
        %v2590 = vpop.f32.mrb[0].mxu0
        %v2591 = vadd.f32 0.0, %v2590
        %v2592 = vpop.f32.mrb[0].mxu0
        %v2593 = vpop.f32.mrb[0].mxu0
        %v2594 = vadd.f32 0.0, %v2593
        %v2595 = vpop.f32.mrb[0].mxu0
        %2596 = vmatprep.mubr.bf16.mxu0 0
        %2597 = vmatmul.mubr.bf16.gmra.mrb[0].mxu0 %v2439
        %v2598 = vpop.f32.mrb[0].mxu0
        %v2599 = vadd.f32 0.0, %v2598
        %v2600 = vpop.f32.mrb[0].mxu0
        %v2601 = vpop.f32.mrb[0].mxu0
        %v2602 = vadd.f32 0.0, %v2601
        %v2603 = vpop.f32.mrb[0].mxu0
        %2604 = vdwg.mxu0
        %v2605 = vadd.f32 %v2399, %v2479
        %v2606 = vadd.f32 %v2400, %v2482
        %v2607 = vadd.f32 %v2401, %v2487
        %v2608 = vadd.f32 %v2402, %v2490
        %v2609 = vadd.f32 %v2403, %v2495
        %v2610 = vadd.f32 %v2404, %v2498
        %v2611 = vadd.f32 %v2405, %v2503
        %v2612 = vadd.f32 %v2406, %v2506
        %v2613 = vadd.f32 %v2407, %v2511
        %v2614 = vadd.f32 %v2408, %v2514
        %v2615 = vadd.f32 %v2409, %v2519
        %v2616 = vadd.f32 %v2410, %v2522
        %v2617 = vadd.f32 %v2411, %v2527
        %v2618 = vadd.f32 %v2412, %v2530
        %v2619 = vadd.f32 %v2413, %v2535
        %v2620 = vadd.f32 %v2414, %v2538
        %v2621 = vadd.f32 %v2415, %v2543
        %v2622 = vadd.f32 %v2416, %v2546
        %v2623 = vadd.f32 %v2417, %v2551
        %v2624 = vadd.f32 %v2418, %v2554
        %v2625 = vadd.f32 %v2419, %v2559
        %v2626 = vadd.f32 %v2420, %v2562
        %v2627 = vadd.f32 %v2421, %v2567
        %v2628 = vadd.f32 %v2422, %v2570
        %v2629 = vadd.f32 %v2423, %v2575
        %v2630 = vadd.f32 %v2424, %v2578
        %v2631 = vadd.f32 %v2425, %v2583
        %v2632 = vadd.f32 %v2426, %v2586
        %v2633 = vadd.f32 %v2427, %v2591
        %v2634 = vadd.f32 %v2428, %v2594
        %v2635 = vadd.f32 %v2429, %v2599
        %v2636 = vadd.f32 %v2430, %v2602
        %v2638 = vshrl.u32 %v413, 16
        %v2640 = vrot.slane %v2638, 4
        %v2641 = vshll.u32 %v413, 16
        %v2643 = vrot.slane %v2641, 5
        %v2644 = vor.u32 %v2640, %v2643
        %v2645 = vrot.slane %v2644, 4
        %v2647 = vshll.u32 %v414, 16
        %v2649 = vrot.slane %v2647, 5
        %v2650 = vsel %vm419, %v2645, %v2649
        %v2651 = vshrl.u32 %v414, 16
        %v2653 = vrot.slane %v2651, 4
        %v2654 = vor.u32 %v2653, %v2649
        %v2655 = vrot.slane %v2654, 4
        %v2657 = vshll.u32 %v415, 16
        %v2659 = vrot.slane %v2657, 5
        %v2660 = vsel %vm419, %v2655, %v2659
        %s2661 = scalar_lea.vmem %s1, 14
        %v2662 = vld [vmem:[%s2661] sm:$0x3]
        %v2663 = vunpack.c.l.b16 %v2650
        %v2664 = vunpack.c.l.b16 %v2660
        %v2665 = vpack.c.b16 %v2664, %v2663
        %v2667 = vsel %vm854, %v2665, 0
        %v2670 = vsel %vm903, %v2662, 0
        %2672 = vmatprep.subr.bf16.mxu0 0
        %2673 = vmatpush1.bf16.msra.mxu0 %v2670
        %2674 = vmatprep.subr.bf16.mxu0 0
        %2675 = vmatpush1.bf16.msra.mxu0 0
        %2676 = vmatprep.subr.bf16.mxu0 0
        %2677 = vmatpush1.bf16.msra.mxu0 0
        %2678 = vmatprep.subr.bf16.mxu0 0
        %2679 = vmatpush1.bf16.msra.mxu0 0
        %2680 = vmatprep.subr.bf16.mxu0 0
        %2681 = vmatpush1.bf16.msra.mxu0 0
        %2682 = vmatprep.subr.bf16.mxu0 0
        %2683 = vmatpush1.bf16.msra.mxu0 0
        %2684 = vmatprep.subr.bf16.mxu0 0
        %2685 = vmatpush1.bf16.msra.mxu0 0
        %2686 = vmatprep.subr.bf16.mxu0 0
        %2687 = vmatpush1.bf16.msra.mxu0 0
        %2688 = vmatprep.subr.bf16.mxu0 0
        %2689 = vmatpush1.bf16.msra.mxu0 0
        %2690 = vmatprep.subr.bf16.mxu0 0
        %2691 = vmatpush1.bf16.msra.mxu0 0
        %2692 = vmatprep.subr.bf16.mxu0 0
        %2693 = vmatpush1.bf16.msra.mxu0 0
        %2694 = vmatprep.subr.bf16.mxu0 0
        %2695 = vmatpush1.bf16.msra.mxu0 0
        %2696 = vmatprep.subr.bf16.mxu0 0
        %2697 = vmatpush1.bf16.msra.mxu0 0
        %2698 = vmatprep.subr.bf16.mxu0 0
        %2699 = vmatpush1.bf16.msra.mxu0 0
        %2700 = vmatprep.subr.bf16.mxu0 0
        %2701 = vmatpush1.bf16.msra.mxu0 0
        %2702 = vmatprep.subr.bf16.mxu0 0
        %2703 = vmatpush1.bf16.msra.mxu0 0
        %2704 = vmatprep.mubr.bf16.mxu0 0
        %2705 = vmatmul.mubr.bf16.gmra.mrb[0].mxu0 %v862
        %v2706 = vpop.f32.mrb[0].mxu0
        %v2707 = vadd.f32 0.0, %v2706
        %v2708 = vpop.f32.mrb[0].mxu0
        %v2709 = vpop.f32.mrb[0].mxu0
        %v2710 = vadd.f32 0.0, %v2709
        %v2711 = vpop.f32.mrb[0].mxu0
        %2712 = vmatprep.mubr.bf16.mxu0 0
        %2713 = vmatmul.mubr.bf16.gmra.mrb[0].mxu0 %v865
        %v2714 = vpop.f32.mrb[0].mxu0
        %v2715 = vadd.f32 0.0, %v2714
        %v2716 = vpop.f32.mrb[0].mxu0
        %v2717 = vpop.f32.mrb[0].mxu0
        %v2718 = vadd.f32 0.0, %v2717
        %v2719 = vpop.f32.mrb[0].mxu0
        %2720 = vmatprep.mubr.bf16.mxu0 0
        %2721 = vmatmul.mubr.bf16.gmra.mrb[0].mxu0 %v868
        %v2722 = vpop.f32.mrb[0].mxu0
        %v2723 = vadd.f32 0.0, %v2722
        %v2724 = vpop.f32.mrb[0].mxu0
        %v2725 = vpop.f32.mrb[0].mxu0
        %v2726 = vadd.f32 0.0, %v2725
        %v2727 = vpop.f32.mrb[0].mxu0
        %2728 = vmatprep.mubr.bf16.mxu0 0
        %2729 = vmatmul.mubr.bf16.gmra.mrb[0].mxu0 %v871
        %v2730 = vpop.f32.mrb[0].mxu0
        %v2731 = vadd.f32 0.0, %v2730
        %v2732 = vpop.f32.mrb[0].mxu0
        %v2733 = vpop.f32.mrb[0].mxu0
        %v2734 = vadd.f32 0.0, %v2733
        %v2735 = vpop.f32.mrb[0].mxu0
        %2736 = vmatprep.mubr.bf16.mxu0 0
        %2737 = vmatmul.mubr.bf16.gmra.mrb[0].mxu0 %v874
        %v2738 = vpop.f32.mrb[0].mxu0
        %v2739 = vadd.f32 0.0, %v2738
        %v2740 = vpop.f32.mrb[0].mxu0
        %v2741 = vpop.f32.mrb[0].mxu0
        %v2742 = vadd.f32 0.0, %v2741
        %v2743 = vpop.f32.mrb[0].mxu0
        %2744 = vmatprep.mubr.bf16.mxu0 0
        %2745 = vmatmul.mubr.bf16.gmra.mrb[0].mxu0 %v877
        %v2746 = vpop.f32.mrb[0].mxu0
        %v2747 = vadd.f32 0.0, %v2746
        %v2748 = vpop.f32.mrb[0].mxu0
        %v2749 = vpop.f32.mrb[0].mxu0
        %v2750 = vadd.f32 0.0, %v2749
        %v2751 = vpop.f32.mrb[0].mxu0
        %2752 = vmatprep.mubr.bf16.mxu0 0
        %2753 = vmatmul.mubr.bf16.gmra.mrb[0].mxu0 %v880
        %v2754 = vpop.f32.mrb[0].mxu0
        %v2755 = vadd.f32 0.0, %v2754
        %v2756 = vpop.f32.mrb[0].mxu0
        %v2757 = vpop.f32.mrb[0].mxu0
        %v2758 = vadd.f32 0.0, %v2757
        %v2759 = vpop.f32.mrb[0].mxu0
        %2760 = vmatprep.mubr.bf16.mxu0 0
        %2761 = vmatmul.mubr.bf16.gmra.mrb[0].mxu0 %v883
        %v2762 = vpop.f32.mrb[0].mxu0
        %v2763 = vadd.f32 0.0, %v2762
        %v2764 = vpop.f32.mrb[0].mxu0
        %v2765 = vpop.f32.mrb[0].mxu0
        %v2766 = vadd.f32 0.0, %v2765
        %v2767 = vpop.f32.mrb[0].mxu0
        %2768 = vmatprep.mubr.bf16.mxu0 0
        %2769 = vmatmul.mubr.bf16.gmra.mrb[0].mxu0 %v886
        %v2770 = vpop.f32.mrb[0].mxu0
        %v2771 = vadd.f32 0.0, %v2770
        %v2772 = vpop.f32.mrb[0].mxu0
        %v2773 = vpop.f32.mrb[0].mxu0
        %v2774 = vadd.f32 0.0, %v2773
        %v2775 = vpop.f32.mrb[0].mxu0
        %2776 = vmatprep.mubr.bf16.mxu0 0
        %2777 = vmatmul.mubr.bf16.gmra.mrb[0].mxu0 %v889
        %v2778 = vpop.f32.mrb[0].mxu0
        %v2779 = vadd.f32 0.0, %v2778
        %v2780 = vpop.f32.mrb[0].mxu0
        %v2781 = vpop.f32.mrb[0].mxu0
        %v2782 = vadd.f32 0.0, %v2781
        %v2783 = vpop.f32.mrb[0].mxu0
        %2784 = vmatprep.mubr.bf16.mxu0 0
        %2785 = vmatmul.mubr.bf16.gmra.mrb[0].mxu0 %v892
        %v2786 = vpop.f32.mrb[0].mxu0
        %v2787 = vadd.f32 0.0, %v2786
        %v2788 = vpop.f32.mrb[0].mxu0
        %v2789 = vpop.f32.mrb[0].mxu0
        %v2790 = vadd.f32 0.0, %v2789
        %v2791 = vpop.f32.mrb[0].mxu0
        %2792 = vmatprep.mubr.bf16.mxu0 0
        %2793 = vmatmul.mubr.bf16.gmra.mrb[0].mxu0 %v895
        %v2794 = vpop.f32.mrb[0].mxu0
        %v2795 = vadd.f32 0.0, %v2794
        %v2796 = vpop.f32.mrb[0].mxu0
        %v2797 = vpop.f32.mrb[0].mxu0
        %v2798 = vadd.f32 0.0, %v2797
        %v2799 = vpop.f32.mrb[0].mxu0
        %2800 = vmatprep.mubr.bf16.mxu0 0
        %2801 = vmatmul.mubr.bf16.gmra.mrb[0].mxu0 %v898
        %v2802 = vpop.f32.mrb[0].mxu0
        %v2803 = vadd.f32 0.0, %v2802
        %v2804 = vpop.f32.mrb[0].mxu0
        %v2805 = vpop.f32.mrb[0].mxu0
        %v2806 = vadd.f32 0.0, %v2805
        %v2807 = vpop.f32.mrb[0].mxu0
        %2808 = vmatprep.mubr.bf16.mxu0 0
        %2809 = vmatmul.mubr.bf16.gmra.mrb[0].mxu0 %v901
        %v2810 = vpop.f32.mrb[0].mxu0
        %v2811 = vadd.f32 0.0, %v2810
        %v2812 = vpop.f32.mrb[0].mxu0
        %v2813 = vpop.f32.mrb[0].mxu0
        %v2814 = vadd.f32 0.0, %v2813
        %v2815 = vpop.f32.mrb[0].mxu0
        %2816 = vmatprep.mubr.bf16.mxu0 0
        %2817 = vmatmul.mubr.bf16.gmra.mrb[0].mxu0 %v2021
        %v2818 = vpop.f32.mrb[0].mxu0
        %v2819 = vadd.f32 0.0, %v2818
        %v2820 = vpop.f32.mrb[0].mxu0
        %v2821 = vpop.f32.mrb[0].mxu0
        %v2822 = vadd.f32 0.0, %v2821
        %v2823 = vpop.f32.mrb[0].mxu0
        %2824 = vmatprep.mubr.bf16.mxu0 0
        %2825 = vmatmul.mubr.bf16.gmra.mrb[0].mxu0 %v2667
        %v2826 = vpop.f32.mrb[0].mxu0
        %v2827 = vadd.f32 0.0, %v2826
        %v2828 = vpop.f32.mrb[0].mxu0
        %v2829 = vpop.f32.mrb[0].mxu0
        %v2830 = vadd.f32 0.0, %v2829
        %v2831 = vpop.f32.mrb[0].mxu0
        %2832 = vdwg.mxu0
        %v2833 = vadd.f32 %v2605, %v2707
        %v2834 = vadd.f32 %v2606, %v2710
        %v2835 = vadd.f32 %v2607, %v2715
        %v2836 = vadd.f32 %v2608, %v2718
        %v2837 = vadd.f32 %v2609, %v2723
        %v2838 = vadd.f32 %v2610, %v2726
        %v2839 = vadd.f32 %v2611, %v2731
        %v2840 = vadd.f32 %v2612, %v2734
        %v2841 = vadd.f32 %v2613, %v2739
        %v2842 = vadd.f32 %v2614, %v2742
        %v2843 = vadd.f32 %v2615, %v2747
        %v2844 = vadd.f32 %v2616, %v2750
        %v2845 = vadd.f32 %v2617, %v2755
        %v2846 = vadd.f32 %v2618, %v2758
        %v2847 = vadd.f32 %v2619, %v2763
        %v2848 = vadd.f32 %v2620, %v2766
        %v2849 = vadd.f32 %v2621, %v2771
        %v2850 = vadd.f32 %v2622, %v2774
        %v2851 = vadd.f32 %v2623, %v2779
        %v2852 = vadd.f32 %v2624, %v2782
        %v2853 = vadd.f32 %v2625, %v2787
        %v2854 = vadd.f32 %v2626, %v2790
        %v2855 = vadd.f32 %v2627, %v2795
        %v2856 = vadd.f32 %v2628, %v2798
        %v2857 = vadd.f32 %v2629, %v2803
        %v2858 = vadd.f32 %v2630, %v2806
        %v2859 = vadd.f32 %v2631, %v2811
        %v2860 = vadd.f32 %v2632, %v2814
        %v2861 = vadd.f32 %v2633, %v2819
        %v2862 = vadd.f32 %v2634, %v2822
        %v2863 = vadd.f32 %v2635, %v2827
        %v2864 = vadd.f32 %v2636, %v2830
        %v2866 = vrot.slane %v413, 5
        %v2867 = vrot.slane %v2866, 4
        %v2868 = vrot.slane %v414, 5
        %v2869 = vsel %vm1378, %v2867, %v2868
        %v2870 = vrot.slane %v2868, 4
        %v2871 = vrot.slane %v415, 5
        %v2872 = vsel %vm1378, %v2870, %v2871
        %s2873 = scalar_lea.vmem %s1, 16
        %v2874 = vld [vmem:[%s2873] sm:$0x3]
        %v2875 = vunpack.c.l.b16 %v2869
        %v2876 = vunpack.c.l.b16 %v2872
        %v2877 = vpack.c.b16 %v2876, %v2875
        %v2879 = vsel %vm854, %v2877, 0
        %v2882 = vsel %vm903, %v2874, 0
        %2884 = vmatprep.subr.bf16.mxu0 0
        %2885 = vmatpush1.bf16.msra.mxu0 %v2882
        %2886 = vmatprep.subr.bf16.mxu0 0
        %2887 = vmatpush1.bf16.msra.mxu0 0
        %2888 = vmatprep.subr.bf16.mxu0 0
        %2889 = vmatpush1.bf16.msra.mxu0 0
        %2890 = vmatprep.subr.bf16.mxu0 0
        %2891 = vmatpush1.bf16.msra.mxu0 0
        %2892 = vmatprep.subr.bf16.mxu0 0
        %2893 = vmatpush1.bf16.msra.mxu0 0
        %2894 = vmatprep.subr.bf16.mxu0 0
        %2895 = vmatpush1.bf16.msra.mxu0 0
        %2896 = vmatprep.subr.bf16.mxu0 0
        %2897 = vmatpush1.bf16.msra.mxu0 0
        %2898 = vmatprep.subr.bf16.mxu0 0
        %2899 = vmatpush1.bf16.msra.mxu0 0
        %2900 = vmatprep.subr.bf16.mxu0 0
        %2901 = vmatpush1.bf16.msra.mxu0 0
        %2902 = vmatprep.subr.bf16.mxu0 0
        %2903 = vmatpush1.bf16.msra.mxu0 0
        %2904 = vmatprep.subr.bf16.mxu0 0
        %2905 = vmatpush1.bf16.msra.mxu0 0
        %2906 = vmatprep.subr.bf16.mxu0 0
        %2907 = vmatpush1.bf16.msra.mxu0 0
        %2908 = vmatprep.subr.bf16.mxu0 0
        %2909 = vmatpush1.bf16.msra.mxu0 0
        %2910 = vmatprep.subr.bf16.mxu0 0
        %2911 = vmatpush1.bf16.msra.mxu0 0
        %2912 = vmatprep.subr.bf16.mxu0 0
        %2913 = vmatpush1.bf16.msra.mxu0 0
        %2914 = vmatprep.subr.bf16.mxu0 0
        %2915 = vmatpush1.bf16.msra.mxu0 0
        %2916 = vmatprep.mubr.bf16.mxu0 0
        %2917 = vmatmul.mubr.bf16.gmra.mrb[0].mxu0 %v1548
        %v2918 = vpop.f32.mrb[0].mxu0
        %v2919 = vadd.f32 0.0, %v2918
        %v2920 = vpop.f32.mrb[0].mxu0
        %v2921 = vpop.f32.mrb[0].mxu0
        %v2922 = vadd.f32 0.0, %v2921
        %v2923 = vpop.f32.mrb[0].mxu0
        %2924 = vmatprep.mubr.bf16.mxu0 0
        %2925 = vmatmul.mubr.bf16.gmra.mrb[0].mxu0 %v1551
        %v2926 = vpop.f32.mrb[0].mxu0
        %v2927 = vadd.f32 0.0, %v2926
        %v2928 = vpop.f32.mrb[0].mxu0
        %v2929 = vpop.f32.mrb[0].mxu0
        %v2930 = vadd.f32 0.0, %v2929
        %v2931 = vpop.f32.mrb[0].mxu0
        %2932 = vmatprep.mubr.bf16.mxu0 0
        %2933 = vmatmul.mubr.bf16.gmra.mrb[0].mxu0 %v1554
        %v2934 = vpop.f32.mrb[0].mxu0
        %v2935 = vadd.f32 0.0, %v2934
        %v2936 = vpop.f32.mrb[0].mxu0
        %v2937 = vpop.f32.mrb[0].mxu0
        %v2938 = vadd.f32 0.0, %v2937
        %v2939 = vpop.f32.mrb[0].mxu0
        %2940 = vmatprep.mubr.bf16.mxu0 0
        %2941 = vmatmul.mubr.bf16.gmra.mrb[0].mxu0 %v1557
        %v2942 = vpop.f32.mrb[0].mxu0
        %v2943 = vadd.f32 0.0, %v2942
        %v2944 = vpop.f32.mrb[0].mxu0
        %v2945 = vpop.f32.mrb[0].mxu0
        %v2946 = vadd.f32 0.0, %v2945
        %v2947 = vpop.f32.mrb[0].mxu0
        %2948 = vmatprep.mubr.bf16.mxu0 0
        %2949 = vmatmul.mubr.bf16.gmra.mrb[0].mxu0 %v1560
        %v2950 = vpop.f32.mrb[0].mxu0
        %v2951 = vadd.f32 0.0, %v2950
        %v2952 = vpop.f32.mrb[0].mxu0
        %v2953 = vpop.f32.mrb[0].mxu0
        %v2954 = vadd.f32 0.0, %v2953
        %v2955 = vpop.f32.mrb[0].mxu0
        %2956 = vmatprep.mubr.bf16.mxu0 0
        %2957 = vmatmul.mubr.bf16.gmra.mrb[0].mxu0 %v1563
        %v2958 = vpop.f32.mrb[0].mxu0
        %v2959 = vadd.f32 0.0, %v2958
        %v2960 = vpop.f32.mrb[0].mxu0
        %v2961 = vpop.f32.mrb[0].mxu0
        %v2962 = vadd.f32 0.0, %v2961
        %v2963 = vpop.f32.mrb[0].mxu0
        %2964 = vmatprep.mubr.bf16.mxu0 0
        %2965 = vmatmul.mubr.bf16.gmra.mrb[0].mxu0 %v1566
        %v2966 = vpop.f32.mrb[0].mxu0
        %v2967 = vadd.f32 0.0, %v2966
        %v2968 = vpop.f32.mrb[0].mxu0
        %v2969 = vpop.f32.mrb[0].mxu0
        %v2970 = vadd.f32 0.0, %v2969
        %v2971 = vpop.f32.mrb[0].mxu0
        %2972 = vmatprep.mubr.bf16.mxu0 0
        %2973 = vmatmul.mubr.bf16.gmra.mrb[0].mxu0 %v1569
        %v2974 = vpop.f32.mrb[0].mxu0
        %v2975 = vadd.f32 0.0, %v2974
        %v2976 = vpop.f32.mrb[0].mxu0
        %v2977 = vpop.f32.mrb[0].mxu0
        %v2978 = vadd.f32 0.0, %v2977
        %v2979 = vpop.f32.mrb[0].mxu0
        %2980 = vmatprep.mubr.bf16.mxu0 0
        %2981 = vmatmul.mubr.bf16.gmra.mrb[0].mxu0 %v1572
        %v2982 = vpop.f32.mrb[0].mxu0
        %v2983 = vadd.f32 0.0, %v2982
        %v2984 = vpop.f32.mrb[0].mxu0
        %v2985 = vpop.f32.mrb[0].mxu0
        %v2986 = vadd.f32 0.0, %v2985
        %v2987 = vpop.f32.mrb[0].mxu0
        %2988 = vmatprep.mubr.bf16.mxu0 0
        %2989 = vmatmul.mubr.bf16.gmra.mrb[0].mxu0 %v1575
        %v2990 = vpop.f32.mrb[0].mxu0
        %v2991 = vadd.f32 0.0, %v2990
        %v2992 = vpop.f32.mrb[0].mxu0
        %v2993 = vpop.f32.mrb[0].mxu0
        %v2994 = vadd.f32 0.0, %v2993
        %v2995 = vpop.f32.mrb[0].mxu0
        %2996 = vmatprep.mubr.bf16.mxu0 0
        %2997 = vmatmul.mubr.bf16.gmra.mrb[0].mxu0 %v1578
        %v2998 = vpop.f32.mrb[0].mxu0
        %v2999 = vadd.f32 0.0, %v2998
        %v3000 = vpop.f32.mrb[0].mxu0
        %v3001 = vpop.f32.mrb[0].mxu0
        %v3002 = vadd.f32 0.0, %v3001
        %v3003 = vpop.f32.mrb[0].mxu0
        %3004 = vmatprep.mubr.bf16.mxu0 0
        %3005 = vmatmul.mubr.bf16.gmra.mrb[0].mxu0 %v1581
        %v3006 = vpop.f32.mrb[0].mxu0
        %v3007 = vadd.f32 0.0, %v3006
        %v3008 = vpop.f32.mrb[0].mxu0
        %v3009 = vpop.f32.mrb[0].mxu0
        %v3010 = vadd.f32 0.0, %v3009
        %v3011 = vpop.f32.mrb[0].mxu0
        %3012 = vmatprep.mubr.bf16.mxu0 0
        %3013 = vmatmul.mubr.bf16.gmra.mrb[0].mxu0 %v1584
        %v3014 = vpop.f32.mrb[0].mxu0
        %v3015 = vadd.f32 0.0, %v3014
        %v3016 = vpop.f32.mrb[0].mxu0
        %v3017 = vpop.f32.mrb[0].mxu0
        %v3018 = vadd.f32 0.0, %v3017
        %v3019 = vpop.f32.mrb[0].mxu0
        %3020 = vmatprep.mubr.bf16.mxu0 0
        %3021 = vmatmul.mubr.bf16.gmra.mrb[0].mxu0 %v1587
        %v3022 = vpop.f32.mrb[0].mxu0
        %v3023 = vadd.f32 0.0, %v3022
        %v3024 = vpop.f32.mrb[0].mxu0
        %v3025 = vpop.f32.mrb[0].mxu0
        %v3026 = vadd.f32 0.0, %v3025
        %v3027 = vpop.f32.mrb[0].mxu0
        %3028 = vmatprep.mubr.bf16.mxu0 0
        %3029 = vmatmul.mubr.bf16.gmra.mrb[0].mxu0 %v2233
        %v3030 = vpop.f32.mrb[0].mxu0
        %v3031 = vadd.f32 0.0, %v3030
        %v3032 = vpop.f32.mrb[0].mxu0
        %v3033 = vpop.f32.mrb[0].mxu0
        %v3034 = vadd.f32 0.0, %v3033
        %v3035 = vpop.f32.mrb[0].mxu0
        %3036 = vmatprep.mubr.bf16.mxu0 0
        %3037 = vmatmul.mubr.bf16.gmra.mrb[0].mxu0 %v2879
        %v3038 = vpop.f32.mrb[0].mxu0
        %v3039 = vadd.f32 0.0, %v3038
        %v3040 = vpop.f32.mrb[0].mxu0
        %v3041 = vpop.f32.mrb[0].mxu0
        %v3042 = vadd.f32 0.0, %v3041
        %v3043 = vpop.f32.mrb[0].mxu0
        %3044 = vdwg.mxu0
        %v3045 = vadd.f32 %v2833, %v2919
        %v3046 = vadd.f32 %v2834, %v2922
        %v3047 = vadd.f32 %v2835, %v2927
        %v3048 = vadd.f32 %v2836, %v2930
        %v3049 = vadd.f32 %v2837, %v2935
        %v3050 = vadd.f32 %v2838, %v2938
        %v3051 = vadd.f32 %v2839, %v2943
        %v3052 = vadd.f32 %v2840, %v2946
        %v3053 = vadd.f32 %v2841, %v2951
        %v3054 = vadd.f32 %v2842, %v2954
        %v3055 = vadd.f32 %v2843, %v2959
        %v3056 = vadd.f32 %v2844, %v2962
        %v3057 = vadd.f32 %v2845, %v2967
        %v3058 = vadd.f32 %v2846, %v2970
        %v3059 = vadd.f32 %v2847, %v2975
        %v3060 = vadd.f32 %v2848, %v2978
        %v3061 = vadd.f32 %v2849, %v2983
        %v3062 = vadd.f32 %v2850, %v2986
        %v3063 = vadd.f32 %v2851, %v2991
        %v3064 = vadd.f32 %v2852, %v2994
        %v3065 = vadd.f32 %v2853, %v2999
        %v3066 = vadd.f32 %v2854, %v3002
        %v3067 = vadd.f32 %v2855, %v3007
        %v3068 = vadd.f32 %v2856, %v3010
        %v3069 = vadd.f32 %v2857, %v3015
        %v3070 = vadd.f32 %v2858, %v3018
        %v3071 = vadd.f32 %v2859, %v3023
        %v3072 = vadd.f32 %v2860, %v3026
        %v3073 = vadd.f32 %v2861, %v3031
        %v3074 = vadd.f32 %v2862, %v3034
        %v3075 = vadd.f32 %v2863, %v3039
        %v3076 = vadd.f32 %v2864, %v3042
        %v3077 = vld [vmem:[%s4] sm:$0x1]
        %v3079 = vlaneseq
        %v3080 = vshrl.u32 %v3079, 7
        %v3081 = vsub.s32 0, %v3080
        %v3082 = vrot.slane %v3077, %v3081
        %v3084 = vadd.f32 %v3045, %v3082
        %v3085 = vadd.f32 %v3046, %v3082
        %v3086 = vadd.f32 %v3047, %v3082
        %v3087 = vadd.f32 %v3048, %v3082
        %v3088 = vadd.f32 %v3049, %v3082
        %v3089 = vadd.f32 %v3050, %v3082
        %v3090 = vadd.f32 %v3051, %v3082
        %v3091 = vadd.f32 %v3052, %v3082
        %v3092 = vadd.f32 %v3053, %v3082
        %v3093 = vadd.f32 %v3054, %v3082
        %v3094 = vadd.f32 %v3055, %v3082
        %v3095 = vadd.f32 %v3056, %v3082
        %v3096 = vadd.f32 %v3057, %v3082
        %v3097 = vadd.f32 %v3058, %v3082
        %v3098 = vadd.f32 %v3059, %v3082
        %v3099 = vadd.f32 %v3060, %v3082
        %v3100 = vadd.f32 %v3061, %v3082
        %v3101 = vadd.f32 %v3062, %v3082
        %v3102 = vadd.f32 %v3063, %v3082
        %v3103 = vadd.f32 %v3064, %v3082
        %v3104 = vadd.f32 %v3065, %v3082
        %v3105 = vadd.f32 %v3066, %v3082
        %v3106 = vadd.f32 %v3067, %v3082
        %v3107 = vadd.f32 %v3068, %v3082
        %v3108 = vadd.f32 %v3069, %v3082
        %v3109 = vadd.f32 %v3070, %v3082
        %v3110 = vadd.f32 %v3071, %v3082
        %v3111 = vadd.f32 %v3072, %v3082
        %v3112 = vadd.f32 %v3073, %v3082
        %v3113 = vadd.f32 %v3074, %v3082
        %v3114 = vadd.f32 %v3075, %v3082
        %v3115 = vadd.f32 %v3076, %v3082
        %3116 = vst [vmem:[#allocation2] sm:$0xff] 0.0
        %3117 = vst [vmem:[#allocation2 + $0x8] sm:$0xff] 0.0
        %3118 = vst [vmem:[#allocation2 + $0x10] sm:$0x3] 0.0
        %3119 = vst [vmem:[#allocation2 + $0x18] sm:$0xff] 0.0
        %3120 = vst [vmem:[#allocation2 + $0x20] sm:$0xff] 0.0
        %3121 = vst [vmem:[#allocation2 + $0x28] sm:$0x3] 0.0
        %3122 = vst [vmem:[#allocation2 + $0x30] sm:$0xff] 0.0
        %3123 = vst [vmem:[#allocation2 + $0x38] sm:$0xff] 0.0
        %3124 = vst [vmem:[#allocation2 + $0x40] sm:$0x3] 0.0
        %3125 = vst [vmem:[#allocation2 + $0x48] sm:$0xff] 0.0
        %3126 = vst [vmem:[#allocation2 + $0x50] sm:$0xff] 0.0
        %3127 = vst [vmem:[#allocation2 + $0x58] sm:$0x3] 0.0
        %3128 = vst [vmem:[#allocation2 + $0x60] sm:$0xff] 0.0
        %3129 = vst [vmem:[#allocation2 + $0x68] sm:$0xff] 0.0
        %3130 = vst [vmem:[#allocation2 + $0x70] sm:$0x3] 0.0
        %3131 = vst [vmem:[#allocation2 + $0x78] sm:$0xff] 0.0
        %3132 = vst [vmem:[#allocation2 + $0x80] sm:$0xff] 0.0
        %3133 = vst [vmem:[#allocation2 + $0x88] sm:$0x3] 0.0
        %3134 = vst [vmem:[#allocation2 + $0x90] sm:$0xff] 0.0
        %3135 = vst [vmem:[#allocation2 + $0x98] sm:$0xff] 0.0
        %3136 = vst [vmem:[#allocation2 + $0xa0] sm:$0x3] 0.0
        %3137 = vst [vmem:[#allocation2 + $0xa8] sm:$0xff] 0.0
        %3138 = vst [vmem:[#allocation2 + $0xb0] sm:$0xff] 0.0
        %3139 = vst [vmem:[#allocation2 + $0xb8] sm:$0x3] 0.0
        %3140 = vst [vmem:[#allocation2 + $0xc0] sm:$0xff] 0.0
        %3141 = vst [vmem:[#allocation2 + $0xc8] sm:$0xff] 0.0
        %3142 = vst [vmem:[#allocation2 + $0xd0] sm:$0x3] 0.0
        %3143 = vst [vmem:[#allocation2 + $0xd8] sm:$0xff] 0.0
        %3144 = vst [vmem:[#allocation2 + $0xe0] sm:$0xff] 0.0
        %3145 = vst [vmem:[#allocation2 + $0xe8] sm:$0x3] 0.0
        %3146 = vst [vmem:[#allocation2 + $0xf0] sm:$0xff] 0.0
        %3147 = vst [vmem:[#allocation2 + $0xf8] sm:$0xff] 0.0
        %3148 = vst [vmem:[#allocation2 + $0x100] sm:$0x3] 0.0
        %3149 = vst [vmem:[#allocation2 + $0x108] sm:$0xff] 0.0
        %3150 = vst [vmem:[#allocation2 + $0x110] sm:$0xff] 0.0
        %3151 = vst [vmem:[#allocation2 + $0x118] sm:$0x3] 0.0
        %3152 = vst [vmem:[#allocation2 + $0x120] sm:$0xff] 0.0
        %3153 = vst [vmem:[#allocation2 + $0x128] sm:$0xff] 0.0
        %3154 = vst [vmem:[#allocation2 + $0x130] sm:$0x3] 0.0
        %3155 = vst [vmem:[#allocation2 + $0x138] sm:$0xff] 0.0
        %3156 = vst [vmem:[#allocation2 + $0x140] sm:$0xff] 0.0
        %3157 = vst [vmem:[#allocation2 + $0x148] sm:$0x3] 0.0
        %3158 = vst [vmem:[#allocation2 + $0x150] sm:$0xff] 0.0
        %3159 = vst [vmem:[#allocation2 + $0x158] sm:$0xff] 0.0
        %3160 = vst [vmem:[#allocation2 + $0x160] sm:$0x3] 0.0
        %3161 = vst [vmem:[#allocation2 + $0x168] sm:$0xff] 0.0
        %3162 = vst [vmem:[#allocation2 + $0x170] sm:$0xff] 0.0
        %3163 = vst [vmem:[#allocation2 + $0x178] sm:$0x3] 0.0
        %3164 = vst [vmem:[#allocation2 + $0x180] sm:$0xff] 0.0
        %3165 = vst [vmem:[#allocation2 + $0x188] sm:$0xff] 0.0
        %3166 = vst [vmem:[#allocation2 + $0x190] sm:$0x3] 0.0
        %3167 = vst [vmem:[#allocation2 + $0x198] sm:$0xff] 0.0
        %3168 = vst [vmem:[#allocation2 + $0x1a0] sm:$0xff] 0.0
        %3169 = vst [vmem:[#allocation2 + $0x1a8] sm:$0x3] 0.0
        %s3170 = scalar_lea.vmem [#allocation2], 24
        %3171 = vst [vmem:[%s3170 + $0x1] sm:$0xff] %v3084
        %3172 = vst [vmem:[%s3170 + $0x9] sm:$0xff] %v3085
        %3173 = vst [vmem:[%s3170 + $0x19] sm:$0xff] %v3086
        %3174 = vst [vmem:[%s3170 + $0x21] sm:$0xff] %v3087
        %3175 = vst [vmem:[%s3170 + $0x31] sm:$0xff] %v3088
        %3176 = vst [vmem:[%s3170 + $0x39] sm:$0xff] %v3089
        %3177 = vst [vmem:[%s3170 + $0x49] sm:$0xff] %v3090
        %3178 = vst [vmem:[%s3170 + $0x51] sm:$0xff] %v3091
        %3179 = vst [vmem:[%s3170 + $0x61] sm:$0xff] %v3092
        %3180 = vst [vmem:[%s3170 + $0x69] sm:$0xff] %v3093
        %3181 = vst [vmem:[%s3170 + $0x79] sm:$0xff] %v3094
        %3182 = vst [vmem:[%s3170 + $0x81] sm:$0xff] %v3095
        %3183 = vst [vmem:[%s3170 + $0x91] sm:$0xff] %v3096
        %3184 = vst [vmem:[%s3170 + $0x99] sm:$0xff] %v3097
        %3185 = vst [vmem:[%s3170 + $0xa9] sm:$0xff] %v3098
        %3186 = vst [vmem:[%s3170 + $0xb1] sm:$0xff] %v3099
        %3187 = vst [vmem:[%s3170 + $0xc1] sm:$0xff] %v3100
        %3188 = vst [vmem:[%s3170 + $0xc9] sm:$0xff] %v3101
        %3189 = vst [vmem:[%s3170 + $0xd9] sm:$0xff] %v3102
        %3190 = vst [vmem:[%s3170 + $0xe1] sm:$0xff] %v3103
        %3191 = vst [vmem:[%s3170 + $0xf1] sm:$0xff] %v3104
        %3192 = vst [vmem:[%s3170 + $0xf9] sm:$0xff] %v3105
        %3193 = vst [vmem:[%s3170 + $0x109] sm:$0xff] %v3106
        %3194 = vst [vmem:[%s3170 + $0x111] sm:$0xff] %v3107
        %3195 = vst [vmem:[%s3170 + $0x121] sm:$0xff] %v3108
        %3196 = vst [vmem:[%s3170 + $0x129] sm:$0xff] %v3109
        %3197 = vst [vmem:[%s3170 + $0x139] sm:$0xff] %v3110
        %3198 = vst [vmem:[%s3170 + $0x141] sm:$0xff] %v3111
        %3199 = vst [vmem:[%s3170 + $0x151] sm:$0xff] %v3112
        %3200 = vst [vmem:[%s3170 + $0x159] sm:$0xff] %v3113
        %3201 = vst [vmem:[%s3170 + $0x169] sm:$0xff] %v3114
        %3202 = vst [vmem:[%s3170 + $0x171] sm:$0xff] %v3115
        %v3203 = vld [vmem:[#allocation2] sm:$0xff]
        %v3204 = vld [vmem:[#allocation2 + $0x8] sm:$0xff]
        %v3205 = vld [vmem:[#allocation2 + $0x10] sm:$0x3]
        %v3206 = vld [vmem:[#allocation2 + $0x18] sm:$0xff]
        %v3207 = vld [vmem:[#allocation2 + $0x20] sm:$0xff]
        %v3208 = vld [vmem:[#allocation2 + $0x28] sm:$0x3]
        %v3209 = vld [vmem:[#allocation2 + $0x30] sm:$0xff]
        %v3210 = vld [vmem:[#allocation2 + $0x38] sm:$0xff]
        %v3211 = vld [vmem:[#allocation2 + $0x40] sm:$0x3]
        %v3212 = vld [vmem:[#allocation2 + $0x48] sm:$0xff]
        %v3213 = vld [vmem:[#allocation2 + $0x50] sm:$0xff]
        %v3214 = vld [vmem:[#allocation2 + $0x58] sm:$0x3]
        %v3215 = vld [vmem:[#allocation2 + $0x60] sm:$0xff]
        %v3216 = vld [vmem:[#allocation2 + $0x68] sm:$0xff]
        %v3217 = vld [vmem:[#allocation2 + $0x70] sm:$0x3]
        %v3218 = vld [vmem:[#allocation2 + $0x78] sm:$0xff]
        %v3219 = vld [vmem:[#allocation2 + $0x80] sm:$0xff]
        %v3220 = vld [vmem:[#allocation2 + $0x88] sm:$0x3]
        %v3221 = vld [vmem:[#allocation2 + $0x90] sm:$0xff]
        %v3222 = vld [vmem:[#allocation2 + $0x98] sm:$0xff]
        %v3223 = vld [vmem:[#allocation2 + $0xa0] sm:$0x3]
        %v3224 = vld [vmem:[#allocation2 + $0xa8] sm:$0xff]
        %v3225 = vld [vmem:[#allocation2 + $0xb0] sm:$0xff]
        %v3226 = vld [vmem:[#allocation2 + $0xb8] sm:$0x3]
        %v3227 = vld [vmem:[#allocation2 + $0xc0] sm:$0xff]
        %v3228 = vld [vmem:[#allocation2 + $0xc8] sm:$0xff]
        %v3229 = vld [vmem:[#allocation2 + $0xd0] sm:$0x3]
        %v3230 = vld [vmem:[#allocation2 + $0xd8] sm:$0xff]
        %v3231 = vld [vmem:[#allocation2 + $0xe0] sm:$0xff]
        %v3232 = vld [vmem:[#allocation2 + $0xe8] sm:$0x3]
        %v3233 = vld [vmem:[#allocation2 + $0xf0] sm:$0xff]
        %v3234 = vld [vmem:[#allocation2 + $0xf8] sm:$0xff]
        %v3235 = vld [vmem:[#allocation2 + $0x100] sm:$0x3]
        %v3236 = vld [vmem:[#allocation2 + $0x108] sm:$0xff]
        %v3237 = vld [vmem:[#allocation2 + $0x110] sm:$0xff]
        %v3238 = vld [vmem:[#allocation2 + $0x118] sm:$0x3]
        %v3239 = vld [vmem:[#allocation2 + $0x120] sm:$0xff]
        %v3240 = vld [vmem:[#allocation2 + $0x128] sm:$0xff]
        %v3241 = vld [vmem:[#allocation2 + $0x130] sm:$0x3]
        %v3242 = vld [vmem:[#allocation2 + $0x138] sm:$0xff]
        %v3243 = vld [vmem:[#allocation2 + $0x140] sm:$0xff]
        %v3244 = vld [vmem:[#allocation2 + $0x148] sm:$0x3]
        %v3245 = vld [vmem:[#allocation2 + $0x150] sm:$0xff]
        %v3246 = vld [vmem:[#allocation2 + $0x158] sm:$0xff]
        %v3247 = vld [vmem:[#allocation2 + $0x160] sm:$0x3]
        %v3248 = vld [vmem:[#allocation2 + $0x168] sm:$0xff]
        %v3249 = vld [vmem:[#allocation2 + $0x170] sm:$0xff]
        %v3250 = vld [vmem:[#allocation2 + $0x178] sm:$0x3]
        %v3251 = vld [vmem:[#allocation2 + $0x180] sm:$0xff]
        %v3252 = vld [vmem:[#allocation2 + $0x188] sm:$0xff]
        %v3253 = vld [vmem:[#allocation2 + $0x190] sm:$0x3]
        %v3254 = vld [vmem:[#allocation2 + $0x198] sm:$0xff]
        %v3255 = vld [vmem:[#allocation2 + $0x1a0] sm:$0xff]
        %v3256 = vld [vmem:[#allocation2 + $0x1a8] sm:$0x3]
        %v3257 = vpack.c.bf16 %v3204, %v3203
        %v3258 = vpack.c.bf16 %v3205, %v3205
        %v3259 = vpack.c.bf16 %v3207, %v3206
        %v3260 = vpack.c.bf16 %v3208, %v3208
        %v3261 = vpack.c.bf16 %v3210, %v3209
        %v3262 = vpack.c.bf16 %v3211, %v3211
        %v3263 = vpack.c.bf16 %v3213, %v3212
        %v3264 = vpack.c.bf16 %v3214, %v3214
        %v3265 = vpack.c.bf16 %v3216, %v3215
        %v3266 = vpack.c.bf16 %v3217, %v3217
        %v3267 = vpack.c.bf16 %v3219, %v3218
        %v3268 = vpack.c.bf16 %v3220, %v3220
        %v3269 = vpack.c.bf16 %v3222, %v3221
        %v3270 = vpack.c.bf16 %v3223, %v3223
        %v3271 = vpack.c.bf16 %v3225, %v3224
        %v3272 = vpack.c.bf16 %v3226, %v3226
        %v3273 = vpack.c.bf16 %v3228, %v3227
        %v3274 = vpack.c.bf16 %v3229, %v3229
        %v3275 = vpack.c.bf16 %v3231, %v3230
        %v3276 = vpack.c.bf16 %v3232, %v3232
        %v3277 = vpack.c.bf16 %v3234, %v3233
        %v3278 = vpack.c.bf16 %v3235, %v3235
        %v3279 = vpack.c.bf16 %v3237, %v3236
        %v3280 = vpack.c.bf16 %v3238, %v3238
        %v3281 = vpack.c.bf16 %v3240, %v3239
        %v3282 = vpack.c.bf16 %v3241, %v3241
        %v3283 = vpack.c.bf16 %v3243, %v3242
        %v3284 = vpack.c.bf16 %v3244, %v3244
        %v3285 = vpack.c.bf16 %v3246, %v3245
        %v3286 = vpack.c.bf16 %v3247, %v3247
        %v3287 = vpack.c.bf16 %v3249, %v3248
        %v3288 = vpack.c.bf16 %v3250, %v3250
        %v3289 = vpack.c.bf16 %v3252, %v3251
        %v3290 = vpack.c.bf16 %v3253, %v3253
        %v3291 = vpack.c.bf16 %v3255, %v3254
        %v3292 = vpack.c.bf16 %v3256, %v3256
        %v3293 = vld [vmem:[#allocation6] sm:$0xf]
        %v3294 = vld [vmem:[#allocation6 + $0x4] sm:$0xf]
        %v3295 = vld [vmem:[#allocation6 + $0x8] sm:$0xf]
        %v3296 = vld [vmem:[#allocation6 + $0xc] sm:$0xf]
        %v3297 = vld [vmem:[#allocation6 + $0x10] sm:$0xf]
        %v3298 = vld [vmem:[#allocation6 + $0x14] sm:$0xf]
        %v3299 = vld [vmem:[#allocation6 + $0x18] sm:$0xf]
        %v3300 = vld [vmem:[#allocation6 + $0x1c] sm:$0xf]
        %v3301 = vld [vmem:[#allocation6 + $0x20] sm:$0xf]
        %v3302 = vld [vmem:[#allocation6 + $0x24] sm:$0xf]
        %v3303 = vld [vmem:[#allocation6 + $0x28] sm:$0xf]
        %v3304 = vld [vmem:[#allocation6 + $0x2c] sm:$0xf]
        %v3305 = vld [vmem:[#allocation6 + $0x30] sm:$0xf]
        %v3306 = vld [vmem:[#allocation6 + $0x34] sm:$0xf]
        %v3307 = vld [vmem:[#allocation6 + $0x38] sm:$0xf]
        %v3308 = vld [vmem:[#allocation6 + $0x3c] sm:$0xf]
        %vm3309 = vsmask.f32 7424
        %v3311 = vshrl.u32 %v3257, 16
        %v3313 = vshll.u32 %v3257, 16
        %v3315 = vrot.slane %v3313, 1
        %v3316 = vor.u32 %v3311, %v3315
        %v3318 = vshll.u32 %v3258, 16
        %v3320 = vrot.slane %v3318, 1
        %v3321 = vsel %vm3309, %v3316, %v3320
        %v3323 = vshrl.u32 %v3259, 16
        %v3325 = vshll.u32 %v3259, 16
        %v3327 = vrot.slane %v3325, 1
        %v3328 = vor.u32 %v3323, %v3327
        %v3330 = vshll.u32 %v3260, 16
        %v3332 = vrot.slane %v3330, 1
        %v3333 = vsel %vm3309, %v3328, %v3332
        %v3335 = vshrl.u32 %v3261, 16
        %v3337 = vshll.u32 %v3261, 16
        %v3339 = vrot.slane %v3337, 1
        %v3340 = vor.u32 %v3335, %v3339
        %v3342 = vshll.u32 %v3262, 16
        %v3344 = vrot.slane %v3342, 1
        %v3345 = vsel %vm3309, %v3340, %v3344
        %v3347 = vshrl.u32 %v3263, 16
        %v3349 = vshll.u32 %v3263, 16
        %v3351 = vrot.slane %v3349, 1
        %v3352 = vor.u32 %v3347, %v3351
        %v3354 = vshll.u32 %v3264, 16
        %v3356 = vrot.slane %v3354, 1
        %v3357 = vsel %vm3309, %v3352, %v3356
        %v3359 = vshrl.u32 %v3265, 16
        %v3361 = vshll.u32 %v3265, 16
        %v3363 = vrot.slane %v3361, 1
        %v3364 = vor.u32 %v3359, %v3363
        %v3366 = vshll.u32 %v3266, 16
        %v3368 = vrot.slane %v3366, 1
        %v3369 = vsel %vm3309, %v3364, %v3368
        %v3371 = vshrl.u32 %v3267, 16
        %v3373 = vshll.u32 %v3267, 16
        %v3375 = vrot.slane %v3373, 1
        %v3376 = vor.u32 %v3371, %v3375
        %v3378 = vshll.u32 %v3268, 16
        %v3380 = vrot.slane %v3378, 1
        %v3381 = vsel %vm3309, %v3376, %v3380
        %v3383 = vshrl.u32 %v3269, 16
        %v3385 = vshll.u32 %v3269, 16
        %v3387 = vrot.slane %v3385, 1
        %v3388 = vor.u32 %v3383, %v3387
        %v3390 = vshll.u32 %v3270, 16
        %v3392 = vrot.slane %v3390, 1
        %v3393 = vsel %vm3309, %v3388, %v3392
        %v3395 = vshrl.u32 %v3271, 16
        %v3397 = vshll.u32 %v3271, 16
        %v3399 = vrot.slane %v3397, 1
        %v3400 = vor.u32 %v3395, %v3399
        %v3402 = vshll.u32 %v3272, 16
        %v3404 = vrot.slane %v3402, 1
        %v3405 = vsel %vm3309, %v3400, %v3404
        %v3407 = vshrl.u32 %v3273, 16
        %v3409 = vshll.u32 %v3273, 16
        %v3411 = vrot.slane %v3409, 1
        %v3412 = vor.u32 %v3407, %v3411
        %v3414 = vshll.u32 %v3274, 16
        %v3416 = vrot.slane %v3414, 1
        %v3417 = vsel %vm3309, %v3412, %v3416
        %v3419 = vshrl.u32 %v3275, 16
        %v3421 = vshll.u32 %v3275, 16
        %v3423 = vrot.slane %v3421, 1
        %v3424 = vor.u32 %v3419, %v3423
        %v3426 = vshll.u32 %v3276, 16
        %v3428 = vrot.slane %v3426, 1
        %v3429 = vsel %vm3309, %v3424, %v3428
        %v3431 = vshrl.u32 %v3277, 16
        %v3433 = vshll.u32 %v3277, 16
        %v3435 = vrot.slane %v3433, 1
        %v3436 = vor.u32 %v3431, %v3435
        %v3438 = vshll.u32 %v3278, 16
        %v3440 = vrot.slane %v3438, 1
        %v3441 = vsel %vm3309, %v3436, %v3440
        %v3443 = vshrl.u32 %v3279, 16
        %v3445 = vshll.u32 %v3279, 16
        %v3447 = vrot.slane %v3445, 1
        %v3448 = vor.u32 %v3443, %v3447
        %v3450 = vshll.u32 %v3280, 16
        %v3452 = vrot.slane %v3450, 1
        %v3453 = vsel %vm3309, %v3448, %v3452
        %v3455 = vshrl.u32 %v3281, 16
        %v3457 = vshll.u32 %v3281, 16
        %v3459 = vrot.slane %v3457, 1
        %v3460 = vor.u32 %v3455, %v3459
        %v3462 = vshll.u32 %v3282, 16
        %v3464 = vrot.slane %v3462, 1
        %v3465 = vsel %vm3309, %v3460, %v3464
        %v3467 = vshrl.u32 %v3283, 16
        %v3469 = vshll.u32 %v3283, 16
        %v3471 = vrot.slane %v3469, 1
        %v3472 = vor.u32 %v3467, %v3471
        %v3474 = vshll.u32 %v3284, 16
        %v3476 = vrot.slane %v3474, 1
        %v3477 = vsel %vm3309, %v3472, %v3476
        %v3479 = vshrl.u32 %v3285, 16
        %v3481 = vshll.u32 %v3285, 16
        %v3483 = vrot.slane %v3481, 1
        %v3484 = vor.u32 %v3479, %v3483
        %v3486 = vshll.u32 %v3286, 16
        %v3488 = vrot.slane %v3486, 1
        %v3489 = vsel %vm3309, %v3484, %v3488
        %v3491 = vshrl.u32 %v3287, 16
        %v3493 = vshll.u32 %v3287, 16
        %v3495 = vrot.slane %v3493, 1
        %v3496 = vor.u32 %v3491, %v3495
        %v3498 = vshll.u32 %v3288, 16
        %v3500 = vrot.slane %v3498, 1
        %v3501 = vsel %vm3309, %v3496, %v3500
        %s3518 = scalar_lea.vmem [#allocation6], 64
        %v3519 = vld [vmem:[%s3518] sm:$0xf]
        %v3520 = vld [vmem:[%s3518 + $0x4] sm:$0xf]
        %v3521 = vld [vmem:[%s3518 + $0x8] sm:$0xf]
        %v3522 = vld [vmem:[%s3518 + $0xc] sm:$0xf]
        %v3523 = vld [vmem:[%s3518 + $0x10] sm:$0xf]
        %v3524 = vld [vmem:[%s3518 + $0x14] sm:$0xf]
        %v3525 = vld [vmem:[%s3518 + $0x18] sm:$0xf]
        %v3526 = vld [vmem:[%s3518 + $0x1c] sm:$0xf]
        %v3527 = vld [vmem:[%s3518 + $0x20] sm:$0xf]
        %v3528 = vld [vmem:[%s3518 + $0x24] sm:$0xf]
        %v3529 = vld [vmem:[%s3518 + $0x28] sm:$0xf]
        %v3530 = vld [vmem:[%s3518 + $0x2c] sm:$0xf]
        %v3531 = vld [vmem:[%s3518 + $0x30] sm:$0xf]
        %v3532 = vld [vmem:[%s3518 + $0x34] sm:$0xf]
        %v3533 = vld [vmem:[%s3518 + $0x38] sm:$0xf]
        %v3534 = vld [vmem:[%s3518 + $0x3c] sm:$0xf]
        %v3551 = vunpack.c.l.b16 %v3519
        %v3552 = vunpack.c.l.b16 %v3520
        %v3553 = vunpack.c.l.b16 %v3521
        %v3554 = vunpack.c.l.b16 %v3522
        %v3555 = vunpack.c.l.b16 %v3523
        %v3556 = vunpack.c.l.b16 %v3524
        %v3557 = vunpack.c.l.b16 %v3525
        %v3558 = vunpack.c.l.b16 %v3526
        %v3559 = vunpack.c.l.b16 %v3527
        %v3560 = vunpack.c.l.b16 %v3528
        %v3561 = vunpack.c.l.b16 %v3529
        %v3562 = vunpack.c.l.b16 %v3530
        %v3563 = vunpack.c.l.b16 %v3531
        %v3564 = vunpack.c.l.b16 %v3532
        %v3565 = vunpack.c.l.b16 %v3533
        %v3566 = vunpack.c.l.b16 %v3534
        %v3567 = vpack.c.b16 %v3552, %v3551
        %v3568 = vpack.c.b16 %v3554, %v3553
        %v3569 = vpack.c.b16 %v3556, %v3555
        %v3570 = vpack.c.b16 %v3558, %v3557
        %v3571 = vpack.c.b16 %v3560, %v3559
        %v3572 = vpack.c.b16 %v3562, %v3561
        %v3573 = vpack.c.b16 %v3564, %v3563
        %v3574 = vpack.c.b16 %v3566, %v3565
        %3583 = vmatprep.subr.bf16.mxu0 0
        %3584 = vmatpush1.bf16.msra.mxu0 %v3567
        %3585 = vmatprep.subr.bf16.mxu0 0
        %3586 = vmatpush1.bf16.msra.mxu0 %v3568
        %3587 = vmatprep.subr.bf16.mxu0 0
        %3588 = vmatpush1.bf16.msra.mxu0 %v3569
        %3589 = vmatprep.subr.bf16.mxu0 0
        %3590 = vmatpush1.bf16.msra.mxu0 %v3570
        %3591 = vmatprep.subr.bf16.mxu0 0
        %3592 = vmatpush1.bf16.msra.mxu0 %v3571
        %3593 = vmatprep.subr.bf16.mxu0 0
        %3594 = vmatpush1.bf16.msra.mxu0 %v3572
        %3595 = vmatprep.subr.bf16.mxu0 0
        %3596 = vmatpush1.bf16.msra.mxu0 %v3573
        %3597 = vmatprep.subr.bf16.mxu0 0
        %3598 = vmatpush1.bf16.msra.mxu0 %v3574
        %3599 = vmatprep.subr.bf16.mxu0 0
        %3600 = vmatpush1.bf16.msra.mxu0 0
        %3601 = vmatprep.subr.bf16.mxu0 0
        %3602 = vmatpush1.bf16.msra.mxu0 0
        %3603 = vmatprep.subr.bf16.mxu0 0
        %3604 = vmatpush1.bf16.msra.mxu0 0
        %3605 = vmatprep.subr.bf16.mxu0 0
        %3606 = vmatpush1.bf16.msra.mxu0 0
        %3607 = vmatprep.subr.bf16.mxu0 0
        %3608 = vmatpush1.bf16.msra.mxu0 0
        %3609 = vmatprep.subr.bf16.mxu0 0
        %3610 = vmatpush1.bf16.msra.mxu0 0
        %3611 = vmatprep.subr.bf16.mxu0 0
        %3612 = vmatpush1.bf16.msra.mxu0 0
        %3613 = vmatprep.subr.bf16.mxu0 0
        %3614 = vmatpush1.bf16.msra.mxu0 0
        %3615 = vmatprep.mubr.bf16.mxu0 0
        %3616 = vmatmul.mubr.bf16.gmra.mrb[0].mxu0 %v3321
        %v3617 = vpop.f32.mrb[0].mxu0
        %v3618 = vadd.f32 0.0, %v3617
        %v3619 = vpop.f32.mrb[0].mxu0
        %v3620 = vpop.f32.mrb[0].mxu0
        %v3621 = vadd.f32 0.0, %v3620
        %v3622 = vpop.f32.mrb[0].mxu0
        %3623 = vmatprep.mubr.bf16.mxu0 0
        %3624 = vmatmul.mubr.bf16.gmra.mrb[0].mxu0 %v3333
        %v3625 = vpop.f32.mrb[0].mxu0
        %v3626 = vadd.f32 0.0, %v3625
        %v3627 = vpop.f32.mrb[0].mxu0
        %v3628 = vpop.f32.mrb[0].mxu0
        %v3629 = vadd.f32 0.0, %v3628
        %v3630 = vpop.f32.mrb[0].mxu0
        %3631 = vmatprep.mubr.bf16.mxu0 0
        %3632 = vmatmul.mubr.bf16.gmra.mrb[0].mxu0 %v3345
        %v3633 = vpop.f32.mrb[0].mxu0
        %v3634 = vadd.f32 0.0, %v3633
        %v3635 = vpop.f32.mrb[0].mxu0
        %v3636 = vpop.f32.mrb[0].mxu0
        %v3637 = vadd.f32 0.0, %v3636
        %v3638 = vpop.f32.mrb[0].mxu0
        %3639 = vmatprep.mubr.bf16.mxu0 0
        %3640 = vmatmul.mubr.bf16.gmra.mrb[0].mxu0 %v3357
        %v3641 = vpop.f32.mrb[0].mxu0
        %v3642 = vadd.f32 0.0, %v3641
        %v3643 = vpop.f32.mrb[0].mxu0
        %v3644 = vpop.f32.mrb[0].mxu0
        %v3645 = vadd.f32 0.0, %v3644
        %v3646 = vpop.f32.mrb[0].mxu0
        %3647 = vmatprep.mubr.bf16.mxu0 0
        %3648 = vmatmul.mubr.bf16.gmra.mrb[0].mxu0 %v3369
        %v3649 = vpop.f32.mrb[0].mxu0
        %v3650 = vadd.f32 0.0, %v3649
        %v3651 = vpop.f32.mrb[0].mxu0
        %v3652 = vpop.f32.mrb[0].mxu0
        %v3653 = vadd.f32 0.0, %v3652
        %v3654 = vpop.f32.mrb[0].mxu0
        %3655 = vmatprep.mubr.bf16.mxu0 0
        %3656 = vmatmul.mubr.bf16.gmra.mrb[0].mxu0 %v3381
        %v3657 = vpop.f32.mrb[0].mxu0
        %v3658 = vadd.f32 0.0, %v3657
        %v3659 = vpop.f32.mrb[0].mxu0
        %v3660 = vpop.f32.mrb[0].mxu0
        %v3661 = vadd.f32 0.0, %v3660
        %v3662 = vpop.f32.mrb[0].mxu0
        %3663 = vmatprep.mubr.bf16.mxu0 0
        %3664 = vmatmul.mubr.bf16.gmra.mrb[0].mxu0 %v3393
        %v3665 = vpop.f32.mrb[0].mxu0
        %v3666 = vadd.f32 0.0, %v3665
        %v3667 = vpop.f32.mrb[0].mxu0
        %v3668 = vpop.f32.mrb[0].mxu0
        %v3669 = vadd.f32 0.0, %v3668
        %v3670 = vpop.f32.mrb[0].mxu0
        %3671 = vmatprep.mubr.bf16.mxu0 0
        %3672 = vmatmul.mubr.bf16.gmra.mrb[0].mxu0 %v3405
        %v3673 = vpop.f32.mrb[0].mxu0
        %v3674 = vadd.f32 0.0, %v3673
        %v3675 = vpop.f32.mrb[0].mxu0
        %v3676 = vpop.f32.mrb[0].mxu0
        %v3677 = vadd.f32 0.0, %v3676
        %v3678 = vpop.f32.mrb[0].mxu0
        %3679 = vmatprep.mubr.bf16.mxu0 0
        %3680 = vmatmul.mubr.bf16.gmra.mrb[0].mxu0 %v3417
        %v3681 = vpop.f32.mrb[0].mxu0
        %v3682 = vadd.f32 0.0, %v3681
        %v3683 = vpop.f32.mrb[0].mxu0
        %v3684 = vpop.f32.mrb[0].mxu0
        %v3685 = vadd.f32 0.0, %v3684
        %v3686 = vpop.f32.mrb[0].mxu0
        %3687 = vmatprep.mubr.bf16.mxu0 0
        %3688 = vmatmul.mubr.bf16.gmra.mrb[0].mxu0 %v3429
        %v3689 = vpop.f32.mrb[0].mxu0
        %v3690 = vadd.f32 0.0, %v3689
        %v3691 = vpop.f32.mrb[0].mxu0
        %v3692 = vpop.f32.mrb[0].mxu0
        %v3693 = vadd.f32 0.0, %v3692
        %v3694 = vpop.f32.mrb[0].mxu0
        %3695 = vmatprep.mubr.bf16.mxu0 0
        %3696 = vmatmul.mubr.bf16.gmra.mrb[0].mxu0 %v3441
        %v3697 = vpop.f32.mrb[0].mxu0
        %v3698 = vadd.f32 0.0, %v3697
        %v3699 = vpop.f32.mrb[0].mxu0
        %v3700 = vpop.f32.mrb[0].mxu0
        %v3701 = vadd.f32 0.0, %v3700
        %v3702 = vpop.f32.mrb[0].mxu0
        %3703 = vmatprep.mubr.bf16.mxu0 0
        %3704 = vmatmul.mubr.bf16.gmra.mrb[0].mxu0 %v3453
        %v3705 = vpop.f32.mrb[0].mxu0
        %v3706 = vadd.f32 0.0, %v3705
        %v3707 = vpop.f32.mrb[0].mxu0
        %v3708 = vpop.f32.mrb[0].mxu0
        %v3709 = vadd.f32 0.0, %v3708
        %v3710 = vpop.f32.mrb[0].mxu0
        %3711 = vmatprep.mubr.bf16.mxu0 0
        %3712 = vmatmul.mubr.bf16.gmra.mrb[0].mxu0 %v3465
        %v3713 = vpop.f32.mrb[0].mxu0
        %v3714 = vadd.f32 0.0, %v3713
        %v3715 = vpop.f32.mrb[0].mxu0
        %v3716 = vpop.f32.mrb[0].mxu0
        %v3717 = vadd.f32 0.0, %v3716
        %v3718 = vpop.f32.mrb[0].mxu0
        %3719 = vmatprep.mubr.bf16.mxu0 0
        %3720 = vmatmul.mubr.bf16.gmra.mrb[0].mxu0 %v3477
        %v3721 = vpop.f32.mrb[0].mxu0
        %v3722 = vadd.f32 0.0, %v3721
        %v3723 = vpop.f32.mrb[0].mxu0
        %v3724 = vpop.f32.mrb[0].mxu0
        %v3725 = vadd.f32 0.0, %v3724
        %v3726 = vpop.f32.mrb[0].mxu0
        %3727 = vmatprep.mubr.bf16.mxu0 0
        %3728 = vmatmul.mubr.bf16.gmra.mrb[0].mxu0 %v3489
        %v3729 = vpop.f32.mrb[0].mxu0
        %v3730 = vadd.f32 0.0, %v3729
        %v3731 = vpop.f32.mrb[0].mxu0
        %v3732 = vpop.f32.mrb[0].mxu0
        %v3733 = vadd.f32 0.0, %v3732
        %v3734 = vpop.f32.mrb[0].mxu0
        %3735 = vmatprep.mubr.bf16.mxu0 0
        %3736 = vmatmul.mubr.bf16.gmra.mrb[0].mxu0 %v3501
        %v3737 = vpop.f32.mrb[0].mxu0
        %v3738 = vadd.f32 0.0, %v3737
        %v3739 = vpop.f32.mrb[0].mxu0
        %v3740 = vpop.f32.mrb[0].mxu0
        %v3741 = vadd.f32 0.0, %v3740
        %v3742 = vpop.f32.mrb[0].mxu0
        %3743 = vdwg.mxu0
        %v3760 = vunpack.c.l.b16 %v3293
        %v3761 = vunpack.c.l.b16 %v3294
        %v3762 = vunpack.c.l.b16 %v3295
        %v3763 = vunpack.c.l.b16 %v3296
        %v3764 = vunpack.c.l.b16 %v3297
        %v3765 = vunpack.c.l.b16 %v3298
        %v3766 = vunpack.c.l.b16 %v3299
        %v3767 = vunpack.c.l.b16 %v3300
        %v3768 = vunpack.c.l.b16 %v3301
        %v3769 = vunpack.c.l.b16 %v3302
        %v3770 = vunpack.c.l.b16 %v3303
        %v3771 = vunpack.c.l.b16 %v3304
        %v3772 = vunpack.c.l.b16 %v3305
        %v3773 = vunpack.c.l.b16 %v3306
        %v3774 = vunpack.c.l.b16 %v3307
        %v3775 = vunpack.c.l.b16 %v3308
        %v3776 = vpack.c.b16 %v3761, %v3760
        %v3777 = vpack.c.b16 %v3763, %v3762
        %v3778 = vpack.c.b16 %v3765, %v3764
        %v3779 = vpack.c.b16 %v3767, %v3766
        %v3780 = vpack.c.b16 %v3769, %v3768
        %v3781 = vpack.c.b16 %v3771, %v3770
        %v3782 = vpack.c.b16 %v3773, %v3772
        %v3783 = vpack.c.b16 %v3775, %v3774
        %3792 = vmatprep.subr.bf16.mxu0 0
        %3793 = vmatpush1.bf16.msra.mxu0 %v3776
        %3794 = vmatprep.subr.bf16.mxu0 0
        %3795 = vmatpush1.bf16.msra.mxu0 %v3777
        %3796 = vmatprep.subr.bf16.mxu0 0
        %3797 = vmatpush1.bf16.msra.mxu0 %v3778
        %3798 = vmatprep.subr.bf16.mxu0 0
        %3799 = vmatpush1.bf16.msra.mxu0 %v3779
        %3800 = vmatprep.subr.bf16.mxu0 0
        %3801 = vmatpush1.bf16.msra.mxu0 %v3780
        %3802 = vmatprep.subr.bf16.mxu0 0
        %3803 = vmatpush1.bf16.msra.mxu0 %v3781
        %3804 = vmatprep.subr.bf16.mxu0 0
        %3805 = vmatpush1.bf16.msra.mxu0 %v3782
        %3806 = vmatprep.subr.bf16.mxu0 0
        %3807 = vmatpush1.bf16.msra.mxu0 %v3783
        %3808 = vmatprep.subr.bf16.mxu0 0
        %3809 = vmatpush1.bf16.msra.mxu0 0
        %3810 = vmatprep.subr.bf16.mxu0 0
        %3811 = vmatpush1.bf16.msra.mxu0 0
        %3812 = vmatprep.subr.bf16.mxu0 0
        %3813 = vmatpush1.bf16.msra.mxu0 0
        %3814 = vmatprep.subr.bf16.mxu0 0
        %3815 = vmatpush1.bf16.msra.mxu0 0
        %3816 = vmatprep.subr.bf16.mxu0 0
        %3817 = vmatpush1.bf16.msra.mxu0 0
        %3818 = vmatprep.subr.bf16.mxu0 0
        %3819 = vmatpush1.bf16.msra.mxu0 0
        %3820 = vmatprep.subr.bf16.mxu0 0
        %3821 = vmatpush1.bf16.msra.mxu0 0
        %3822 = vmatprep.subr.bf16.mxu0 0
        %3823 = vmatpush1.bf16.msra.mxu0 0
        %3824 = vmatprep.mubr.bf16.mxu0 0
        %3825 = vmatmul.mubr.bf16.gmra.mrb[0].mxu0 %v3257
        %v3826 = vpop.f32.mrb[0].mxu0
        %v3827 = vadd.f32 %v3618, %v3826
        %v3828 = vpop.f32.mrb[0].mxu0
        %v3829 = vpop.f32.mrb[0].mxu0
        %v3830 = vadd.f32 %v3621, %v3829
        %v3831 = vpop.f32.mrb[0].mxu0
        %3832 = vmatprep.mubr.bf16.mxu0 0
        %3833 = vmatmul.mubr.bf16.gmra.mrb[0].mxu0 %v3259
        %v3834 = vpop.f32.mrb[0].mxu0
        %v3835 = vadd.f32 %v3626, %v3834
        %v3836 = vpop.f32.mrb[0].mxu0
        %v3837 = vpop.f32.mrb[0].mxu0
        %v3838 = vadd.f32 %v3629, %v3837
        %v3839 = vpop.f32.mrb[0].mxu0
        %3840 = vmatprep.mubr.bf16.mxu0 0
        %3841 = vmatmul.mubr.bf16.gmra.mrb[0].mxu0 %v3261
        %v3842 = vpop.f32.mrb[0].mxu0
        %v3843 = vadd.f32 %v3634, %v3842
        %v3844 = vpop.f32.mrb[0].mxu0
        %v3845 = vpop.f32.mrb[0].mxu0
        %v3846 = vadd.f32 %v3637, %v3845
        %v3847 = vpop.f32.mrb[0].mxu0
        %3848 = vmatprep.mubr.bf16.mxu0 0
        %3849 = vmatmul.mubr.bf16.gmra.mrb[0].mxu0 %v3263
        %v3850 = vpop.f32.mrb[0].mxu0
        %v3851 = vadd.f32 %v3642, %v3850
        %v3852 = vpop.f32.mrb[0].mxu0
        %v3853 = vpop.f32.mrb[0].mxu0
        %v3854 = vadd.f32 %v3645, %v3853
        %v3855 = vpop.f32.mrb[0].mxu0
        %3856 = vmatprep.mubr.bf16.mxu0 0
        %3857 = vmatmul.mubr.bf16.gmra.mrb[0].mxu0 %v3265
        %v3858 = vpop.f32.mrb[0].mxu0
        %v3859 = vadd.f32 %v3650, %v3858
        %v3860 = vpop.f32.mrb[0].mxu0
        %v3861 = vpop.f32.mrb[0].mxu0
        %v3862 = vadd.f32 %v3653, %v3861
        %v3863 = vpop.f32.mrb[0].mxu0
        %3864 = vmatprep.mubr.bf16.mxu0 0
        %3865 = vmatmul.mubr.bf16.gmra.mrb[0].mxu0 %v3267
        %v3866 = vpop.f32.mrb[0].mxu0
        %v3867 = vadd.f32 %v3658, %v3866
        %v3868 = vpop.f32.mrb[0].mxu0
        %v3869 = vpop.f32.mrb[0].mxu0
        %v3870 = vadd.f32 %v3661, %v3869
        %v3871 = vpop.f32.mrb[0].mxu0
        %3872 = vmatprep.mubr.bf16.mxu0 0
        %3873 = vmatmul.mubr.bf16.gmra.mrb[0].mxu0 %v3269
        %v3874 = vpop.f32.mrb[0].mxu0
        %v3875 = vadd.f32 %v3666, %v3874
        %v3876 = vpop.f32.mrb[0].mxu0
        %v3877 = vpop.f32.mrb[0].mxu0
        %v3878 = vadd.f32 %v3669, %v3877
        %v3879 = vpop.f32.mrb[0].mxu0
        %3880 = vmatprep.mubr.bf16.mxu0 0
        %3881 = vmatmul.mubr.bf16.gmra.mrb[0].mxu0 %v3271
        %v3882 = vpop.f32.mrb[0].mxu0
        %v3883 = vadd.f32 %v3674, %v3882
        %v3884 = vpop.f32.mrb[0].mxu0
        %v3885 = vpop.f32.mrb[0].mxu0
        %v3886 = vadd.f32 %v3677, %v3885
        %v3887 = vpop.f32.mrb[0].mxu0
        %3888 = vmatprep.mubr.bf16.mxu0 0
        %3889 = vmatmul.mubr.bf16.gmra.mrb[0].mxu0 %v3273
        %v3890 = vpop.f32.mrb[0].mxu0
        %v3891 = vadd.f32 %v3682, %v3890
        %v3892 = vpop.f32.mrb[0].mxu0
        %v3893 = vpop.f32.mrb[0].mxu0
        %v3894 = vadd.f32 %v3685, %v3893
        %v3895 = vpop.f32.mrb[0].mxu0
        %3896 = vmatprep.mubr.bf16.mxu0 0
        %3897 = vmatmul.mubr.bf16.gmra.mrb[0].mxu0 %v3275
        %v3898 = vpop.f32.mrb[0].mxu0
        %v3899 = vadd.f32 %v3690, %v3898
        %v3900 = vpop.f32.mrb[0].mxu0
        %v3901 = vpop.f32.mrb[0].mxu0
        %v3902 = vadd.f32 %v3693, %v3901
        %v3903 = vpop.f32.mrb[0].mxu0
        %3904 = vmatprep.mubr.bf16.mxu0 0
        %3905 = vmatmul.mubr.bf16.gmra.mrb[0].mxu0 %v3277
        %v3906 = vpop.f32.mrb[0].mxu0
        %v3907 = vadd.f32 %v3698, %v3906
        %v3908 = vpop.f32.mrb[0].mxu0
        %v3909 = vpop.f32.mrb[0].mxu0
        %v3910 = vadd.f32 %v3701, %v3909
        %v3911 = vpop.f32.mrb[0].mxu0
        %3912 = vmatprep.mubr.bf16.mxu0 0
        %3913 = vmatmul.mubr.bf16.gmra.mrb[0].mxu0 %v3279
        %v3914 = vpop.f32.mrb[0].mxu0
        %v3915 = vadd.f32 %v3706, %v3914
        %v3916 = vpop.f32.mrb[0].mxu0
        %v3917 = vpop.f32.mrb[0].mxu0
        %v3918 = vadd.f32 %v3709, %v3917
        %v3919 = vpop.f32.mrb[0].mxu0
        %3920 = vmatprep.mubr.bf16.mxu0 0
        %3921 = vmatmul.mubr.bf16.gmra.mrb[0].mxu0 %v3281
        %v3922 = vpop.f32.mrb[0].mxu0
        %v3923 = vadd.f32 %v3714, %v3922
        %v3924 = vpop.f32.mrb[0].mxu0
        %v3925 = vpop.f32.mrb[0].mxu0
        %v3926 = vadd.f32 %v3717, %v3925
        %v3927 = vpop.f32.mrb[0].mxu0
        %3928 = vmatprep.mubr.bf16.mxu0 0
        %3929 = vmatmul.mubr.bf16.gmra.mrb[0].mxu0 %v3283
        %v3930 = vpop.f32.mrb[0].mxu0
        %v3931 = vadd.f32 %v3722, %v3930
        %v3932 = vpop.f32.mrb[0].mxu0
        %v3933 = vpop.f32.mrb[0].mxu0
        %v3934 = vadd.f32 %v3725, %v3933
        %v3935 = vpop.f32.mrb[0].mxu0
        %3936 = vmatprep.mubr.bf16.mxu0 0
        %3937 = vmatmul.mubr.bf16.gmra.mrb[0].mxu0 %v3285
        %v3938 = vpop.f32.mrb[0].mxu0
        %v3939 = vadd.f32 %v3730, %v3938
        %v3940 = vpop.f32.mrb[0].mxu0
        %v3941 = vpop.f32.mrb[0].mxu0
        %v3942 = vadd.f32 %v3733, %v3941
        %v3943 = vpop.f32.mrb[0].mxu0
        %3944 = vmatprep.mubr.bf16.mxu0 0
        %3945 = vmatmul.mubr.bf16.gmra.mrb[0].mxu0 %v3287
        %v3946 = vpop.f32.mrb[0].mxu0
        %v3947 = vadd.f32 %v3738, %v3946
        %v3948 = vpop.f32.mrb[0].mxu0
        %v3949 = vpop.f32.mrb[0].mxu0
        %v3950 = vadd.f32 %v3741, %v3949
        %v3951 = vpop.f32.mrb[0].mxu0
        %3952 = vdwg.mxu0
        %vm3985 = vcmask 1046528
        %v3986 = vrot.slane %v3257, 1
        %v3987 = vrot.slane %v3258, 1
        %v3988 = vsel %vm3985, %v3986, %v3987
        %v3989 = vrot.slane %v3259, 1
        %v3990 = vrot.slane %v3260, 1
        %v3991 = vsel %vm3985, %v3989, %v3990
        %v3992 = vrot.slane %v3261, 1
        %v3993 = vrot.slane %v3262, 1
        %v3994 = vsel %vm3985, %v3992, %v3993
        %v3995 = vrot.slane %v3263, 1
        %v3996 = vrot.slane %v3264, 1
        %v3997 = vsel %vm3985, %v3995, %v3996
        %v3998 = vrot.slane %v3265, 1
        %v3999 = vrot.slane %v3266, 1
        %v4000 = vsel %vm3985, %v3998, %v3999
        %v4001 = vrot.slane %v3267, 1
        %v4002 = vrot.slane %v3268, 1
        %v4003 = vsel %vm3985, %v4001, %v4002
        %v4004 = vrot.slane %v3269, 1
        %v4005 = vrot.slane %v3270, 1
        %v4006 = vsel %vm3985, %v4004, %v4005
        %v4007 = vrot.slane %v3271, 1
        %v4008 = vrot.slane %v3272, 1
        %v4009 = vsel %vm3985, %v4007, %v4008
        %v4010 = vrot.slane %v3273, 1
        %v4011 = vrot.slane %v3274, 1
        %v4012 = vsel %vm3985, %v4010, %v4011
        %v4013 = vrot.slane %v3275, 1
        %v4014 = vrot.slane %v3276, 1
        %v4015 = vsel %vm3985, %v4013, %v4014
        %v4016 = vrot.slane %v3277, 1
        %v4017 = vrot.slane %v3278, 1
        %v4018 = vsel %vm3985, %v4016, %v4017
        %v4019 = vrot.slane %v3279, 1
        %v4020 = vrot.slane %v3280, 1
        %v4021 = vsel %vm3985, %v4019, %v4020
        %v4022 = vrot.slane %v3281, 1
        %v4023 = vrot.slane %v3282, 1
        %v4024 = vsel %vm3985, %v4022, %v4023
        %v4025 = vrot.slane %v3283, 1
        %v4026 = vrot.slane %v3284, 1
        %v4027 = vsel %vm3985, %v4025, %v4026
        %v4028 = vrot.slane %v3285, 1
        %v4029 = vrot.slane %v3286, 1
        %v4030 = vsel %vm3985, %v4028, %v4029
        %v4031 = vrot.slane %v3287, 1
        %v4032 = vrot.slane %v3288, 1
        %v4033 = vsel %vm3985, %v4031, %v4032
        %s4050 = scalar_lea.vmem [#allocation6], 128
        %v4051 = vld [vmem:[%s4050] sm:$0xf]
        %v4052 = vld [vmem:[%s4050 + $0x4] sm:$0xf]
        %v4053 = vld [vmem:[%s4050 + $0x8] sm:$0xf]
        %v4054 = vld [vmem:[%s4050 + $0xc] sm:$0xf]
        %v4055 = vld [vmem:[%s4050 + $0x10] sm:$0xf]
        %v4056 = vld [vmem:[%s4050 + $0x14] sm:$0xf]
        %v4057 = vld [vmem:[%s4050 + $0x18] sm:$0xf]
        %v4058 = vld [vmem:[%s4050 + $0x1c] sm:$0xf]
        %v4059 = vld [vmem:[%s4050 + $0x20] sm:$0xf]
        %v4060 = vld [vmem:[%s4050 + $0x24] sm:$0xf]
        %v4061 = vld [vmem:[%s4050 + $0x28] sm:$0xf]
        %v4062 = vld [vmem:[%s4050 + $0x2c] sm:$0xf]
        %v4063 = vld [vmem:[%s4050 + $0x30] sm:$0xf]
        %v4064 = vld [vmem:[%s4050 + $0x34] sm:$0xf]
        %v4065 = vld [vmem:[%s4050 + $0x38] sm:$0xf]
        %v4066 = vld [vmem:[%s4050 + $0x3c] sm:$0xf]
        %v4083 = vunpack.c.l.b16 %v4051
        %v4084 = vunpack.c.l.b16 %v4052
        %v4085 = vunpack.c.l.b16 %v4053
        %v4086 = vunpack.c.l.b16 %v4054
        %v4087 = vunpack.c.l.b16 %v4055
        %v4088 = vunpack.c.l.b16 %v4056
        %v4089 = vunpack.c.l.b16 %v4057
        %v4090 = vunpack.c.l.b16 %v4058
        %v4091 = vunpack.c.l.b16 %v4059
        %v4092 = vunpack.c.l.b16 %v4060
        %v4093 = vunpack.c.l.b16 %v4061
        %v4094 = vunpack.c.l.b16 %v4062
        %v4095 = vunpack.c.l.b16 %v4063
        %v4096 = vunpack.c.l.b16 %v4064
        %v4097 = vunpack.c.l.b16 %v4065
        %v4098 = vunpack.c.l.b16 %v4066
        %v4099 = vpack.c.b16 %v4084, %v4083
        %v4100 = vpack.c.b16 %v4086, %v4085
        %v4101 = vpack.c.b16 %v4088, %v4087
        %v4102 = vpack.c.b16 %v4090, %v4089
        %v4103 = vpack.c.b16 %v4092, %v4091
        %v4104 = vpack.c.b16 %v4094, %v4093
        %v4105 = vpack.c.b16 %v4096, %v4095
        %v4106 = vpack.c.b16 %v4098, %v4097
        %4115 = vmatprep.subr.bf16.mxu0 0
        %4116 = vmatpush1.bf16.msra.mxu0 %v4099
        %4117 = vmatprep.subr.bf16.mxu0 0
        %4118 = vmatpush1.bf16.msra.mxu0 %v4100
        %4119 = vmatprep.subr.bf16.mxu0 0
        %4120 = vmatpush1.bf16.msra.mxu0 %v4101
        %4121 = vmatprep.subr.bf16.mxu0 0
        %4122 = vmatpush1.bf16.msra.mxu0 %v4102
        %4123 = vmatprep.subr.bf16.mxu0 0
        %4124 = vmatpush1.bf16.msra.mxu0 %v4103
        %4125 = vmatprep.subr.bf16.mxu0 0
        %4126 = vmatpush1.bf16.msra.mxu0 %v4104
        %4127 = vmatprep.subr.bf16.mxu0 0
        %4128 = vmatpush1.bf16.msra.mxu0 %v4105
        %4129 = vmatprep.subr.bf16.mxu0 0
        %4130 = vmatpush1.bf16.msra.mxu0 %v4106
        %4131 = vmatprep.subr.bf16.mxu0 0
        %4132 = vmatpush1.bf16.msra.mxu0 0
        %4133 = vmatprep.subr.bf16.mxu0 0
        %4134 = vmatpush1.bf16.msra.mxu0 0
        %4135 = vmatprep.subr.bf16.mxu0 0
        %4136 = vmatpush1.bf16.msra.mxu0 0
        %4137 = vmatprep.subr.bf16.mxu0 0
        %4138 = vmatpush1.bf16.msra.mxu0 0
        %4139 = vmatprep.subr.bf16.mxu0 0
        %4140 = vmatpush1.bf16.msra.mxu0 0
        %4141 = vmatprep.subr.bf16.mxu0 0
        %4142 = vmatpush1.bf16.msra.mxu0 0
        %4143 = vmatprep.subr.bf16.mxu0 0
        %4144 = vmatpush1.bf16.msra.mxu0 0
        %4145 = vmatprep.subr.bf16.mxu0 0
        %4146 = vmatpush1.bf16.msra.mxu0 0
        %4147 = vmatprep.mubr.bf16.mxu0 0
        %4148 = vmatmul.mubr.bf16.gmra.mrb[0].mxu0 %v3988
        %v4149 = vpop.f32.mrb[0].mxu0
        %v4150 = vadd.f32 0.0, %v4149
        %v4151 = vpop.f32.mrb[0].mxu0
        %v4152 = vpop.f32.mrb[0].mxu0
        %v4153 = vadd.f32 0.0, %v4152
        %v4154 = vpop.f32.mrb[0].mxu0
        %4155 = vmatprep.mubr.bf16.mxu0 0
        %4156 = vmatmul.mubr.bf16.gmra.mrb[0].mxu0 %v3991
        %v4157 = vpop.f32.mrb[0].mxu0
        %v4158 = vadd.f32 0.0, %v4157
        %v4159 = vpop.f32.mrb[0].mxu0
        %v4160 = vpop.f32.mrb[0].mxu0
        %v4161 = vadd.f32 0.0, %v4160
        %v4162 = vpop.f32.mrb[0].mxu0
        %4163 = vmatprep.mubr.bf16.mxu0 0
        %4164 = vmatmul.mubr.bf16.gmra.mrb[0].mxu0 %v3994
        %v4165 = vpop.f32.mrb[0].mxu0
        %v4166 = vadd.f32 0.0, %v4165
        %v4167 = vpop.f32.mrb[0].mxu0
        %v4168 = vpop.f32.mrb[0].mxu0
        %v4169 = vadd.f32 0.0, %v4168
        %v4170 = vpop.f32.mrb[0].mxu0
        %4171 = vmatprep.mubr.bf16.mxu0 0
        %4172 = vmatmul.mubr.bf16.gmra.mrb[0].mxu0 %v3997
        %v4173 = vpop.f32.mrb[0].mxu0
        %v4174 = vadd.f32 0.0, %v4173
        %v4175 = vpop.f32.mrb[0].mxu0
        %v4176 = vpop.f32.mrb[0].mxu0
        %v4177 = vadd.f32 0.0, %v4176
        %v4178 = vpop.f32.mrb[0].mxu0
        %4179 = vmatprep.mubr.bf16.mxu0 0
        %4180 = vmatmul.mubr.bf16.gmra.mrb[0].mxu0 %v4000
        %v4181 = vpop.f32.mrb[0].mxu0
        %v4182 = vadd.f32 0.0, %v4181
        %v4183 = vpop.f32.mrb[0].mxu0
        %v4184 = vpop.f32.mrb[0].mxu0
        %v4185 = vadd.f32 0.0, %v4184
        %v4186 = vpop.f32.mrb[0].mxu0
        %4187 = vmatprep.mubr.bf16.mxu0 0
        %4188 = vmatmul.mubr.bf16.gmra.mrb[0].mxu0 %v4003
        %v4189 = vpop.f32.mrb[0].mxu0
        %v4190 = vadd.f32 0.0, %v4189
        %v4191 = vpop.f32.mrb[0].mxu0
        %v4192 = vpop.f32.mrb[0].mxu0
        %v4193 = vadd.f32 0.0, %v4192
        %v4194 = vpop.f32.mrb[0].mxu0
        %4195 = vmatprep.mubr.bf16.mxu0 0
        %4196 = vmatmul.mubr.bf16.gmra.mrb[0].mxu0 %v4006
        %v4197 = vpop.f32.mrb[0].mxu0
        %v4198 = vadd.f32 0.0, %v4197
        %v4199 = vpop.f32.mrb[0].mxu0
        %v4200 = vpop.f32.mrb[0].mxu0
        %v4201 = vadd.f32 0.0, %v4200
        %v4202 = vpop.f32.mrb[0].mxu0
        %4203 = vmatprep.mubr.bf16.mxu0 0
        %4204 = vmatmul.mubr.bf16.gmra.mrb[0].mxu0 %v4009
        %v4205 = vpop.f32.mrb[0].mxu0
        %v4206 = vadd.f32 0.0, %v4205
        %v4207 = vpop.f32.mrb[0].mxu0
        %v4208 = vpop.f32.mrb[0].mxu0
        %v4209 = vadd.f32 0.0, %v4208
        %v4210 = vpop.f32.mrb[0].mxu0
        %4211 = vmatprep.mubr.bf16.mxu0 0
        %4212 = vmatmul.mubr.bf16.gmra.mrb[0].mxu0 %v4012
        %v4213 = vpop.f32.mrb[0].mxu0
        %v4214 = vadd.f32 0.0, %v4213
        %v4215 = vpop.f32.mrb[0].mxu0
        %v4216 = vpop.f32.mrb[0].mxu0
        %v4217 = vadd.f32 0.0, %v4216
        %v4218 = vpop.f32.mrb[0].mxu0
        %4219 = vmatprep.mubr.bf16.mxu0 0
        %4220 = vmatmul.mubr.bf16.gmra.mrb[0].mxu0 %v4015
        %v4221 = vpop.f32.mrb[0].mxu0
        %v4222 = vadd.f32 0.0, %v4221
        %v4223 = vpop.f32.mrb[0].mxu0
        %v4224 = vpop.f32.mrb[0].mxu0
        %v4225 = vadd.f32 0.0, %v4224
        %v4226 = vpop.f32.mrb[0].mxu0
        %4227 = vmatprep.mubr.bf16.mxu0 0
        %4228 = vmatmul.mubr.bf16.gmra.mrb[0].mxu0 %v4018
        %v4229 = vpop.f32.mrb[0].mxu0
        %v4230 = vadd.f32 0.0, %v4229
        %v4231 = vpop.f32.mrb[0].mxu0
        %v4232 = vpop.f32.mrb[0].mxu0
        %v4233 = vadd.f32 0.0, %v4232
        %v4234 = vpop.f32.mrb[0].mxu0
        %4235 = vmatprep.mubr.bf16.mxu0 0
        %4236 = vmatmul.mubr.bf16.gmra.mrb[0].mxu0 %v4021
        %v4237 = vpop.f32.mrb[0].mxu0
        %v4238 = vadd.f32 0.0, %v4237
        %v4239 = vpop.f32.mrb[0].mxu0
        %v4240 = vpop.f32.mrb[0].mxu0
        %v4241 = vadd.f32 0.0, %v4240
        %v4242 = vpop.f32.mrb[0].mxu0
        %4243 = vmatprep.mubr.bf16.mxu0 0
        %4244 = vmatmul.mubr.bf16.gmra.mrb[0].mxu0 %v4024
        %v4245 = vpop.f32.mrb[0].mxu0
        %v4246 = vadd.f32 0.0, %v4245
        %v4247 = vpop.f32.mrb[0].mxu0
        %v4248 = vpop.f32.mrb[0].mxu0
        %v4249 = vadd.f32 0.0, %v4248
        %v4250 = vpop.f32.mrb[0].mxu0
        %4251 = vmatprep.mubr.bf16.mxu0 0
        %4252 = vmatmul.mubr.bf16.gmra.mrb[0].mxu0 %v4027
        %v4253 = vpop.f32.mrb[0].mxu0
        %v4254 = vadd.f32 0.0, %v4253
        %v4255 = vpop.f32.mrb[0].mxu0
        %v4256 = vpop.f32.mrb[0].mxu0
        %v4257 = vadd.f32 0.0, %v4256
        %v4258 = vpop.f32.mrb[0].mxu0
        %4259 = vmatprep.mubr.bf16.mxu0 0
        %4260 = vmatmul.mubr.bf16.gmra.mrb[0].mxu0 %v4030
        %v4261 = vpop.f32.mrb[0].mxu0
        %v4262 = vadd.f32 0.0, %v4261
        %v4263 = vpop.f32.mrb[0].mxu0
        %v4264 = vpop.f32.mrb[0].mxu0
        %v4265 = vadd.f32 0.0, %v4264
        %v4266 = vpop.f32.mrb[0].mxu0
        %4267 = vmatprep.mubr.bf16.mxu0 0
        %4268 = vmatmul.mubr.bf16.gmra.mrb[0].mxu0 %v4033
        %v4269 = vpop.f32.mrb[0].mxu0
        %v4270 = vadd.f32 0.0, %v4269
        %v4271 = vpop.f32.mrb[0].mxu0
        %v4272 = vpop.f32.mrb[0].mxu0
        %v4273 = vadd.f32 0.0, %v4272
        %v4274 = vpop.f32.mrb[0].mxu0
        %4275 = vdwg.mxu0
        %v4276 = vadd.f32 %v3827, %v4150
        %v4277 = vadd.f32 %v3830, %v4153
        %v4278 = vadd.f32 %v3835, %v4158
        %v4279 = vadd.f32 %v3838, %v4161
        %v4280 = vadd.f32 %v3843, %v4166
        %v4281 = vadd.f32 %v3846, %v4169
        %v4282 = vadd.f32 %v3851, %v4174
        %v4283 = vadd.f32 %v3854, %v4177
        %v4284 = vadd.f32 %v3859, %v4182
        %v4285 = vadd.f32 %v3862, %v4185
        %v4286 = vadd.f32 %v3867, %v4190
        %v4287 = vadd.f32 %v3870, %v4193
        %v4288 = vadd.f32 %v3875, %v4198
        %v4289 = vadd.f32 %v3878, %v4201
        %v4290 = vadd.f32 %v3883, %v4206
        %v4291 = vadd.f32 %v3886, %v4209
        %v4292 = vadd.f32 %v3891, %v4214
        %v4293 = vadd.f32 %v3894, %v4217
        %v4294 = vadd.f32 %v3899, %v4222
        %v4295 = vadd.f32 %v3902, %v4225
        %v4296 = vadd.f32 %v3907, %v4230
        %v4297 = vadd.f32 %v3910, %v4233
        %v4298 = vadd.f32 %v3915, %v4238
        %v4299 = vadd.f32 %v3918, %v4241
        %v4300 = vadd.f32 %v3923, %v4246
        %v4301 = vadd.f32 %v3926, %v4249
        %v4302 = vadd.f32 %v3931, %v4254
        %v4303 = vadd.f32 %v3934, %v4257
        %v4304 = vadd.f32 %v3939, %v4262
        %v4305 = vadd.f32 %v3942, %v4265
        %v4306 = vadd.f32 %v3947, %v4270
        %v4307 = vadd.f32 %v3950, %v4273
        %s4308 = scalar_lea.vmem [#allocation6], 192
        %v4309 = vld [vmem:[%s4308] sm:$0xf]
        %v4310 = vld [vmem:[%s4308 + $0x4] sm:$0xf]
        %v4311 = vld [vmem:[%s4308 + $0x8] sm:$0xf]
        %v4312 = vld [vmem:[%s4308 + $0xc] sm:$0xf]
        %v4313 = vld [vmem:[%s4308 + $0x10] sm:$0xf]
        %v4314 = vld [vmem:[%s4308 + $0x14] sm:$0xf]
        %v4315 = vld [vmem:[%s4308 + $0x18] sm:$0xf]
        %v4316 = vld [vmem:[%s4308 + $0x1c] sm:$0xf]
        %v4317 = vld [vmem:[%s4308 + $0x20] sm:$0xf]
        %v4318 = vld [vmem:[%s4308 + $0x24] sm:$0xf]
        %v4319 = vld [vmem:[%s4308 + $0x28] sm:$0xf]
        %v4320 = vld [vmem:[%s4308 + $0x2c] sm:$0xf]
        %v4321 = vld [vmem:[%s4308 + $0x30] sm:$0xf]
        %v4322 = vld [vmem:[%s4308 + $0x34] sm:$0xf]
        %v4323 = vld [vmem:[%s4308 + $0x38] sm:$0xf]
        %v4324 = vld [vmem:[%s4308 + $0x3c] sm:$0xf]
        %v4341 = vunpack.c.l.b16 %v4309
        %v4342 = vunpack.c.l.b16 %v4310
        %v4343 = vunpack.c.l.b16 %v4311
        %v4344 = vunpack.c.l.b16 %v4312
        %v4345 = vunpack.c.l.b16 %v4313
        %v4346 = vunpack.c.l.b16 %v4314
        %v4347 = vunpack.c.l.b16 %v4315
        %v4348 = vunpack.c.l.b16 %v4316
        %v4349 = vunpack.c.l.b16 %v4317
        %v4350 = vunpack.c.l.b16 %v4318
        %v4351 = vunpack.c.l.b16 %v4319
        %v4352 = vunpack.c.l.b16 %v4320
        %v4353 = vunpack.c.l.b16 %v4321
        %v4354 = vunpack.c.l.b16 %v4322
        %v4355 = vunpack.c.l.b16 %v4323
        %v4356 = vunpack.c.l.b16 %v4324
        %v4357 = vpack.c.b16 %v4342, %v4341
        %v4358 = vpack.c.b16 %v4344, %v4343
        %v4359 = vpack.c.b16 %v4346, %v4345
        %v4360 = vpack.c.b16 %v4348, %v4347
        %v4361 = vpack.c.b16 %v4350, %v4349
        %v4362 = vpack.c.b16 %v4352, %v4351
        %v4363 = vpack.c.b16 %v4354, %v4353
        %v4364 = vpack.c.b16 %v4356, %v4355
        %4373 = vmatprep.subr.bf16.mxu0 0
        %4374 = vmatpush1.bf16.msra.mxu0 %v4357
        %4375 = vmatprep.subr.bf16.mxu0 0
        %4376 = vmatpush1.bf16.msra.mxu0 %v4358
        %4377 = vmatprep.subr.bf16.mxu0 0
        %4378 = vmatpush1.bf16.msra.mxu0 %v4359
        %4379 = vmatprep.subr.bf16.mxu0 0
        %4380 = vmatpush1.bf16.msra.mxu0 %v4360
        %4381 = vmatprep.subr.bf16.mxu0 0
        %4382 = vmatpush1.bf16.msra.mxu0 %v4361
        %4383 = vmatprep.subr.bf16.mxu0 0
        %4384 = vmatpush1.bf16.msra.mxu0 %v4362
        %4385 = vmatprep.subr.bf16.mxu0 0
        %4386 = vmatpush1.bf16.msra.mxu0 %v4363
        %4387 = vmatprep.subr.bf16.mxu0 0
        %4388 = vmatpush1.bf16.msra.mxu0 %v4364
        %4389 = vmatprep.subr.bf16.mxu0 0
        %4390 = vmatpush1.bf16.msra.mxu0 0
        %4391 = vmatprep.subr.bf16.mxu0 0
        %4392 = vmatpush1.bf16.msra.mxu0 0
        %4393 = vmatprep.subr.bf16.mxu0 0
        %4394 = vmatpush1.bf16.msra.mxu0 0
        %4395 = vmatprep.subr.bf16.mxu0 0
        %4396 = vmatpush1.bf16.msra.mxu0 0
        %4397 = vmatprep.subr.bf16.mxu0 0
        %4398 = vmatpush1.bf16.msra.mxu0 0
        %4399 = vmatprep.subr.bf16.mxu0 0
        %4400 = vmatpush1.bf16.msra.mxu0 0
        %4401 = vmatprep.subr.bf16.mxu0 0
        %4402 = vmatpush1.bf16.msra.mxu0 0
        %4403 = vmatprep.subr.bf16.mxu0 0
        %4404 = vmatpush1.bf16.msra.mxu0 0
        %4405 = vmatprep.mubr.bf16.mxu0 0
        %4406 = vmatmul.mubr.bf16.gmra.mrb[0].mxu0 %v3259
        %v4407 = vpop.f32.mrb[0].mxu0
        %v4408 = vadd.f32 0.0, %v4407
        %v4409 = vpop.f32.mrb[0].mxu0
        %v4410 = vpop.f32.mrb[0].mxu0
        %v4411 = vadd.f32 0.0, %v4410
        %v4412 = vpop.f32.mrb[0].mxu0
        %4413 = vmatprep.mubr.bf16.mxu0 0
        %4414 = vmatmul.mubr.bf16.gmra.mrb[0].mxu0 %v3261
        %v4415 = vpop.f32.mrb[0].mxu0
        %v4416 = vadd.f32 0.0, %v4415
        %v4417 = vpop.f32.mrb[0].mxu0
        %v4418 = vpop.f32.mrb[0].mxu0
        %v4419 = vadd.f32 0.0, %v4418
        %v4420 = vpop.f32.mrb[0].mxu0
        %4421 = vmatprep.mubr.bf16.mxu0 0
        %4422 = vmatmul.mubr.bf16.gmra.mrb[0].mxu0 %v3263
        %v4423 = vpop.f32.mrb[0].mxu0
        %v4424 = vadd.f32 0.0, %v4423
        %v4425 = vpop.f32.mrb[0].mxu0
        %v4426 = vpop.f32.mrb[0].mxu0
        %v4427 = vadd.f32 0.0, %v4426
        %v4428 = vpop.f32.mrb[0].mxu0
        %4429 = vmatprep.mubr.bf16.mxu0 0
        %4430 = vmatmul.mubr.bf16.gmra.mrb[0].mxu0 %v3265
        %v4431 = vpop.f32.mrb[0].mxu0
        %v4432 = vadd.f32 0.0, %v4431
        %v4433 = vpop.f32.mrb[0].mxu0
        %v4434 = vpop.f32.mrb[0].mxu0
        %v4435 = vadd.f32 0.0, %v4434
        %v4436 = vpop.f32.mrb[0].mxu0
        %4437 = vmatprep.mubr.bf16.mxu0 0
        %4438 = vmatmul.mubr.bf16.gmra.mrb[0].mxu0 %v3267
        %v4439 = vpop.f32.mrb[0].mxu0
        %v4440 = vadd.f32 0.0, %v4439
        %v4441 = vpop.f32.mrb[0].mxu0
        %v4442 = vpop.f32.mrb[0].mxu0
        %v4443 = vadd.f32 0.0, %v4442
        %v4444 = vpop.f32.mrb[0].mxu0
        %4445 = vmatprep.mubr.bf16.mxu0 0
        %4446 = vmatmul.mubr.bf16.gmra.mrb[0].mxu0 %v3269
        %v4447 = vpop.f32.mrb[0].mxu0
        %v4448 = vadd.f32 0.0, %v4447
        %v4449 = vpop.f32.mrb[0].mxu0
        %v4450 = vpop.f32.mrb[0].mxu0
        %v4451 = vadd.f32 0.0, %v4450
        %v4452 = vpop.f32.mrb[0].mxu0
        %4453 = vmatprep.mubr.bf16.mxu0 0
        %4454 = vmatmul.mubr.bf16.gmra.mrb[0].mxu0 %v3271
        %v4455 = vpop.f32.mrb[0].mxu0
        %v4456 = vadd.f32 0.0, %v4455
        %v4457 = vpop.f32.mrb[0].mxu0
        %v4458 = vpop.f32.mrb[0].mxu0
        %v4459 = vadd.f32 0.0, %v4458
        %v4460 = vpop.f32.mrb[0].mxu0
        %4461 = vmatprep.mubr.bf16.mxu0 0
        %4462 = vmatmul.mubr.bf16.gmra.mrb[0].mxu0 %v3273
        %v4463 = vpop.f32.mrb[0].mxu0
        %v4464 = vadd.f32 0.0, %v4463
        %v4465 = vpop.f32.mrb[0].mxu0
        %v4466 = vpop.f32.mrb[0].mxu0
        %v4467 = vadd.f32 0.0, %v4466
        %v4468 = vpop.f32.mrb[0].mxu0
        %4469 = vmatprep.mubr.bf16.mxu0 0
        %4470 = vmatmul.mubr.bf16.gmra.mrb[0].mxu0 %v3275
        %v4471 = vpop.f32.mrb[0].mxu0
        %v4472 = vadd.f32 0.0, %v4471
        %v4473 = vpop.f32.mrb[0].mxu0
        %v4474 = vpop.f32.mrb[0].mxu0
        %v4475 = vadd.f32 0.0, %v4474
        %v4476 = vpop.f32.mrb[0].mxu0
        %4477 = vmatprep.mubr.bf16.mxu0 0
        %4478 = vmatmul.mubr.bf16.gmra.mrb[0].mxu0 %v3277
        %v4479 = vpop.f32.mrb[0].mxu0
        %v4480 = vadd.f32 0.0, %v4479
        %v4481 = vpop.f32.mrb[0].mxu0
        %v4482 = vpop.f32.mrb[0].mxu0
        %v4483 = vadd.f32 0.0, %v4482
        %v4484 = vpop.f32.mrb[0].mxu0
        %4485 = vmatprep.mubr.bf16.mxu0 0
        %4486 = vmatmul.mubr.bf16.gmra.mrb[0].mxu0 %v3279
        %v4487 = vpop.f32.mrb[0].mxu0
        %v4488 = vadd.f32 0.0, %v4487
        %v4489 = vpop.f32.mrb[0].mxu0
        %v4490 = vpop.f32.mrb[0].mxu0
        %v4491 = vadd.f32 0.0, %v4490
        %v4492 = vpop.f32.mrb[0].mxu0
        %4493 = vmatprep.mubr.bf16.mxu0 0
        %4494 = vmatmul.mubr.bf16.gmra.mrb[0].mxu0 %v3281
        %v4495 = vpop.f32.mrb[0].mxu0
        %v4496 = vadd.f32 0.0, %v4495
        %v4497 = vpop.f32.mrb[0].mxu0
        %v4498 = vpop.f32.mrb[0].mxu0
        %v4499 = vadd.f32 0.0, %v4498
        %v4500 = vpop.f32.mrb[0].mxu0
        %4501 = vmatprep.mubr.bf16.mxu0 0
        %4502 = vmatmul.mubr.bf16.gmra.mrb[0].mxu0 %v3283
        %v4503 = vpop.f32.mrb[0].mxu0
        %v4504 = vadd.f32 0.0, %v4503
        %v4505 = vpop.f32.mrb[0].mxu0
        %v4506 = vpop.f32.mrb[0].mxu0
        %v4507 = vadd.f32 0.0, %v4506
        %v4508 = vpop.f32.mrb[0].mxu0
        %4509 = vmatprep.mubr.bf16.mxu0 0
        %4510 = vmatmul.mubr.bf16.gmra.mrb[0].mxu0 %v3285
        %v4511 = vpop.f32.mrb[0].mxu0
        %v4512 = vadd.f32 0.0, %v4511
        %v4513 = vpop.f32.mrb[0].mxu0
        %v4514 = vpop.f32.mrb[0].mxu0
        %v4515 = vadd.f32 0.0, %v4514
        %v4516 = vpop.f32.mrb[0].mxu0
        %4517 = vmatprep.mubr.bf16.mxu0 0
        %4518 = vmatmul.mubr.bf16.gmra.mrb[0].mxu0 %v3287
        %v4519 = vpop.f32.mrb[0].mxu0
        %v4520 = vadd.f32 0.0, %v4519
        %v4521 = vpop.f32.mrb[0].mxu0
        %v4522 = vpop.f32.mrb[0].mxu0
        %v4523 = vadd.f32 0.0, %v4522
        %v4524 = vpop.f32.mrb[0].mxu0
        %4525 = vmatprep.mubr.bf16.mxu0 0
        %4526 = vmatmul.mubr.bf16.gmra.mrb[0].mxu0 %v3289
        %v4527 = vpop.f32.mrb[0].mxu0
        %v4528 = vadd.f32 0.0, %v4527
        %v4529 = vpop.f32.mrb[0].mxu0
        %v4530 = vpop.f32.mrb[0].mxu0
        %v4531 = vadd.f32 0.0, %v4530
        %v4532 = vpop.f32.mrb[0].mxu0
        %4533 = vdwg.mxu0
        %v4534 = vadd.f32 %v4276, %v4408
        %v4535 = vadd.f32 %v4277, %v4411
        %v4536 = vadd.f32 %v4278, %v4416
        %v4537 = vadd.f32 %v4279, %v4419
        %v4538 = vadd.f32 %v4280, %v4424
        %v4539 = vadd.f32 %v4281, %v4427
        %v4540 = vadd.f32 %v4282, %v4432
        %v4541 = vadd.f32 %v4283, %v4435
        %v4542 = vadd.f32 %v4284, %v4440
        %v4543 = vadd.f32 %v4285, %v4443
        %v4544 = vadd.f32 %v4286, %v4448
        %v4545 = vadd.f32 %v4287, %v4451
        %v4546 = vadd.f32 %v4288, %v4456
        %v4547 = vadd.f32 %v4289, %v4459
        %v4548 = vadd.f32 %v4290, %v4464
        %v4549 = vadd.f32 %v4291, %v4467
        %v4550 = vadd.f32 %v4292, %v4472
        %v4551 = vadd.f32 %v4293, %v4475
        %v4552 = vadd.f32 %v4294, %v4480
        %v4553 = vadd.f32 %v4295, %v4483
        %v4554 = vadd.f32 %v4296, %v4488
        %v4555 = vadd.f32 %v4297, %v4491
        %v4556 = vadd.f32 %v4298, %v4496
        %v4557 = vadd.f32 %v4299, %v4499
        %v4558 = vadd.f32 %v4300, %v4504
        %v4559 = vadd.f32 %v4301, %v4507
        %v4560 = vadd.f32 %v4302, %v4512
        %v4561 = vadd.f32 %v4303, %v4515
        %v4562 = vadd.f32 %v4304, %v4520
        %v4563 = vadd.f32 %v4305, %v4523
        %v4564 = vadd.f32 %v4306, %v4528
        %v4565 = vadd.f32 %v4307, %v4531
        %v4567 = vshrl.u32 %v3289, 16
        %v4569 = vshll.u32 %v3289, 16
        %v4571 = vrot.slane %v4569, 1
        %v4572 = vor.u32 %v4567, %v4571
        %v4574 = vshll.u32 %v3290, 16
        %v4576 = vrot.slane %v4574, 1
        %v4577 = vsel %vm3309, %v4572, %v4576
        %s4579 = scalar_lea.vmem [#allocation6], 256
        %v4580 = vld [vmem:[%s4579] sm:$0xf]
        %v4581 = vld [vmem:[%s4579 + $0x4] sm:$0xf]
        %v4582 = vld [vmem:[%s4579 + $0x8] sm:$0xf]
        %v4583 = vld [vmem:[%s4579 + $0xc] sm:$0xf]
        %v4584 = vld [vmem:[%s4579 + $0x10] sm:$0xf]
        %v4585 = vld [vmem:[%s4579 + $0x14] sm:$0xf]
        %v4586 = vld [vmem:[%s4579 + $0x18] sm:$0xf]
        %v4587 = vld [vmem:[%s4579 + $0x1c] sm:$0xf]
        %v4588 = vld [vmem:[%s4579 + $0x20] sm:$0xf]
        %v4589 = vld [vmem:[%s4579 + $0x24] sm:$0xf]
        %v4590 = vld [vmem:[%s4579 + $0x28] sm:$0xf]
        %v4591 = vld [vmem:[%s4579 + $0x2c] sm:$0xf]
        %v4592 = vld [vmem:[%s4579 + $0x30] sm:$0xf]
        %v4593 = vld [vmem:[%s4579 + $0x34] sm:$0xf]
        %v4594 = vld [vmem:[%s4579 + $0x38] sm:$0xf]
        %v4595 = vld [vmem:[%s4579 + $0x3c] sm:$0xf]
        %v4612 = vunpack.c.l.b16 %v4580
        %v4613 = vunpack.c.l.b16 %v4581
        %v4614 = vunpack.c.l.b16 %v4582
        %v4615 = vunpack.c.l.b16 %v4583
        %v4616 = vunpack.c.l.b16 %v4584
        %v4617 = vunpack.c.l.b16 %v4585
        %v4618 = vunpack.c.l.b16 %v4586
        %v4619 = vunpack.c.l.b16 %v4587
        %v4620 = vunpack.c.l.b16 %v4588
        %v4621 = vunpack.c.l.b16 %v4589
        %v4622 = vunpack.c.l.b16 %v4590
        %v4623 = vunpack.c.l.b16 %v4591
        %v4624 = vunpack.c.l.b16 %v4592
        %v4625 = vunpack.c.l.b16 %v4593
        %v4626 = vunpack.c.l.b16 %v4594
        %v4627 = vunpack.c.l.b16 %v4595
        %v4628 = vpack.c.b16 %v4613, %v4612
        %v4629 = vpack.c.b16 %v4615, %v4614
        %v4630 = vpack.c.b16 %v4617, %v4616
        %v4631 = vpack.c.b16 %v4619, %v4618
        %v4632 = vpack.c.b16 %v4621, %v4620
        %v4633 = vpack.c.b16 %v4623, %v4622
        %v4634 = vpack.c.b16 %v4625, %v4624
        %v4635 = vpack.c.b16 %v4627, %v4626
        %4644 = vmatprep.subr.bf16.mxu0 0
        %4645 = vmatpush1.bf16.msra.mxu0 %v4628
        %4646 = vmatprep.subr.bf16.mxu0 0
        %4647 = vmatpush1.bf16.msra.mxu0 %v4629
        %4648 = vmatprep.subr.bf16.mxu0 0
        %4649 = vmatpush1.bf16.msra.mxu0 %v4630
        %4650 = vmatprep.subr.bf16.mxu0 0
        %4651 = vmatpush1.bf16.msra.mxu0 %v4631
        %4652 = vmatprep.subr.bf16.mxu0 0
        %4653 = vmatpush1.bf16.msra.mxu0 %v4632
        %4654 = vmatprep.subr.bf16.mxu0 0
        %4655 = vmatpush1.bf16.msra.mxu0 %v4633
        %4656 = vmatprep.subr.bf16.mxu0 0
        %4657 = vmatpush1.bf16.msra.mxu0 %v4634
        %4658 = vmatprep.subr.bf16.mxu0 0
        %4659 = vmatpush1.bf16.msra.mxu0 %v4635
        %4660 = vmatprep.subr.bf16.mxu0 0
        %4661 = vmatpush1.bf16.msra.mxu0 0
        %4662 = vmatprep.subr.bf16.mxu0 0
        %4663 = vmatpush1.bf16.msra.mxu0 0
        %4664 = vmatprep.subr.bf16.mxu0 0
        %4665 = vmatpush1.bf16.msra.mxu0 0
        %4666 = vmatprep.subr.bf16.mxu0 0
        %4667 = vmatpush1.bf16.msra.mxu0 0
        %4668 = vmatprep.subr.bf16.mxu0 0
        %4669 = vmatpush1.bf16.msra.mxu0 0
        %4670 = vmatprep.subr.bf16.mxu0 0
        %4671 = vmatpush1.bf16.msra.mxu0 0
        %4672 = vmatprep.subr.bf16.mxu0 0
        %4673 = vmatpush1.bf16.msra.mxu0 0
        %4674 = vmatprep.subr.bf16.mxu0 0
        %4675 = vmatpush1.bf16.msra.mxu0 0
        %4676 = vmatprep.mubr.bf16.mxu0 0
        %4677 = vmatmul.mubr.bf16.gmra.mrb[0].mxu0 %v3333
        %v4678 = vpop.f32.mrb[0].mxu0
        %v4679 = vadd.f32 0.0, %v4678
        %v4680 = vpop.f32.mrb[0].mxu0
        %v4681 = vpop.f32.mrb[0].mxu0
        %v4682 = vadd.f32 0.0, %v4681
        %v4683 = vpop.f32.mrb[0].mxu0
        %4684 = vmatprep.mubr.bf16.mxu0 0
        %4685 = vmatmul.mubr.bf16.gmra.mrb[0].mxu0 %v3345
        %v4686 = vpop.f32.mrb[0].mxu0
        %v4687 = vadd.f32 0.0, %v4686
        %v4688 = vpop.f32.mrb[0].mxu0
        %v4689 = vpop.f32.mrb[0].mxu0
        %v4690 = vadd.f32 0.0, %v4689
        %v4691 = vpop.f32.mrb[0].mxu0
        %4692 = vmatprep.mubr.bf16.mxu0 0
        %4693 = vmatmul.mubr.bf16.gmra.mrb[0].mxu0 %v3357
        %v4694 = vpop.f32.mrb[0].mxu0
        %v4695 = vadd.f32 0.0, %v4694
        %v4696 = vpop.f32.mrb[0].mxu0
        %v4697 = vpop.f32.mrb[0].mxu0
        %v4698 = vadd.f32 0.0, %v4697
        %v4699 = vpop.f32.mrb[0].mxu0
        %4700 = vmatprep.mubr.bf16.mxu0 0
        %4701 = vmatmul.mubr.bf16.gmra.mrb[0].mxu0 %v3369
        %v4702 = vpop.f32.mrb[0].mxu0
        %v4703 = vadd.f32 0.0, %v4702
        %v4704 = vpop.f32.mrb[0].mxu0
        %v4705 = vpop.f32.mrb[0].mxu0
        %v4706 = vadd.f32 0.0, %v4705
        %v4707 = vpop.f32.mrb[0].mxu0
        %4708 = vmatprep.mubr.bf16.mxu0 0
        %4709 = vmatmul.mubr.bf16.gmra.mrb[0].mxu0 %v3381
        %v4710 = vpop.f32.mrb[0].mxu0
        %v4711 = vadd.f32 0.0, %v4710
        %v4712 = vpop.f32.mrb[0].mxu0
        %v4713 = vpop.f32.mrb[0].mxu0
        %v4714 = vadd.f32 0.0, %v4713
        %v4715 = vpop.f32.mrb[0].mxu0
        %4716 = vmatprep.mubr.bf16.mxu0 0
        %4717 = vmatmul.mubr.bf16.gmra.mrb[0].mxu0 %v3393
        %v4718 = vpop.f32.mrb[0].mxu0
        %v4719 = vadd.f32 0.0, %v4718
        %v4720 = vpop.f32.mrb[0].mxu0
        %v4721 = vpop.f32.mrb[0].mxu0
        %v4722 = vadd.f32 0.0, %v4721
        %v4723 = vpop.f32.mrb[0].mxu0
        %4724 = vmatprep.mubr.bf16.mxu0 0
        %4725 = vmatmul.mubr.bf16.gmra.mrb[0].mxu0 %v3405
        %v4726 = vpop.f32.mrb[0].mxu0
        %v4727 = vadd.f32 0.0, %v4726
        %v4728 = vpop.f32.mrb[0].mxu0
        %v4729 = vpop.f32.mrb[0].mxu0
        %v4730 = vadd.f32 0.0, %v4729
        %v4731 = vpop.f32.mrb[0].mxu0
        %4732 = vmatprep.mubr.bf16.mxu0 0
        %4733 = vmatmul.mubr.bf16.gmra.mrb[0].mxu0 %v3417
        %v4734 = vpop.f32.mrb[0].mxu0
        %v4735 = vadd.f32 0.0, %v4734
        %v4736 = vpop.f32.mrb[0].mxu0
        %v4737 = vpop.f32.mrb[0].mxu0
        %v4738 = vadd.f32 0.0, %v4737
        %v4739 = vpop.f32.mrb[0].mxu0
        %4740 = vmatprep.mubr.bf16.mxu0 0
        %4741 = vmatmul.mubr.bf16.gmra.mrb[0].mxu0 %v3429
        %v4742 = vpop.f32.mrb[0].mxu0
        %v4743 = vadd.f32 0.0, %v4742
        %v4744 = vpop.f32.mrb[0].mxu0
        %v4745 = vpop.f32.mrb[0].mxu0
        %v4746 = vadd.f32 0.0, %v4745
        %v4747 = vpop.f32.mrb[0].mxu0
        %4748 = vmatprep.mubr.bf16.mxu0 0
        %4749 = vmatmul.mubr.bf16.gmra.mrb[0].mxu0 %v3441
        %v4750 = vpop.f32.mrb[0].mxu0
        %v4751 = vadd.f32 0.0, %v4750
        %v4752 = vpop.f32.mrb[0].mxu0
        %v4753 = vpop.f32.mrb[0].mxu0
        %v4754 = vadd.f32 0.0, %v4753
        %v4755 = vpop.f32.mrb[0].mxu0
        %4756 = vmatprep.mubr.bf16.mxu0 0
        %4757 = vmatmul.mubr.bf16.gmra.mrb[0].mxu0 %v3453
        %v4758 = vpop.f32.mrb[0].mxu0
        %v4759 = vadd.f32 0.0, %v4758
        %v4760 = vpop.f32.mrb[0].mxu0
        %v4761 = vpop.f32.mrb[0].mxu0
        %v4762 = vadd.f32 0.0, %v4761
        %v4763 = vpop.f32.mrb[0].mxu0
        %4764 = vmatprep.mubr.bf16.mxu0 0
        %4765 = vmatmul.mubr.bf16.gmra.mrb[0].mxu0 %v3465
        %v4766 = vpop.f32.mrb[0].mxu0
        %v4767 = vadd.f32 0.0, %v4766
        %v4768 = vpop.f32.mrb[0].mxu0
        %v4769 = vpop.f32.mrb[0].mxu0
        %v4770 = vadd.f32 0.0, %v4769
        %v4771 = vpop.f32.mrb[0].mxu0
        %4772 = vmatprep.mubr.bf16.mxu0 0
        %4773 = vmatmul.mubr.bf16.gmra.mrb[0].mxu0 %v3477
        %v4774 = vpop.f32.mrb[0].mxu0
        %v4775 = vadd.f32 0.0, %v4774
        %v4776 = vpop.f32.mrb[0].mxu0
        %v4777 = vpop.f32.mrb[0].mxu0
        %v4778 = vadd.f32 0.0, %v4777
        %v4779 = vpop.f32.mrb[0].mxu0
        %4780 = vmatprep.mubr.bf16.mxu0 0
        %4781 = vmatmul.mubr.bf16.gmra.mrb[0].mxu0 %v3489
        %v4782 = vpop.f32.mrb[0].mxu0
        %v4783 = vadd.f32 0.0, %v4782
        %v4784 = vpop.f32.mrb[0].mxu0
        %v4785 = vpop.f32.mrb[0].mxu0
        %v4786 = vadd.f32 0.0, %v4785
        %v4787 = vpop.f32.mrb[0].mxu0
        %4788 = vmatprep.mubr.bf16.mxu0 0
        %4789 = vmatmul.mubr.bf16.gmra.mrb[0].mxu0 %v3501
        %v4790 = vpop.f32.mrb[0].mxu0
        %v4791 = vadd.f32 0.0, %v4790
        %v4792 = vpop.f32.mrb[0].mxu0
        %v4793 = vpop.f32.mrb[0].mxu0
        %v4794 = vadd.f32 0.0, %v4793
        %v4795 = vpop.f32.mrb[0].mxu0
        %4796 = vmatprep.mubr.bf16.mxu0 0
        %4797 = vmatmul.mubr.bf16.gmra.mrb[0].mxu0 %v4577
        %v4798 = vpop.f32.mrb[0].mxu0
        %v4799 = vadd.f32 0.0, %v4798
        %v4800 = vpop.f32.mrb[0].mxu0
        %v4801 = vpop.f32.mrb[0].mxu0
        %v4802 = vadd.f32 0.0, %v4801
        %v4803 = vpop.f32.mrb[0].mxu0
        %4804 = vdwg.mxu0
        %v4805 = vadd.f32 %v4534, %v4679
        %v4806 = vadd.f32 %v4535, %v4682
        %v4807 = vadd.f32 %v4536, %v4687
        %v4808 = vadd.f32 %v4537, %v4690
        %v4809 = vadd.f32 %v4538, %v4695
        %v4810 = vadd.f32 %v4539, %v4698
        %v4811 = vadd.f32 %v4540, %v4703
        %v4812 = vadd.f32 %v4541, %v4706
        %v4813 = vadd.f32 %v4542, %v4711
        %v4814 = vadd.f32 %v4543, %v4714
        %v4815 = vadd.f32 %v4544, %v4719
        %v4816 = vadd.f32 %v4545, %v4722
        %v4817 = vadd.f32 %v4546, %v4727
        %v4818 = vadd.f32 %v4547, %v4730
        %v4819 = vadd.f32 %v4548, %v4735
        %v4820 = vadd.f32 %v4549, %v4738
        %v4821 = vadd.f32 %v4550, %v4743
        %v4822 = vadd.f32 %v4551, %v4746
        %v4823 = vadd.f32 %v4552, %v4751
        %v4824 = vadd.f32 %v4553, %v4754
        %v4825 = vadd.f32 %v4554, %v4759
        %v4826 = vadd.f32 %v4555, %v4762
        %v4827 = vadd.f32 %v4556, %v4767
        %v4828 = vadd.f32 %v4557, %v4770
        %v4829 = vadd.f32 %v4558, %v4775
        %v4830 = vadd.f32 %v4559, %v4778
        %v4831 = vadd.f32 %v4560, %v4783
        %v4832 = vadd.f32 %v4561, %v4786
        %v4833 = vadd.f32 %v4562, %v4791
        %v4834 = vadd.f32 %v4563, %v4794
        %v4835 = vadd.f32 %v4564, %v4799
        %v4836 = vadd.f32 %v4565, %v4802
        %v4839 = vrot.slane %v3289, 1
        %v4840 = vrot.slane %v3290, 1
        %v4841 = vsel %vm3985, %v4839, %v4840
        %s4843 = scalar_lea.vmem [#allocation6], 320
        %v4844 = vld [vmem:[%s4843] sm:$0xf]
        %v4845 = vld [vmem:[%s4843 + $0x4] sm:$0xf]
        %v4846 = vld [vmem:[%s4843 + $0x8] sm:$0xf]
        %v4847 = vld [vmem:[%s4843 + $0xc] sm:$0xf]
        %v4848 = vld [vmem:[%s4843 + $0x10] sm:$0xf]
        %v4849 = vld [vmem:[%s4843 + $0x14] sm:$0xf]
        %v4850 = vld [vmem:[%s4843 + $0x18] sm:$0xf]
        %v4851 = vld [vmem:[%s4843 + $0x1c] sm:$0xf]
        %v4852 = vld [vmem:[%s4843 + $0x20] sm:$0xf]
        %v4853 = vld [vmem:[%s4843 + $0x24] sm:$0xf]
        %v4854 = vld [vmem:[%s4843 + $0x28] sm:$0xf]
        %v4855 = vld [vmem:[%s4843 + $0x2c] sm:$0xf]
        %v4856 = vld [vmem:[%s4843 + $0x30] sm:$0xf]
        %v4857 = vld [vmem:[%s4843 + $0x34] sm:$0xf]
        %v4858 = vld [vmem:[%s4843 + $0x38] sm:$0xf]
        %v4859 = vld [vmem:[%s4843 + $0x3c] sm:$0xf]
        %v4876 = vunpack.c.l.b16 %v4844
        %v4877 = vunpack.c.l.b16 %v4845
        %v4878 = vunpack.c.l.b16 %v4846
        %v4879 = vunpack.c.l.b16 %v4847
        %v4880 = vunpack.c.l.b16 %v4848
        %v4881 = vunpack.c.l.b16 %v4849
        %v4882 = vunpack.c.l.b16 %v4850
        %v4883 = vunpack.c.l.b16 %v4851
        %v4884 = vunpack.c.l.b16 %v4852
        %v4885 = vunpack.c.l.b16 %v4853
        %v4886 = vunpack.c.l.b16 %v4854
        %v4887 = vunpack.c.l.b16 %v4855
        %v4888 = vunpack.c.l.b16 %v4856
        %v4889 = vunpack.c.l.b16 %v4857
        %v4890 = vunpack.c.l.b16 %v4858
        %v4891 = vunpack.c.l.b16 %v4859
        %v4892 = vpack.c.b16 %v4877, %v4876
        %v4893 = vpack.c.b16 %v4879, %v4878
        %v4894 = vpack.c.b16 %v4881, %v4880
        %v4895 = vpack.c.b16 %v4883, %v4882
        %v4896 = vpack.c.b16 %v4885, %v4884
        %v4897 = vpack.c.b16 %v4887, %v4886
        %v4898 = vpack.c.b16 %v4889, %v4888
        %v4899 = vpack.c.b16 %v4891, %v4890
        %4908 = vmatprep.subr.bf16.mxu0 0
        %4909 = vmatpush1.bf16.msra.mxu0 %v4892
        %4910 = vmatprep.subr.bf16.mxu0 0
        %4911 = vmatpush1.bf16.msra.mxu0 %v4893
        %4912 = vmatprep.subr.bf16.mxu0 0
        %4913 = vmatpush1.bf16.msra.mxu0 %v4894
        %4914 = vmatprep.subr.bf16.mxu0 0
        %4915 = vmatpush1.bf16.msra.mxu0 %v4895
        %4916 = vmatprep.subr.bf16.mxu0 0
        %4917 = vmatpush1.bf16.msra.mxu0 %v4896
        %4918 = vmatprep.subr.bf16.mxu0 0
        %4919 = vmatpush1.bf16.msra.mxu0 %v4897
        %4920 = vmatprep.subr.bf16.mxu0 0
        %4921 = vmatpush1.bf16.msra.mxu0 %v4898
        %4922 = vmatprep.subr.bf16.mxu0 0
        %4923 = vmatpush1.bf16.msra.mxu0 %v4899
        %4924 = vmatprep.subr.bf16.mxu0 0
        %4925 = vmatpush1.bf16.msra.mxu0 0
        %4926 = vmatprep.subr.bf16.mxu0 0
        %4927 = vmatpush1.bf16.msra.mxu0 0
        %4928 = vmatprep.subr.bf16.mxu0 0
        %4929 = vmatpush1.bf16.msra.mxu0 0
        %4930 = vmatprep.subr.bf16.mxu0 0
        %4931 = vmatpush1.bf16.msra.mxu0 0
        %4932 = vmatprep.subr.bf16.mxu0 0
        %4933 = vmatpush1.bf16.msra.mxu0 0
        %4934 = vmatprep.subr.bf16.mxu0 0
        %4935 = vmatpush1.bf16.msra.mxu0 0
        %4936 = vmatprep.subr.bf16.mxu0 0
        %4937 = vmatpush1.bf16.msra.mxu0 0
        %4938 = vmatprep.subr.bf16.mxu0 0
        %4939 = vmatpush1.bf16.msra.mxu0 0
        %4940 = vmatprep.mubr.bf16.mxu0 0
        %4941 = vmatmul.mubr.bf16.gmra.mrb[0].mxu0 %v3991
        %v4942 = vpop.f32.mrb[0].mxu0
        %v4943 = vadd.f32 0.0, %v4942
        %v4944 = vpop.f32.mrb[0].mxu0
        %v4945 = vpop.f32.mrb[0].mxu0
        %v4946 = vadd.f32 0.0, %v4945
        %v4947 = vpop.f32.mrb[0].mxu0
        %4948 = vmatprep.mubr.bf16.mxu0 0
        %4949 = vmatmul.mubr.bf16.gmra.mrb[0].mxu0 %v3994
        %v4950 = vpop.f32.mrb[0].mxu0
        %v4951 = vadd.f32 0.0, %v4950
        %v4952 = vpop.f32.mrb[0].mxu0
        %v4953 = vpop.f32.mrb[0].mxu0
        %v4954 = vadd.f32 0.0, %v4953
        %v4955 = vpop.f32.mrb[0].mxu0
        %4956 = vmatprep.mubr.bf16.mxu0 0
        %4957 = vmatmul.mubr.bf16.gmra.mrb[0].mxu0 %v3997
        %v4958 = vpop.f32.mrb[0].mxu0
        %v4959 = vadd.f32 0.0, %v4958
        %v4960 = vpop.f32.mrb[0].mxu0
        %v4961 = vpop.f32.mrb[0].mxu0
        %v4962 = vadd.f32 0.0, %v4961
        %v4963 = vpop.f32.mrb[0].mxu0
        %4964 = vmatprep.mubr.bf16.mxu0 0
        %4965 = vmatmul.mubr.bf16.gmra.mrb[0].mxu0 %v4000
        %v4966 = vpop.f32.mrb[0].mxu0
        %v4967 = vadd.f32 0.0, %v4966
        %v4968 = vpop.f32.mrb[0].mxu0
        %v4969 = vpop.f32.mrb[0].mxu0
        %v4970 = vadd.f32 0.0, %v4969
        %v4971 = vpop.f32.mrb[0].mxu0
        %4972 = vmatprep.mubr.bf16.mxu0 0
        %4973 = vmatmul.mubr.bf16.gmra.mrb[0].mxu0 %v4003
        %v4974 = vpop.f32.mrb[0].mxu0
        %v4975 = vadd.f32 0.0, %v4974
        %v4976 = vpop.f32.mrb[0].mxu0
        %v4977 = vpop.f32.mrb[0].mxu0
        %v4978 = vadd.f32 0.0, %v4977
        %v4979 = vpop.f32.mrb[0].mxu0
        %4980 = vmatprep.mubr.bf16.mxu0 0
        %4981 = vmatmul.mubr.bf16.gmra.mrb[0].mxu0 %v4006
        %v4982 = vpop.f32.mrb[0].mxu0
        %v4983 = vadd.f32 0.0, %v4982
        %v4984 = vpop.f32.mrb[0].mxu0
        %v4985 = vpop.f32.mrb[0].mxu0
        %v4986 = vadd.f32 0.0, %v4985
        %v4987 = vpop.f32.mrb[0].mxu0
        %4988 = vmatprep.mubr.bf16.mxu0 0
        %4989 = vmatmul.mubr.bf16.gmra.mrb[0].mxu0 %v4009
        %v4990 = vpop.f32.mrb[0].mxu0
        %v4991 = vadd.f32 0.0, %v4990
        %v4992 = vpop.f32.mrb[0].mxu0
        %v4993 = vpop.f32.mrb[0].mxu0
        %v4994 = vadd.f32 0.0, %v4993
        %v4995 = vpop.f32.mrb[0].mxu0
        %4996 = vmatprep.mubr.bf16.mxu0 0
        %4997 = vmatmul.mubr.bf16.gmra.mrb[0].mxu0 %v4012
        %v4998 = vpop.f32.mrb[0].mxu0
        %v4999 = vadd.f32 0.0, %v4998
        %v5000 = vpop.f32.mrb[0].mxu0
        %v5001 = vpop.f32.mrb[0].mxu0
        %v5002 = vadd.f32 0.0, %v5001
        %v5003 = vpop.f32.mrb[0].mxu0
        %5004 = vmatprep.mubr.bf16.mxu0 0
        %5005 = vmatmul.mubr.bf16.gmra.mrb[0].mxu0 %v4015
        %v5006 = vpop.f32.mrb[0].mxu0
        %v5007 = vadd.f32 0.0, %v5006
        %v5008 = vpop.f32.mrb[0].mxu0
        %v5009 = vpop.f32.mrb[0].mxu0
        %v5010 = vadd.f32 0.0, %v5009
        %v5011 = vpop.f32.mrb[0].mxu0
        %5012 = vmatprep.mubr.bf16.mxu0 0
        %5013 = vmatmul.mubr.bf16.gmra.mrb[0].mxu0 %v4018
        %v5014 = vpop.f32.mrb[0].mxu0
        %v5015 = vadd.f32 0.0, %v5014
        %v5016 = vpop.f32.mrb[0].mxu0
        %v5017 = vpop.f32.mrb[0].mxu0
        %v5018 = vadd.f32 0.0, %v5017
        %v5019 = vpop.f32.mrb[0].mxu0
        %5020 = vmatprep.mubr.bf16.mxu0 0
        %5021 = vmatmul.mubr.bf16.gmra.mrb[0].mxu0 %v4021
        %v5022 = vpop.f32.mrb[0].mxu0
        %v5023 = vadd.f32 0.0, %v5022
        %v5024 = vpop.f32.mrb[0].mxu0
        %v5025 = vpop.f32.mrb[0].mxu0
        %v5026 = vadd.f32 0.0, %v5025
        %v5027 = vpop.f32.mrb[0].mxu0
        %5028 = vmatprep.mubr.bf16.mxu0 0
        %5029 = vmatmul.mubr.bf16.gmra.mrb[0].mxu0 %v4024
        %v5030 = vpop.f32.mrb[0].mxu0
        %v5031 = vadd.f32 0.0, %v5030
        %v5032 = vpop.f32.mrb[0].mxu0
        %v5033 = vpop.f32.mrb[0].mxu0
        %v5034 = vadd.f32 0.0, %v5033
        %v5035 = vpop.f32.mrb[0].mxu0
        %5036 = vmatprep.mubr.bf16.mxu0 0
        %5037 = vmatmul.mubr.bf16.gmra.mrb[0].mxu0 %v4027
        %v5038 = vpop.f32.mrb[0].mxu0
        %v5039 = vadd.f32 0.0, %v5038
        %v5040 = vpop.f32.mrb[0].mxu0
        %v5041 = vpop.f32.mrb[0].mxu0
        %v5042 = vadd.f32 0.0, %v5041
        %v5043 = vpop.f32.mrb[0].mxu0
        %5044 = vmatprep.mubr.bf16.mxu0 0
        %5045 = vmatmul.mubr.bf16.gmra.mrb[0].mxu0 %v4030
        %v5046 = vpop.f32.mrb[0].mxu0
        %v5047 = vadd.f32 0.0, %v5046
        %v5048 = vpop.f32.mrb[0].mxu0
        %v5049 = vpop.f32.mrb[0].mxu0
        %v5050 = vadd.f32 0.0, %v5049
        %v5051 = vpop.f32.mrb[0].mxu0
        %5052 = vmatprep.mubr.bf16.mxu0 0
        %5053 = vmatmul.mubr.bf16.gmra.mrb[0].mxu0 %v4033
        %v5054 = vpop.f32.mrb[0].mxu0
        %v5055 = vadd.f32 0.0, %v5054
        %v5056 = vpop.f32.mrb[0].mxu0
        %v5057 = vpop.f32.mrb[0].mxu0
        %v5058 = vadd.f32 0.0, %v5057
        %v5059 = vpop.f32.mrb[0].mxu0
        %5060 = vmatprep.mubr.bf16.mxu0 0
        %5061 = vmatmul.mubr.bf16.gmra.mrb[0].mxu0 %v4841
        %v5062 = vpop.f32.mrb[0].mxu0
        %v5063 = vadd.f32 0.0, %v5062
        %v5064 = vpop.f32.mrb[0].mxu0
        %v5065 = vpop.f32.mrb[0].mxu0
        %v5066 = vadd.f32 0.0, %v5065
        %v5067 = vpop.f32.mrb[0].mxu0
        %5068 = vdwg.mxu0
        %v5069 = vadd.f32 %v4805, %v4943
        %v5070 = vadd.f32 %v4806, %v4946
        %v5071 = vadd.f32 %v4807, %v4951
        %v5072 = vadd.f32 %v4808, %v4954
        %v5073 = vadd.f32 %v4809, %v4959
        %v5074 = vadd.f32 %v4810, %v4962
        %v5075 = vadd.f32 %v4811, %v4967
        %v5076 = vadd.f32 %v4812, %v4970
        %v5077 = vadd.f32 %v4813, %v4975
        %v5078 = vadd.f32 %v4814, %v4978
        %v5079 = vadd.f32 %v4815, %v4983
        %v5080 = vadd.f32 %v4816, %v4986
        %v5081 = vadd.f32 %v4817, %v4991
        %v5082 = vadd.f32 %v4818, %v4994
        %v5083 = vadd.f32 %v4819, %v4999
        %v5084 = vadd.f32 %v4820, %v5002
        %v5085 = vadd.f32 %v4821, %v5007
        %v5086 = vadd.f32 %v4822, %v5010
        %v5087 = vadd.f32 %v4823, %v5015
        %v5088 = vadd.f32 %v4824, %v5018
        %v5089 = vadd.f32 %v4825, %v5023
        %v5090 = vadd.f32 %v4826, %v5026
        %v5091 = vadd.f32 %v4827, %v5031
        %v5092 = vadd.f32 %v4828, %v5034
        %v5093 = vadd.f32 %v4829, %v5039
        %v5094 = vadd.f32 %v4830, %v5042
        %v5095 = vadd.f32 %v4831, %v5047
        %v5096 = vadd.f32 %v4832, %v5050
        %v5097 = vadd.f32 %v4833, %v5055
        %v5098 = vadd.f32 %v4834, %v5058
        %v5099 = vadd.f32 %v4835, %v5063
        %v5100 = vadd.f32 %v4836, %v5066
        %s5101 = scalar_lea.vmem [#allocation6], 384
        %v5102 = vld [vmem:[%s5101] sm:$0xf]
        %v5103 = vld [vmem:[%s5101 + $0x4] sm:$0xf]
        %v5104 = vld [vmem:[%s5101 + $0x8] sm:$0xf]
        %v5105 = vld [vmem:[%s5101 + $0xc] sm:$0xf]
        %v5106 = vld [vmem:[%s5101 + $0x10] sm:$0xf]
        %v5107 = vld [vmem:[%s5101 + $0x14] sm:$0xf]
        %v5108 = vld [vmem:[%s5101 + $0x18] sm:$0xf]
        %v5109 = vld [vmem:[%s5101 + $0x1c] sm:$0xf]
        %v5110 = vld [vmem:[%s5101 + $0x20] sm:$0xf]
        %v5111 = vld [vmem:[%s5101 + $0x24] sm:$0xf]
        %v5112 = vld [vmem:[%s5101 + $0x28] sm:$0xf]
        %v5113 = vld [vmem:[%s5101 + $0x2c] sm:$0xf]
        %v5114 = vld [vmem:[%s5101 + $0x30] sm:$0xf]
        %v5115 = vld [vmem:[%s5101 + $0x34] sm:$0xf]
        %v5116 = vld [vmem:[%s5101 + $0x38] sm:$0xf]
        %v5117 = vld [vmem:[%s5101 + $0x3c] sm:$0xf]
        %v5134 = vunpack.c.l.b16 %v5102
        %v5135 = vunpack.c.l.b16 %v5103
        %v5136 = vunpack.c.l.b16 %v5104
        %v5137 = vunpack.c.l.b16 %v5105
        %v5138 = vunpack.c.l.b16 %v5106
        %v5139 = vunpack.c.l.b16 %v5107
        %v5140 = vunpack.c.l.b16 %v5108
        %v5141 = vunpack.c.l.b16 %v5109
        %v5142 = vunpack.c.l.b16 %v5110
        %v5143 = vunpack.c.l.b16 %v5111
        %v5144 = vunpack.c.l.b16 %v5112
        %v5145 = vunpack.c.l.b16 %v5113
        %v5146 = vunpack.c.l.b16 %v5114
        %v5147 = vunpack.c.l.b16 %v5115
        %v5148 = vunpack.c.l.b16 %v5116
        %v5149 = vunpack.c.l.b16 %v5117
        %v5150 = vpack.c.b16 %v5135, %v5134
        %v5151 = vpack.c.b16 %v5137, %v5136
        %v5152 = vpack.c.b16 %v5139, %v5138
        %v5153 = vpack.c.b16 %v5141, %v5140
        %v5154 = vpack.c.b16 %v5143, %v5142
        %v5155 = vpack.c.b16 %v5145, %v5144
        %v5156 = vpack.c.b16 %v5147, %v5146
        %v5157 = vpack.c.b16 %v5149, %v5148
        %5166 = vmatprep.subr.bf16.mxu0 0
        %5167 = vmatpush1.bf16.msra.mxu0 %v5150
        %5168 = vmatprep.subr.bf16.mxu0 0
        %5169 = vmatpush1.bf16.msra.mxu0 %v5151
        %5170 = vmatprep.subr.bf16.mxu0 0
        %5171 = vmatpush1.bf16.msra.mxu0 %v5152
        %5172 = vmatprep.subr.bf16.mxu0 0
        %5173 = vmatpush1.bf16.msra.mxu0 %v5153
        %5174 = vmatprep.subr.bf16.mxu0 0
        %5175 = vmatpush1.bf16.msra.mxu0 %v5154
        %5176 = vmatprep.subr.bf16.mxu0 0
        %5177 = vmatpush1.bf16.msra.mxu0 %v5155
        %5178 = vmatprep.subr.bf16.mxu0 0
        %5179 = vmatpush1.bf16.msra.mxu0 %v5156
        %5180 = vmatprep.subr.bf16.mxu0 0
        %5181 = vmatpush1.bf16.msra.mxu0 %v5157
        %5182 = vmatprep.subr.bf16.mxu0 0
        %5183 = vmatpush1.bf16.msra.mxu0 0
        %5184 = vmatprep.subr.bf16.mxu0 0
        %5185 = vmatpush1.bf16.msra.mxu0 0
        %5186 = vmatprep.subr.bf16.mxu0 0
        %5187 = vmatpush1.bf16.msra.mxu0 0
        %5188 = vmatprep.subr.bf16.mxu0 0
        %5189 = vmatpush1.bf16.msra.mxu0 0
        %5190 = vmatprep.subr.bf16.mxu0 0
        %5191 = vmatpush1.bf16.msra.mxu0 0
        %5192 = vmatprep.subr.bf16.mxu0 0
        %5193 = vmatpush1.bf16.msra.mxu0 0
        %5194 = vmatprep.subr.bf16.mxu0 0
        %5195 = vmatpush1.bf16.msra.mxu0 0
        %5196 = vmatprep.subr.bf16.mxu0 0
        %5197 = vmatpush1.bf16.msra.mxu0 0
        %5198 = vmatprep.mubr.bf16.mxu0 0
        %5199 = vmatmul.mubr.bf16.gmra.mrb[0].mxu0 %v3261
        %v5200 = vpop.f32.mrb[0].mxu0
        %v5201 = vadd.f32 0.0, %v5200
        %v5202 = vpop.f32.mrb[0].mxu0
        %v5203 = vpop.f32.mrb[0].mxu0
        %v5204 = vadd.f32 0.0, %v5203
        %v5205 = vpop.f32.mrb[0].mxu0
        %5206 = vmatprep.mubr.bf16.mxu0 0
        %5207 = vmatmul.mubr.bf16.gmra.mrb[0].mxu0 %v3263
        %v5208 = vpop.f32.mrb[0].mxu0
        %v5209 = vadd.f32 0.0, %v5208
        %v5210 = vpop.f32.mrb[0].mxu0
        %v5211 = vpop.f32.mrb[0].mxu0
        %v5212 = vadd.f32 0.0, %v5211
        %v5213 = vpop.f32.mrb[0].mxu0
        %5214 = vmatprep.mubr.bf16.mxu0 0
        %5215 = vmatmul.mubr.bf16.gmra.mrb[0].mxu0 %v3265
        %v5216 = vpop.f32.mrb[0].mxu0
        %v5217 = vadd.f32 0.0, %v5216
        %v5218 = vpop.f32.mrb[0].mxu0
        %v5219 = vpop.f32.mrb[0].mxu0
        %v5220 = vadd.f32 0.0, %v5219
        %v5221 = vpop.f32.mrb[0].mxu0
        %5222 = vmatprep.mubr.bf16.mxu0 0
        %5223 = vmatmul.mubr.bf16.gmra.mrb[0].mxu0 %v3267
        %v5224 = vpop.f32.mrb[0].mxu0
        %v5225 = vadd.f32 0.0, %v5224
        %v5226 = vpop.f32.mrb[0].mxu0
        %v5227 = vpop.f32.mrb[0].mxu0
        %v5228 = vadd.f32 0.0, %v5227
        %v5229 = vpop.f32.mrb[0].mxu0
        %5230 = vmatprep.mubr.bf16.mxu0 0
        %5231 = vmatmul.mubr.bf16.gmra.mrb[0].mxu0 %v3269
        %v5232 = vpop.f32.mrb[0].mxu0
        %v5233 = vadd.f32 0.0, %v5232
        %v5234 = vpop.f32.mrb[0].mxu0
        %v5235 = vpop.f32.mrb[0].mxu0
        %v5236 = vadd.f32 0.0, %v5235
        %v5237 = vpop.f32.mrb[0].mxu0
        %5238 = vmatprep.mubr.bf16.mxu0 0
        %5239 = vmatmul.mubr.bf16.gmra.mrb[0].mxu0 %v3271
        %v5240 = vpop.f32.mrb[0].mxu0
        %v5241 = vadd.f32 0.0, %v5240
        %v5242 = vpop.f32.mrb[0].mxu0
        %v5243 = vpop.f32.mrb[0].mxu0
        %v5244 = vadd.f32 0.0, %v5243
        %v5245 = vpop.f32.mrb[0].mxu0
        %5246 = vmatprep.mubr.bf16.mxu0 0
        %5247 = vmatmul.mubr.bf16.gmra.mrb[0].mxu0 %v3273
        %v5248 = vpop.f32.mrb[0].mxu0
        %v5249 = vadd.f32 0.0, %v5248
        %v5250 = vpop.f32.mrb[0].mxu0
        %v5251 = vpop.f32.mrb[0].mxu0
        %v5252 = vadd.f32 0.0, %v5251
        %v5253 = vpop.f32.mrb[0].mxu0
        %5254 = vmatprep.mubr.bf16.mxu0 0
        %5255 = vmatmul.mubr.bf16.gmra.mrb[0].mxu0 %v3275
        %v5256 = vpop.f32.mrb[0].mxu0
        %v5257 = vadd.f32 0.0, %v5256
        %v5258 = vpop.f32.mrb[0].mxu0
        %v5259 = vpop.f32.mrb[0].mxu0
        %v5260 = vadd.f32 0.0, %v5259
        %v5261 = vpop.f32.mrb[0].mxu0
        %5262 = vmatprep.mubr.bf16.mxu0 0
        %5263 = vmatmul.mubr.bf16.gmra.mrb[0].mxu0 %v3277
        %v5264 = vpop.f32.mrb[0].mxu0
        %v5265 = vadd.f32 0.0, %v5264
        %v5266 = vpop.f32.mrb[0].mxu0
        %v5267 = vpop.f32.mrb[0].mxu0
        %v5268 = vadd.f32 0.0, %v5267
        %v5269 = vpop.f32.mrb[0].mxu0
        %5270 = vmatprep.mubr.bf16.mxu0 0
        %5271 = vmatmul.mubr.bf16.gmra.mrb[0].mxu0 %v3279
        %v5272 = vpop.f32.mrb[0].mxu0
        %v5273 = vadd.f32 0.0, %v5272
        %v5274 = vpop.f32.mrb[0].mxu0
        %v5275 = vpop.f32.mrb[0].mxu0
        %v5276 = vadd.f32 0.0, %v5275
        %v5277 = vpop.f32.mrb[0].mxu0
        %5278 = vmatprep.mubr.bf16.mxu0 0
        %5279 = vmatmul.mubr.bf16.gmra.mrb[0].mxu0 %v3281
        %v5280 = vpop.f32.mrb[0].mxu0
        %v5281 = vadd.f32 0.0, %v5280
        %v5282 = vpop.f32.mrb[0].mxu0
        %v5283 = vpop.f32.mrb[0].mxu0
        %v5284 = vadd.f32 0.0, %v5283
        %v5285 = vpop.f32.mrb[0].mxu0
        %5286 = vmatprep.mubr.bf16.mxu0 0
        %5287 = vmatmul.mubr.bf16.gmra.mrb[0].mxu0 %v3283
        %v5288 = vpop.f32.mrb[0].mxu0
        %v5289 = vadd.f32 0.0, %v5288
        %v5290 = vpop.f32.mrb[0].mxu0
        %v5291 = vpop.f32.mrb[0].mxu0
        %v5292 = vadd.f32 0.0, %v5291
        %v5293 = vpop.f32.mrb[0].mxu0
        %5294 = vmatprep.mubr.bf16.mxu0 0
        %5295 = vmatmul.mubr.bf16.gmra.mrb[0].mxu0 %v3285
        %v5296 = vpop.f32.mrb[0].mxu0
        %v5297 = vadd.f32 0.0, %v5296
        %v5298 = vpop.f32.mrb[0].mxu0
        %v5299 = vpop.f32.mrb[0].mxu0
        %v5300 = vadd.f32 0.0, %v5299
        %v5301 = vpop.f32.mrb[0].mxu0
        %5302 = vmatprep.mubr.bf16.mxu0 0
        %5303 = vmatmul.mubr.bf16.gmra.mrb[0].mxu0 %v3287
        %v5304 = vpop.f32.mrb[0].mxu0
        %v5305 = vadd.f32 0.0, %v5304
        %v5306 = vpop.f32.mrb[0].mxu0
        %v5307 = vpop.f32.mrb[0].mxu0
        %v5308 = vadd.f32 0.0, %v5307
        %v5309 = vpop.f32.mrb[0].mxu0
        %5310 = vmatprep.mubr.bf16.mxu0 0
        %5311 = vmatmul.mubr.bf16.gmra.mrb[0].mxu0 %v3289
        %v5312 = vpop.f32.mrb[0].mxu0
        %v5313 = vadd.f32 0.0, %v5312
        %v5314 = vpop.f32.mrb[0].mxu0
        %v5315 = vpop.f32.mrb[0].mxu0
        %v5316 = vadd.f32 0.0, %v5315
        %v5317 = vpop.f32.mrb[0].mxu0
        %5318 = vmatprep.mubr.bf16.mxu0 0
        %5319 = vmatmul.mubr.bf16.gmra.mrb[0].mxu0 %v3291
        %v5320 = vpop.f32.mrb[0].mxu0
        %v5321 = vadd.f32 0.0, %v5320
        %v5322 = vpop.f32.mrb[0].mxu0
        %v5323 = vpop.f32.mrb[0].mxu0
        %v5324 = vadd.f32 0.0, %v5323
        %v5325 = vpop.f32.mrb[0].mxu0
        %5326 = vdwg.mxu0
        %v5327 = vadd.f32 %v5069, %v5201
        %v5328 = vadd.f32 %v5070, %v5204
        %v5329 = vadd.f32 %v5071, %v5209
        %v5330 = vadd.f32 %v5072, %v5212
        %v5331 = vadd.f32 %v5073, %v5217
        %v5332 = vadd.f32 %v5074, %v5220
        %v5333 = vadd.f32 %v5075, %v5225
        %v5334 = vadd.f32 %v5076, %v5228
        %v5335 = vadd.f32 %v5077, %v5233
        %v5336 = vadd.f32 %v5078, %v5236
        %v5337 = vadd.f32 %v5079, %v5241
        %v5338 = vadd.f32 %v5080, %v5244
        %v5339 = vadd.f32 %v5081, %v5249
        %v5340 = vadd.f32 %v5082, %v5252
        %v5341 = vadd.f32 %v5083, %v5257
        %v5342 = vadd.f32 %v5084, %v5260
        %v5343 = vadd.f32 %v5085, %v5265
        %v5344 = vadd.f32 %v5086, %v5268
        %v5345 = vadd.f32 %v5087, %v5273
        %v5346 = vadd.f32 %v5088, %v5276
        %v5347 = vadd.f32 %v5089, %v5281
        %v5348 = vadd.f32 %v5090, %v5284
        %v5349 = vadd.f32 %v5091, %v5289
        %v5350 = vadd.f32 %v5092, %v5292
        %v5351 = vadd.f32 %v5093, %v5297
        %v5352 = vadd.f32 %v5094, %v5300
        %v5353 = vadd.f32 %v5095, %v5305
        %v5354 = vadd.f32 %v5096, %v5308
        %v5355 = vadd.f32 %v5097, %v5313
        %v5356 = vadd.f32 %v5098, %v5316
        %v5357 = vadd.f32 %v5099, %v5321
        %v5358 = vadd.f32 %v5100, %v5324
        %v5360 = vshrl.u32 %v3291, 16
        %v5362 = vshll.u32 %v3291, 16
        %v5364 = vrot.slane %v5362, 1
        %v5365 = vor.u32 %v5360, %v5364
        %v5367 = vshll.u32 %v3292, 16
        %v5369 = vrot.slane %v5367, 1
        %v5370 = vsel %vm3309, %v5365, %v5369
        %s5372 = scalar_lea.vmem [#allocation6], 448
        %v5373 = vld [vmem:[%s5372] sm:$0xf]
        %v5374 = vld [vmem:[%s5372 + $0x4] sm:$0xf]
        %v5375 = vld [vmem:[%s5372 + $0x8] sm:$0xf]
        %v5376 = vld [vmem:[%s5372 + $0xc] sm:$0xf]
        %v5377 = vld [vmem:[%s5372 + $0x10] sm:$0xf]
        %v5378 = vld [vmem:[%s5372 + $0x14] sm:$0xf]
        %v5379 = vld [vmem:[%s5372 + $0x18] sm:$0xf]
        %v5380 = vld [vmem:[%s5372 + $0x1c] sm:$0xf]
        %v5381 = vld [vmem:[%s5372 + $0x20] sm:$0xf]
        %v5382 = vld [vmem:[%s5372 + $0x24] sm:$0xf]
        %v5383 = vld [vmem:[%s5372 + $0x28] sm:$0xf]
        %v5384 = vld [vmem:[%s5372 + $0x2c] sm:$0xf]
        %v5385 = vld [vmem:[%s5372 + $0x30] sm:$0xf]
        %v5386 = vld [vmem:[%s5372 + $0x34] sm:$0xf]
        %v5387 = vld [vmem:[%s5372 + $0x38] sm:$0xf]
        %v5388 = vld [vmem:[%s5372 + $0x3c] sm:$0xf]
        %v5405 = vunpack.c.l.b16 %v5373
        %v5406 = vunpack.c.l.b16 %v5374
        %v5407 = vunpack.c.l.b16 %v5375
        %v5408 = vunpack.c.l.b16 %v5376
        %v5409 = vunpack.c.l.b16 %v5377
        %v5410 = vunpack.c.l.b16 %v5378
        %v5411 = vunpack.c.l.b16 %v5379
        %v5412 = vunpack.c.l.b16 %v5380
        %v5413 = vunpack.c.l.b16 %v5381
        %v5414 = vunpack.c.l.b16 %v5382
        %v5415 = vunpack.c.l.b16 %v5383
        %v5416 = vunpack.c.l.b16 %v5384
        %v5417 = vunpack.c.l.b16 %v5385
        %v5418 = vunpack.c.l.b16 %v5386
        %v5419 = vunpack.c.l.b16 %v5387
        %v5420 = vunpack.c.l.b16 %v5388
        %v5421 = vpack.c.b16 %v5406, %v5405
        %v5422 = vpack.c.b16 %v5408, %v5407
        %v5423 = vpack.c.b16 %v5410, %v5409
        %v5424 = vpack.c.b16 %v5412, %v5411
        %v5425 = vpack.c.b16 %v5414, %v5413
        %v5426 = vpack.c.b16 %v5416, %v5415
        %v5427 = vpack.c.b16 %v5418, %v5417
        %v5428 = vpack.c.b16 %v5420, %v5419
        %5437 = vmatprep.subr.bf16.mxu0 0
        %5438 = vmatpush1.bf16.msra.mxu0 %v5421
        %5439 = vmatprep.subr.bf16.mxu0 0
        %5440 = vmatpush1.bf16.msra.mxu0 %v5422
        %5441 = vmatprep.subr.bf16.mxu0 0
        %5442 = vmatpush1.bf16.msra.mxu0 %v5423
        %5443 = vmatprep.subr.bf16.mxu0 0
        %5444 = vmatpush1.bf16.msra.mxu0 %v5424
        %5445 = vmatprep.subr.bf16.mxu0 0
        %5446 = vmatpush1.bf16.msra.mxu0 %v5425
        %5447 = vmatprep.subr.bf16.mxu0 0
        %5448 = vmatpush1.bf16.msra.mxu0 %v5426
        %5449 = vmatprep.subr.bf16.mxu0 0
        %5450 = vmatpush1.bf16.msra.mxu0 %v5427
        %5451 = vmatprep.subr.bf16.mxu0 0
        %5452 = vmatpush1.bf16.msra.mxu0 %v5428
        %5453 = vmatprep.subr.bf16.mxu0 0
        %5454 = vmatpush1.bf16.msra.mxu0 0
        %5455 = vmatprep.subr.bf16.mxu0 0
        %5456 = vmatpush1.bf16.msra.mxu0 0
        %5457 = vmatprep.subr.bf16.mxu0 0
        %5458 = vmatpush1.bf16.msra.mxu0 0
        %5459 = vmatprep.subr.bf16.mxu0 0
        %5460 = vmatpush1.bf16.msra.mxu0 0
        %5461 = vmatprep.subr.bf16.mxu0 0
        %5462 = vmatpush1.bf16.msra.mxu0 0
        %5463 = vmatprep.subr.bf16.mxu0 0
        %5464 = vmatpush1.bf16.msra.mxu0 0
        %5465 = vmatprep.subr.bf16.mxu0 0
        %5466 = vmatpush1.bf16.msra.mxu0 0
        %5467 = vmatprep.subr.bf16.mxu0 0
        %5468 = vmatpush1.bf16.msra.mxu0 0
        %5469 = vmatprep.mubr.bf16.mxu0 0
        %5470 = vmatmul.mubr.bf16.gmra.mrb[0].mxu0 %v3345
        %v5471 = vpop.f32.mrb[0].mxu0
        %v5472 = vadd.f32 0.0, %v5471
        %v5473 = vpop.f32.mrb[0].mxu0
        %v5474 = vpop.f32.mrb[0].mxu0
        %v5475 = vadd.f32 0.0, %v5474
        %v5476 = vpop.f32.mrb[0].mxu0
        %5477 = vmatprep.mubr.bf16.mxu0 0
        %5478 = vmatmul.mubr.bf16.gmra.mrb[0].mxu0 %v3357
        %v5479 = vpop.f32.mrb[0].mxu0
        %v5480 = vadd.f32 0.0, %v5479
        %v5481 = vpop.f32.mrb[0].mxu0
        %v5482 = vpop.f32.mrb[0].mxu0
        %v5483 = vadd.f32 0.0, %v5482
        %v5484 = vpop.f32.mrb[0].mxu0
        %5485 = vmatprep.mubr.bf16.mxu0 0
        %5486 = vmatmul.mubr.bf16.gmra.mrb[0].mxu0 %v3369
        %v5487 = vpop.f32.mrb[0].mxu0
        %v5488 = vadd.f32 0.0, %v5487
        %v5489 = vpop.f32.mrb[0].mxu0
        %v5490 = vpop.f32.mrb[0].mxu0
        %v5491 = vadd.f32 0.0, %v5490
        %v5492 = vpop.f32.mrb[0].mxu0
        %5493 = vmatprep.mubr.bf16.mxu0 0
        %5494 = vmatmul.mubr.bf16.gmra.mrb[0].mxu0 %v3381
        %v5495 = vpop.f32.mrb[0].mxu0
        %v5496 = vadd.f32 0.0, %v5495
        %v5497 = vpop.f32.mrb[0].mxu0
        %v5498 = vpop.f32.mrb[0].mxu0
        %v5499 = vadd.f32 0.0, %v5498
        %v5500 = vpop.f32.mrb[0].mxu0
        %5501 = vmatprep.mubr.bf16.mxu0 0
        %5502 = vmatmul.mubr.bf16.gmra.mrb[0].mxu0 %v3393
        %v5503 = vpop.f32.mrb[0].mxu0
        %v5504 = vadd.f32 0.0, %v5503
        %v5505 = vpop.f32.mrb[0].mxu0
        %v5506 = vpop.f32.mrb[0].mxu0
        %v5507 = vadd.f32 0.0, %v5506
        %v5508 = vpop.f32.mrb[0].mxu0
        %5509 = vmatprep.mubr.bf16.mxu0 0
        %5510 = vmatmul.mubr.bf16.gmra.mrb[0].mxu0 %v3405
        %v5511 = vpop.f32.mrb[0].mxu0
        %v5512 = vadd.f32 0.0, %v5511
        %v5513 = vpop.f32.mrb[0].mxu0
        %v5514 = vpop.f32.mrb[0].mxu0
        %v5515 = vadd.f32 0.0, %v5514
        %v5516 = vpop.f32.mrb[0].mxu0
        %5517 = vmatprep.mubr.bf16.mxu0 0
        %5518 = vmatmul.mubr.bf16.gmra.mrb[0].mxu0 %v3417
        %v5519 = vpop.f32.mrb[0].mxu0
        %v5520 = vadd.f32 0.0, %v5519
        %v5521 = vpop.f32.mrb[0].mxu0
        %v5522 = vpop.f32.mrb[0].mxu0
        %v5523 = vadd.f32 0.0, %v5522
        %v5524 = vpop.f32.mrb[0].mxu0
        %5525 = vmatprep.mubr.bf16.mxu0 0
        %5526 = vmatmul.mubr.bf16.gmra.mrb[0].mxu0 %v3429
        %v5527 = vpop.f32.mrb[0].mxu0
        %v5528 = vadd.f32 0.0, %v5527
        %v5529 = vpop.f32.mrb[0].mxu0
        %v5530 = vpop.f32.mrb[0].mxu0
        %v5531 = vadd.f32 0.0, %v5530
        %v5532 = vpop.f32.mrb[0].mxu0
        %5533 = vmatprep.mubr.bf16.mxu0 0
        %5534 = vmatmul.mubr.bf16.gmra.mrb[0].mxu0 %v3441
        %v5535 = vpop.f32.mrb[0].mxu0
        %v5536 = vadd.f32 0.0, %v5535
        %v5537 = vpop.f32.mrb[0].mxu0
        %v5538 = vpop.f32.mrb[0].mxu0
        %v5539 = vadd.f32 0.0, %v5538
        %v5540 = vpop.f32.mrb[0].mxu0
        %5541 = vmatprep.mubr.bf16.mxu0 0
        %5542 = vmatmul.mubr.bf16.gmra.mrb[0].mxu0 %v3453
        %v5543 = vpop.f32.mrb[0].mxu0
        %v5544 = vadd.f32 0.0, %v5543
        %v5545 = vpop.f32.mrb[0].mxu0
        %v5546 = vpop.f32.mrb[0].mxu0
        %v5547 = vadd.f32 0.0, %v5546
        %v5548 = vpop.f32.mrb[0].mxu0
        %5549 = vmatprep.mubr.bf16.mxu0 0
        %5550 = vmatmul.mubr.bf16.gmra.mrb[0].mxu0 %v3465
        %v5551 = vpop.f32.mrb[0].mxu0
        %v5552 = vadd.f32 0.0, %v5551
        %v5553 = vpop.f32.mrb[0].mxu0
        %v5554 = vpop.f32.mrb[0].mxu0
        %v5555 = vadd.f32 0.0, %v5554
        %v5556 = vpop.f32.mrb[0].mxu0
        %5557 = vmatprep.mubr.bf16.mxu0 0
        %5558 = vmatmul.mubr.bf16.gmra.mrb[0].mxu0 %v3477
        %v5559 = vpop.f32.mrb[0].mxu0
        %v5560 = vadd.f32 0.0, %v5559
        %v5561 = vpop.f32.mrb[0].mxu0
        %v5562 = vpop.f32.mrb[0].mxu0
        %v5563 = vadd.f32 0.0, %v5562
        %v5564 = vpop.f32.mrb[0].mxu0
        %5565 = vmatprep.mubr.bf16.mxu0 0
        %5566 = vmatmul.mubr.bf16.gmra.mrb[0].mxu0 %v3489
        %v5567 = vpop.f32.mrb[0].mxu0
        %v5568 = vadd.f32 0.0, %v5567
        %v5569 = vpop.f32.mrb[0].mxu0
        %v5570 = vpop.f32.mrb[0].mxu0
        %v5571 = vadd.f32 0.0, %v5570
        %v5572 = vpop.f32.mrb[0].mxu0
        %5573 = vmatprep.mubr.bf16.mxu0 0
        %5574 = vmatmul.mubr.bf16.gmra.mrb[0].mxu0 %v3501
        %v5575 = vpop.f32.mrb[0].mxu0
        %v5576 = vadd.f32 0.0, %v5575
        %v5577 = vpop.f32.mrb[0].mxu0
        %v5578 = vpop.f32.mrb[0].mxu0
        %v5579 = vadd.f32 0.0, %v5578
        %v5580 = vpop.f32.mrb[0].mxu0
        %5581 = vmatprep.mubr.bf16.mxu0 0
        %5582 = vmatmul.mubr.bf16.gmra.mrb[0].mxu0 %v4577
        %v5583 = vpop.f32.mrb[0].mxu0
        %v5584 = vadd.f32 0.0, %v5583
        %v5585 = vpop.f32.mrb[0].mxu0
        %v5586 = vpop.f32.mrb[0].mxu0
        %v5587 = vadd.f32 0.0, %v5586
        %v5588 = vpop.f32.mrb[0].mxu0
        %5589 = vmatprep.mubr.bf16.mxu0 0
        %5590 = vmatmul.mubr.bf16.gmra.mrb[0].mxu0 %v5370
        %v5591 = vpop.f32.mrb[0].mxu0
        %v5592 = vadd.f32 0.0, %v5591
        %v5593 = vpop.f32.mrb[0].mxu0
        %v5594 = vpop.f32.mrb[0].mxu0
        %v5595 = vadd.f32 0.0, %v5594
        %v5596 = vpop.f32.mrb[0].mxu0
        %5597 = vdwg.mxu0
        %v5598 = vadd.f32 %v5327, %v5472
        %v5599 = vadd.f32 %v5328, %v5475
        %v5600 = vadd.f32 %v5329, %v5480
        %v5601 = vadd.f32 %v5330, %v5483
        %v5602 = vadd.f32 %v5331, %v5488
        %v5603 = vadd.f32 %v5332, %v5491
        %v5604 = vadd.f32 %v5333, %v5496
        %v5605 = vadd.f32 %v5334, %v5499
        %v5606 = vadd.f32 %v5335, %v5504
        %v5607 = vadd.f32 %v5336, %v5507
        %v5608 = vadd.f32 %v5337, %v5512
        %v5609 = vadd.f32 %v5338, %v5515
        %v5610 = vadd.f32 %v5339, %v5520
        %v5611 = vadd.f32 %v5340, %v5523
        %v5612 = vadd.f32 %v5341, %v5528
        %v5613 = vadd.f32 %v5342, %v5531
        %v5614 = vadd.f32 %v5343, %v5536
        %v5615 = vadd.f32 %v5344, %v5539
        %v5616 = vadd.f32 %v5345, %v5544
        %v5617 = vadd.f32 %v5346, %v5547
        %v5618 = vadd.f32 %v5347, %v5552
        %v5619 = vadd.f32 %v5348, %v5555
        %v5620 = vadd.f32 %v5349, %v5560
        %v5621 = vadd.f32 %v5350, %v5563
        %v5622 = vadd.f32 %v5351, %v5568
        %v5623 = vadd.f32 %v5352, %v5571
        %v5624 = vadd.f32 %v5353, %v5576
        %v5625 = vadd.f32 %v5354, %v5579
        %v5626 = vadd.f32 %v5355, %v5584
        %v5627 = vadd.f32 %v5356, %v5587
        %v5628 = vadd.f32 %v5357, %v5592
        %v5629 = vadd.f32 %v5358, %v5595
        %v5632 = vrot.slane %v3291, 1
        %v5633 = vrot.slane %v3292, 1
        %v5634 = vsel %vm3985, %v5632, %v5633
        %s5636 = scalar_lea.vmem [#allocation6], 512
        %v5637 = vld [vmem:[%s5636] sm:$0xf]
        %v5638 = vld [vmem:[%s5636 + $0x4] sm:$0xf]
        %v5639 = vld [vmem:[%s5636 + $0x8] sm:$0xf]
        %v5640 = vld [vmem:[%s5636 + $0xc] sm:$0xf]
        %v5641 = vld [vmem:[%s5636 + $0x10] sm:$0xf]
        %v5642 = vld [vmem:[%s5636 + $0x14] sm:$0xf]
        %v5643 = vld [vmem:[%s5636 + $0x18] sm:$0xf]
        %v5644 = vld [vmem:[%s5636 + $0x1c] sm:$0xf]
        %v5645 = vld [vmem:[%s5636 + $0x20] sm:$0xf]
        %v5646 = vld [vmem:[%s5636 + $0x24] sm:$0xf]
        %v5647 = vld [vmem:[%s5636 + $0x28] sm:$0xf]
        %v5648 = vld [vmem:[%s5636 + $0x2c] sm:$0xf]
        %v5649 = vld [vmem:[%s5636 + $0x30] sm:$0xf]
        %v5650 = vld [vmem:[%s5636 + $0x34] sm:$0xf]
        %v5651 = vld [vmem:[%s5636 + $0x38] sm:$0xf]
        %v5652 = vld [vmem:[%s5636 + $0x3c] sm:$0xf]
        %v5669 = vunpack.c.l.b16 %v5637
        %v5670 = vunpack.c.l.b16 %v5638
        %v5671 = vunpack.c.l.b16 %v5639
        %v5672 = vunpack.c.l.b16 %v5640
        %v5673 = vunpack.c.l.b16 %v5641
        %v5674 = vunpack.c.l.b16 %v5642
        %v5675 = vunpack.c.l.b16 %v5643
        %v5676 = vunpack.c.l.b16 %v5644
        %v5677 = vunpack.c.l.b16 %v5645
        %v5678 = vunpack.c.l.b16 %v5646
        %v5679 = vunpack.c.l.b16 %v5647
        %v5680 = vunpack.c.l.b16 %v5648
        %v5681 = vunpack.c.l.b16 %v5649
        %v5682 = vunpack.c.l.b16 %v5650
        %v5683 = vunpack.c.l.b16 %v5651
        %v5684 = vunpack.c.l.b16 %v5652
        %v5685 = vpack.c.b16 %v5670, %v5669
        %v5686 = vpack.c.b16 %v5672, %v5671
        %v5687 = vpack.c.b16 %v5674, %v5673
        %v5688 = vpack.c.b16 %v5676, %v5675
        %v5689 = vpack.c.b16 %v5678, %v5677
        %v5690 = vpack.c.b16 %v5680, %v5679
        %v5691 = vpack.c.b16 %v5682, %v5681
        %v5692 = vpack.c.b16 %v5684, %v5683
        %5701 = vmatprep.subr.bf16.mxu0 0
        %5702 = vmatpush1.bf16.msra.mxu0 %v5685
        %5703 = vmatprep.subr.bf16.mxu0 0
        %5704 = vmatpush1.bf16.msra.mxu0 %v5686
        %5705 = vmatprep.subr.bf16.mxu0 0
        %5706 = vmatpush1.bf16.msra.mxu0 %v5687
        %5707 = vmatprep.subr.bf16.mxu0 0
        %5708 = vmatpush1.bf16.msra.mxu0 %v5688
        %5709 = vmatprep.subr.bf16.mxu0 0
        %5710 = vmatpush1.bf16.msra.mxu0 %v5689
        %5711 = vmatprep.subr.bf16.mxu0 0
        %5712 = vmatpush1.bf16.msra.mxu0 %v5690
        %5713 = vmatprep.subr.bf16.mxu0 0
        %5714 = vmatpush1.bf16.msra.mxu0 %v5691
        %5715 = vmatprep.subr.bf16.mxu0 0
        %5716 = vmatpush1.bf16.msra.mxu0 %v5692
        %5717 = vmatprep.subr.bf16.mxu0 0
        %5718 = vmatpush1.bf16.msra.mxu0 0
        %5719 = vmatprep.subr.bf16.mxu0 0
        %5720 = vmatpush1.bf16.msra.mxu0 0
        %5721 = vmatprep.subr.bf16.mxu0 0
        %5722 = vmatpush1.bf16.msra.mxu0 0
        %5723 = vmatprep.subr.bf16.mxu0 0
        %5724 = vmatpush1.bf16.msra.mxu0 0
        %5725 = vmatprep.subr.bf16.mxu0 0
        %5726 = vmatpush1.bf16.msra.mxu0 0
        %5727 = vmatprep.subr.bf16.mxu0 0
        %5728 = vmatpush1.bf16.msra.mxu0 0
        %5729 = vmatprep.subr.bf16.mxu0 0
        %5730 = vmatpush1.bf16.msra.mxu0 0
        %5731 = vmatprep.subr.bf16.mxu0 0
        %5732 = vmatpush1.bf16.msra.mxu0 0
        %5733 = vmatprep.mubr.bf16.mxu0 0
        %5734 = vmatmul.mubr.bf16.gmra.mrb[0].mxu0 %v3994
        %v5735 = vpop.f32.mrb[0].mxu0
        %v5736 = vadd.f32 0.0, %v5735
        %v5737 = vpop.f32.mrb[0].mxu0
        %v5738 = vpop.f32.mrb[0].mxu0
        %v5739 = vadd.f32 0.0, %v5738
        %v5740 = vpop.f32.mrb[0].mxu0
        %5741 = vmatprep.mubr.bf16.mxu0 0
        %5742 = vmatmul.mubr.bf16.gmra.mrb[0].mxu0 %v3997
        %v5743 = vpop.f32.mrb[0].mxu0
        %v5744 = vadd.f32 0.0, %v5743
        %v5745 = vpop.f32.mrb[0].mxu0
        %v5746 = vpop.f32.mrb[0].mxu0
        %v5747 = vadd.f32 0.0, %v5746
        %v5748 = vpop.f32.mrb[0].mxu0
        %5749 = vmatprep.mubr.bf16.mxu0 0
        %5750 = vmatmul.mubr.bf16.gmra.mrb[0].mxu0 %v4000
        %v5751 = vpop.f32.mrb[0].mxu0
        %v5752 = vadd.f32 0.0, %v5751
        %v5753 = vpop.f32.mrb[0].mxu0
        %v5754 = vpop.f32.mrb[0].mxu0
        %v5755 = vadd.f32 0.0, %v5754
        %v5756 = vpop.f32.mrb[0].mxu0
        %5757 = vmatprep.mubr.bf16.mxu0 0
        %5758 = vmatmul.mubr.bf16.gmra.mrb[0].mxu0 %v4003
        %v5759 = vpop.f32.mrb[0].mxu0
        %v5760 = vadd.f32 0.0, %v5759
        %v5761 = vpop.f32.mrb[0].mxu0
        %v5762 = vpop.f32.mrb[0].mxu0
        %v5763 = vadd.f32 0.0, %v5762
        %v5764 = vpop.f32.mrb[0].mxu0
        %5765 = vmatprep.mubr.bf16.mxu0 0
        %5766 = vmatmul.mubr.bf16.gmra.mrb[0].mxu0 %v4006
        %v5767 = vpop.f32.mrb[0].mxu0
        %v5768 = vadd.f32 0.0, %v5767
        %v5769 = vpop.f32.mrb[0].mxu0
        %v5770 = vpop.f32.mrb[0].mxu0
        %v5771 = vadd.f32 0.0, %v5770
        %v5772 = vpop.f32.mrb[0].mxu0
        %5773 = vmatprep.mubr.bf16.mxu0 0
        %5774 = vmatmul.mubr.bf16.gmra.mrb[0].mxu0 %v4009
        %v5775 = vpop.f32.mrb[0].mxu0
        %v5776 = vadd.f32 0.0, %v5775
        %v5777 = vpop.f32.mrb[0].mxu0
        %v5778 = vpop.f32.mrb[0].mxu0
        %v5779 = vadd.f32 0.0, %v5778
        %v5780 = vpop.f32.mrb[0].mxu0
        %5781 = vmatprep.mubr.bf16.mxu0 0
        %5782 = vmatmul.mubr.bf16.gmra.mrb[0].mxu0 %v4012
        %v5783 = vpop.f32.mrb[0].mxu0
        %v5784 = vadd.f32 0.0, %v5783
        %v5785 = vpop.f32.mrb[0].mxu0
        %v5786 = vpop.f32.mrb[0].mxu0
        %v5787 = vadd.f32 0.0, %v5786
        %v5788 = vpop.f32.mrb[0].mxu0
        %5789 = vmatprep.mubr.bf16.mxu0 0
        %5790 = vmatmul.mubr.bf16.gmra.mrb[0].mxu0 %v4015
        %v5791 = vpop.f32.mrb[0].mxu0
        %v5792 = vadd.f32 0.0, %v5791
        %v5793 = vpop.f32.mrb[0].mxu0
        %v5794 = vpop.f32.mrb[0].mxu0
        %v5795 = vadd.f32 0.0, %v5794
        %v5796 = vpop.f32.mrb[0].mxu0
        %5797 = vmatprep.mubr.bf16.mxu0 0
        %5798 = vmatmul.mubr.bf16.gmra.mrb[0].mxu0 %v4018
        %v5799 = vpop.f32.mrb[0].mxu0
        %v5800 = vadd.f32 0.0, %v5799
        %v5801 = vpop.f32.mrb[0].mxu0
        %v5802 = vpop.f32.mrb[0].mxu0
        %v5803 = vadd.f32 0.0, %v5802
        %v5804 = vpop.f32.mrb[0].mxu0
        %5805 = vmatprep.mubr.bf16.mxu0 0
        %5806 = vmatmul.mubr.bf16.gmra.mrb[0].mxu0 %v4021
        %v5807 = vpop.f32.mrb[0].mxu0
        %v5808 = vadd.f32 0.0, %v5807
        %v5809 = vpop.f32.mrb[0].mxu0
        %v5810 = vpop.f32.mrb[0].mxu0
        %v5811 = vadd.f32 0.0, %v5810
        %v5812 = vpop.f32.mrb[0].mxu0
        %5813 = vmatprep.mubr.bf16.mxu0 0
        %5814 = vmatmul.mubr.bf16.gmra.mrb[0].mxu0 %v4024
        %v5815 = vpop.f32.mrb[0].mxu0
        %v5816 = vadd.f32 0.0, %v5815
        %v5817 = vpop.f32.mrb[0].mxu0
        %v5818 = vpop.f32.mrb[0].mxu0
        %v5819 = vadd.f32 0.0, %v5818
        %v5820 = vpop.f32.mrb[0].mxu0
        %5821 = vmatprep.mubr.bf16.mxu0 0
        %5822 = vmatmul.mubr.bf16.gmra.mrb[0].mxu0 %v4027
        %v5823 = vpop.f32.mrb[0].mxu0
        %v5824 = vadd.f32 0.0, %v5823
        %v5825 = vpop.f32.mrb[0].mxu0
        %v5826 = vpop.f32.mrb[0].mxu0
        %v5827 = vadd.f32 0.0, %v5826
        %v5828 = vpop.f32.mrb[0].mxu0
        %5829 = vmatprep.mubr.bf16.mxu0 0
        %5830 = vmatmul.mubr.bf16.gmra.mrb[0].mxu0 %v4030
        %v5831 = vpop.f32.mrb[0].mxu0
        %v5832 = vadd.f32 0.0, %v5831
        %v5833 = vpop.f32.mrb[0].mxu0
        %v5834 = vpop.f32.mrb[0].mxu0
        %v5835 = vadd.f32 0.0, %v5834
        %v5836 = vpop.f32.mrb[0].mxu0
        %5837 = vmatprep.mubr.bf16.mxu0 0
        %5838 = vmatmul.mubr.bf16.gmra.mrb[0].mxu0 %v4033
        %v5839 = vpop.f32.mrb[0].mxu0
        %v5840 = vadd.f32 0.0, %v5839
        %v5841 = vpop.f32.mrb[0].mxu0
        %v5842 = vpop.f32.mrb[0].mxu0
        %v5843 = vadd.f32 0.0, %v5842
        %v5844 = vpop.f32.mrb[0].mxu0
        %5845 = vmatprep.mubr.bf16.mxu0 0
        %5846 = vmatmul.mubr.bf16.gmra.mrb[0].mxu0 %v4841
        %v5847 = vpop.f32.mrb[0].mxu0
        %v5848 = vadd.f32 0.0, %v5847
        %v5849 = vpop.f32.mrb[0].mxu0
        %v5850 = vpop.f32.mrb[0].mxu0
        %v5851 = vadd.f32 0.0, %v5850
        %v5852 = vpop.f32.mrb[0].mxu0
        %5853 = vmatprep.mubr.bf16.mxu0 0
        %5854 = vmatmul.mubr.bf16.gmra.mrb[0].mxu0 %v5634
        %v5855 = vpop.f32.mrb[0].mxu0
        %v5856 = vadd.f32 0.0, %v5855
        %v5857 = vpop.f32.mrb[0].mxu0
        %v5858 = vpop.f32.mrb[0].mxu0
        %v5859 = vadd.f32 0.0, %v5858
        %v5860 = vpop.f32.mrb[0].mxu0
        %5861 = vdwg.mxu0
        %v5862 = vadd.f32 %v5598, %v5736
        %v5863 = vadd.f32 %v5599, %v5739
        %v5864 = vadd.f32 %v5600, %v5744
        %v5865 = vadd.f32 %v5601, %v5747
        %v5866 = vadd.f32 %v5602, %v5752
        %v5867 = vadd.f32 %v5603, %v5755
        %v5868 = vadd.f32 %v5604, %v5760
        %v5869 = vadd.f32 %v5605, %v5763
        %v5870 = vadd.f32 %v5606, %v5768
        %v5871 = vadd.f32 %v5607, %v5771
        %v5872 = vadd.f32 %v5608, %v5776
        %v5873 = vadd.f32 %v5609, %v5779
        %v5874 = vadd.f32 %v5610, %v5784
        %v5875 = vadd.f32 %v5611, %v5787
        %v5876 = vadd.f32 %v5612, %v5792
        %v5877 = vadd.f32 %v5613, %v5795
        %v5878 = vadd.f32 %v5614, %v5800
        %v5879 = vadd.f32 %v5615, %v5803
        %v5880 = vadd.f32 %v5616, %v5808
        %v5881 = vadd.f32 %v5617, %v5811
        %v5882 = vadd.f32 %v5618, %v5816
        %v5883 = vadd.f32 %v5619, %v5819
        %v5884 = vadd.f32 %v5620, %v5824
        %v5885 = vadd.f32 %v5621, %v5827
        %v5886 = vadd.f32 %v5622, %v5832
        %v5887 = vadd.f32 %v5623, %v5835
        %v5888 = vadd.f32 %v5624, %v5840
        %v5889 = vadd.f32 %v5625, %v5843
        %v5890 = vadd.f32 %v5626, %v5848
        %v5891 = vadd.f32 %v5627, %v5851
        %v5892 = vadd.f32 %v5628, %v5856
        %v5893 = vadd.f32 %v5629, %v5859
        %v5894 = vld [vmem:[%s5] sm:$0x1]
        %v5896 = vlaneseq
        %v5897 = vshrl.u32 %v5896, 7
        %v5898 = vsub.s32 0, %v5897
        %v5899 = vrot.slane %v5894, %v5898
        %v5901 = vmul.f32 %v5862, %v5899
        %v5902 = vmul.f32 %v5863, %v5899
        %v5903 = vmul.f32 %v5864, %v5899
        %v5904 = vmul.f32 %v5865, %v5899
        %v5905 = vmul.f32 %v5866, %v5899
        %v5906 = vmul.f32 %v5867, %v5899
        %v5907 = vmul.f32 %v5868, %v5899
        %v5908 = vmul.f32 %v5869, %v5899
        %v5909 = vmul.f32 %v5870, %v5899
        %v5910 = vmul.f32 %v5871, %v5899
        %v5911 = vmul.f32 %v5872, %v5899
        %v5912 = vmul.f32 %v5873, %v5899
        %v5913 = vmul.f32 %v5874, %v5899
        %v5914 = vmul.f32 %v5875, %v5899
        %v5915 = vmul.f32 %v5876, %v5899
        %v5916 = vmul.f32 %v5877, %v5899
        %v5917 = vmul.f32 %v5878, %v5899
        %v5918 = vmul.f32 %v5879, %v5899
        %v5919 = vmul.f32 %v5880, %v5899
        %v5920 = vmul.f32 %v5881, %v5899
        %v5921 = vmul.f32 %v5882, %v5899
        %v5922 = vmul.f32 %v5883, %v5899
        %v5923 = vmul.f32 %v5884, %v5899
        %v5924 = vmul.f32 %v5885, %v5899
        %v5925 = vmul.f32 %v5886, %v5899
        %v5926 = vmul.f32 %v5887, %v5899
        %v5927 = vmul.f32 %v5888, %v5899
        %v5928 = vmul.f32 %v5889, %v5899
        %v5929 = vmul.f32 %v5890, %v5899
        %v5930 = vmul.f32 %v5891, %v5899
        %v5931 = vmul.f32 %v5892, %v5899
        %v5932 = vmul.f32 %v5893, %v5899
        %v5933 = vld [vmem:[%s6] sm:$0x1]
        %v5935 = vlaneseq
        %v5936 = vshrl.u32 %v5935, 7
        %v5937 = vsub.s32 0, %v5936
        %v5938 = vrot.slane %v5933, %v5937
        %v5940 = vadd.f32 %v5901, %v5938
        %v5941 = vadd.f32 %v5902, %v5938
        %v5942 = vadd.f32 %v5903, %v5938
        %v5943 = vadd.f32 %v5904, %v5938
        %v5944 = vadd.f32 %v5905, %v5938
        %v5945 = vadd.f32 %v5906, %v5938
        %v5946 = vadd.f32 %v5907, %v5938
        %v5947 = vadd.f32 %v5908, %v5938
        %v5948 = vadd.f32 %v5909, %v5938
        %v5949 = vadd.f32 %v5910, %v5938
        %v5950 = vadd.f32 %v5911, %v5938
        %v5951 = vadd.f32 %v5912, %v5938
        %v5952 = vadd.f32 %v5913, %v5938
        %v5953 = vadd.f32 %v5914, %v5938
        %v5954 = vadd.f32 %v5915, %v5938
        %v5955 = vadd.f32 %v5916, %v5938
        %v5956 = vadd.f32 %v5917, %v5938
        %v5957 = vadd.f32 %v5918, %v5938
        %v5958 = vadd.f32 %v5919, %v5938
        %v5959 = vadd.f32 %v5920, %v5938
        %v5960 = vadd.f32 %v5921, %v5938
        %v5961 = vadd.f32 %v5922, %v5938
        %v5962 = vadd.f32 %v5923, %v5938
        %v5963 = vadd.f32 %v5924, %v5938
        %v5964 = vadd.f32 %v5925, %v5938
        %v5965 = vadd.f32 %v5926, %v5938
        %v5966 = vadd.f32 %v5927, %v5938
        %v5967 = vadd.f32 %v5928, %v5938
        %v5968 = vadd.f32 %v5929, %v5938
        %v5969 = vadd.f32 %v5930, %v5938
        %v5970 = vadd.f32 %v5931, %v5938
        %v5971 = vadd.f32 %v5932, %v5938
        %vm5972 = vcmp.ge.f32.partialorder %v5940, 0.0
        %vm5973 = vcmp.ge.f32.partialorder %v5941, 0.0
        %vm5974 = vcmp.ge.f32.partialorder %v5942, 0.0
        %vm5975 = vcmp.ge.f32.partialorder %v5943, 0.0
        %vm5976 = vcmp.ge.f32.partialorder %v5944, 0.0
        %vm5977 = vcmp.ge.f32.partialorder %v5945, 0.0
        %vm5978 = vcmp.ge.f32.partialorder %v5946, 0.0
        %vm5979 = vcmp.ge.f32.partialorder %v5947, 0.0
        %vm5980 = vcmp.ge.f32.partialorder %v5948, 0.0
        %vm5981 = vcmp.ge.f32.partialorder %v5949, 0.0
        %vm5982 = vcmp.ge.f32.partialorder %v5950, 0.0
        %vm5983 = vcmp.ge.f32.partialorder %v5951, 0.0
        %vm5984 = vcmp.ge.f32.partialorder %v5952, 0.0
        %vm5985 = vcmp.ge.f32.partialorder %v5953, 0.0
        %vm5986 = vcmp.ge.f32.partialorder %v5954, 0.0
        %vm5987 = vcmp.ge.f32.partialorder %v5955, 0.0
        %vm5988 = vcmp.ge.f32.partialorder %v5956, 0.0
        %vm5989 = vcmp.ge.f32.partialorder %v5957, 0.0
        %vm5990 = vcmp.ge.f32.partialorder %v5958, 0.0
        %vm5991 = vcmp.ge.f32.partialorder %v5959, 0.0
        %vm5992 = vcmp.ge.f32.partialorder %v5960, 0.0
        %vm5993 = vcmp.ge.f32.partialorder %v5961, 0.0
        %vm5994 = vcmp.ge.f32.partialorder %v5962, 0.0
        %vm5995 = vcmp.ge.f32.partialorder %v5963, 0.0
        %vm5996 = vcmp.ge.f32.partialorder %v5964, 0.0
        %vm5997 = vcmp.ge.f32.partialorder %v5965, 0.0
        %vm5998 = vcmp.ge.f32.partialorder %v5966, 0.0
        %vm5999 = vcmp.ge.f32.partialorder %v5967, 0.0
        %vm6000 = vcmp.ge.f32.partialorder %v5968, 0.0
        %vm6001 = vcmp.ge.f32.partialorder %v5969, 0.0
        %vm6002 = vcmp.ge.f32.partialorder %v5970, 0.0
        %vm6003 = vcmp.ge.f32.partialorder %v5971, 0.0
        %v6004 = vmul.f32 %v5940, 0.01
        %v6005 = vmul.f32 %v5941, 0.01
        %v6006 = vmul.f32 %v5942, 0.01
        %v6007 = vmul.f32 %v5943, 0.01
        %v6008 = vmul.f32 %v5944, 0.01
        %v6009 = vmul.f32 %v5945, 0.01
        %v6010 = vmul.f32 %v5946, 0.01
        %v6011 = vmul.f32 %v5947, 0.01
        %v6012 = vmul.f32 %v5948, 0.01
        %v6013 = vmul.f32 %v5949, 0.01
        %v6014 = vmul.f32 %v5950, 0.01
        %v6015 = vmul.f32 %v5951, 0.01
        %v6016 = vmul.f32 %v5952, 0.01
        %v6017 = vmul.f32 %v5953, 0.01
        %v6018 = vmul.f32 %v5954, 0.01
        %v6019 = vmul.f32 %v5955, 0.01
        %v6020 = vmul.f32 %v5956, 0.01
        %v6021 = vmul.f32 %v5957, 0.01
        %v6022 = vmul.f32 %v5958, 0.01
        %v6023 = vmul.f32 %v5959, 0.01
        %v6024 = vmul.f32 %v5960, 0.01
        %v6025 = vmul.f32 %v5961, 0.01
        %v6026 = vmul.f32 %v5962, 0.01
        %v6027 = vmul.f32 %v5963, 0.01
        %v6028 = vmul.f32 %v5964, 0.01
        %v6029 = vmul.f32 %v5965, 0.01
        %v6030 = vmul.f32 %v5966, 0.01
        %v6031 = vmul.f32 %v5967, 0.01
        %v6032 = vmul.f32 %v5968, 0.01
        %v6033 = vmul.f32 %v5969, 0.01
        %v6034 = vmul.f32 %v5970, 0.01
        %v6035 = vmul.f32 %v5971, 0.01
        %v6036 = vsel %vm5972, %v5940, %v6004
        %v6037 = vsel %vm5973, %v5941, %v6005
        %v6038 = vsel %vm5974, %v5942, %v6006
        %v6039 = vsel %vm5975, %v5943, %v6007
        %v6040 = vsel %vm5976, %v5944, %v6008
        %v6041 = vsel %vm5977, %v5945, %v6009
        %v6042 = vsel %vm5978, %v5946, %v6010
        %v6043 = vsel %vm5979, %v5947, %v6011
        %v6044 = vsel %vm5980, %v5948, %v6012
        %v6045 = vsel %vm5981, %v5949, %v6013
        %v6046 = vsel %vm5982, %v5950, %v6014
        %v6047 = vsel %vm5983, %v5951, %v6015
        %v6048 = vsel %vm5984, %v5952, %v6016
        %v6049 = vsel %vm5985, %v5953, %v6017
        %v6050 = vsel %vm5986, %v5954, %v6018
        %v6051 = vsel %vm5987, %v5955, %v6019
        %v6052 = vsel %vm5988, %v5956, %v6020
        %v6053 = vsel %vm5989, %v5957, %v6021
        %v6054 = vsel %vm5990, %v5958, %v6022
        %v6055 = vsel %vm5991, %v5959, %v6023
        %v6056 = vsel %vm5992, %v5960, %v6024
        %v6057 = vsel %vm5993, %v5961, %v6025
        %v6058 = vsel %vm5994, %v5962, %v6026
        %v6059 = vsel %vm5995, %v5963, %v6027
        %v6060 = vsel %vm5996, %v5964, %v6028
        %v6061 = vsel %vm5997, %v5965, %v6029
        %v6062 = vsel %vm5998, %v5966, %v6030
        %v6063 = vsel %vm5999, %v5967, %v6031
        %v6064 = vsel %vm6000, %v5968, %v6032
        %v6065 = vsel %vm6001, %v5969, %v6033
        %v6066 = vsel %vm6002, %v5970, %v6034
        %v6067 = vsel %vm6003, %v5971, %v6035
        %6068 = vst [vmem:[#allocation3] sm:$0xff] 0.0
        %6069 = vst [vmem:[#allocation3 + $0x8] sm:$0xff] 0.0
        %6070 = vst [vmem:[#allocation3 + $0x10] sm:$0x3] 0.0
        %6071 = vst [vmem:[#allocation3 + $0x18] sm:$0xff] 0.0
        %6072 = vst [vmem:[#allocation3 + $0x20] sm:$0xff] 0.0
        %6073 = vst [vmem:[#allocation3 + $0x28] sm:$0x3] 0.0
        %6074 = vst [vmem:[#allocation3 + $0x30] sm:$0xff] 0.0
        %6075 = vst [vmem:[#allocation3 + $0x38] sm:$0xff] 0.0
        %6076 = vst [vmem:[#allocation3 + $0x40] sm:$0x3] 0.0
        %6077 = vst [vmem:[#allocation3 + $0x48] sm:$0xff] 0.0
        %6078 = vst [vmem:[#allocation3 + $0x50] sm:$0xff] 0.0
        %6079 = vst [vmem:[#allocation3 + $0x58] sm:$0x3] 0.0
        %6080 = vst [vmem:[#allocation3 + $0x60] sm:$0xff] 0.0
        %6081 = vst [vmem:[#allocation3 + $0x68] sm:$0xff] 0.0
        %6082 = vst [vmem:[#allocation3 + $0x70] sm:$0x3] 0.0
        %6083 = vst [vmem:[#allocation3 + $0x78] sm:$0xff] 0.0
        %6084 = vst [vmem:[#allocation3 + $0x80] sm:$0xff] 0.0
        %6085 = vst [vmem:[#allocation3 + $0x88] sm:$0x3] 0.0
        %6086 = vst [vmem:[#allocation3 + $0x90] sm:$0xff] 0.0
        %6087 = vst [vmem:[#allocation3 + $0x98] sm:$0xff] 0.0
        %6088 = vst [vmem:[#allocation3 + $0xa0] sm:$0x3] 0.0
        %6089 = vst [vmem:[#allocation3 + $0xa8] sm:$0xff] 0.0
        %6090 = vst [vmem:[#allocation3 + $0xb0] sm:$0xff] 0.0
        %6091 = vst [vmem:[#allocation3 + $0xb8] sm:$0x3] 0.0
        %6092 = vst [vmem:[#allocation3 + $0xc0] sm:$0xff] 0.0
        %6093 = vst [vmem:[#allocation3 + $0xc8] sm:$0xff] 0.0
        %6094 = vst [vmem:[#allocation3 + $0xd0] sm:$0x3] 0.0
        %6095 = vst [vmem:[#allocation3 + $0xd8] sm:$0xff] 0.0
        %6096 = vst [vmem:[#allocation3 + $0xe0] sm:$0xff] 0.0
        %6097 = vst [vmem:[#allocation3 + $0xe8] sm:$0x3] 0.0
        %6098 = vst [vmem:[#allocation3 + $0xf0] sm:$0xff] 0.0
        %6099 = vst [vmem:[#allocation3 + $0xf8] sm:$0xff] 0.0
        %6100 = vst [vmem:[#allocation3 + $0x100] sm:$0x3] 0.0
        %6101 = vst [vmem:[#allocation3 + $0x108] sm:$0xff] 0.0
        %6102 = vst [vmem:[#allocation3 + $0x110] sm:$0xff] 0.0
        %6103 = vst [vmem:[#allocation3 + $0x118] sm:$0x3] 0.0
        %6104 = vst [vmem:[#allocation3 + $0x120] sm:$0xff] 0.0
        %6105 = vst [vmem:[#allocation3 + $0x128] sm:$0xff] 0.0
        %6106 = vst [vmem:[#allocation3 + $0x130] sm:$0x3] 0.0
        %6107 = vst [vmem:[#allocation3 + $0x138] sm:$0xff] 0.0
        %6108 = vst [vmem:[#allocation3 + $0x140] sm:$0xff] 0.0
        %6109 = vst [vmem:[#allocation3 + $0x148] sm:$0x3] 0.0
        %6110 = vst [vmem:[#allocation3 + $0x150] sm:$0xff] 0.0
        %6111 = vst [vmem:[#allocation3 + $0x158] sm:$0xff] 0.0
        %6112 = vst [vmem:[#allocation3 + $0x160] sm:$0x3] 0.0
        %6113 = vst [vmem:[#allocation3 + $0x168] sm:$0xff] 0.0
        %6114 = vst [vmem:[#allocation3 + $0x170] sm:$0xff] 0.0
        %6115 = vst [vmem:[#allocation3 + $0x178] sm:$0x3] 0.0
        %6116 = vst [vmem:[#allocation3 + $0x180] sm:$0xff] 0.0
        %6117 = vst [vmem:[#allocation3 + $0x188] sm:$0xff] 0.0
        %6118 = vst [vmem:[#allocation3 + $0x190] sm:$0x3] 0.0
        %6119 = vst [vmem:[#allocation3 + $0x198] sm:$0xff] 0.0
        %6120 = vst [vmem:[#allocation3 + $0x1a0] sm:$0xff] 0.0
        %6121 = vst [vmem:[#allocation3 + $0x1a8] sm:$0x3] 0.0
        %s6122 = scalar_lea.vmem [#allocation3], 24
        %6123 = vst [vmem:[%s6122 + $0x1] sm:$0xff] %v6036
        %6124 = vst [vmem:[%s6122 + $0x9] sm:$0xff] %v6037
        %6125 = vst [vmem:[%s6122 + $0x19] sm:$0xff] %v6038
        %6126 = vst [vmem:[%s6122 + $0x21] sm:$0xff] %v6039
        %6127 = vst [vmem:[%s6122 + $0x31] sm:$0xff] %v6040
        %6128 = vst [vmem:[%s6122 + $0x39] sm:$0xff] %v6041
        %6129 = vst [vmem:[%s6122 + $0x49] sm:$0xff] %v6042
        %6130 = vst [vmem:[%s6122 + $0x51] sm:$0xff] %v6043
        %6131 = vst [vmem:[%s6122 + $0x61] sm:$0xff] %v6044
        %6132 = vst [vmem:[%s6122 + $0x69] sm:$0xff] %v6045
        %6133 = vst [vmem:[%s6122 + $0x79] sm:$0xff] %v6046
        %6134 = vst [vmem:[%s6122 + $0x81] sm:$0xff] %v6047
        %6135 = vst [vmem:[%s6122 + $0x91] sm:$0xff] %v6048
        %6136 = vst [vmem:[%s6122 + $0x99] sm:$0xff] %v6049
        %6137 = vst [vmem:[%s6122 + $0xa9] sm:$0xff] %v6050
        %6138 = vst [vmem:[%s6122 + $0xb1] sm:$0xff] %v6051
        %6139 = vst [vmem:[%s6122 + $0xc1] sm:$0xff] %v6052
        %6140 = vst [vmem:[%s6122 + $0xc9] sm:$0xff] %v6053
        %6141 = vst [vmem:[%s6122 + $0xd9] sm:$0xff] %v6054
        %6142 = vst [vmem:[%s6122 + $0xe1] sm:$0xff] %v6055
        %6143 = vst [vmem:[%s6122 + $0xf1] sm:$0xff] %v6056
        %6144 = vst [vmem:[%s6122 + $0xf9] sm:$0xff] %v6057
        %6145 = vst [vmem:[%s6122 + $0x109] sm:$0xff] %v6058
        %6146 = vst [vmem:[%s6122 + $0x111] sm:$0xff] %v6059
        %6147 = vst [vmem:[%s6122 + $0x121] sm:$0xff] %v6060
        %6148 = vst [vmem:[%s6122 + $0x129] sm:$0xff] %v6061
        %6149 = vst [vmem:[%s6122 + $0x139] sm:$0xff] %v6062
        %6150 = vst [vmem:[%s6122 + $0x141] sm:$0xff] %v6063
        %6151 = vst [vmem:[%s6122 + $0x151] sm:$0xff] %v6064
        %6152 = vst [vmem:[%s6122 + $0x159] sm:$0xff] %v6065
        %6153 = vst [vmem:[%s6122 + $0x169] sm:$0xff] %v6066
        %6154 = vst [vmem:[%s6122 + $0x171] sm:$0xff] %v6067
        %v6155 = vld [vmem:[#allocation3] sm:$0xff]
        %v6156 = vld [vmem:[#allocation3 + $0x8] sm:$0xff]
        %v6157 = vld [vmem:[#allocation3 + $0x10] sm:$0x3]
        %v6158 = vld [vmem:[#allocation3 + $0x18] sm:$0xff]
        %v6159 = vld [vmem:[#allocation3 + $0x20] sm:$0xff]
        %v6160 = vld [vmem:[#allocation3 + $0x28] sm:$0x3]
        %v6161 = vld [vmem:[#allocation3 + $0x30] sm:$0xff]
        %v6162 = vld [vmem:[#allocation3 + $0x38] sm:$0xff]
        %v6163 = vld [vmem:[#allocation3 + $0x40] sm:$0x3]
        %v6164 = vld [vmem:[#allocation3 + $0x48] sm:$0xff]
        %v6165 = vld [vmem:[#allocation3 + $0x50] sm:$0xff]
        %v6166 = vld [vmem:[#allocation3 + $0x58] sm:$0x3]
        %v6167 = vld [vmem:[#allocation3 + $0x60] sm:$0xff]
        %v6168 = vld [vmem:[#allocation3 + $0x68] sm:$0xff]
        %v6169 = vld [vmem:[#allocation3 + $0x70] sm:$0x3]
        %v6170 = vld [vmem:[#allocation3 + $0x78] sm:$0xff]
        %v6171 = vld [vmem:[#allocation3 + $0x80] sm:$0xff]
        %v6172 = vld [vmem:[#allocation3 + $0x88] sm:$0x3]
        %v6173 = vld [vmem:[#allocation3 + $0x90] sm:$0xff]
        %v6174 = vld [vmem:[#allocation3 + $0x98] sm:$0xff]
        %v6175 = vld [vmem:[#allocation3 + $0xa0] sm:$0x3]
        %v6176 = vld [vmem:[#allocation3 + $0xa8] sm:$0xff]
        %v6177 = vld [vmem:[#allocation3 + $0xb0] sm:$0xff]
        %v6178 = vld [vmem:[#allocation3 + $0xb8] sm:$0x3]
        %v6179 = vld [vmem:[#allocation3 + $0xc0] sm:$0xff]
        %v6180 = vld [vmem:[#allocation3 + $0xc8] sm:$0xff]
        %v6181 = vld [vmem:[#allocation3 + $0xd0] sm:$0x3]
        %v6182 = vld [vmem:[#allocation3 + $0xd8] sm:$0xff]
        %v6183 = vld [vmem:[#allocation3 + $0xe0] sm:$0xff]
        %v6184 = vld [vmem:[#allocation3 + $0xe8] sm:$0x3]
        %v6185 = vld [vmem:[#allocation3 + $0xf0] sm:$0xff]
        %v6186 = vld [vmem:[#allocation3 + $0xf8] sm:$0xff]
        %v6187 = vld [vmem:[#allocation3 + $0x100] sm:$0x3]
        %v6188 = vld [vmem:[#allocation3 + $0x108] sm:$0xff]
        %v6189 = vld [vmem:[#allocation3 + $0x110] sm:$0xff]
        %v6190 = vld [vmem:[#allocation3 + $0x118] sm:$0x3]
        %v6191 = vld [vmem:[#allocation3 + $0x120] sm:$0xff]
        %v6192 = vld [vmem:[#allocation3 + $0x128] sm:$0xff]
        %v6193 = vld [vmem:[#allocation3 + $0x130] sm:$0x3]
        %v6194 = vld [vmem:[#allocation3 + $0x138] sm:$0xff]
        %v6195 = vld [vmem:[#allocation3 + $0x140] sm:$0xff]
        %v6196 = vld [vmem:[#allocation3 + $0x148] sm:$0x3]
        %v6197 = vld [vmem:[#allocation3 + $0x150] sm:$0xff]
        %v6198 = vld [vmem:[#allocation3 + $0x158] sm:$0xff]
        %v6199 = vld [vmem:[#allocation3 + $0x160] sm:$0x3]
        %v6200 = vld [vmem:[#allocation3 + $0x168] sm:$0xff]
        %v6201 = vld [vmem:[#allocation3 + $0x170] sm:$0xff]
        %v6202 = vld [vmem:[#allocation3 + $0x178] sm:$0x3]
        %v6203 = vld [vmem:[#allocation3 + $0x180] sm:$0xff]
        %v6204 = vld [vmem:[#allocation3 + $0x188] sm:$0xff]
        %v6205 = vld [vmem:[#allocation3 + $0x190] sm:$0x3]
        %v6206 = vld [vmem:[#allocation3 + $0x198] sm:$0xff]
        %v6207 = vld [vmem:[#allocation3 + $0x1a0] sm:$0xff]
        %v6208 = vld [vmem:[#allocation3 + $0x1a8] sm:$0x3]
        %v6209 = vpack.c.bf16 %v6156, %v6155
        %v6210 = vpack.c.bf16 %v6157, %v6157
        %v6211 = vpack.c.bf16 %v6159, %v6158
        %v6212 = vpack.c.bf16 %v6160, %v6160
        %v6213 = vpack.c.bf16 %v6162, %v6161
        %v6214 = vpack.c.bf16 %v6163, %v6163
        %v6215 = vpack.c.bf16 %v6165, %v6164
        %v6216 = vpack.c.bf16 %v6166, %v6166
        %v6217 = vpack.c.bf16 %v6168, %v6167
        %v6218 = vpack.c.bf16 %v6169, %v6169
        %v6219 = vpack.c.bf16 %v6171, %v6170
        %v6220 = vpack.c.bf16 %v6172, %v6172
        %v6221 = vpack.c.bf16 %v6174, %v6173
        %v6222 = vpack.c.bf16 %v6175, %v6175
        %v6223 = vpack.c.bf16 %v6177, %v6176
        %v6224 = vpack.c.bf16 %v6178, %v6178
        %v6225 = vpack.c.bf16 %v6180, %v6179
        %v6226 = vpack.c.bf16 %v6181, %v6181
        %v6227 = vpack.c.bf16 %v6183, %v6182
        %v6228 = vpack.c.bf16 %v6184, %v6184
        %v6229 = vpack.c.bf16 %v6186, %v6185
        %v6230 = vpack.c.bf16 %v6187, %v6187
        %v6231 = vpack.c.bf16 %v6189, %v6188
        %v6232 = vpack.c.bf16 %v6190, %v6190
        %v6233 = vpack.c.bf16 %v6192, %v6191
        %v6234 = vpack.c.bf16 %v6193, %v6193
        %v6235 = vpack.c.bf16 %v6195, %v6194
        %v6236 = vpack.c.bf16 %v6196, %v6196
        %v6237 = vpack.c.bf16 %v6198, %v6197
        %v6238 = vpack.c.bf16 %v6199, %v6199
        %v6239 = vpack.c.bf16 %v6201, %v6200
        %v6240 = vpack.c.bf16 %v6202, %v6202
        %v6241 = vpack.c.bf16 %v6204, %v6203
        %v6242 = vpack.c.bf16 %v6205, %v6205
        %v6243 = vpack.c.bf16 %v6207, %v6206
        %v6244 = vpack.c.bf16 %v6208, %v6208
        %v6245 = vld [vmem:[#allocation9] sm:$0xf]
        %v6246 = vld [vmem:[#allocation9 + $0x4] sm:$0xf]
        %v6247 = vld [vmem:[#allocation9 + $0x8] sm:$0xf]
        %v6248 = vld [vmem:[#allocation9 + $0xc] sm:$0xf]
        %v6249 = vld [vmem:[#allocation9 + $0x10] sm:$0xf]
        %v6250 = vld [vmem:[#allocation9 + $0x14] sm:$0xf]
        %v6251 = vld [vmem:[#allocation9 + $0x18] sm:$0xf]
        %v6252 = vld [vmem:[#allocation9 + $0x1c] sm:$0xf]
        %v6253 = vld [vmem:[#allocation9 + $0x20] sm:$0xf]
        %v6254 = vld [vmem:[#allocation9 + $0x24] sm:$0xf]
        %v6255 = vld [vmem:[#allocation9 + $0x28] sm:$0xf]
        %v6256 = vld [vmem:[#allocation9 + $0x2c] sm:$0xf]
        %v6257 = vld [vmem:[#allocation9 + $0x30] sm:$0xf]
        %v6258 = vld [vmem:[#allocation9 + $0x34] sm:$0xf]
        %v6259 = vld [vmem:[#allocation9 + $0x38] sm:$0xf]
        %v6260 = vld [vmem:[#allocation9 + $0x3c] sm:$0xf]
        %v6262 = vshrl.u32 %v6209, 16
        %v6264 = vshll.u32 %v6209, 16
        %v6266 = vrot.slane %v6264, 1
        %v6267 = vor.u32 %v6262, %v6266
        %v6269 = vshll.u32 %v6210, 16
        %v6271 = vrot.slane %v6269, 1
        %v6272 = vsel %vm3309, %v6267, %v6271
        %v6274 = vshrl.u32 %v6211, 16
        %v6276 = vshll.u32 %v6211, 16
        %v6278 = vrot.slane %v6276, 1
        %v6279 = vor.u32 %v6274, %v6278
        %v6281 = vshll.u32 %v6212, 16
        %v6283 = vrot.slane %v6281, 1
        %v6284 = vsel %vm3309, %v6279, %v6283
        %v6286 = vshrl.u32 %v6213, 16
        %v6288 = vshll.u32 %v6213, 16
        %v6290 = vrot.slane %v6288, 1
        %v6291 = vor.u32 %v6286, %v6290
        %v6293 = vshll.u32 %v6214, 16
        %v6295 = vrot.slane %v6293, 1
        %v6296 = vsel %vm3309, %v6291, %v6295
        %v6298 = vshrl.u32 %v6215, 16
        %v6300 = vshll.u32 %v6215, 16
        %v6302 = vrot.slane %v6300, 1
        %v6303 = vor.u32 %v6298, %v6302
        %v6305 = vshll.u32 %v6216, 16
        %v6307 = vrot.slane %v6305, 1
        %v6308 = vsel %vm3309, %v6303, %v6307
        %v6310 = vshrl.u32 %v6217, 16
        %v6312 = vshll.u32 %v6217, 16
        %v6314 = vrot.slane %v6312, 1
        %v6315 = vor.u32 %v6310, %v6314
        %v6317 = vshll.u32 %v6218, 16
        %v6319 = vrot.slane %v6317, 1
        %v6320 = vsel %vm3309, %v6315, %v6319
        %v6322 = vshrl.u32 %v6219, 16
        %v6324 = vshll.u32 %v6219, 16
        %v6326 = vrot.slane %v6324, 1
        %v6327 = vor.u32 %v6322, %v6326
        %v6329 = vshll.u32 %v6220, 16
        %v6331 = vrot.slane %v6329, 1
        %v6332 = vsel %vm3309, %v6327, %v6331
        %v6334 = vshrl.u32 %v6221, 16
        %v6336 = vshll.u32 %v6221, 16
        %v6338 = vrot.slane %v6336, 1
        %v6339 = vor.u32 %v6334, %v6338
        %v6341 = vshll.u32 %v6222, 16
        %v6343 = vrot.slane %v6341, 1
        %v6344 = vsel %vm3309, %v6339, %v6343
        %v6346 = vshrl.u32 %v6223, 16
        %v6348 = vshll.u32 %v6223, 16
        %v6350 = vrot.slane %v6348, 1
        %v6351 = vor.u32 %v6346, %v6350
        %v6353 = vshll.u32 %v6224, 16
        %v6355 = vrot.slane %v6353, 1
        %v6356 = vsel %vm3309, %v6351, %v6355
        %v6358 = vshrl.u32 %v6225, 16
        %v6360 = vshll.u32 %v6225, 16
        %v6362 = vrot.slane %v6360, 1
        %v6363 = vor.u32 %v6358, %v6362
        %v6365 = vshll.u32 %v6226, 16
        %v6367 = vrot.slane %v6365, 1
        %v6368 = vsel %vm3309, %v6363, %v6367
        %v6370 = vshrl.u32 %v6227, 16
        %v6372 = vshll.u32 %v6227, 16
        %v6374 = vrot.slane %v6372, 1
        %v6375 = vor.u32 %v6370, %v6374
        %v6377 = vshll.u32 %v6228, 16
        %v6379 = vrot.slane %v6377, 1
        %v6380 = vsel %vm3309, %v6375, %v6379
        %v6382 = vshrl.u32 %v6229, 16
        %v6384 = vshll.u32 %v6229, 16
        %v6386 = vrot.slane %v6384, 1
        %v6387 = vor.u32 %v6382, %v6386
        %v6389 = vshll.u32 %v6230, 16
        %v6391 = vrot.slane %v6389, 1
        %v6392 = vsel %vm3309, %v6387, %v6391
        %v6394 = vshrl.u32 %v6231, 16
        %v6396 = vshll.u32 %v6231, 16
        %v6398 = vrot.slane %v6396, 1
        %v6399 = vor.u32 %v6394, %v6398
        %v6401 = vshll.u32 %v6232, 16
        %v6403 = vrot.slane %v6401, 1
        %v6404 = vsel %vm3309, %v6399, %v6403
        %v6406 = vshrl.u32 %v6233, 16
        %v6408 = vshll.u32 %v6233, 16
        %v6410 = vrot.slane %v6408, 1
        %v6411 = vor.u32 %v6406, %v6410
        %v6413 = vshll.u32 %v6234, 16
        %v6415 = vrot.slane %v6413, 1
        %v6416 = vsel %vm3309, %v6411, %v6415
        %v6418 = vshrl.u32 %v6235, 16
        %v6420 = vshll.u32 %v6235, 16
        %v6422 = vrot.slane %v6420, 1
        %v6423 = vor.u32 %v6418, %v6422
        %v6425 = vshll.u32 %v6236, 16
        %v6427 = vrot.slane %v6425, 1
        %v6428 = vsel %vm3309, %v6423, %v6427
        %v6430 = vshrl.u32 %v6237, 16
        %v6432 = vshll.u32 %v6237, 16
        %v6434 = vrot.slane %v6432, 1
        %v6435 = vor.u32 %v6430, %v6434
        %v6437 = vshll.u32 %v6238, 16
        %v6439 = vrot.slane %v6437, 1
        %v6440 = vsel %vm3309, %v6435, %v6439
        %v6442 = vshrl.u32 %v6239, 16
        %v6444 = vshll.u32 %v6239, 16
        %v6446 = vrot.slane %v6444, 1
        %v6447 = vor.u32 %v6442, %v6446
        %v6449 = vshll.u32 %v6240, 16
        %v6451 = vrot.slane %v6449, 1
        %v6452 = vsel %vm3309, %v6447, %v6451
        %s6469 = scalar_lea.vmem [#allocation9], 64
        %v6470 = vld [vmem:[%s6469] sm:$0xf]
        %v6471 = vld [vmem:[%s6469 + $0x4] sm:$0xf]
        %v6472 = vld [vmem:[%s6469 + $0x8] sm:$0xf]
        %v6473 = vld [vmem:[%s6469 + $0xc] sm:$0xf]
        %v6474 = vld [vmem:[%s6469 + $0x10] sm:$0xf]
        %v6475 = vld [vmem:[%s6469 + $0x14] sm:$0xf]
        %v6476 = vld [vmem:[%s6469 + $0x18] sm:$0xf]
        %v6477 = vld [vmem:[%s6469 + $0x1c] sm:$0xf]
        %v6478 = vld [vmem:[%s6469 + $0x20] sm:$0xf]
        %v6479 = vld [vmem:[%s6469 + $0x24] sm:$0xf]
        %v6480 = vld [vmem:[%s6469 + $0x28] sm:$0xf]
        %v6481 = vld [vmem:[%s6469 + $0x2c] sm:$0xf]
        %v6482 = vld [vmem:[%s6469 + $0x30] sm:$0xf]
        %v6483 = vld [vmem:[%s6469 + $0x34] sm:$0xf]
        %v6484 = vld [vmem:[%s6469 + $0x38] sm:$0xf]
        %v6485 = vld [vmem:[%s6469 + $0x3c] sm:$0xf]
        %v6502 = vunpack.c.l.b16 %v6470
        %v6503 = vunpack.c.l.b16 %v6471
        %v6504 = vunpack.c.l.b16 %v6472
        %v6505 = vunpack.c.l.b16 %v6473
        %v6506 = vunpack.c.l.b16 %v6474
        %v6507 = vunpack.c.l.b16 %v6475
        %v6508 = vunpack.c.l.b16 %v6476
        %v6509 = vunpack.c.l.b16 %v6477
        %v6510 = vunpack.c.l.b16 %v6478
        %v6511 = vunpack.c.l.b16 %v6479
        %v6512 = vunpack.c.l.b16 %v6480
        %v6513 = vunpack.c.l.b16 %v6481
        %v6514 = vunpack.c.l.b16 %v6482
        %v6515 = vunpack.c.l.b16 %v6483
        %v6516 = vunpack.c.l.b16 %v6484
        %v6517 = vunpack.c.l.b16 %v6485
        %v6518 = vpack.c.b16 %v6503, %v6502
        %v6519 = vpack.c.b16 %v6505, %v6504
        %v6520 = vpack.c.b16 %v6507, %v6506
        %v6521 = vpack.c.b16 %v6509, %v6508
        %v6522 = vpack.c.b16 %v6511, %v6510
        %v6523 = vpack.c.b16 %v6513, %v6512
        %v6524 = vpack.c.b16 %v6515, %v6514
        %v6525 = vpack.c.b16 %v6517, %v6516
        %6534 = vmatprep.subr.bf16.mxu0 0
        %6535 = vmatpush1.bf16.msra.mxu0 %v6518
        %6536 = vmatprep.subr.bf16.mxu0 0
        %6537 = vmatpush1.bf16.msra.mxu0 %v6519
        %6538 = vmatprep.subr.bf16.mxu0 0
        %6539 = vmatpush1.bf16.msra.mxu0 %v6520
        %6540 = vmatprep.subr.bf16.mxu0 0
        %6541 = vmatpush1.bf16.msra.mxu0 %v6521
        %6542 = vmatprep.subr.bf16.mxu0 0
        %6543 = vmatpush1.bf16.msra.mxu0 %v6522
        %6544 = vmatprep.subr.bf16.mxu0 0
        %6545 = vmatpush1.bf16.msra.mxu0 %v6523
        %6546 = vmatprep.subr.bf16.mxu0 0
        %6547 = vmatpush1.bf16.msra.mxu0 %v6524
        %6548 = vmatprep.subr.bf16.mxu0 0
        %6549 = vmatpush1.bf16.msra.mxu0 %v6525
        %6550 = vmatprep.subr.bf16.mxu0 0
        %6551 = vmatpush1.bf16.msra.mxu0 0
        %6552 = vmatprep.subr.bf16.mxu0 0
        %6553 = vmatpush1.bf16.msra.mxu0 0
        %6554 = vmatprep.subr.bf16.mxu0 0
        %6555 = vmatpush1.bf16.msra.mxu0 0
        %6556 = vmatprep.subr.bf16.mxu0 0
        %6557 = vmatpush1.bf16.msra.mxu0 0
        %6558 = vmatprep.subr.bf16.mxu0 0
        %6559 = vmatpush1.bf16.msra.mxu0 0
        %6560 = vmatprep.subr.bf16.mxu0 0
        %6561 = vmatpush1.bf16.msra.mxu0 0
        %6562 = vmatprep.subr.bf16.mxu0 0
        %6563 = vmatpush1.bf16.msra.mxu0 0
        %6564 = vmatprep.subr.bf16.mxu0 0
        %6565 = vmatpush1.bf16.msra.mxu0 0
        %6566 = vmatprep.mubr.bf16.mxu0 0
        %6567 = vmatmul.mubr.bf16.gmra.mrb[0].mxu0 %v6272
        %v6568 = vpop.f32.mrb[0].mxu0
        %v6569 = vadd.f32 0.0, %v6568
        %v6570 = vpop.f32.mrb[0].mxu0
        %v6571 = vpop.f32.mrb[0].mxu0
        %v6572 = vadd.f32 0.0, %v6571
        %v6573 = vpop.f32.mrb[0].mxu0
        %6574 = vmatprep.mubr.bf16.mxu0 0
        %6575 = vmatmul.mubr.bf16.gmra.mrb[0].mxu0 %v6284
        %v6576 = vpop.f32.mrb[0].mxu0
        %v6577 = vadd.f32 0.0, %v6576
        %v6578 = vpop.f32.mrb[0].mxu0
        %v6579 = vpop.f32.mrb[0].mxu0
        %v6580 = vadd.f32 0.0, %v6579
        %v6581 = vpop.f32.mrb[0].mxu0
        %6582 = vmatprep.mubr.bf16.mxu0 0
        %6583 = vmatmul.mubr.bf16.gmra.mrb[0].mxu0 %v6296
        %v6584 = vpop.f32.mrb[0].mxu0
        %v6585 = vadd.f32 0.0, %v6584
        %v6586 = vpop.f32.mrb[0].mxu0
        %v6587 = vpop.f32.mrb[0].mxu0
        %v6588 = vadd.f32 0.0, %v6587
        %v6589 = vpop.f32.mrb[0].mxu0
        %6590 = vmatprep.mubr.bf16.mxu0 0
        %6591 = vmatmul.mubr.bf16.gmra.mrb[0].mxu0 %v6308
        %v6592 = vpop.f32.mrb[0].mxu0
        %v6593 = vadd.f32 0.0, %v6592
        %v6594 = vpop.f32.mrb[0].mxu0
        %v6595 = vpop.f32.mrb[0].mxu0
        %v6596 = vadd.f32 0.0, %v6595
        %v6597 = vpop.f32.mrb[0].mxu0
        %6598 = vmatprep.mubr.bf16.mxu0 0
        %6599 = vmatmul.mubr.bf16.gmra.mrb[0].mxu0 %v6320
        %v6600 = vpop.f32.mrb[0].mxu0
        %v6601 = vadd.f32 0.0, %v6600
        %v6602 = vpop.f32.mrb[0].mxu0
        %v6603 = vpop.f32.mrb[0].mxu0
        %v6604 = vadd.f32 0.0, %v6603
        %v6605 = vpop.f32.mrb[0].mxu0
        %6606 = vmatprep.mubr.bf16.mxu0 0
        %6607 = vmatmul.mubr.bf16.gmra.mrb[0].mxu0 %v6332
        %v6608 = vpop.f32.mrb[0].mxu0
        %v6609 = vadd.f32 0.0, %v6608
        %v6610 = vpop.f32.mrb[0].mxu0
        %v6611 = vpop.f32.mrb[0].mxu0
        %v6612 = vadd.f32 0.0, %v6611
        %v6613 = vpop.f32.mrb[0].mxu0
        %6614 = vmatprep.mubr.bf16.mxu0 0
        %6615 = vmatmul.mubr.bf16.gmra.mrb[0].mxu0 %v6344
        %v6616 = vpop.f32.mrb[0].mxu0
        %v6617 = vadd.f32 0.0, %v6616
        %v6618 = vpop.f32.mrb[0].mxu0
        %v6619 = vpop.f32.mrb[0].mxu0
        %v6620 = vadd.f32 0.0, %v6619
        %v6621 = vpop.f32.mrb[0].mxu0
        %6622 = vmatprep.mubr.bf16.mxu0 0
        %6623 = vmatmul.mubr.bf16.gmra.mrb[0].mxu0 %v6356
        %v6624 = vpop.f32.mrb[0].mxu0
        %v6625 = vadd.f32 0.0, %v6624
        %v6626 = vpop.f32.mrb[0].mxu0
        %v6627 = vpop.f32.mrb[0].mxu0
        %v6628 = vadd.f32 0.0, %v6627
        %v6629 = vpop.f32.mrb[0].mxu0
        %6630 = vmatprep.mubr.bf16.mxu0 0
        %6631 = vmatmul.mubr.bf16.gmra.mrb[0].mxu0 %v6368
        %v6632 = vpop.f32.mrb[0].mxu0
        %v6633 = vadd.f32 0.0, %v6632
        %v6634 = vpop.f32.mrb[0].mxu0
        %v6635 = vpop.f32.mrb[0].mxu0
        %v6636 = vadd.f32 0.0, %v6635
        %v6637 = vpop.f32.mrb[0].mxu0
        %6638 = vmatprep.mubr.bf16.mxu0 0
        %6639 = vmatmul.mubr.bf16.gmra.mrb[0].mxu0 %v6380
        %v6640 = vpop.f32.mrb[0].mxu0
        %v6641 = vadd.f32 0.0, %v6640
        %v6642 = vpop.f32.mrb[0].mxu0
        %v6643 = vpop.f32.mrb[0].mxu0
        %v6644 = vadd.f32 0.0, %v6643
        %v6645 = vpop.f32.mrb[0].mxu0
        %6646 = vmatprep.mubr.bf16.mxu0 0
        %6647 = vmatmul.mubr.bf16.gmra.mrb[0].mxu0 %v6392
        %v6648 = vpop.f32.mrb[0].mxu0
        %v6649 = vadd.f32 0.0, %v6648
        %v6650 = vpop.f32.mrb[0].mxu0
        %v6651 = vpop.f32.mrb[0].mxu0
        %v6652 = vadd.f32 0.0, %v6651
        %v6653 = vpop.f32.mrb[0].mxu0
        %6654 = vmatprep.mubr.bf16.mxu0 0
        %6655 = vmatmul.mubr.bf16.gmra.mrb[0].mxu0 %v6404
        %v6656 = vpop.f32.mrb[0].mxu0
        %v6657 = vadd.f32 0.0, %v6656
        %v6658 = vpop.f32.mrb[0].mxu0
        %v6659 = vpop.f32.mrb[0].mxu0
        %v6660 = vadd.f32 0.0, %v6659
        %v6661 = vpop.f32.mrb[0].mxu0
        %6662 = vmatprep.mubr.bf16.mxu0 0
        %6663 = vmatmul.mubr.bf16.gmra.mrb[0].mxu0 %v6416
        %v6664 = vpop.f32.mrb[0].mxu0
        %v6665 = vadd.f32 0.0, %v6664
        %v6666 = vpop.f32.mrb[0].mxu0
        %v6667 = vpop.f32.mrb[0].mxu0
        %v6668 = vadd.f32 0.0, %v6667
        %v6669 = vpop.f32.mrb[0].mxu0
        %6670 = vmatprep.mubr.bf16.mxu0 0
        %6671 = vmatmul.mubr.bf16.gmra.mrb[0].mxu0 %v6428
        %v6672 = vpop.f32.mrb[0].mxu0
        %v6673 = vadd.f32 0.0, %v6672
        %v6674 = vpop.f32.mrb[0].mxu0
        %v6675 = vpop.f32.mrb[0].mxu0
        %v6676 = vadd.f32 0.0, %v6675
        %v6677 = vpop.f32.mrb[0].mxu0
        %6678 = vmatprep.mubr.bf16.mxu0 0
        %6679 = vmatmul.mubr.bf16.gmra.mrb[0].mxu0 %v6440
        %v6680 = vpop.f32.mrb[0].mxu0
        %v6681 = vadd.f32 0.0, %v6680
        %v6682 = vpop.f32.mrb[0].mxu0
        %v6683 = vpop.f32.mrb[0].mxu0
        %v6684 = vadd.f32 0.0, %v6683
        %v6685 = vpop.f32.mrb[0].mxu0
        %6686 = vmatprep.mubr.bf16.mxu0 0
        %6687 = vmatmul.mubr.bf16.gmra.mrb[0].mxu0 %v6452
        %v6688 = vpop.f32.mrb[0].mxu0
        %v6689 = vadd.f32 0.0, %v6688
        %v6690 = vpop.f32.mrb[0].mxu0
        %v6691 = vpop.f32.mrb[0].mxu0
        %v6692 = vadd.f32 0.0, %v6691
        %v6693 = vpop.f32.mrb[0].mxu0
        %6694 = vdwg.mxu0
        %v6711 = vunpack.c.l.b16 %v6245
        %v6712 = vunpack.c.l.b16 %v6246
        %v6713 = vunpack.c.l.b16 %v6247
        %v6714 = vunpack.c.l.b16 %v6248
        %v6715 = vunpack.c.l.b16 %v6249
        %v6716 = vunpack.c.l.b16 %v6250
        %v6717 = vunpack.c.l.b16 %v6251
        %v6718 = vunpack.c.l.b16 %v6252
        %v6719 = vunpack.c.l.b16 %v6253
        %v6720 = vunpack.c.l.b16 %v6254
        %v6721 = vunpack.c.l.b16 %v6255
        %v6722 = vunpack.c.l.b16 %v6256
        %v6723 = vunpack.c.l.b16 %v6257
        %v6724 = vunpack.c.l.b16 %v6258
        %v6725 = vunpack.c.l.b16 %v6259
        %v6726 = vunpack.c.l.b16 %v6260
        %v6727 = vpack.c.b16 %v6712, %v6711
        %v6728 = vpack.c.b16 %v6714, %v6713
        %v6729 = vpack.c.b16 %v6716, %v6715
        %v6730 = vpack.c.b16 %v6718, %v6717
        %v6731 = vpack.c.b16 %v6720, %v6719
        %v6732 = vpack.c.b16 %v6722, %v6721
        %v6733 = vpack.c.b16 %v6724, %v6723
        %v6734 = vpack.c.b16 %v6726, %v6725
        %6743 = vmatprep.subr.bf16.mxu0 0
        %6744 = vmatpush1.bf16.msra.mxu0 %v6727
        %6745 = vmatprep.subr.bf16.mxu0 0
        %6746 = vmatpush1.bf16.msra.mxu0 %v6728
        %6747 = vmatprep.subr.bf16.mxu0 0
        %6748 = vmatpush1.bf16.msra.mxu0 %v6729
        %6749 = vmatprep.subr.bf16.mxu0 0
        %6750 = vmatpush1.bf16.msra.mxu0 %v6730
        %6751 = vmatprep.subr.bf16.mxu0 0
        %6752 = vmatpush1.bf16.msra.mxu0 %v6731
        %6753 = vmatprep.subr.bf16.mxu0 0
        %6754 = vmatpush1.bf16.msra.mxu0 %v6732
        %6755 = vmatprep.subr.bf16.mxu0 0
        %6756 = vmatpush1.bf16.msra.mxu0 %v6733
        %6757 = vmatprep.subr.bf16.mxu0 0
        %6758 = vmatpush1.bf16.msra.mxu0 %v6734
        %6759 = vmatprep.subr.bf16.mxu0 0
        %6760 = vmatpush1.bf16.msra.mxu0 0
        %6761 = vmatprep.subr.bf16.mxu0 0
        %6762 = vmatpush1.bf16.msra.mxu0 0
        %6763 = vmatprep.subr.bf16.mxu0 0
        %6764 = vmatpush1.bf16.msra.mxu0 0
        %6765 = vmatprep.subr.bf16.mxu0 0
        %6766 = vmatpush1.bf16.msra.mxu0 0
        %6767 = vmatprep.subr.bf16.mxu0 0
        %6768 = vmatpush1.bf16.msra.mxu0 0
        %6769 = vmatprep.subr.bf16.mxu0 0
        %6770 = vmatpush1.bf16.msra.mxu0 0
        %6771 = vmatprep.subr.bf16.mxu0 0
        %6772 = vmatpush1.bf16.msra.mxu0 0
        %6773 = vmatprep.subr.bf16.mxu0 0
        %6774 = vmatpush1.bf16.msra.mxu0 0
        %6775 = vmatprep.mubr.bf16.mxu0 0
        %6776 = vmatmul.mubr.bf16.gmra.mrb[0].mxu0 %v6209
        %v6777 = vpop.f32.mrb[0].mxu0
        %v6778 = vadd.f32 %v6569, %v6777
        %v6779 = vpop.f32.mrb[0].mxu0
        %v6780 = vpop.f32.mrb[0].mxu0
        %v6781 = vadd.f32 %v6572, %v6780
        %v6782 = vpop.f32.mrb[0].mxu0
        %6783 = vmatprep.mubr.bf16.mxu0 0
        %6784 = vmatmul.mubr.bf16.gmra.mrb[0].mxu0 %v6211
        %v6785 = vpop.f32.mrb[0].mxu0
        %v6786 = vadd.f32 %v6577, %v6785
        %v6787 = vpop.f32.mrb[0].mxu0
        %v6788 = vpop.f32.mrb[0].mxu0
        %v6789 = vadd.f32 %v6580, %v6788
        %v6790 = vpop.f32.mrb[0].mxu0
        %6791 = vmatprep.mubr.bf16.mxu0 0
        %6792 = vmatmul.mubr.bf16.gmra.mrb[0].mxu0 %v6213
        %v6793 = vpop.f32.mrb[0].mxu0
        %v6794 = vadd.f32 %v6585, %v6793
        %v6795 = vpop.f32.mrb[0].mxu0
        %v6796 = vpop.f32.mrb[0].mxu0
        %v6797 = vadd.f32 %v6588, %v6796
        %v6798 = vpop.f32.mrb[0].mxu0
        %6799 = vmatprep.mubr.bf16.mxu0 0
        %6800 = vmatmul.mubr.bf16.gmra.mrb[0].mxu0 %v6215
        %v6801 = vpop.f32.mrb[0].mxu0
        %v6802 = vadd.f32 %v6593, %v6801
        %v6803 = vpop.f32.mrb[0].mxu0
        %v6804 = vpop.f32.mrb[0].mxu0
        %v6805 = vadd.f32 %v6596, %v6804
        %v6806 = vpop.f32.mrb[0].mxu0
        %6807 = vmatprep.mubr.bf16.mxu0 0
        %6808 = vmatmul.mubr.bf16.gmra.mrb[0].mxu0 %v6217
        %v6809 = vpop.f32.mrb[0].mxu0
        %v6810 = vadd.f32 %v6601, %v6809
        %v6811 = vpop.f32.mrb[0].mxu0
        %v6812 = vpop.f32.mrb[0].mxu0
        %v6813 = vadd.f32 %v6604, %v6812
        %v6814 = vpop.f32.mrb[0].mxu0
        %6815 = vmatprep.mubr.bf16.mxu0 0
        %6816 = vmatmul.mubr.bf16.gmra.mrb[0].mxu0 %v6219
        %v6817 = vpop.f32.mrb[0].mxu0
        %v6818 = vadd.f32 %v6609, %v6817
        %v6819 = vpop.f32.mrb[0].mxu0
        %v6820 = vpop.f32.mrb[0].mxu0
        %v6821 = vadd.f32 %v6612, %v6820
        %v6822 = vpop.f32.mrb[0].mxu0
        %6823 = vmatprep.mubr.bf16.mxu0 0
        %6824 = vmatmul.mubr.bf16.gmra.mrb[0].mxu0 %v6221
        %v6825 = vpop.f32.mrb[0].mxu0
        %v6826 = vadd.f32 %v6617, %v6825
        %v6827 = vpop.f32.mrb[0].mxu0
        %v6828 = vpop.f32.mrb[0].mxu0
        %v6829 = vadd.f32 %v6620, %v6828
        %v6830 = vpop.f32.mrb[0].mxu0
        %6831 = vmatprep.mubr.bf16.mxu0 0
        %6832 = vmatmul.mubr.bf16.gmra.mrb[0].mxu0 %v6223
        %v6833 = vpop.f32.mrb[0].mxu0
        %v6834 = vadd.f32 %v6625, %v6833
        %v6835 = vpop.f32.mrb[0].mxu0
        %v6836 = vpop.f32.mrb[0].mxu0
        %v6837 = vadd.f32 %v6628, %v6836
        %v6838 = vpop.f32.mrb[0].mxu0
        %6839 = vmatprep.mubr.bf16.mxu0 0
        %6840 = vmatmul.mubr.bf16.gmra.mrb[0].mxu0 %v6225
        %v6841 = vpop.f32.mrb[0].mxu0
        %v6842 = vadd.f32 %v6633, %v6841
        %v6843 = vpop.f32.mrb[0].mxu0
        %v6844 = vpop.f32.mrb[0].mxu0
        %v6845 = vadd.f32 %v6636, %v6844
        %v6846 = vpop.f32.mrb[0].mxu0
        %6847 = vmatprep.mubr.bf16.mxu0 0
        %6848 = vmatmul.mubr.bf16.gmra.mrb[0].mxu0 %v6227
        %v6849 = vpop.f32.mrb[0].mxu0
        %v6850 = vadd.f32 %v6641, %v6849
        %v6851 = vpop.f32.mrb[0].mxu0
        %v6852 = vpop.f32.mrb[0].mxu0
        %v6853 = vadd.f32 %v6644, %v6852
        %v6854 = vpop.f32.mrb[0].mxu0
        %6855 = vmatprep.mubr.bf16.mxu0 0
        %6856 = vmatmul.mubr.bf16.gmra.mrb[0].mxu0 %v6229
        %v6857 = vpop.f32.mrb[0].mxu0
        %v6858 = vadd.f32 %v6649, %v6857
        %v6859 = vpop.f32.mrb[0].mxu0
        %v6860 = vpop.f32.mrb[0].mxu0
        %v6861 = vadd.f32 %v6652, %v6860
        %v6862 = vpop.f32.mrb[0].mxu0
        %6863 = vmatprep.mubr.bf16.mxu0 0
        %6864 = vmatmul.mubr.bf16.gmra.mrb[0].mxu0 %v6231
        %v6865 = vpop.f32.mrb[0].mxu0
        %v6866 = vadd.f32 %v6657, %v6865
        %v6867 = vpop.f32.mrb[0].mxu0
        %v6868 = vpop.f32.mrb[0].mxu0
        %v6869 = vadd.f32 %v6660, %v6868
        %v6870 = vpop.f32.mrb[0].mxu0
        %6871 = vmatprep.mubr.bf16.mxu0 0
        %6872 = vmatmul.mubr.bf16.gmra.mrb[0].mxu0 %v6233
        %v6873 = vpop.f32.mrb[0].mxu0
        %v6874 = vadd.f32 %v6665, %v6873
        %v6875 = vpop.f32.mrb[0].mxu0
        %v6876 = vpop.f32.mrb[0].mxu0
        %v6877 = vadd.f32 %v6668, %v6876
        %v6878 = vpop.f32.mrb[0].mxu0
        %6879 = vmatprep.mubr.bf16.mxu0 0
        %6880 = vmatmul.mubr.bf16.gmra.mrb[0].mxu0 %v6235
        %v6881 = vpop.f32.mrb[0].mxu0
        %v6882 = vadd.f32 %v6673, %v6881
        %v6883 = vpop.f32.mrb[0].mxu0
        %v6884 = vpop.f32.mrb[0].mxu0
        %v6885 = vadd.f32 %v6676, %v6884
        %v6886 = vpop.f32.mrb[0].mxu0
        %6887 = vmatprep.mubr.bf16.mxu0 0
        %6888 = vmatmul.mubr.bf16.gmra.mrb[0].mxu0 %v6237
        %v6889 = vpop.f32.mrb[0].mxu0
        %v6890 = vadd.f32 %v6681, %v6889
        %v6891 = vpop.f32.mrb[0].mxu0
        %v6892 = vpop.f32.mrb[0].mxu0
        %v6893 = vadd.f32 %v6684, %v6892
        %v6894 = vpop.f32.mrb[0].mxu0
        %6895 = vmatprep.mubr.bf16.mxu0 0
        %6896 = vmatmul.mubr.bf16.gmra.mrb[0].mxu0 %v6239
        %v6897 = vpop.f32.mrb[0].mxu0
        %v6898 = vadd.f32 %v6689, %v6897
        %v6899 = vpop.f32.mrb[0].mxu0
        %v6900 = vpop.f32.mrb[0].mxu0
        %v6901 = vadd.f32 %v6692, %v6900
        %v6902 = vpop.f32.mrb[0].mxu0
        %6903 = vdwg.mxu0
        %v6936 = vrot.slane %v6209, 1
        %v6937 = vrot.slane %v6210, 1
        %v6938 = vsel %vm3985, %v6936, %v6937
        %v6939 = vrot.slane %v6211, 1
        %v6940 = vrot.slane %v6212, 1
        %v6941 = vsel %vm3985, %v6939, %v6940
        %v6942 = vrot.slane %v6213, 1
        %v6943 = vrot.slane %v6214, 1
        %v6944 = vsel %vm3985, %v6942, %v6943
        %v6945 = vrot.slane %v6215, 1
        %v6946 = vrot.slane %v6216, 1
        %v6947 = vsel %vm3985, %v6945, %v6946
        %v6948 = vrot.slane %v6217, 1
        %v6949 = vrot.slane %v6218, 1
        %v6950 = vsel %vm3985, %v6948, %v6949
        %v6951 = vrot.slane %v6219, 1
        %v6952 = vrot.slane %v6220, 1
        %v6953 = vsel %vm3985, %v6951, %v6952
        %v6954 = vrot.slane %v6221, 1
        %v6955 = vrot.slane %v6222, 1
        %v6956 = vsel %vm3985, %v6954, %v6955
        %v6957 = vrot.slane %v6223, 1
        %v6958 = vrot.slane %v6224, 1
        %v6959 = vsel %vm3985, %v6957, %v6958
        %v6960 = vrot.slane %v6225, 1
        %v6961 = vrot.slane %v6226, 1
        %v6962 = vsel %vm3985, %v6960, %v6961
        %v6963 = vrot.slane %v6227, 1
        %v6964 = vrot.slane %v6228, 1
        %v6965 = vsel %vm3985, %v6963, %v6964
        %v6966 = vrot.slane %v6229, 1
        %v6967 = vrot.slane %v6230, 1
        %v6968 = vsel %vm3985, %v6966, %v6967
        %v6969 = vrot.slane %v6231, 1
        %v6970 = vrot.slane %v6232, 1
        %v6971 = vsel %vm3985, %v6969, %v6970
        %v6972 = vrot.slane %v6233, 1
        %v6973 = vrot.slane %v6234, 1
        %v6974 = vsel %vm3985, %v6972, %v6973
        %v6975 = vrot.slane %v6235, 1
        %v6976 = vrot.slane %v6236, 1
        %v6977 = vsel %vm3985, %v6975, %v6976
        %v6978 = vrot.slane %v6237, 1
        %v6979 = vrot.slane %v6238, 1
        %v6980 = vsel %vm3985, %v6978, %v6979
        %v6981 = vrot.slane %v6239, 1
        %v6982 = vrot.slane %v6240, 1
        %v6983 = vsel %vm3985, %v6981, %v6982
        %s7000 = scalar_lea.vmem [#allocation9], 128
        %v7001 = vld [vmem:[%s7000] sm:$0xf]
        %v7002 = vld [vmem:[%s7000 + $0x4] sm:$0xf]
        %v7003 = vld [vmem:[%s7000 + $0x8] sm:$0xf]
        %v7004 = vld [vmem:[%s7000 + $0xc] sm:$0xf]
        %v7005 = vld [vmem:[%s7000 + $0x10] sm:$0xf]
        %v7006 = vld [vmem:[%s7000 + $0x14] sm:$0xf]
        %v7007 = vld [vmem:[%s7000 + $0x18] sm:$0xf]
        %v7008 = vld [vmem:[%s7000 + $0x1c] sm:$0xf]
        %v7009 = vld [vmem:[%s7000 + $0x20] sm:$0xf]
        %v7010 = vld [vmem:[%s7000 + $0x24] sm:$0xf]
        %v7011 = vld [vmem:[%s7000 + $0x28] sm:$0xf]
        %v7012 = vld [vmem:[%s7000 + $0x2c] sm:$0xf]
        %v7013 = vld [vmem:[%s7000 + $0x30] sm:$0xf]
        %v7014 = vld [vmem:[%s7000 + $0x34] sm:$0xf]
        %v7015 = vld [vmem:[%s7000 + $0x38] sm:$0xf]
        %v7016 = vld [vmem:[%s7000 + $0x3c] sm:$0xf]
        %v7033 = vunpack.c.l.b16 %v7001
        %v7034 = vunpack.c.l.b16 %v7002
        %v7035 = vunpack.c.l.b16 %v7003
        %v7036 = vunpack.c.l.b16 %v7004
        %v7037 = vunpack.c.l.b16 %v7005
        %v7038 = vunpack.c.l.b16 %v7006
        %v7039 = vunpack.c.l.b16 %v7007
        %v7040 = vunpack.c.l.b16 %v7008
        %v7041 = vunpack.c.l.b16 %v7009
        %v7042 = vunpack.c.l.b16 %v7010
        %v7043 = vunpack.c.l.b16 %v7011
        %v7044 = vunpack.c.l.b16 %v7012
        %v7045 = vunpack.c.l.b16 %v7013
        %v7046 = vunpack.c.l.b16 %v7014
        %v7047 = vunpack.c.l.b16 %v7015
        %v7048 = vunpack.c.l.b16 %v7016
        %v7049 = vpack.c.b16 %v7034, %v7033
        %v7050 = vpack.c.b16 %v7036, %v7035
        %v7051 = vpack.c.b16 %v7038, %v7037
        %v7052 = vpack.c.b16 %v7040, %v7039
        %v7053 = vpack.c.b16 %v7042, %v7041
        %v7054 = vpack.c.b16 %v7044, %v7043
        %v7055 = vpack.c.b16 %v7046, %v7045
        %v7056 = vpack.c.b16 %v7048, %v7047
        %7065 = vmatprep.subr.bf16.mxu0 0
        %7066 = vmatpush1.bf16.msra.mxu0 %v7049
        %7067 = vmatprep.subr.bf16.mxu0 0
        %7068 = vmatpush1.bf16.msra.mxu0 %v7050
        %7069 = vmatprep.subr.bf16.mxu0 0
        %7070 = vmatpush1.bf16.msra.mxu0 %v7051
        %7071 = vmatprep.subr.bf16.mxu0 0
        %7072 = vmatpush1.bf16.msra.mxu0 %v7052
        %7073 = vmatprep.subr.bf16.mxu0 0
        %7074 = vmatpush1.bf16.msra.mxu0 %v7053
        %7075 = vmatprep.subr.bf16.mxu0 0
        %7076 = vmatpush1.bf16.msra.mxu0 %v7054
        %7077 = vmatprep.subr.bf16.mxu0 0
        %7078 = vmatpush1.bf16.msra.mxu0 %v7055
        %7079 = vmatprep.subr.bf16.mxu0 0
        %7080 = vmatpush1.bf16.msra.mxu0 %v7056
        %7081 = vmatprep.subr.bf16.mxu0 0
        %7082 = vmatpush1.bf16.msra.mxu0 0
        %7083 = vmatprep.subr.bf16.mxu0 0
        %7084 = vmatpush1.bf16.msra.mxu0 0
        %7085 = vmatprep.subr.bf16.mxu0 0
        %7086 = vmatpush1.bf16.msra.mxu0 0
        %7087 = vmatprep.subr.bf16.mxu0 0
        %7088 = vmatpush1.bf16.msra.mxu0 0
        %7089 = vmatprep.subr.bf16.mxu0 0
        %7090 = vmatpush1.bf16.msra.mxu0 0
        %7091 = vmatprep.subr.bf16.mxu0 0
        %7092 = vmatpush1.bf16.msra.mxu0 0
        %7093 = vmatprep.subr.bf16.mxu0 0
        %7094 = vmatpush1.bf16.msra.mxu0 0
        %7095 = vmatprep.subr.bf16.mxu0 0
        %7096 = vmatpush1.bf16.msra.mxu0 0
        %7097 = vmatprep.mubr.bf16.mxu0 0
        %7098 = vmatmul.mubr.bf16.gmra.mrb[0].mxu0 %v6938
        %v7099 = vpop.f32.mrb[0].mxu0
        %v7100 = vadd.f32 0.0, %v7099
        %v7101 = vpop.f32.mrb[0].mxu0
        %v7102 = vpop.f32.mrb[0].mxu0
        %v7103 = vadd.f32 0.0, %v7102
        %v7104 = vpop.f32.mrb[0].mxu0
        %7105 = vmatprep.mubr.bf16.mxu0 0
        %7106 = vmatmul.mubr.bf16.gmra.mrb[0].mxu0 %v6941
        %v7107 = vpop.f32.mrb[0].mxu0
        %v7108 = vadd.f32 0.0, %v7107
        %v7109 = vpop.f32.mrb[0].mxu0
        %v7110 = vpop.f32.mrb[0].mxu0
        %v7111 = vadd.f32 0.0, %v7110
        %v7112 = vpop.f32.mrb[0].mxu0
        %7113 = vmatprep.mubr.bf16.mxu0 0
        %7114 = vmatmul.mubr.bf16.gmra.mrb[0].mxu0 %v6944
        %v7115 = vpop.f32.mrb[0].mxu0
        %v7116 = vadd.f32 0.0, %v7115
        %v7117 = vpop.f32.mrb[0].mxu0
        %v7118 = vpop.f32.mrb[0].mxu0
        %v7119 = vadd.f32 0.0, %v7118
        %v7120 = vpop.f32.mrb[0].mxu0
        %7121 = vmatprep.mubr.bf16.mxu0 0
        %7122 = vmatmul.mubr.bf16.gmra.mrb[0].mxu0 %v6947
        %v7123 = vpop.f32.mrb[0].mxu0
        %v7124 = vadd.f32 0.0, %v7123
        %v7125 = vpop.f32.mrb[0].mxu0
        %v7126 = vpop.f32.mrb[0].mxu0
        %v7127 = vadd.f32 0.0, %v7126
        %v7128 = vpop.f32.mrb[0].mxu0
        %7129 = vmatprep.mubr.bf16.mxu0 0
        %7130 = vmatmul.mubr.bf16.gmra.mrb[0].mxu0 %v6950
        %v7131 = vpop.f32.mrb[0].mxu0
        %v7132 = vadd.f32 0.0, %v7131
        %v7133 = vpop.f32.mrb[0].mxu0
        %v7134 = vpop.f32.mrb[0].mxu0
        %v7135 = vadd.f32 0.0, %v7134
        %v7136 = vpop.f32.mrb[0].mxu0
        %7137 = vmatprep.mubr.bf16.mxu0 0
        %7138 = vmatmul.mubr.bf16.gmra.mrb[0].mxu0 %v6953
        %v7139 = vpop.f32.mrb[0].mxu0
        %v7140 = vadd.f32 0.0, %v7139
        %v7141 = vpop.f32.mrb[0].mxu0
        %v7142 = vpop.f32.mrb[0].mxu0
        %v7143 = vadd.f32 0.0, %v7142
        %v7144 = vpop.f32.mrb[0].mxu0
        %7145 = vmatprep.mubr.bf16.mxu0 0
        %7146 = vmatmul.mubr.bf16.gmra.mrb[0].mxu0 %v6956
        %v7147 = vpop.f32.mrb[0].mxu0
        %v7148 = vadd.f32 0.0, %v7147
        %v7149 = vpop.f32.mrb[0].mxu0
        %v7150 = vpop.f32.mrb[0].mxu0
        %v7151 = vadd.f32 0.0, %v7150
        %v7152 = vpop.f32.mrb[0].mxu0
        %7153 = vmatprep.mubr.bf16.mxu0 0
        %7154 = vmatmul.mubr.bf16.gmra.mrb[0].mxu0 %v6959
        %v7155 = vpop.f32.mrb[0].mxu0
        %v7156 = vadd.f32 0.0, %v7155
        %v7157 = vpop.f32.mrb[0].mxu0
        %v7158 = vpop.f32.mrb[0].mxu0
        %v7159 = vadd.f32 0.0, %v7158
        %v7160 = vpop.f32.mrb[0].mxu0
        %7161 = vmatprep.mubr.bf16.mxu0 0
        %7162 = vmatmul.mubr.bf16.gmra.mrb[0].mxu0 %v6962
        %v7163 = vpop.f32.mrb[0].mxu0
        %v7164 = vadd.f32 0.0, %v7163
        %v7165 = vpop.f32.mrb[0].mxu0
        %v7166 = vpop.f32.mrb[0].mxu0
        %v7167 = vadd.f32 0.0, %v7166
        %v7168 = vpop.f32.mrb[0].mxu0
        %7169 = vmatprep.mubr.bf16.mxu0 0
        %7170 = vmatmul.mubr.bf16.gmra.mrb[0].mxu0 %v6965
        %v7171 = vpop.f32.mrb[0].mxu0
        %v7172 = vadd.f32 0.0, %v7171
        %v7173 = vpop.f32.mrb[0].mxu0
        %v7174 = vpop.f32.mrb[0].mxu0
        %v7175 = vadd.f32 0.0, %v7174
        %v7176 = vpop.f32.mrb[0].mxu0
        %7177 = vmatprep.mubr.bf16.mxu0 0
        %7178 = vmatmul.mubr.bf16.gmra.mrb[0].mxu0 %v6968
        %v7179 = vpop.f32.mrb[0].mxu0
        %v7180 = vadd.f32 0.0, %v7179
        %v7181 = vpop.f32.mrb[0].mxu0
        %v7182 = vpop.f32.mrb[0].mxu0
        %v7183 = vadd.f32 0.0, %v7182
        %v7184 = vpop.f32.mrb[0].mxu0
        %7185 = vmatprep.mubr.bf16.mxu0 0
        %7186 = vmatmul.mubr.bf16.gmra.mrb[0].mxu0 %v6971
        %v7187 = vpop.f32.mrb[0].mxu0
        %v7188 = vadd.f32 0.0, %v7187
        %v7189 = vpop.f32.mrb[0].mxu0
        %v7190 = vpop.f32.mrb[0].mxu0
        %v7191 = vadd.f32 0.0, %v7190
        %v7192 = vpop.f32.mrb[0].mxu0
        %7193 = vmatprep.mubr.bf16.mxu0 0
        %7194 = vmatmul.mubr.bf16.gmra.mrb[0].mxu0 %v6974
        %v7195 = vpop.f32.mrb[0].mxu0
        %v7196 = vadd.f32 0.0, %v7195
        %v7197 = vpop.f32.mrb[0].mxu0
        %v7198 = vpop.f32.mrb[0].mxu0
        %v7199 = vadd.f32 0.0, %v7198
        %v7200 = vpop.f32.mrb[0].mxu0
        %7201 = vmatprep.mubr.bf16.mxu0 0
        %7202 = vmatmul.mubr.bf16.gmra.mrb[0].mxu0 %v6977
        %v7203 = vpop.f32.mrb[0].mxu0
        %v7204 = vadd.f32 0.0, %v7203
        %v7205 = vpop.f32.mrb[0].mxu0
        %v7206 = vpop.f32.mrb[0].mxu0
        %v7207 = vadd.f32 0.0, %v7206
        %v7208 = vpop.f32.mrb[0].mxu0
        %7209 = vmatprep.mubr.bf16.mxu0 0
        %7210 = vmatmul.mubr.bf16.gmra.mrb[0].mxu0 %v6980
        %v7211 = vpop.f32.mrb[0].mxu0
        %v7212 = vadd.f32 0.0, %v7211
        %v7213 = vpop.f32.mrb[0].mxu0
        %v7214 = vpop.f32.mrb[0].mxu0
        %v7215 = vadd.f32 0.0, %v7214
        %v7216 = vpop.f32.mrb[0].mxu0
        %7217 = vmatprep.mubr.bf16.mxu0 0
        %7218 = vmatmul.mubr.bf16.gmra.mrb[0].mxu0 %v6983
        %v7219 = vpop.f32.mrb[0].mxu0
        %v7220 = vadd.f32 0.0, %v7219
        %v7221 = vpop.f32.mrb[0].mxu0
        %v7222 = vpop.f32.mrb[0].mxu0
        %v7223 = vadd.f32 0.0, %v7222
        %v7224 = vpop.f32.mrb[0].mxu0
        %7225 = vdwg.mxu0
        %v7226 = vadd.f32 %v6778, %v7100
        %v7227 = vadd.f32 %v6781, %v7103
        %v7228 = vadd.f32 %v6786, %v7108
        %v7229 = vadd.f32 %v6789, %v7111
        %v7230 = vadd.f32 %v6794, %v7116
        %v7231 = vadd.f32 %v6797, %v7119
        %v7232 = vadd.f32 %v6802, %v7124
        %v7233 = vadd.f32 %v6805, %v7127
        %v7234 = vadd.f32 %v6810, %v7132
        %v7235 = vadd.f32 %v6813, %v7135
        %v7236 = vadd.f32 %v6818, %v7140
        %v7237 = vadd.f32 %v6821, %v7143
        %v7238 = vadd.f32 %v6826, %v7148
        %v7239 = vadd.f32 %v6829, %v7151
        %v7240 = vadd.f32 %v6834, %v7156
        %v7241 = vadd.f32 %v6837, %v7159
        %v7242 = vadd.f32 %v6842, %v7164
        %v7243 = vadd.f32 %v6845, %v7167
        %v7244 = vadd.f32 %v6850, %v7172
        %v7245 = vadd.f32 %v6853, %v7175
        %v7246 = vadd.f32 %v6858, %v7180
        %v7247 = vadd.f32 %v6861, %v7183
        %v7248 = vadd.f32 %v6866, %v7188
        %v7249 = vadd.f32 %v6869, %v7191
        %v7250 = vadd.f32 %v6874, %v7196
        %v7251 = vadd.f32 %v6877, %v7199
        %v7252 = vadd.f32 %v6882, %v7204
        %v7253 = vadd.f32 %v6885, %v7207
        %v7254 = vadd.f32 %v6890, %v7212
        %v7255 = vadd.f32 %v6893, %v7215
        %v7256 = vadd.f32 %v6898, %v7220
        %v7257 = vadd.f32 %v6901, %v7223
        %s7258 = scalar_lea.vmem [#allocation9], 192
        %v7259 = vld [vmem:[%s7258] sm:$0xf]
        %v7260 = vld [vmem:[%s7258 + $0x4] sm:$0xf]
        %v7261 = vld [vmem:[%s7258 + $0x8] sm:$0xf]
        %v7262 = vld [vmem:[%s7258 + $0xc] sm:$0xf]
        %v7263 = vld [vmem:[%s7258 + $0x10] sm:$0xf]
        %v7264 = vld [vmem:[%s7258 + $0x14] sm:$0xf]
        %v7265 = vld [vmem:[%s7258 + $0x18] sm:$0xf]
        %v7266 = vld [vmem:[%s7258 + $0x1c] sm:$0xf]
        %v7267 = vld [vmem:[%s7258 + $0x20] sm:$0xf]
        %v7268 = vld [vmem:[%s7258 + $0x24] sm:$0xf]
        %v7269 = vld [vmem:[%s7258 + $0x28] sm:$0xf]
        %v7270 = vld [vmem:[%s7258 + $0x2c] sm:$0xf]
        %v7271 = vld [vmem:[%s7258 + $0x30] sm:$0xf]
        %v7272 = vld [vmem:[%s7258 + $0x34] sm:$0xf]
        %v7273 = vld [vmem:[%s7258 + $0x38] sm:$0xf]
        %v7274 = vld [vmem:[%s7258 + $0x3c] sm:$0xf]
        %v7291 = vunpack.c.l.b16 %v7259
        %v7292 = vunpack.c.l.b16 %v7260
        %v7293 = vunpack.c.l.b16 %v7261
        %v7294 = vunpack.c.l.b16 %v7262
        %v7295 = vunpack.c.l.b16 %v7263
        %v7296 = vunpack.c.l.b16 %v7264
        %v7297 = vunpack.c.l.b16 %v7265
        %v7298 = vunpack.c.l.b16 %v7266
        %v7299 = vunpack.c.l.b16 %v7267
        %v7300 = vunpack.c.l.b16 %v7268
        %v7301 = vunpack.c.l.b16 %v7269
        %v7302 = vunpack.c.l.b16 %v7270
        %v7303 = vunpack.c.l.b16 %v7271
        %v7304 = vunpack.c.l.b16 %v7272
        %v7305 = vunpack.c.l.b16 %v7273
        %v7306 = vunpack.c.l.b16 %v7274
        %v7307 = vpack.c.b16 %v7292, %v7291
        %v7308 = vpack.c.b16 %v7294, %v7293
        %v7309 = vpack.c.b16 %v7296, %v7295
        %v7310 = vpack.c.b16 %v7298, %v7297
        %v7311 = vpack.c.b16 %v7300, %v7299
        %v7312 = vpack.c.b16 %v7302, %v7301
        %v7313 = vpack.c.b16 %v7304, %v7303
        %v7314 = vpack.c.b16 %v7306, %v7305
        %7323 = vmatprep.subr.bf16.mxu0 0
        %7324 = vmatpush1.bf16.msra.mxu0 %v7307
        %7325 = vmatprep.subr.bf16.mxu0 0
        %7326 = vmatpush1.bf16.msra.mxu0 %v7308
        %7327 = vmatprep.subr.bf16.mxu0 0
        %7328 = vmatpush1.bf16.msra.mxu0 %v7309
        %7329 = vmatprep.subr.bf16.mxu0 0
        %7330 = vmatpush1.bf16.msra.mxu0 %v7310
        %7331 = vmatprep.subr.bf16.mxu0 0
        %7332 = vmatpush1.bf16.msra.mxu0 %v7311
        %7333 = vmatprep.subr.bf16.mxu0 0
        %7334 = vmatpush1.bf16.msra.mxu0 %v7312
        %7335 = vmatprep.subr.bf16.mxu0 0
        %7336 = vmatpush1.bf16.msra.mxu0 %v7313
        %7337 = vmatprep.subr.bf16.mxu0 0
        %7338 = vmatpush1.bf16.msra.mxu0 %v7314
        %7339 = vmatprep.subr.bf16.mxu0 0
        %7340 = vmatpush1.bf16.msra.mxu0 0
        %7341 = vmatprep.subr.bf16.mxu0 0
        %7342 = vmatpush1.bf16.msra.mxu0 0
        %7343 = vmatprep.subr.bf16.mxu0 0
        %7344 = vmatpush1.bf16.msra.mxu0 0
        %7345 = vmatprep.subr.bf16.mxu0 0
        %7346 = vmatpush1.bf16.msra.mxu0 0
        %7347 = vmatprep.subr.bf16.mxu0 0
        %7348 = vmatpush1.bf16.msra.mxu0 0
        %7349 = vmatprep.subr.bf16.mxu0 0
        %7350 = vmatpush1.bf16.msra.mxu0 0
        %7351 = vmatprep.subr.bf16.mxu0 0
        %7352 = vmatpush1.bf16.msra.mxu0 0
        %7353 = vmatprep.subr.bf16.mxu0 0
        %7354 = vmatpush1.bf16.msra.mxu0 0
        %7355 = vmatprep.mubr.bf16.mxu0 0
        %7356 = vmatmul.mubr.bf16.gmra.mrb[0].mxu0 %v6211
        %v7357 = vpop.f32.mrb[0].mxu0
        %v7358 = vadd.f32 0.0, %v7357
        %v7359 = vpop.f32.mrb[0].mxu0
        %v7360 = vpop.f32.mrb[0].mxu0
        %v7361 = vadd.f32 0.0, %v7360
        %v7362 = vpop.f32.mrb[0].mxu0
        %7363 = vmatprep.mubr.bf16.mxu0 0
        %7364 = vmatmul.mubr.bf16.gmra.mrb[0].mxu0 %v6213
        %v7365 = vpop.f32.mrb[0].mxu0
        %v7366 = vadd.f32 0.0, %v7365
        %v7367 = vpop.f32.mrb[0].mxu0
        %v7368 = vpop.f32.mrb[0].mxu0
        %v7369 = vadd.f32 0.0, %v7368
        %v7370 = vpop.f32.mrb[0].mxu0
        %7371 = vmatprep.mubr.bf16.mxu0 0
        %7372 = vmatmul.mubr.bf16.gmra.mrb[0].mxu0 %v6215
        %v7373 = vpop.f32.mrb[0].mxu0
        %v7374 = vadd.f32 0.0, %v7373
        %v7375 = vpop.f32.mrb[0].mxu0
        %v7376 = vpop.f32.mrb[0].mxu0
        %v7377 = vadd.f32 0.0, %v7376
        %v7378 = vpop.f32.mrb[0].mxu0
        %7379 = vmatprep.mubr.bf16.mxu0 0
        %7380 = vmatmul.mubr.bf16.gmra.mrb[0].mxu0 %v6217
        %v7381 = vpop.f32.mrb[0].mxu0
        %v7382 = vadd.f32 0.0, %v7381
        %v7383 = vpop.f32.mrb[0].mxu0
        %v7384 = vpop.f32.mrb[0].mxu0
        %v7385 = vadd.f32 0.0, %v7384
        %v7386 = vpop.f32.mrb[0].mxu0
        %7387 = vmatprep.mubr.bf16.mxu0 0
        %7388 = vmatmul.mubr.bf16.gmra.mrb[0].mxu0 %v6219
        %v7389 = vpop.f32.mrb[0].mxu0
        %v7390 = vadd.f32 0.0, %v7389
        %v7391 = vpop.f32.mrb[0].mxu0
        %v7392 = vpop.f32.mrb[0].mxu0
        %v7393 = vadd.f32 0.0, %v7392
        %v7394 = vpop.f32.mrb[0].mxu0
        %7395 = vmatprep.mubr.bf16.mxu0 0
        %7396 = vmatmul.mubr.bf16.gmra.mrb[0].mxu0 %v6221
        %v7397 = vpop.f32.mrb[0].mxu0
        %v7398 = vadd.f32 0.0, %v7397
        %v7399 = vpop.f32.mrb[0].mxu0
        %v7400 = vpop.f32.mrb[0].mxu0
        %v7401 = vadd.f32 0.0, %v7400
        %v7402 = vpop.f32.mrb[0].mxu0
        %7403 = vmatprep.mubr.bf16.mxu0 0
        %7404 = vmatmul.mubr.bf16.gmra.mrb[0].mxu0 %v6223
        %v7405 = vpop.f32.mrb[0].mxu0
        %v7406 = vadd.f32 0.0, %v7405
        %v7407 = vpop.f32.mrb[0].mxu0
        %v7408 = vpop.f32.mrb[0].mxu0
        %v7409 = vadd.f32 0.0, %v7408
        %v7410 = vpop.f32.mrb[0].mxu0
        %7411 = vmatprep.mubr.bf16.mxu0 0
        %7412 = vmatmul.mubr.bf16.gmra.mrb[0].mxu0 %v6225
        %v7413 = vpop.f32.mrb[0].mxu0
        %v7414 = vadd.f32 0.0, %v7413
        %v7415 = vpop.f32.mrb[0].mxu0
        %v7416 = vpop.f32.mrb[0].mxu0
        %v7417 = vadd.f32 0.0, %v7416
        %v7418 = vpop.f32.mrb[0].mxu0
        %7419 = vmatprep.mubr.bf16.mxu0 0
        %7420 = vmatmul.mubr.bf16.gmra.mrb[0].mxu0 %v6227
        %v7421 = vpop.f32.mrb[0].mxu0
        %v7422 = vadd.f32 0.0, %v7421
        %v7423 = vpop.f32.mrb[0].mxu0
        %v7424 = vpop.f32.mrb[0].mxu0
        %v7425 = vadd.f32 0.0, %v7424
        %v7426 = vpop.f32.mrb[0].mxu0
        %7427 = vmatprep.mubr.bf16.mxu0 0
        %7428 = vmatmul.mubr.bf16.gmra.mrb[0].mxu0 %v6229
        %v7429 = vpop.f32.mrb[0].mxu0
        %v7430 = vadd.f32 0.0, %v7429
        %v7431 = vpop.f32.mrb[0].mxu0
        %v7432 = vpop.f32.mrb[0].mxu0
        %v7433 = vadd.f32 0.0, %v7432
        %v7434 = vpop.f32.mrb[0].mxu0
        %7435 = vmatprep.mubr.bf16.mxu0 0
        %7436 = vmatmul.mubr.bf16.gmra.mrb[0].mxu0 %v6231
        %v7437 = vpop.f32.mrb[0].mxu0
        %v7438 = vadd.f32 0.0, %v7437
        %v7439 = vpop.f32.mrb[0].mxu0
        %v7440 = vpop.f32.mrb[0].mxu0
        %v7441 = vadd.f32 0.0, %v7440
        %v7442 = vpop.f32.mrb[0].mxu0
        %7443 = vmatprep.mubr.bf16.mxu0 0
        %7444 = vmatmul.mubr.bf16.gmra.mrb[0].mxu0 %v6233
        %v7445 = vpop.f32.mrb[0].mxu0
        %v7446 = vadd.f32 0.0, %v7445
        %v7447 = vpop.f32.mrb[0].mxu0
        %v7448 = vpop.f32.mrb[0].mxu0
        %v7449 = vadd.f32 0.0, %v7448
        %v7450 = vpop.f32.mrb[0].mxu0
        %7451 = vmatprep.mubr.bf16.mxu0 0
        %7452 = vmatmul.mubr.bf16.gmra.mrb[0].mxu0 %v6235
        %v7453 = vpop.f32.mrb[0].mxu0
        %v7454 = vadd.f32 0.0, %v7453
        %v7455 = vpop.f32.mrb[0].mxu0
        %v7456 = vpop.f32.mrb[0].mxu0
        %v7457 = vadd.f32 0.0, %v7456
        %v7458 = vpop.f32.mrb[0].mxu0
        %7459 = vmatprep.mubr.bf16.mxu0 0
        %7460 = vmatmul.mubr.bf16.gmra.mrb[0].mxu0 %v6237
        %v7461 = vpop.f32.mrb[0].mxu0
        %v7462 = vadd.f32 0.0, %v7461
        %v7463 = vpop.f32.mrb[0].mxu0
        %v7464 = vpop.f32.mrb[0].mxu0
        %v7465 = vadd.f32 0.0, %v7464
        %v7466 = vpop.f32.mrb[0].mxu0
        %7467 = vmatprep.mubr.bf16.mxu0 0
        %7468 = vmatmul.mubr.bf16.gmra.mrb[0].mxu0 %v6239
        %v7469 = vpop.f32.mrb[0].mxu0
        %v7470 = vadd.f32 0.0, %v7469
        %v7471 = vpop.f32.mrb[0].mxu0
        %v7472 = vpop.f32.mrb[0].mxu0
        %v7473 = vadd.f32 0.0, %v7472
        %v7474 = vpop.f32.mrb[0].mxu0
        %7475 = vmatprep.mubr.bf16.mxu0 0
        %7476 = vmatmul.mubr.bf16.gmra.mrb[0].mxu0 %v6241
        %v7477 = vpop.f32.mrb[0].mxu0
        %v7478 = vadd.f32 0.0, %v7477
        %v7479 = vpop.f32.mrb[0].mxu0
        %v7480 = vpop.f32.mrb[0].mxu0
        %v7481 = vadd.f32 0.0, %v7480
        %v7482 = vpop.f32.mrb[0].mxu0
        %7483 = vdwg.mxu0
        %v7484 = vadd.f32 %v7226, %v7358
        %v7485 = vadd.f32 %v7227, %v7361
        %v7486 = vadd.f32 %v7228, %v7366
        %v7487 = vadd.f32 %v7229, %v7369
        %v7488 = vadd.f32 %v7230, %v7374
        %v7489 = vadd.f32 %v7231, %v7377
        %v7490 = vadd.f32 %v7232, %v7382
        %v7491 = vadd.f32 %v7233, %v7385
        %v7492 = vadd.f32 %v7234, %v7390
        %v7493 = vadd.f32 %v7235, %v7393
        %v7494 = vadd.f32 %v7236, %v7398
        %v7495 = vadd.f32 %v7237, %v7401
        %v7496 = vadd.f32 %v7238, %v7406
        %v7497 = vadd.f32 %v7239, %v7409
        %v7498 = vadd.f32 %v7240, %v7414
        %v7499 = vadd.f32 %v7241, %v7417
        %v7500 = vadd.f32 %v7242, %v7422
        %v7501 = vadd.f32 %v7243, %v7425
        %v7502 = vadd.f32 %v7244, %v7430
        %v7503 = vadd.f32 %v7245, %v7433
        %v7504 = vadd.f32 %v7246, %v7438
        %v7505 = vadd.f32 %v7247, %v7441
        %v7506 = vadd.f32 %v7248, %v7446
        %v7507 = vadd.f32 %v7249, %v7449
        %v7508 = vadd.f32 %v7250, %v7454
        %v7509 = vadd.f32 %v7251, %v7457
        %v7510 = vadd.f32 %v7252, %v7462
        %v7511 = vadd.f32 %v7253, %v7465
        %v7512 = vadd.f32 %v7254, %v7470
        %v7513 = vadd.f32 %v7255, %v7473
        %v7514 = vadd.f32 %v7256, %v7478
        %v7515 = vadd.f32 %v7257, %v7481
        %v7517 = vshrl.u32 %v6241, 16
        %v7519 = vshll.u32 %v6241, 16
        %v7521 = vrot.slane %v7519, 1
        %v7522 = vor.u32 %v7517, %v7521
        %v7524 = vshll.u32 %v6242, 16
        %v7526 = vrot.slane %v7524, 1
        %v7527 = vsel %vm3309, %v7522, %v7526
        %s7529 = scalar_lea.vmem [#allocation9], 256
        %v7530 = vld [vmem:[%s7529] sm:$0xf]
        %v7531 = vld [vmem:[%s7529 + $0x4] sm:$0xf]
        %v7532 = vld [vmem:[%s7529 + $0x8] sm:$0xf]
        %v7533 = vld [vmem:[%s7529 + $0xc] sm:$0xf]
        %v7534 = vld [vmem:[%s7529 + $0x10] sm:$0xf]
        %v7535 = vld [vmem:[%s7529 + $0x14] sm:$0xf]
        %v7536 = vld [vmem:[%s7529 + $0x18] sm:$0xf]
        %v7537 = vld [vmem:[%s7529 + $0x1c] sm:$0xf]
        %v7538 = vld [vmem:[%s7529 + $0x20] sm:$0xf]
        %v7539 = vld [vmem:[%s7529 + $0x24] sm:$0xf]
        %v7540 = vld [vmem:[%s7529 + $0x28] sm:$0xf]
        %v7541 = vld [vmem:[%s7529 + $0x2c] sm:$0xf]
        %v7542 = vld [vmem:[%s7529 + $0x30] sm:$0xf]
        %v7543 = vld [vmem:[%s7529 + $0x34] sm:$0xf]
        %v7544 = vld [vmem:[%s7529 + $0x38] sm:$0xf]
        %v7545 = vld [vmem:[%s7529 + $0x3c] sm:$0xf]
        %v7562 = vunpack.c.l.b16 %v7530
        %v7563 = vunpack.c.l.b16 %v7531
        %v7564 = vunpack.c.l.b16 %v7532
        %v7565 = vunpack.c.l.b16 %v7533
        %v7566 = vunpack.c.l.b16 %v7534
        %v7567 = vunpack.c.l.b16 %v7535
        %v7568 = vunpack.c.l.b16 %v7536
        %v7569 = vunpack.c.l.b16 %v7537
        %v7570 = vunpack.c.l.b16 %v7538
        %v7571 = vunpack.c.l.b16 %v7539
        %v7572 = vunpack.c.l.b16 %v7540
        %v7573 = vunpack.c.l.b16 %v7541
        %v7574 = vunpack.c.l.b16 %v7542
        %v7575 = vunpack.c.l.b16 %v7543
        %v7576 = vunpack.c.l.b16 %v7544
        %v7577 = vunpack.c.l.b16 %v7545
        %v7578 = vpack.c.b16 %v7563, %v7562
        %v7579 = vpack.c.b16 %v7565, %v7564
        %v7580 = vpack.c.b16 %v7567, %v7566
        %v7581 = vpack.c.b16 %v7569, %v7568
        %v7582 = vpack.c.b16 %v7571, %v7570
        %v7583 = vpack.c.b16 %v7573, %v7572
        %v7584 = vpack.c.b16 %v7575, %v7574
        %v7585 = vpack.c.b16 %v7577, %v7576
        %7594 = vmatprep.subr.bf16.mxu0 0
        %7595 = vmatpush1.bf16.msra.mxu0 %v7578
        %7596 = vmatprep.subr.bf16.mxu0 0
        %7597 = vmatpush1.bf16.msra.mxu0 %v7579
        %7598 = vmatprep.subr.bf16.mxu0 0
        %7599 = vmatpush1.bf16.msra.mxu0 %v7580
        %7600 = vmatprep.subr.bf16.mxu0 0
        %7601 = vmatpush1.bf16.msra.mxu0 %v7581
        %7602 = vmatprep.subr.bf16.mxu0 0
        %7603 = vmatpush1.bf16.msra.mxu0 %v7582
        %7604 = vmatprep.subr.bf16.mxu0 0
        %7605 = vmatpush1.bf16.msra.mxu0 %v7583
        %7606 = vmatprep.subr.bf16.mxu0 0
        %7607 = vmatpush1.bf16.msra.mxu0 %v7584
        %7608 = vmatprep.subr.bf16.mxu0 0
        %7609 = vmatpush1.bf16.msra.mxu0 %v7585
        %7610 = vmatprep.subr.bf16.mxu0 0
        %7611 = vmatpush1.bf16.msra.mxu0 0
        %7612 = vmatprep.subr.bf16.mxu0 0
        %7613 = vmatpush1.bf16.msra.mxu0 0
        %7614 = vmatprep.subr.bf16.mxu0 0
        %7615 = vmatpush1.bf16.msra.mxu0 0
        %7616 = vmatprep.subr.bf16.mxu0 0
        %7617 = vmatpush1.bf16.msra.mxu0 0
        %7618 = vmatprep.subr.bf16.mxu0 0
        %7619 = vmatpush1.bf16.msra.mxu0 0
        %7620 = vmatprep.subr.bf16.mxu0 0
        %7621 = vmatpush1.bf16.msra.mxu0 0
        %7622 = vmatprep.subr.bf16.mxu0 0
        %7623 = vmatpush1.bf16.msra.mxu0 0
        %7624 = vmatprep.subr.bf16.mxu0 0
        %7625 = vmatpush1.bf16.msra.mxu0 0
        %7626 = vmatprep.mubr.bf16.mxu0 0
        %7627 = vmatmul.mubr.bf16.gmra.mrb[0].mxu0 %v6284
        %v7628 = vpop.f32.mrb[0].mxu0
        %v7629 = vadd.f32 0.0, %v7628
        %v7630 = vpop.f32.mrb[0].mxu0
        %v7631 = vpop.f32.mrb[0].mxu0
        %v7632 = vadd.f32 0.0, %v7631
        %v7633 = vpop.f32.mrb[0].mxu0
        %7634 = vmatprep.mubr.bf16.mxu0 0
        %7635 = vmatmul.mubr.bf16.gmra.mrb[0].mxu0 %v6296
        %v7636 = vpop.f32.mrb[0].mxu0
        %v7637 = vadd.f32 0.0, %v7636
        %v7638 = vpop.f32.mrb[0].mxu0
        %v7639 = vpop.f32.mrb[0].mxu0
        %v7640 = vadd.f32 0.0, %v7639
        %v7641 = vpop.f32.mrb[0].mxu0
        %7642 = vmatprep.mubr.bf16.mxu0 0
        %7643 = vmatmul.mubr.bf16.gmra.mrb[0].mxu0 %v6308
        %v7644 = vpop.f32.mrb[0].mxu0
        %v7645 = vadd.f32 0.0, %v7644
        %v7646 = vpop.f32.mrb[0].mxu0
        %v7647 = vpop.f32.mrb[0].mxu0
        %v7648 = vadd.f32 0.0, %v7647
        %v7649 = vpop.f32.mrb[0].mxu0
        %7650 = vmatprep.mubr.bf16.mxu0 0
        %7651 = vmatmul.mubr.bf16.gmra.mrb[0].mxu0 %v6320
        %v7652 = vpop.f32.mrb[0].mxu0
        %v7653 = vadd.f32 0.0, %v7652
        %v7654 = vpop.f32.mrb[0].mxu0
        %v7655 = vpop.f32.mrb[0].mxu0
        %v7656 = vadd.f32 0.0, %v7655
        %v7657 = vpop.f32.mrb[0].mxu0
        %7658 = vmatprep.mubr.bf16.mxu0 0
        %7659 = vmatmul.mubr.bf16.gmra.mrb[0].mxu0 %v6332
        %v7660 = vpop.f32.mrb[0].mxu0
        %v7661 = vadd.f32 0.0, %v7660
        %v7662 = vpop.f32.mrb[0].mxu0
        %v7663 = vpop.f32.mrb[0].mxu0
        %v7664 = vadd.f32 0.0, %v7663
        %v7665 = vpop.f32.mrb[0].mxu0
        %7666 = vmatprep.mubr.bf16.mxu0 0
        %7667 = vmatmul.mubr.bf16.gmra.mrb[0].mxu0 %v6344
        %v7668 = vpop.f32.mrb[0].mxu0
        %v7669 = vadd.f32 0.0, %v7668
        %v7670 = vpop.f32.mrb[0].mxu0
        %v7671 = vpop.f32.mrb[0].mxu0
        %v7672 = vadd.f32 0.0, %v7671
        %v7673 = vpop.f32.mrb[0].mxu0
        %7674 = vmatprep.mubr.bf16.mxu0 0
        %7675 = vmatmul.mubr.bf16.gmra.mrb[0].mxu0 %v6356
        %v7676 = vpop.f32.mrb[0].mxu0
        %v7677 = vadd.f32 0.0, %v7676
        %v7678 = vpop.f32.mrb[0].mxu0
        %v7679 = vpop.f32.mrb[0].mxu0
        %v7680 = vadd.f32 0.0, %v7679
        %v7681 = vpop.f32.mrb[0].mxu0
        %7682 = vmatprep.mubr.bf16.mxu0 0
        %7683 = vmatmul.mubr.bf16.gmra.mrb[0].mxu0 %v6368
        %v7684 = vpop.f32.mrb[0].mxu0
        %v7685 = vadd.f32 0.0, %v7684
        %v7686 = vpop.f32.mrb[0].mxu0
        %v7687 = vpop.f32.mrb[0].mxu0
        %v7688 = vadd.f32 0.0, %v7687
        %v7689 = vpop.f32.mrb[0].mxu0
        %7690 = vmatprep.mubr.bf16.mxu0 0
        %7691 = vmatmul.mubr.bf16.gmra.mrb[0].mxu0 %v6380
        %v7692 = vpop.f32.mrb[0].mxu0
        %v7693 = vadd.f32 0.0, %v7692
        %v7694 = vpop.f32.mrb[0].mxu0
        %v7695 = vpop.f32.mrb[0].mxu0
        %v7696 = vadd.f32 0.0, %v7695
        %v7697 = vpop.f32.mrb[0].mxu0
        %7698 = vmatprep.mubr.bf16.mxu0 0
        %7699 = vmatmul.mubr.bf16.gmra.mrb[0].mxu0 %v6392
        %v7700 = vpop.f32.mrb[0].mxu0
        %v7701 = vadd.f32 0.0, %v7700
        %v7702 = vpop.f32.mrb[0].mxu0
        %v7703 = vpop.f32.mrb[0].mxu0
        %v7704 = vadd.f32 0.0, %v7703
        %v7705 = vpop.f32.mrb[0].mxu0
        %7706 = vmatprep.mubr.bf16.mxu0 0
        %7707 = vmatmul.mubr.bf16.gmra.mrb[0].mxu0 %v6404
        %v7708 = vpop.f32.mrb[0].mxu0
        %v7709 = vadd.f32 0.0, %v7708
        %v7710 = vpop.f32.mrb[0].mxu0
        %v7711 = vpop.f32.mrb[0].mxu0
        %v7712 = vadd.f32 0.0, %v7711
        %v7713 = vpop.f32.mrb[0].mxu0
        %7714 = vmatprep.mubr.bf16.mxu0 0
        %7715 = vmatmul.mubr.bf16.gmra.mrb[0].mxu0 %v6416
        %v7716 = vpop.f32.mrb[0].mxu0
        %v7717 = vadd.f32 0.0, %v7716
        %v7718 = vpop.f32.mrb[0].mxu0
        %v7719 = vpop.f32.mrb[0].mxu0
        %v7720 = vadd.f32 0.0, %v7719
        %v7721 = vpop.f32.mrb[0].mxu0
        %7722 = vmatprep.mubr.bf16.mxu0 0
        %7723 = vmatmul.mubr.bf16.gmra.mrb[0].mxu0 %v6428
        %v7724 = vpop.f32.mrb[0].mxu0
        %v7725 = vadd.f32 0.0, %v7724
        %v7726 = vpop.f32.mrb[0].mxu0
        %v7727 = vpop.f32.mrb[0].mxu0
        %v7728 = vadd.f32 0.0, %v7727
        %v7729 = vpop.f32.mrb[0].mxu0
        %7730 = vmatprep.mubr.bf16.mxu0 0
        %7731 = vmatmul.mubr.bf16.gmra.mrb[0].mxu0 %v6440
        %v7732 = vpop.f32.mrb[0].mxu0
        %v7733 = vadd.f32 0.0, %v7732
        %v7734 = vpop.f32.mrb[0].mxu0
        %v7735 = vpop.f32.mrb[0].mxu0
        %v7736 = vadd.f32 0.0, %v7735
        %v7737 = vpop.f32.mrb[0].mxu0
        %7738 = vmatprep.mubr.bf16.mxu0 0
        %7739 = vmatmul.mubr.bf16.gmra.mrb[0].mxu0 %v6452
        %v7740 = vpop.f32.mrb[0].mxu0
        %v7741 = vadd.f32 0.0, %v7740
        %v7742 = vpop.f32.mrb[0].mxu0
        %v7743 = vpop.f32.mrb[0].mxu0
        %v7744 = vadd.f32 0.0, %v7743
        %v7745 = vpop.f32.mrb[0].mxu0
        %7746 = vmatprep.mubr.bf16.mxu0 0
        %7747 = vmatmul.mubr.bf16.gmra.mrb[0].mxu0 %v7527
        %v7748 = vpop.f32.mrb[0].mxu0
        %v7749 = vadd.f32 0.0, %v7748
        %v7750 = vpop.f32.mrb[0].mxu0
        %v7751 = vpop.f32.mrb[0].mxu0
        %v7752 = vadd.f32 0.0, %v7751
        %v7753 = vpop.f32.mrb[0].mxu0
        %7754 = vdwg.mxu0
        %v7755 = vadd.f32 %v7484, %v7629
        %v7756 = vadd.f32 %v7485, %v7632
        %v7757 = vadd.f32 %v7486, %v7637
        %v7758 = vadd.f32 %v7487, %v7640
        %v7759 = vadd.f32 %v7488, %v7645
        %v7760 = vadd.f32 %v7489, %v7648
        %v7761 = vadd.f32 %v7490, %v7653
        %v7762 = vadd.f32 %v7491, %v7656
        %v7763 = vadd.f32 %v7492, %v7661
        %v7764 = vadd.f32 %v7493, %v7664
        %v7765 = vadd.f32 %v7494, %v7669
        %v7766 = vadd.f32 %v7495, %v7672
        %v7767 = vadd.f32 %v7496, %v7677
        %v7768 = vadd.f32 %v7497, %v7680
        %v7769 = vadd.f32 %v7498, %v7685
        %v7770 = vadd.f32 %v7499, %v7688
        %v7771 = vadd.f32 %v7500, %v7693
        %v7772 = vadd.f32 %v7501, %v7696
        %v7773 = vadd.f32 %v7502, %v7701
        %v7774 = vadd.f32 %v7503, %v7704
        %v7775 = vadd.f32 %v7504, %v7709
        %v7776 = vadd.f32 %v7505, %v7712
        %v7777 = vadd.f32 %v7506, %v7717
        %v7778 = vadd.f32 %v7507, %v7720
        %v7779 = vadd.f32 %v7508, %v7725
        %v7780 = vadd.f32 %v7509, %v7728
        %v7781 = vadd.f32 %v7510, %v7733
        %v7782 = vadd.f32 %v7511, %v7736
        %v7783 = vadd.f32 %v7512, %v7741
        %v7784 = vadd.f32 %v7513, %v7744
        %v7785 = vadd.f32 %v7514, %v7749
        %v7786 = vadd.f32 %v7515, %v7752
        %v7789 = vrot.slane %v6241, 1
        %v7790 = vrot.slane %v6242, 1
        %v7791 = vsel %vm3985, %v7789, %v7790
        %s7793 = scalar_lea.vmem [#allocation9], 320
        %v7794 = vld [vmem:[%s7793] sm:$0xf]
        %v7795 = vld [vmem:[%s7793 + $0x4] sm:$0xf]
        %v7796 = vld [vmem:[%s7793 + $0x8] sm:$0xf]
        %v7797 = vld [vmem:[%s7793 + $0xc] sm:$0xf]
        %v7798 = vld [vmem:[%s7793 + $0x10] sm:$0xf]
        %v7799 = vld [vmem:[%s7793 + $0x14] sm:$0xf]
        %v7800 = vld [vmem:[%s7793 + $0x18] sm:$0xf]
        %v7801 = vld [vmem:[%s7793 + $0x1c] sm:$0xf]
        %v7802 = vld [vmem:[%s7793 + $0x20] sm:$0xf]
        %v7803 = vld [vmem:[%s7793 + $0x24] sm:$0xf]
        %v7804 = vld [vmem:[%s7793 + $0x28] sm:$0xf]
        %v7805 = vld [vmem:[%s7793 + $0x2c] sm:$0xf]
        %v7806 = vld [vmem:[%s7793 + $0x30] sm:$0xf]
        %v7807 = vld [vmem:[%s7793 + $0x34] sm:$0xf]
        %v7808 = vld [vmem:[%s7793 + $0x38] sm:$0xf]
        %v7809 = vld [vmem:[%s7793 + $0x3c] sm:$0xf]
        %v7826 = vunpack.c.l.b16 %v7794
        %v7827 = vunpack.c.l.b16 %v7795
        %v7828 = vunpack.c.l.b16 %v7796
        %v7829 = vunpack.c.l.b16 %v7797
        %v7830 = vunpack.c.l.b16 %v7798
        %v7831 = vunpack.c.l.b16 %v7799
        %v7832 = vunpack.c.l.b16 %v7800
        %v7833 = vunpack.c.l.b16 %v7801
        %v7834 = vunpack.c.l.b16 %v7802
        %v7835 = vunpack.c.l.b16 %v7803
        %v7836 = vunpack.c.l.b16 %v7804
        %v7837 = vunpack.c.l.b16 %v7805
        %v7838 = vunpack.c.l.b16 %v7806
        %v7839 = vunpack.c.l.b16 %v7807
        %v7840 = vunpack.c.l.b16 %v7808
        %v7841 = vunpack.c.l.b16 %v7809
        %v7842 = vpack.c.b16 %v7827, %v7826
        %v7843 = vpack.c.b16 %v7829, %v7828
        %v7844 = vpack.c.b16 %v7831, %v7830
        %v7845 = vpack.c.b16 %v7833, %v7832
        %v7846 = vpack.c.b16 %v7835, %v7834
        %v7847 = vpack.c.b16 %v7837, %v7836
        %v7848 = vpack.c.b16 %v7839, %v7838
        %v7849 = vpack.c.b16 %v7841, %v7840
        %7858 = vmatprep.subr.bf16.mxu0 0
        %7859 = vmatpush1.bf16.msra.mxu0 %v7842
        %7860 = vmatprep.subr.bf16.mxu0 0
        %7861 = vmatpush1.bf16.msra.mxu0 %v7843
        %7862 = vmatprep.subr.bf16.mxu0 0
        %7863 = vmatpush1.bf16.msra.mxu0 %v7844
        %7864 = vmatprep.subr.bf16.mxu0 0
        %7865 = vmatpush1.bf16.msra.mxu0 %v7845
        %7866 = vmatprep.subr.bf16.mxu0 0
        %7867 = vmatpush1.bf16.msra.mxu0 %v7846
        %7868 = vmatprep.subr.bf16.mxu0 0
        %7869 = vmatpush1.bf16.msra.mxu0 %v7847
        %7870 = vmatprep.subr.bf16.mxu0 0
        %7871 = vmatpush1.bf16.msra.mxu0 %v7848
        %7872 = vmatprep.subr.bf16.mxu0 0
        %7873 = vmatpush1.bf16.msra.mxu0 %v7849
        %7874 = vmatprep.subr.bf16.mxu0 0
        %7875 = vmatpush1.bf16.msra.mxu0 0
        %7876 = vmatprep.subr.bf16.mxu0 0
        %7877 = vmatpush1.bf16.msra.mxu0 0
        %7878 = vmatprep.subr.bf16.mxu0 0
        %7879 = vmatpush1.bf16.msra.mxu0 0
        %7880 = vmatprep.subr.bf16.mxu0 0
        %7881 = vmatpush1.bf16.msra.mxu0 0
        %7882 = vmatprep.subr.bf16.mxu0 0
        %7883 = vmatpush1.bf16.msra.mxu0 0
        %7884 = vmatprep.subr.bf16.mxu0 0
        %7885 = vmatpush1.bf16.msra.mxu0 0
        %7886 = vmatprep.subr.bf16.mxu0 0
        %7887 = vmatpush1.bf16.msra.mxu0 0
        %7888 = vmatprep.subr.bf16.mxu0 0
        %7889 = vmatpush1.bf16.msra.mxu0 0
        %7890 = vmatprep.mubr.bf16.mxu0 0
        %7891 = vmatmul.mubr.bf16.gmra.mrb[0].mxu0 %v6941
        %v7892 = vpop.f32.mrb[0].mxu0
        %v7893 = vadd.f32 0.0, %v7892
        %v7894 = vpop.f32.mrb[0].mxu0
        %v7895 = vpop.f32.mrb[0].mxu0
        %v7896 = vadd.f32 0.0, %v7895
        %v7897 = vpop.f32.mrb[0].mxu0
        %7898 = vmatprep.mubr.bf16.mxu0 0
        %7899 = vmatmul.mubr.bf16.gmra.mrb[0].mxu0 %v6944
        %v7900 = vpop.f32.mrb[0].mxu0
        %v7901 = vadd.f32 0.0, %v7900
        %v7902 = vpop.f32.mrb[0].mxu0
        %v7903 = vpop.f32.mrb[0].mxu0
        %v7904 = vadd.f32 0.0, %v7903
        %v7905 = vpop.f32.mrb[0].mxu0
        %7906 = vmatprep.mubr.bf16.mxu0 0
        %7907 = vmatmul.mubr.bf16.gmra.mrb[0].mxu0 %v6947
        %v7908 = vpop.f32.mrb[0].mxu0
        %v7909 = vadd.f32 0.0, %v7908
        %v7910 = vpop.f32.mrb[0].mxu0
        %v7911 = vpop.f32.mrb[0].mxu0
        %v7912 = vadd.f32 0.0, %v7911
        %v7913 = vpop.f32.mrb[0].mxu0
        %7914 = vmatprep.mubr.bf16.mxu0 0
        %7915 = vmatmul.mubr.bf16.gmra.mrb[0].mxu0 %v6950
        %v7916 = vpop.f32.mrb[0].mxu0
        %v7917 = vadd.f32 0.0, %v7916
        %v7918 = vpop.f32.mrb[0].mxu0
        %v7919 = vpop.f32.mrb[0].mxu0
        %v7920 = vadd.f32 0.0, %v7919
        %v7921 = vpop.f32.mrb[0].mxu0
        %7922 = vmatprep.mubr.bf16.mxu0 0
        %7923 = vmatmul.mubr.bf16.gmra.mrb[0].mxu0 %v6953
        %v7924 = vpop.f32.mrb[0].mxu0
        %v7925 = vadd.f32 0.0, %v7924
        %v7926 = vpop.f32.mrb[0].mxu0
        %v7927 = vpop.f32.mrb[0].mxu0
        %v7928 = vadd.f32 0.0, %v7927
        %v7929 = vpop.f32.mrb[0].mxu0
        %7930 = vmatprep.mubr.bf16.mxu0 0
        %7931 = vmatmul.mubr.bf16.gmra.mrb[0].mxu0 %v6956
        %v7932 = vpop.f32.mrb[0].mxu0
        %v7933 = vadd.f32 0.0, %v7932
        %v7934 = vpop.f32.mrb[0].mxu0
        %v7935 = vpop.f32.mrb[0].mxu0
        %v7936 = vadd.f32 0.0, %v7935
        %v7937 = vpop.f32.mrb[0].mxu0
        %7938 = vmatprep.mubr.bf16.mxu0 0
        %7939 = vmatmul.mubr.bf16.gmra.mrb[0].mxu0 %v6959
        %v7940 = vpop.f32.mrb[0].mxu0
        %v7941 = vadd.f32 0.0, %v7940
        %v7942 = vpop.f32.mrb[0].mxu0
        %v7943 = vpop.f32.mrb[0].mxu0
        %v7944 = vadd.f32 0.0, %v7943
        %v7945 = vpop.f32.mrb[0].mxu0
        %7946 = vmatprep.mubr.bf16.mxu0 0
        %7947 = vmatmul.mubr.bf16.gmra.mrb[0].mxu0 %v6962
        %v7948 = vpop.f32.mrb[0].mxu0
        %v7949 = vadd.f32 0.0, %v7948
        %v7950 = vpop.f32.mrb[0].mxu0
        %v7951 = vpop.f32.mrb[0].mxu0
        %v7952 = vadd.f32 0.0, %v7951
        %v7953 = vpop.f32.mrb[0].mxu0
        %7954 = vmatprep.mubr.bf16.mxu0 0
        %7955 = vmatmul.mubr.bf16.gmra.mrb[0].mxu0 %v6965
        %v7956 = vpop.f32.mrb[0].mxu0
        %v7957 = vadd.f32 0.0, %v7956
        %v7958 = vpop.f32.mrb[0].mxu0
        %v7959 = vpop.f32.mrb[0].mxu0
        %v7960 = vadd.f32 0.0, %v7959
        %v7961 = vpop.f32.mrb[0].mxu0
        %7962 = vmatprep.mubr.bf16.mxu0 0
        %7963 = vmatmul.mubr.bf16.gmra.mrb[0].mxu0 %v6968
        %v7964 = vpop.f32.mrb[0].mxu0
        %v7965 = vadd.f32 0.0, %v7964
        %v7966 = vpop.f32.mrb[0].mxu0
        %v7967 = vpop.f32.mrb[0].mxu0
        %v7968 = vadd.f32 0.0, %v7967
        %v7969 = vpop.f32.mrb[0].mxu0
        %7970 = vmatprep.mubr.bf16.mxu0 0
        %7971 = vmatmul.mubr.bf16.gmra.mrb[0].mxu0 %v6971
        %v7972 = vpop.f32.mrb[0].mxu0
        %v7973 = vadd.f32 0.0, %v7972
        %v7974 = vpop.f32.mrb[0].mxu0
        %v7975 = vpop.f32.mrb[0].mxu0
        %v7976 = vadd.f32 0.0, %v7975
        %v7977 = vpop.f32.mrb[0].mxu0
        %7978 = vmatprep.mubr.bf16.mxu0 0
        %7979 = vmatmul.mubr.bf16.gmra.mrb[0].mxu0 %v6974
        %v7980 = vpop.f32.mrb[0].mxu0
        %v7981 = vadd.f32 0.0, %v7980
        %v7982 = vpop.f32.mrb[0].mxu0
        %v7983 = vpop.f32.mrb[0].mxu0
        %v7984 = vadd.f32 0.0, %v7983
        %v7985 = vpop.f32.mrb[0].mxu0
        %7986 = vmatprep.mubr.bf16.mxu0 0
        %7987 = vmatmul.mubr.bf16.gmra.mrb[0].mxu0 %v6977
        %v7988 = vpop.f32.mrb[0].mxu0
        %v7989 = vadd.f32 0.0, %v7988
        %v7990 = vpop.f32.mrb[0].mxu0
        %v7991 = vpop.f32.mrb[0].mxu0
        %v7992 = vadd.f32 0.0, %v7991
        %v7993 = vpop.f32.mrb[0].mxu0
        %7994 = vmatprep.mubr.bf16.mxu0 0
        %7995 = vmatmul.mubr.bf16.gmra.mrb[0].mxu0 %v6980
        %v7996 = vpop.f32.mrb[0].mxu0
        %v7997 = vadd.f32 0.0, %v7996
        %v7998 = vpop.f32.mrb[0].mxu0
        %v7999 = vpop.f32.mrb[0].mxu0
        %v8000 = vadd.f32 0.0, %v7999
        %v8001 = vpop.f32.mrb[0].mxu0
        %8002 = vmatprep.mubr.bf16.mxu0 0
        %8003 = vmatmul.mubr.bf16.gmra.mrb[0].mxu0 %v6983
        %v8004 = vpop.f32.mrb[0].mxu0
        %v8005 = vadd.f32 0.0, %v8004
        %v8006 = vpop.f32.mrb[0].mxu0
        %v8007 = vpop.f32.mrb[0].mxu0
        %v8008 = vadd.f32 0.0, %v8007
        %v8009 = vpop.f32.mrb[0].mxu0
        %8010 = vmatprep.mubr.bf16.mxu0 0
        %8011 = vmatmul.mubr.bf16.gmra.mrb[0].mxu0 %v7791
        %v8012 = vpop.f32.mrb[0].mxu0
        %v8013 = vadd.f32 0.0, %v8012
        %v8014 = vpop.f32.mrb[0].mxu0
        %v8015 = vpop.f32.mrb[0].mxu0
        %v8016 = vadd.f32 0.0, %v8015
        %v8017 = vpop.f32.mrb[0].mxu0
        %8018 = vdwg.mxu0
        %v8019 = vadd.f32 %v7755, %v7893
        %v8020 = vadd.f32 %v7756, %v7896
        %v8021 = vadd.f32 %v7757, %v7901
        %v8022 = vadd.f32 %v7758, %v7904
        %v8023 = vadd.f32 %v7759, %v7909
        %v8024 = vadd.f32 %v7760, %v7912
        %v8025 = vadd.f32 %v7761, %v7917
        %v8026 = vadd.f32 %v7762, %v7920
        %v8027 = vadd.f32 %v7763, %v7925
        %v8028 = vadd.f32 %v7764, %v7928
        %v8029 = vadd.f32 %v7765, %v7933
        %v8030 = vadd.f32 %v7766, %v7936
        %v8031 = vadd.f32 %v7767, %v7941
        %v8032 = vadd.f32 %v7768, %v7944
        %v8033 = vadd.f32 %v7769, %v7949
        %v8034 = vadd.f32 %v7770, %v7952
        %v8035 = vadd.f32 %v7771, %v7957
        %v8036 = vadd.f32 %v7772, %v7960
        %v8037 = vadd.f32 %v7773, %v7965
        %v8038 = vadd.f32 %v7774, %v7968
        %v8039 = vadd.f32 %v7775, %v7973
        %v8040 = vadd.f32 %v7776, %v7976
        %v8041 = vadd.f32 %v7777, %v7981
        %v8042 = vadd.f32 %v7778, %v7984
        %v8043 = vadd.f32 %v7779, %v7989
        %v8044 = vadd.f32 %v7780, %v7992
        %v8045 = vadd.f32 %v7781, %v7997
        %v8046 = vadd.f32 %v7782, %v8000
        %v8047 = vadd.f32 %v7783, %v8005
        %v8048 = vadd.f32 %v7784, %v8008
        %v8049 = vadd.f32 %v7785, %v8013
        %v8050 = vadd.f32 %v7786, %v8016
        %s8051 = scalar_lea.vmem [#allocation9], 384
        %v8052 = vld [vmem:[%s8051] sm:$0xf]
        %v8053 = vld [vmem:[%s8051 + $0x4] sm:$0xf]
        %v8054 = vld [vmem:[%s8051 + $0x8] sm:$0xf]
        %v8055 = vld [vmem:[%s8051 + $0xc] sm:$0xf]
        %v8056 = vld [vmem:[%s8051 + $0x10] sm:$0xf]
        %v8057 = vld [vmem:[%s8051 + $0x14] sm:$0xf]
        %v8058 = vld [vmem:[%s8051 + $0x18] sm:$0xf]
        %v8059 = vld [vmem:[%s8051 + $0x1c] sm:$0xf]
        %v8060 = vld [vmem:[%s8051 + $0x20] sm:$0xf]
        %v8061 = vld [vmem:[%s8051 + $0x24] sm:$0xf]
        %v8062 = vld [vmem:[%s8051 + $0x28] sm:$0xf]
        %v8063 = vld [vmem:[%s8051 + $0x2c] sm:$0xf]
        %v8064 = vld [vmem:[%s8051 + $0x30] sm:$0xf]
        %v8065 = vld [vmem:[%s8051 + $0x34] sm:$0xf]
        %v8066 = vld [vmem:[%s8051 + $0x38] sm:$0xf]
        %v8067 = vld [vmem:[%s8051 + $0x3c] sm:$0xf]
        %v8084 = vunpack.c.l.b16 %v8052
        %v8085 = vunpack.c.l.b16 %v8053
        %v8086 = vunpack.c.l.b16 %v8054
        %v8087 = vunpack.c.l.b16 %v8055
        %v8088 = vunpack.c.l.b16 %v8056
        %v8089 = vunpack.c.l.b16 %v8057
        %v8090 = vunpack.c.l.b16 %v8058
        %v8091 = vunpack.c.l.b16 %v8059
        %v8092 = vunpack.c.l.b16 %v8060
        %v8093 = vunpack.c.l.b16 %v8061
        %v8094 = vunpack.c.l.b16 %v8062
        %v8095 = vunpack.c.l.b16 %v8063
        %v8096 = vunpack.c.l.b16 %v8064
        %v8097 = vunpack.c.l.b16 %v8065
        %v8098 = vunpack.c.l.b16 %v8066
        %v8099 = vunpack.c.l.b16 %v8067
        %v8100 = vpack.c.b16 %v8085, %v8084
        %v8101 = vpack.c.b16 %v8087, %v8086
        %v8102 = vpack.c.b16 %v8089, %v8088
        %v8103 = vpack.c.b16 %v8091, %v8090
        %v8104 = vpack.c.b16 %v8093, %v8092
        %v8105 = vpack.c.b16 %v8095, %v8094
        %v8106 = vpack.c.b16 %v8097, %v8096
        %v8107 = vpack.c.b16 %v8099, %v8098
        %8116 = vmatprep.subr.bf16.mxu0 0
        %8117 = vmatpush1.bf16.msra.mxu0 %v8100
        %8118 = vmatprep.subr.bf16.mxu0 0
        %8119 = vmatpush1.bf16.msra.mxu0 %v8101
        %8120 = vmatprep.subr.bf16.mxu0 0
        %8121 = vmatpush1.bf16.msra.mxu0 %v8102
        %8122 = vmatprep.subr.bf16.mxu0 0
        %8123 = vmatpush1.bf16.msra.mxu0 %v8103
        %8124 = vmatprep.subr.bf16.mxu0 0
        %8125 = vmatpush1.bf16.msra.mxu0 %v8104
        %8126 = vmatprep.subr.bf16.mxu0 0
        %8127 = vmatpush1.bf16.msra.mxu0 %v8105
        %8128 = vmatprep.subr.bf16.mxu0 0
        %8129 = vmatpush1.bf16.msra.mxu0 %v8106
        %8130 = vmatprep.subr.bf16.mxu0 0
        %8131 = vmatpush1.bf16.msra.mxu0 %v8107
        %8132 = vmatprep.subr.bf16.mxu0 0
        %8133 = vmatpush1.bf16.msra.mxu0 0
        %8134 = vmatprep.subr.bf16.mxu0 0
        %8135 = vmatpush1.bf16.msra.mxu0 0
        %8136 = vmatprep.subr.bf16.mxu0 0
        %8137 = vmatpush1.bf16.msra.mxu0 0
        %8138 = vmatprep.subr.bf16.mxu0 0
        %8139 = vmatpush1.bf16.msra.mxu0 0
        %8140 = vmatprep.subr.bf16.mxu0 0
        %8141 = vmatpush1.bf16.msra.mxu0 0
        %8142 = vmatprep.subr.bf16.mxu0 0
        %8143 = vmatpush1.bf16.msra.mxu0 0
        %8144 = vmatprep.subr.bf16.mxu0 0
        %8145 = vmatpush1.bf16.msra.mxu0 0
        %8146 = vmatprep.subr.bf16.mxu0 0
        %8147 = vmatpush1.bf16.msra.mxu0 0
        %8148 = vmatprep.mubr.bf16.mxu0 0
        %8149 = vmatmul.mubr.bf16.gmra.mrb[0].mxu0 %v6213
        %v8150 = vpop.f32.mrb[0].mxu0
        %v8151 = vadd.f32 0.0, %v8150
        %v8152 = vpop.f32.mrb[0].mxu0
        %v8153 = vpop.f32.mrb[0].mxu0
        %v8154 = vadd.f32 0.0, %v8153
        %v8155 = vpop.f32.mrb[0].mxu0
        %8156 = vmatprep.mubr.bf16.mxu0 0
        %8157 = vmatmul.mubr.bf16.gmra.mrb[0].mxu0 %v6215
        %v8158 = vpop.f32.mrb[0].mxu0
        %v8159 = vadd.f32 0.0, %v8158
        %v8160 = vpop.f32.mrb[0].mxu0
        %v8161 = vpop.f32.mrb[0].mxu0
        %v8162 = vadd.f32 0.0, %v8161
        %v8163 = vpop.f32.mrb[0].mxu0
        %8164 = vmatprep.mubr.bf16.mxu0 0
        %8165 = vmatmul.mubr.bf16.gmra.mrb[0].mxu0 %v6217
        %v8166 = vpop.f32.mrb[0].mxu0
        %v8167 = vadd.f32 0.0, %v8166
        %v8168 = vpop.f32.mrb[0].mxu0
        %v8169 = vpop.f32.mrb[0].mxu0
        %v8170 = vadd.f32 0.0, %v8169
        %v8171 = vpop.f32.mrb[0].mxu0
        %8172 = vmatprep.mubr.bf16.mxu0 0
        %8173 = vmatmul.mubr.bf16.gmra.mrb[0].mxu0 %v6219
        %v8174 = vpop.f32.mrb[0].mxu0
        %v8175 = vadd.f32 0.0, %v8174
        %v8176 = vpop.f32.mrb[0].mxu0
        %v8177 = vpop.f32.mrb[0].mxu0
        %v8178 = vadd.f32 0.0, %v8177
        %v8179 = vpop.f32.mrb[0].mxu0
        %8180 = vmatprep.mubr.bf16.mxu0 0
        %8181 = vmatmul.mubr.bf16.gmra.mrb[0].mxu0 %v6221
        %v8182 = vpop.f32.mrb[0].mxu0
        %v8183 = vadd.f32 0.0, %v8182
        %v8184 = vpop.f32.mrb[0].mxu0
        %v8185 = vpop.f32.mrb[0].mxu0
        %v8186 = vadd.f32 0.0, %v8185
        %v8187 = vpop.f32.mrb[0].mxu0
        %8188 = vmatprep.mubr.bf16.mxu0 0
        %8189 = vmatmul.mubr.bf16.gmra.mrb[0].mxu0 %v6223
        %v8190 = vpop.f32.mrb[0].mxu0
        %v8191 = vadd.f32 0.0, %v8190
        %v8192 = vpop.f32.mrb[0].mxu0
        %v8193 = vpop.f32.mrb[0].mxu0
        %v8194 = vadd.f32 0.0, %v8193
        %v8195 = vpop.f32.mrb[0].mxu0
        %8196 = vmatprep.mubr.bf16.mxu0 0
        %8197 = vmatmul.mubr.bf16.gmra.mrb[0].mxu0 %v6225
        %v8198 = vpop.f32.mrb[0].mxu0
        %v8199 = vadd.f32 0.0, %v8198
        %v8200 = vpop.f32.mrb[0].mxu0
        %v8201 = vpop.f32.mrb[0].mxu0
        %v8202 = vadd.f32 0.0, %v8201
        %v8203 = vpop.f32.mrb[0].mxu0
        %8204 = vmatprep.mubr.bf16.mxu0 0
        %8205 = vmatmul.mubr.bf16.gmra.mrb[0].mxu0 %v6227
        %v8206 = vpop.f32.mrb[0].mxu0
        %v8207 = vadd.f32 0.0, %v8206
        %v8208 = vpop.f32.mrb[0].mxu0
        %v8209 = vpop.f32.mrb[0].mxu0
        %v8210 = vadd.f32 0.0, %v8209
        %v8211 = vpop.f32.mrb[0].mxu0
        %8212 = vmatprep.mubr.bf16.mxu0 0
        %8213 = vmatmul.mubr.bf16.gmra.mrb[0].mxu0 %v6229
        %v8214 = vpop.f32.mrb[0].mxu0
        %v8215 = vadd.f32 0.0, %v8214
        %v8216 = vpop.f32.mrb[0].mxu0
        %v8217 = vpop.f32.mrb[0].mxu0
        %v8218 = vadd.f32 0.0, %v8217
        %v8219 = vpop.f32.mrb[0].mxu0
        %8220 = vmatprep.mubr.bf16.mxu0 0
        %8221 = vmatmul.mubr.bf16.gmra.mrb[0].mxu0 %v6231
        %v8222 = vpop.f32.mrb[0].mxu0
        %v8223 = vadd.f32 0.0, %v8222
        %v8224 = vpop.f32.mrb[0].mxu0
        %v8225 = vpop.f32.mrb[0].mxu0
        %v8226 = vadd.f32 0.0, %v8225
        %v8227 = vpop.f32.mrb[0].mxu0
        %8228 = vmatprep.mubr.bf16.mxu0 0
        %8229 = vmatmul.mubr.bf16.gmra.mrb[0].mxu0 %v6233
        %v8230 = vpop.f32.mrb[0].mxu0
        %v8231 = vadd.f32 0.0, %v8230
        %v8232 = vpop.f32.mrb[0].mxu0
        %v8233 = vpop.f32.mrb[0].mxu0
        %v8234 = vadd.f32 0.0, %v8233
        %v8235 = vpop.f32.mrb[0].mxu0
        %8236 = vmatprep.mubr.bf16.mxu0 0
        %8237 = vmatmul.mubr.bf16.gmra.mrb[0].mxu0 %v6235
        %v8238 = vpop.f32.mrb[0].mxu0
        %v8239 = vadd.f32 0.0, %v8238
        %v8240 = vpop.f32.mrb[0].mxu0
        %v8241 = vpop.f32.mrb[0].mxu0
        %v8242 = vadd.f32 0.0, %v8241
        %v8243 = vpop.f32.mrb[0].mxu0
        %8244 = vmatprep.mubr.bf16.mxu0 0
        %8245 = vmatmul.mubr.bf16.gmra.mrb[0].mxu0 %v6237
        %v8246 = vpop.f32.mrb[0].mxu0
        %v8247 = vadd.f32 0.0, %v8246
        %v8248 = vpop.f32.mrb[0].mxu0
        %v8249 = vpop.f32.mrb[0].mxu0
        %v8250 = vadd.f32 0.0, %v8249
        %v8251 = vpop.f32.mrb[0].mxu0
        %8252 = vmatprep.mubr.bf16.mxu0 0
        %8253 = vmatmul.mubr.bf16.gmra.mrb[0].mxu0 %v6239
        %v8254 = vpop.f32.mrb[0].mxu0
        %v8255 = vadd.f32 0.0, %v8254
        %v8256 = vpop.f32.mrb[0].mxu0
        %v8257 = vpop.f32.mrb[0].mxu0
        %v8258 = vadd.f32 0.0, %v8257
        %v8259 = vpop.f32.mrb[0].mxu0
        %8260 = vmatprep.mubr.bf16.mxu0 0
        %8261 = vmatmul.mubr.bf16.gmra.mrb[0].mxu0 %v6241
        %v8262 = vpop.f32.mrb[0].mxu0
        %v8263 = vadd.f32 0.0, %v8262
        %v8264 = vpop.f32.mrb[0].mxu0
        %v8265 = vpop.f32.mrb[0].mxu0
        %v8266 = vadd.f32 0.0, %v8265
        %v8267 = vpop.f32.mrb[0].mxu0
        %8268 = vmatprep.mubr.bf16.mxu0 0
        %8269 = vmatmul.mubr.bf16.gmra.mrb[0].mxu0 %v6243
        %v8270 = vpop.f32.mrb[0].mxu0
        %v8271 = vadd.f32 0.0, %v8270
        %v8272 = vpop.f32.mrb[0].mxu0
        %v8273 = vpop.f32.mrb[0].mxu0
        %v8274 = vadd.f32 0.0, %v8273
        %v8275 = vpop.f32.mrb[0].mxu0
        %8276 = vdwg.mxu0
        %v8277 = vadd.f32 %v8019, %v8151
        %v8278 = vadd.f32 %v8020, %v8154
        %v8279 = vadd.f32 %v8021, %v8159
        %v8280 = vadd.f32 %v8022, %v8162
        %v8281 = vadd.f32 %v8023, %v8167
        %v8282 = vadd.f32 %v8024, %v8170
        %v8283 = vadd.f32 %v8025, %v8175
        %v8284 = vadd.f32 %v8026, %v8178
        %v8285 = vadd.f32 %v8027, %v8183
        %v8286 = vadd.f32 %v8028, %v8186
        %v8287 = vadd.f32 %v8029, %v8191
        %v8288 = vadd.f32 %v8030, %v8194
        %v8289 = vadd.f32 %v8031, %v8199
        %v8290 = vadd.f32 %v8032, %v8202
        %v8291 = vadd.f32 %v8033, %v8207
        %v8292 = vadd.f32 %v8034, %v8210
        %v8293 = vadd.f32 %v8035, %v8215
        %v8294 = vadd.f32 %v8036, %v8218
        %v8295 = vadd.f32 %v8037, %v8223
        %v8296 = vadd.f32 %v8038, %v8226
        %v8297 = vadd.f32 %v8039, %v8231
        %v8298 = vadd.f32 %v8040, %v8234
        %v8299 = vadd.f32 %v8041, %v8239
        %v8300 = vadd.f32 %v8042, %v8242
        %v8301 = vadd.f32 %v8043, %v8247
        %v8302 = vadd.f32 %v8044, %v8250
        %v8303 = vadd.f32 %v8045, %v8255
        %v8304 = vadd.f32 %v8046, %v8258
        %v8305 = vadd.f32 %v8047, %v8263
        %v8306 = vadd.f32 %v8048, %v8266
        %v8307 = vadd.f32 %v8049, %v8271
        %v8308 = vadd.f32 %v8050, %v8274
        %v8310 = vshrl.u32 %v6243, 16
        %v8312 = vshll.u32 %v6243, 16
        %v8314 = vrot.slane %v8312, 1
        %v8315 = vor.u32 %v8310, %v8314
        %v8317 = vshll.u32 %v6244, 16
        %v8319 = vrot.slane %v8317, 1
        %v8320 = vsel %vm3309, %v8315, %v8319
        %s8322 = scalar_lea.vmem [#allocation9], 448
        %v8323 = vld [vmem:[%s8322] sm:$0xf]
        %v8324 = vld [vmem:[%s8322 + $0x4] sm:$0xf]
        %v8325 = vld [vmem:[%s8322 + $0x8] sm:$0xf]
        %v8326 = vld [vmem:[%s8322 + $0xc] sm:$0xf]
        %v8327 = vld [vmem:[%s8322 + $0x10] sm:$0xf]
        %v8328 = vld [vmem:[%s8322 + $0x14] sm:$0xf]
        %v8329 = vld [vmem:[%s8322 + $0x18] sm:$0xf]
        %v8330 = vld [vmem:[%s8322 + $0x1c] sm:$0xf]
        %v8331 = vld [vmem:[%s8322 + $0x20] sm:$0xf]
        %v8332 = vld [vmem:[%s8322 + $0x24] sm:$0xf]
        %v8333 = vld [vmem:[%s8322 + $0x28] sm:$0xf]
        %v8334 = vld [vmem:[%s8322 + $0x2c] sm:$0xf]
        %v8335 = vld [vmem:[%s8322 + $0x30] sm:$0xf]
        %v8336 = vld [vmem:[%s8322 + $0x34] sm:$0xf]
        %v8337 = vld [vmem:[%s8322 + $0x38] sm:$0xf]
        %v8338 = vld [vmem:[%s8322 + $0x3c] sm:$0xf]
        %v8355 = vunpack.c.l.b16 %v8323
        %v8356 = vunpack.c.l.b16 %v8324
        %v8357 = vunpack.c.l.b16 %v8325
        %v8358 = vunpack.c.l.b16 %v8326
        %v8359 = vunpack.c.l.b16 %v8327
        %v8360 = vunpack.c.l.b16 %v8328
        %v8361 = vunpack.c.l.b16 %v8329
        %v8362 = vunpack.c.l.b16 %v8330
        %v8363 = vunpack.c.l.b16 %v8331
        %v8364 = vunpack.c.l.b16 %v8332
        %v8365 = vunpack.c.l.b16 %v8333
        %v8366 = vunpack.c.l.b16 %v8334
        %v8367 = vunpack.c.l.b16 %v8335
        %v8368 = vunpack.c.l.b16 %v8336
        %v8369 = vunpack.c.l.b16 %v8337
        %v8370 = vunpack.c.l.b16 %v8338
        %v8371 = vpack.c.b16 %v8356, %v8355
        %v8372 = vpack.c.b16 %v8358, %v8357
        %v8373 = vpack.c.b16 %v8360, %v8359
        %v8374 = vpack.c.b16 %v8362, %v8361
        %v8375 = vpack.c.b16 %v8364, %v8363
        %v8376 = vpack.c.b16 %v8366, %v8365
        %v8377 = vpack.c.b16 %v8368, %v8367
        %v8378 = vpack.c.b16 %v8370, %v8369
        %8387 = vmatprep.subr.bf16.mxu0 0
        %8388 = vmatpush1.bf16.msra.mxu0 %v8371
        %8389 = vmatprep.subr.bf16.mxu0 0
        %8390 = vmatpush1.bf16.msra.mxu0 %v8372
        %8391 = vmatprep.subr.bf16.mxu0 0
        %8392 = vmatpush1.bf16.msra.mxu0 %v8373
        %8393 = vmatprep.subr.bf16.mxu0 0
        %8394 = vmatpush1.bf16.msra.mxu0 %v8374
        %8395 = vmatprep.subr.bf16.mxu0 0
        %8396 = vmatpush1.bf16.msra.mxu0 %v8375
        %8397 = vmatprep.subr.bf16.mxu0 0
        %8398 = vmatpush1.bf16.msra.mxu0 %v8376
        %8399 = vmatprep.subr.bf16.mxu0 0
        %8400 = vmatpush1.bf16.msra.mxu0 %v8377
        %8401 = vmatprep.subr.bf16.mxu0 0
        %8402 = vmatpush1.bf16.msra.mxu0 %v8378
        %8403 = vmatprep.subr.bf16.mxu0 0
        %8404 = vmatpush1.bf16.msra.mxu0 0
        %8405 = vmatprep.subr.bf16.mxu0 0
        %8406 = vmatpush1.bf16.msra.mxu0 0
        %8407 = vmatprep.subr.bf16.mxu0 0
        %8408 = vmatpush1.bf16.msra.mxu0 0
        %8409 = vmatprep.subr.bf16.mxu0 0
        %8410 = vmatpush1.bf16.msra.mxu0 0
        %8411 = vmatprep.subr.bf16.mxu0 0
        %8412 = vmatpush1.bf16.msra.mxu0 0
        %8413 = vmatprep.subr.bf16.mxu0 0
        %8414 = vmatpush1.bf16.msra.mxu0 0
        %8415 = vmatprep.subr.bf16.mxu0 0
        %8416 = vmatpush1.bf16.msra.mxu0 0
        %8417 = vmatprep.subr.bf16.mxu0 0
        %8418 = vmatpush1.bf16.msra.mxu0 0
        %8419 = vmatprep.mubr.bf16.mxu0 0
        %8420 = vmatmul.mubr.bf16.gmra.mrb[0].mxu0 %v6296
        %v8421 = vpop.f32.mrb[0].mxu0
        %v8422 = vadd.f32 0.0, %v8421
        %v8423 = vpop.f32.mrb[0].mxu0
        %v8424 = vpop.f32.mrb[0].mxu0
        %v8425 = vadd.f32 0.0, %v8424
        %v8426 = vpop.f32.mrb[0].mxu0
        %8427 = vmatprep.mubr.bf16.mxu0 0
        %8428 = vmatmul.mubr.bf16.gmra.mrb[0].mxu0 %v6308
        %v8429 = vpop.f32.mrb[0].mxu0
        %v8430 = vadd.f32 0.0, %v8429
        %v8431 = vpop.f32.mrb[0].mxu0
        %v8432 = vpop.f32.mrb[0].mxu0
        %v8433 = vadd.f32 0.0, %v8432
        %v8434 = vpop.f32.mrb[0].mxu0
        %8435 = vmatprep.mubr.bf16.mxu0 0
        %8436 = vmatmul.mubr.bf16.gmra.mrb[0].mxu0 %v6320
        %v8437 = vpop.f32.mrb[0].mxu0
        %v8438 = vadd.f32 0.0, %v8437
        %v8439 = vpop.f32.mrb[0].mxu0
        %v8440 = vpop.f32.mrb[0].mxu0
        %v8441 = vadd.f32 0.0, %v8440
        %v8442 = vpop.f32.mrb[0].mxu0
        %8443 = vmatprep.mubr.bf16.mxu0 0
        %8444 = vmatmul.mubr.bf16.gmra.mrb[0].mxu0 %v6332
        %v8445 = vpop.f32.mrb[0].mxu0
        %v8446 = vadd.f32 0.0, %v8445
        %v8447 = vpop.f32.mrb[0].mxu0
        %v8448 = vpop.f32.mrb[0].mxu0
        %v8449 = vadd.f32 0.0, %v8448
        %v8450 = vpop.f32.mrb[0].mxu0
        %8451 = vmatprep.mubr.bf16.mxu0 0
        %8452 = vmatmul.mubr.bf16.gmra.mrb[0].mxu0 %v6344
        %v8453 = vpop.f32.mrb[0].mxu0
        %v8454 = vadd.f32 0.0, %v8453
        %v8455 = vpop.f32.mrb[0].mxu0
        %v8456 = vpop.f32.mrb[0].mxu0
        %v8457 = vadd.f32 0.0, %v8456
        %v8458 = vpop.f32.mrb[0].mxu0
        %8459 = vmatprep.mubr.bf16.mxu0 0
        %8460 = vmatmul.mubr.bf16.gmra.mrb[0].mxu0 %v6356
        %v8461 = vpop.f32.mrb[0].mxu0
        %v8462 = vadd.f32 0.0, %v8461
        %v8463 = vpop.f32.mrb[0].mxu0
        %v8464 = vpop.f32.mrb[0].mxu0
        %v8465 = vadd.f32 0.0, %v8464
        %v8466 = vpop.f32.mrb[0].mxu0
        %8467 = vmatprep.mubr.bf16.mxu0 0
        %8468 = vmatmul.mubr.bf16.gmra.mrb[0].mxu0 %v6368
        %v8469 = vpop.f32.mrb[0].mxu0
        %v8470 = vadd.f32 0.0, %v8469
        %v8471 = vpop.f32.mrb[0].mxu0
        %v8472 = vpop.f32.mrb[0].mxu0
        %v8473 = vadd.f32 0.0, %v8472
        %v8474 = vpop.f32.mrb[0].mxu0
        %8475 = vmatprep.mubr.bf16.mxu0 0
        %8476 = vmatmul.mubr.bf16.gmra.mrb[0].mxu0 %v6380
        %v8477 = vpop.f32.mrb[0].mxu0
        %v8478 = vadd.f32 0.0, %v8477
        %v8479 = vpop.f32.mrb[0].mxu0
        %v8480 = vpop.f32.mrb[0].mxu0
        %v8481 = vadd.f32 0.0, %v8480
        %v8482 = vpop.f32.mrb[0].mxu0
        %8483 = vmatprep.mubr.bf16.mxu0 0
        %8484 = vmatmul.mubr.bf16.gmra.mrb[0].mxu0 %v6392
        %v8485 = vpop.f32.mrb[0].mxu0
        %v8486 = vadd.f32 0.0, %v8485
        %v8487 = vpop.f32.mrb[0].mxu0
        %v8488 = vpop.f32.mrb[0].mxu0
        %v8489 = vadd.f32 0.0, %v8488
        %v8490 = vpop.f32.mrb[0].mxu0
        %8491 = vmatprep.mubr.bf16.mxu0 0
        %8492 = vmatmul.mubr.bf16.gmra.mrb[0].mxu0 %v6404
        %v8493 = vpop.f32.mrb[0].mxu0
        %v8494 = vadd.f32 0.0, %v8493
        %v8495 = vpop.f32.mrb[0].mxu0
        %v8496 = vpop.f32.mrb[0].mxu0
        %v8497 = vadd.f32 0.0, %v8496
        %v8498 = vpop.f32.mrb[0].mxu0
        %8499 = vmatprep.mubr.bf16.mxu0 0
        %8500 = vmatmul.mubr.bf16.gmra.mrb[0].mxu0 %v6416
        %v8501 = vpop.f32.mrb[0].mxu0
        %v8502 = vadd.f32 0.0, %v8501
        %v8503 = vpop.f32.mrb[0].mxu0
        %v8504 = vpop.f32.mrb[0].mxu0
        %v8505 = vadd.f32 0.0, %v8504
        %v8506 = vpop.f32.mrb[0].mxu0
        %8507 = vmatprep.mubr.bf16.mxu0 0
        %8508 = vmatmul.mubr.bf16.gmra.mrb[0].mxu0 %v6428
        %v8509 = vpop.f32.mrb[0].mxu0
        %v8510 = vadd.f32 0.0, %v8509
        %v8511 = vpop.f32.mrb[0].mxu0
        %v8512 = vpop.f32.mrb[0].mxu0
        %v8513 = vadd.f32 0.0, %v8512
        %v8514 = vpop.f32.mrb[0].mxu0
        %8515 = vmatprep.mubr.bf16.mxu0 0
        %8516 = vmatmul.mubr.bf16.gmra.mrb[0].mxu0 %v6440
        %v8517 = vpop.f32.mrb[0].mxu0
        %v8518 = vadd.f32 0.0, %v8517
        %v8519 = vpop.f32.mrb[0].mxu0
        %v8520 = vpop.f32.mrb[0].mxu0
        %v8521 = vadd.f32 0.0, %v8520
        %v8522 = vpop.f32.mrb[0].mxu0
        %8523 = vmatprep.mubr.bf16.mxu0 0
        %8524 = vmatmul.mubr.bf16.gmra.mrb[0].mxu0 %v6452
        %v8525 = vpop.f32.mrb[0].mxu0
        %v8526 = vadd.f32 0.0, %v8525
        %v8527 = vpop.f32.mrb[0].mxu0
        %v8528 = vpop.f32.mrb[0].mxu0
        %v8529 = vadd.f32 0.0, %v8528
        %v8530 = vpop.f32.mrb[0].mxu0
        %8531 = vmatprep.mubr.bf16.mxu0 0
        %8532 = vmatmul.mubr.bf16.gmra.mrb[0].mxu0 %v7527
        %v8533 = vpop.f32.mrb[0].mxu0
        %v8534 = vadd.f32 0.0, %v8533
        %v8535 = vpop.f32.mrb[0].mxu0
        %v8536 = vpop.f32.mrb[0].mxu0
        %v8537 = vadd.f32 0.0, %v8536
        %v8538 = vpop.f32.mrb[0].mxu0
        %8539 = vmatprep.mubr.bf16.mxu0 0
        %8540 = vmatmul.mubr.bf16.gmra.mrb[0].mxu0 %v8320
        %v8541 = vpop.f32.mrb[0].mxu0
        %v8542 = vadd.f32 0.0, %v8541
        %v8543 = vpop.f32.mrb[0].mxu0
        %v8544 = vpop.f32.mrb[0].mxu0
        %v8545 = vadd.f32 0.0, %v8544
        %v8546 = vpop.f32.mrb[0].mxu0
        %8547 = vdwg.mxu0
        %v8548 = vadd.f32 %v8277, %v8422
        %v8549 = vadd.f32 %v8278, %v8425
        %v8550 = vadd.f32 %v8279, %v8430
        %v8551 = vadd.f32 %v8280, %v8433
        %v8552 = vadd.f32 %v8281, %v8438
        %v8553 = vadd.f32 %v8282, %v8441
        %v8554 = vadd.f32 %v8283, %v8446
        %v8555 = vadd.f32 %v8284, %v8449
        %v8556 = vadd.f32 %v8285, %v8454
        %v8557 = vadd.f32 %v8286, %v8457
        %v8558 = vadd.f32 %v8287, %v8462
        %v8559 = vadd.f32 %v8288, %v8465
        %v8560 = vadd.f32 %v8289, %v8470
        %v8561 = vadd.f32 %v8290, %v8473
        %v8562 = vadd.f32 %v8291, %v8478
        %v8563 = vadd.f32 %v8292, %v8481
        %v8564 = vadd.f32 %v8293, %v8486
        %v8565 = vadd.f32 %v8294, %v8489
        %v8566 = vadd.f32 %v8295, %v8494
        %v8567 = vadd.f32 %v8296, %v8497
        %v8568 = vadd.f32 %v8297, %v8502
        %v8569 = vadd.f32 %v8298, %v8505
        %v8570 = vadd.f32 %v8299, %v8510
        %v8571 = vadd.f32 %v8300, %v8513
        %v8572 = vadd.f32 %v8301, %v8518
        %v8573 = vadd.f32 %v8302, %v8521
        %v8574 = vadd.f32 %v8303, %v8526
        %v8575 = vadd.f32 %v8304, %v8529
        %v8576 = vadd.f32 %v8305, %v8534
        %v8577 = vadd.f32 %v8306, %v8537
        %v8578 = vadd.f32 %v8307, %v8542
        %v8579 = vadd.f32 %v8308, %v8545
        %v8582 = vrot.slane %v6243, 1
        %v8583 = vrot.slane %v6244, 1
        %v8584 = vsel %vm3985, %v8582, %v8583
        %s8586 = scalar_lea.vmem [#allocation9], 512
        %v8587 = vld [vmem:[%s8586] sm:$0xf]
        %v8588 = vld [vmem:[%s8586 + $0x4] sm:$0xf]
        %v8589 = vld [vmem:[%s8586 + $0x8] sm:$0xf]
        %v8590 = vld [vmem:[%s8586 + $0xc] sm:$0xf]
        %v8591 = vld [vmem:[%s8586 + $0x10] sm:$0xf]
        %v8592 = vld [vmem:[%s8586 + $0x14] sm:$0xf]
        %v8593 = vld [vmem:[%s8586 + $0x18] sm:$0xf]
        %v8594 = vld [vmem:[%s8586 + $0x1c] sm:$0xf]
        %v8595 = vld [vmem:[%s8586 + $0x20] sm:$0xf]
        %v8596 = vld [vmem:[%s8586 + $0x24] sm:$0xf]
        %v8597 = vld [vmem:[%s8586 + $0x28] sm:$0xf]
        %v8598 = vld [vmem:[%s8586 + $0x2c] sm:$0xf]
        %v8599 = vld [vmem:[%s8586 + $0x30] sm:$0xf]
        %v8600 = vld [vmem:[%s8586 + $0x34] sm:$0xf]
        %v8601 = vld [vmem:[%s8586 + $0x38] sm:$0xf]
        %v8602 = vld [vmem:[%s8586 + $0x3c] sm:$0xf]
        %v8619 = vunpack.c.l.b16 %v8587
        %v8620 = vunpack.c.l.b16 %v8588
        %v8621 = vunpack.c.l.b16 %v8589
        %v8622 = vunpack.c.l.b16 %v8590
        %v8623 = vunpack.c.l.b16 %v8591
        %v8624 = vunpack.c.l.b16 %v8592
        %v8625 = vunpack.c.l.b16 %v8593
        %v8626 = vunpack.c.l.b16 %v8594
        %v8627 = vunpack.c.l.b16 %v8595
        %v8628 = vunpack.c.l.b16 %v8596
        %v8629 = vunpack.c.l.b16 %v8597
        %v8630 = vunpack.c.l.b16 %v8598
        %v8631 = vunpack.c.l.b16 %v8599
        %v8632 = vunpack.c.l.b16 %v8600
        %v8633 = vunpack.c.l.b16 %v8601
        %v8634 = vunpack.c.l.b16 %v8602
        %v8635 = vpack.c.b16 %v8620, %v8619
        %v8636 = vpack.c.b16 %v8622, %v8621
        %v8637 = vpack.c.b16 %v8624, %v8623
        %v8638 = vpack.c.b16 %v8626, %v8625
        %v8639 = vpack.c.b16 %v8628, %v8627
        %v8640 = vpack.c.b16 %v8630, %v8629
        %v8641 = vpack.c.b16 %v8632, %v8631
        %v8642 = vpack.c.b16 %v8634, %v8633
        %8651 = vmatprep.subr.bf16.mxu0 0
        %8652 = vmatpush1.bf16.msra.mxu0 %v8635
        %8653 = vmatprep.subr.bf16.mxu0 0
        %8654 = vmatpush1.bf16.msra.mxu0 %v8636
        %8655 = vmatprep.subr.bf16.mxu0 0
        %8656 = vmatpush1.bf16.msra.mxu0 %v8637
        %8657 = vmatprep.subr.bf16.mxu0 0
        %8658 = vmatpush1.bf16.msra.mxu0 %v8638
        %8659 = vmatprep.subr.bf16.mxu0 0
        %8660 = vmatpush1.bf16.msra.mxu0 %v8639
        %8661 = vmatprep.subr.bf16.mxu0 0
        %8662 = vmatpush1.bf16.msra.mxu0 %v8640
        %8663 = vmatprep.subr.bf16.mxu0 0
        %8664 = vmatpush1.bf16.msra.mxu0 %v8641
        %8665 = vmatprep.subr.bf16.mxu0 0
        %8666 = vmatpush1.bf16.msra.mxu0 %v8642
        %8667 = vmatprep.subr.bf16.mxu0 0
        %8668 = vmatpush1.bf16.msra.mxu0 0
        %8669 = vmatprep.subr.bf16.mxu0 0
        %8670 = vmatpush1.bf16.msra.mxu0 0
        %8671 = vmatprep.subr.bf16.mxu0 0
        %8672 = vmatpush1.bf16.msra.mxu0 0
        %8673 = vmatprep.subr.bf16.mxu0 0
        %8674 = vmatpush1.bf16.msra.mxu0 0
        %8675 = vmatprep.subr.bf16.mxu0 0
        %8676 = vmatpush1.bf16.msra.mxu0 0
        %8677 = vmatprep.subr.bf16.mxu0 0
        %8678 = vmatpush1.bf16.msra.mxu0 0
        %8679 = vmatprep.subr.bf16.mxu0 0
        %8680 = vmatpush1.bf16.msra.mxu0 0
        %8681 = vmatprep.subr.bf16.mxu0 0
        %8682 = vmatpush1.bf16.msra.mxu0 0
        %8683 = vmatprep.mubr.bf16.mxu0 0
        %8684 = vmatmul.mubr.bf16.gmra.mrb[0].mxu0 %v6944
        %v8685 = vpop.f32.mrb[0].mxu0
        %v8686 = vadd.f32 0.0, %v8685
        %v8687 = vpop.f32.mrb[0].mxu0
        %v8688 = vpop.f32.mrb[0].mxu0
        %v8689 = vadd.f32 0.0, %v8688
        %v8690 = vpop.f32.mrb[0].mxu0
        %8691 = vmatprep.mubr.bf16.mxu0 0
        %8692 = vmatmul.mubr.bf16.gmra.mrb[0].mxu0 %v6947
        %v8693 = vpop.f32.mrb[0].mxu0
        %v8694 = vadd.f32 0.0, %v8693
        %v8695 = vpop.f32.mrb[0].mxu0
        %v8696 = vpop.f32.mrb[0].mxu0
        %v8697 = vadd.f32 0.0, %v8696
        %v8698 = vpop.f32.mrb[0].mxu0
        %8699 = vmatprep.mubr.bf16.mxu0 0
        %8700 = vmatmul.mubr.bf16.gmra.mrb[0].mxu0 %v6950
        %v8701 = vpop.f32.mrb[0].mxu0
        %v8702 = vadd.f32 0.0, %v8701
        %v8703 = vpop.f32.mrb[0].mxu0
        %v8704 = vpop.f32.mrb[0].mxu0
        %v8705 = vadd.f32 0.0, %v8704
        %v8706 = vpop.f32.mrb[0].mxu0
        %8707 = vmatprep.mubr.bf16.mxu0 0
        %8708 = vmatmul.mubr.bf16.gmra.mrb[0].mxu0 %v6953
        %v8709 = vpop.f32.mrb[0].mxu0
        %v8710 = vadd.f32 0.0, %v8709
        %v8711 = vpop.f32.mrb[0].mxu0
        %v8712 = vpop.f32.mrb[0].mxu0
        %v8713 = vadd.f32 0.0, %v8712
        %v8714 = vpop.f32.mrb[0].mxu0
        %8715 = vmatprep.mubr.bf16.mxu0 0
        %8716 = vmatmul.mubr.bf16.gmra.mrb[0].mxu0 %v6956
        %v8717 = vpop.f32.mrb[0].mxu0
        %v8718 = vadd.f32 0.0, %v8717
        %v8719 = vpop.f32.mrb[0].mxu0
        %v8720 = vpop.f32.mrb[0].mxu0
        %v8721 = vadd.f32 0.0, %v8720
        %v8722 = vpop.f32.mrb[0].mxu0
        %8723 = vmatprep.mubr.bf16.mxu0 0
        %8724 = vmatmul.mubr.bf16.gmra.mrb[0].mxu0 %v6959
        %v8725 = vpop.f32.mrb[0].mxu0
        %v8726 = vadd.f32 0.0, %v8725
        %v8727 = vpop.f32.mrb[0].mxu0
        %v8728 = vpop.f32.mrb[0].mxu0
        %v8729 = vadd.f32 0.0, %v8728
        %v8730 = vpop.f32.mrb[0].mxu0
        %8731 = vmatprep.mubr.bf16.mxu0 0
        %8732 = vmatmul.mubr.bf16.gmra.mrb[0].mxu0 %v6962
        %v8733 = vpop.f32.mrb[0].mxu0
        %v8734 = vadd.f32 0.0, %v8733
        %v8735 = vpop.f32.mrb[0].mxu0
        %v8736 = vpop.f32.mrb[0].mxu0
        %v8737 = vadd.f32 0.0, %v8736
        %v8738 = vpop.f32.mrb[0].mxu0
        %8739 = vmatprep.mubr.bf16.mxu0 0
        %8740 = vmatmul.mubr.bf16.gmra.mrb[0].mxu0 %v6965
        %v8741 = vpop.f32.mrb[0].mxu0
        %v8742 = vadd.f32 0.0, %v8741
        %v8743 = vpop.f32.mrb[0].mxu0
        %v8744 = vpop.f32.mrb[0].mxu0
        %v8745 = vadd.f32 0.0, %v8744
        %v8746 = vpop.f32.mrb[0].mxu0
        %8747 = vmatprep.mubr.bf16.mxu0 0
        %8748 = vmatmul.mubr.bf16.gmra.mrb[0].mxu0 %v6968
        %v8749 = vpop.f32.mrb[0].mxu0
        %v8750 = vadd.f32 0.0, %v8749
        %v8751 = vpop.f32.mrb[0].mxu0
        %v8752 = vpop.f32.mrb[0].mxu0
        %v8753 = vadd.f32 0.0, %v8752
        %v8754 = vpop.f32.mrb[0].mxu0
        %8755 = vmatprep.mubr.bf16.mxu0 0
        %8756 = vmatmul.mubr.bf16.gmra.mrb[0].mxu0 %v6971
        %v8757 = vpop.f32.mrb[0].mxu0
        %v8758 = vadd.f32 0.0, %v8757
        %v8759 = vpop.f32.mrb[0].mxu0
        %v8760 = vpop.f32.mrb[0].mxu0
        %v8761 = vadd.f32 0.0, %v8760
        %v8762 = vpop.f32.mrb[0].mxu0
        %8763 = vmatprep.mubr.bf16.mxu0 0
        %8764 = vmatmul.mubr.bf16.gmra.mrb[0].mxu0 %v6974
        %v8765 = vpop.f32.mrb[0].mxu0
        %v8766 = vadd.f32 0.0, %v8765
        %v8767 = vpop.f32.mrb[0].mxu0
        %v8768 = vpop.f32.mrb[0].mxu0
        %v8769 = vadd.f32 0.0, %v8768
        %v8770 = vpop.f32.mrb[0].mxu0
        %8771 = vmatprep.mubr.bf16.mxu0 0
        %8772 = vmatmul.mubr.bf16.gmra.mrb[0].mxu0 %v6977
        %v8773 = vpop.f32.mrb[0].mxu0
        %v8774 = vadd.f32 0.0, %v8773
        %v8775 = vpop.f32.mrb[0].mxu0
        %v8776 = vpop.f32.mrb[0].mxu0
        %v8777 = vadd.f32 0.0, %v8776
        %v8778 = vpop.f32.mrb[0].mxu0
        %8779 = vmatprep.mubr.bf16.mxu0 0
        %8780 = vmatmul.mubr.bf16.gmra.mrb[0].mxu0 %v6980
        %v8781 = vpop.f32.mrb[0].mxu0
        %v8782 = vadd.f32 0.0, %v8781
        %v8783 = vpop.f32.mrb[0].mxu0
        %v8784 = vpop.f32.mrb[0].mxu0
        %v8785 = vadd.f32 0.0, %v8784
        %v8786 = vpop.f32.mrb[0].mxu0
        %8787 = vmatprep.mubr.bf16.mxu0 0
        %8788 = vmatmul.mubr.bf16.gmra.mrb[0].mxu0 %v6983
        %v8789 = vpop.f32.mrb[0].mxu0
        %v8790 = vadd.f32 0.0, %v8789
        %v8791 = vpop.f32.mrb[0].mxu0
        %v8792 = vpop.f32.mrb[0].mxu0
        %v8793 = vadd.f32 0.0, %v8792
        %v8794 = vpop.f32.mrb[0].mxu0
        %8795 = vmatprep.mubr.bf16.mxu0 0
        %8796 = vmatmul.mubr.bf16.gmra.mrb[0].mxu0 %v7791
        %v8797 = vpop.f32.mrb[0].mxu0
        %v8798 = vadd.f32 0.0, %v8797
        %v8799 = vpop.f32.mrb[0].mxu0
        %v8800 = vpop.f32.mrb[0].mxu0
        %v8801 = vadd.f32 0.0, %v8800
        %v8802 = vpop.f32.mrb[0].mxu0
        %8803 = vmatprep.mubr.bf16.mxu0 0
        %8804 = vmatmul.mubr.bf16.gmra.mrb[0].mxu0 %v8584
        %v8805 = vpop.f32.mrb[0].mxu0
        %v8806 = vadd.f32 0.0, %v8805
        %v8807 = vpop.f32.mrb[0].mxu0
        %v8808 = vpop.f32.mrb[0].mxu0
        %v8809 = vadd.f32 0.0, %v8808
        %v8810 = vpop.f32.mrb[0].mxu0
        %8811 = vdwg.mxu0
        %v8812 = vadd.f32 %v8548, %v8686
        %v8813 = vadd.f32 %v8549, %v8689
        %v8814 = vadd.f32 %v8550, %v8694
        %v8815 = vadd.f32 %v8551, %v8697
        %v8816 = vadd.f32 %v8552, %v8702
        %v8817 = vadd.f32 %v8553, %v8705
        %v8818 = vadd.f32 %v8554, %v8710
        %v8819 = vadd.f32 %v8555, %v8713
        %v8820 = vadd.f32 %v8556, %v8718
        %v8821 = vadd.f32 %v8557, %v8721
        %v8822 = vadd.f32 %v8558, %v8726
        %v8823 = vadd.f32 %v8559, %v8729
        %v8824 = vadd.f32 %v8560, %v8734
        %v8825 = vadd.f32 %v8561, %v8737
        %v8826 = vadd.f32 %v8562, %v8742
        %v8827 = vadd.f32 %v8563, %v8745
        %v8828 = vadd.f32 %v8564, %v8750
        %v8829 = vadd.f32 %v8565, %v8753
        %v8830 = vadd.f32 %v8566, %v8758
        %v8831 = vadd.f32 %v8567, %v8761
        %v8832 = vadd.f32 %v8568, %v8766
        %v8833 = vadd.f32 %v8569, %v8769
        %v8834 = vadd.f32 %v8570, %v8774
        %v8835 = vadd.f32 %v8571, %v8777
        %v8836 = vadd.f32 %v8572, %v8782
        %v8837 = vadd.f32 %v8573, %v8785
        %v8838 = vadd.f32 %v8574, %v8790
        %v8839 = vadd.f32 %v8575, %v8793
        %v8840 = vadd.f32 %v8576, %v8798
        %v8841 = vadd.f32 %v8577, %v8801
        %v8842 = vadd.f32 %v8578, %v8806
        %v8843 = vadd.f32 %v8579, %v8809
        %v8844 = vld [vmem:[%s7] sm:$0x1]
        %v8846 = vlaneseq
        %v8847 = vshrl.u32 %v8846, 7
        %v8848 = vsub.s32 0, %v8847
        %v8849 = vrot.slane %v8844, %v8848
        %v8851 = vmul.f32 %v8812, %v8849
        %v8852 = vmul.f32 %v8813, %v8849
        %v8853 = vmul.f32 %v8814, %v8849
        %v8854 = vmul.f32 %v8815, %v8849
        %v8855 = vmul.f32 %v8816, %v8849
        %v8856 = vmul.f32 %v8817, %v8849
        %v8857 = vmul.f32 %v8818, %v8849
        %v8858 = vmul.f32 %v8819, %v8849
        %v8859 = vmul.f32 %v8820, %v8849
        %v8860 = vmul.f32 %v8821, %v8849
        %v8861 = vmul.f32 %v8822, %v8849
        %v8862 = vmul.f32 %v8823, %v8849
        %v8863 = vmul.f32 %v8824, %v8849
        %v8864 = vmul.f32 %v8825, %v8849
        %v8865 = vmul.f32 %v8826, %v8849
        %v8866 = vmul.f32 %v8827, %v8849
        %v8867 = vmul.f32 %v8828, %v8849
        %v8868 = vmul.f32 %v8829, %v8849
        %v8869 = vmul.f32 %v8830, %v8849
        %v8870 = vmul.f32 %v8831, %v8849
        %v8871 = vmul.f32 %v8832, %v8849
        %v8872 = vmul.f32 %v8833, %v8849
        %v8873 = vmul.f32 %v8834, %v8849
        %v8874 = vmul.f32 %v8835, %v8849
        %v8875 = vmul.f32 %v8836, %v8849
        %v8876 = vmul.f32 %v8837, %v8849
        %v8877 = vmul.f32 %v8838, %v8849
        %v8878 = vmul.f32 %v8839, %v8849
        %v8879 = vmul.f32 %v8840, %v8849
        %v8880 = vmul.f32 %v8841, %v8849
        %v8881 = vmul.f32 %v8842, %v8849
        %v8882 = vmul.f32 %v8843, %v8849
        %v8883 = vld [vmem:[%s8] sm:$0x1]
        %v8885 = vlaneseq
        %v8886 = vshrl.u32 %v8885, 7
        %v8887 = vsub.s32 0, %v8886
        %v8888 = vrot.slane %v8883, %v8887
        %v8890 = vadd.f32 %v8851, %v8888
        %v8891 = vadd.f32 %v8852, %v8888
        %v8892 = vadd.f32 %v8853, %v8888
        %v8893 = vadd.f32 %v8854, %v8888
        %v8894 = vadd.f32 %v8855, %v8888
        %v8895 = vadd.f32 %v8856, %v8888
        %v8896 = vadd.f32 %v8857, %v8888
        %v8897 = vadd.f32 %v8858, %v8888
        %v8898 = vadd.f32 %v8859, %v8888
        %v8899 = vadd.f32 %v8860, %v8888
        %v8900 = vadd.f32 %v8861, %v8888
        %v8901 = vadd.f32 %v8862, %v8888
        %v8902 = vadd.f32 %v8863, %v8888
        %v8903 = vadd.f32 %v8864, %v8888
        %v8904 = vadd.f32 %v8865, %v8888
        %v8905 = vadd.f32 %v8866, %v8888
        %v8906 = vadd.f32 %v8867, %v8888
        %v8907 = vadd.f32 %v8868, %v8888
        %v8908 = vadd.f32 %v8869, %v8888
        %v8909 = vadd.f32 %v8870, %v8888
        %v8910 = vadd.f32 %v8871, %v8888
        %v8911 = vadd.f32 %v8872, %v8888
        %v8912 = vadd.f32 %v8873, %v8888
        %v8913 = vadd.f32 %v8874, %v8888
        %v8914 = vadd.f32 %v8875, %v8888
        %v8915 = vadd.f32 %v8876, %v8888
        %v8916 = vadd.f32 %v8877, %v8888
        %v8917 = vadd.f32 %v8878, %v8888
        %v8918 = vadd.f32 %v8879, %v8888
        %v8919 = vadd.f32 %v8880, %v8888
        %v8920 = vadd.f32 %v8881, %v8888
        %v8921 = vadd.f32 %v8882, %v8888
        %vm8970 = vcmask 1046528
        %v8971 = vrot.slane %v3206, 1
        %v8972 = vrot.slane %v3207, 1
        %v8973 = vsel %vm8970, %v8971, %v8972
        %v8974 = vrot.slane %v3208, 1
        %v8975 = vsel %vm8970, %v8972, %v8974
        %v8976 = vrot.slane %v3209, 1
        %v8977 = vrot.slane %v3210, 1
        %v8978 = vsel %vm8970, %v8976, %v8977
        %v8979 = vrot.slane %v3211, 1
        %v8980 = vsel %vm8970, %v8977, %v8979
        %v8981 = vrot.slane %v3212, 1
        %v8982 = vrot.slane %v3213, 1
        %v8983 = vsel %vm8970, %v8981, %v8982
        %v8984 = vrot.slane %v3214, 1
        %v8985 = vsel %vm8970, %v8982, %v8984
        %v8986 = vrot.slane %v3215, 1
        %v8987 = vrot.slane %v3216, 1
        %v8988 = vsel %vm8970, %v8986, %v8987
        %v8989 = vrot.slane %v3217, 1
        %v8990 = vsel %vm8970, %v8987, %v8989
        %v8991 = vrot.slane %v3218, 1
        %v8992 = vrot.slane %v3219, 1
        %v8993 = vsel %vm8970, %v8991, %v8992
        %v8994 = vrot.slane %v3220, 1
        %v8995 = vsel %vm8970, %v8992, %v8994
        %v8996 = vrot.slane %v3221, 1
        %v8997 = vrot.slane %v3222, 1
        %v8998 = vsel %vm8970, %v8996, %v8997
        %v8999 = vrot.slane %v3223, 1
        %v9000 = vsel %vm8970, %v8997, %v8999
        %v9001 = vrot.slane %v3224, 1
        %v9002 = vrot.slane %v3225, 1
        %v9003 = vsel %vm8970, %v9001, %v9002
        %v9004 = vrot.slane %v3226, 1
        %v9005 = vsel %vm8970, %v9002, %v9004
        %v9006 = vrot.slane %v3227, 1
        %v9007 = vrot.slane %v3228, 1
        %v9008 = vsel %vm8970, %v9006, %v9007
        %v9009 = vrot.slane %v3229, 1
        %v9010 = vsel %vm8970, %v9007, %v9009
        %v9011 = vrot.slane %v3230, 1
        %v9012 = vrot.slane %v3231, 1
        %v9013 = vsel %vm8970, %v9011, %v9012
        %v9014 = vrot.slane %v3232, 1
        %v9015 = vsel %vm8970, %v9012, %v9014
        %v9016 = vrot.slane %v3233, 1
        %v9017 = vrot.slane %v3234, 1
        %v9018 = vsel %vm8970, %v9016, %v9017
        %v9019 = vrot.slane %v3235, 1
        %v9020 = vsel %vm8970, %v9017, %v9019
        %v9021 = vrot.slane %v3236, 1
        %v9022 = vrot.slane %v3237, 1
        %v9023 = vsel %vm8970, %v9021, %v9022
        %v9024 = vrot.slane %v3238, 1
        %v9025 = vsel %vm8970, %v9022, %v9024
        %v9026 = vrot.slane %v3239, 1
        %v9027 = vrot.slane %v3240, 1
        %v9028 = vsel %vm8970, %v9026, %v9027
        %v9029 = vrot.slane %v3241, 1
        %v9030 = vsel %vm8970, %v9027, %v9029
        %v9031 = vrot.slane %v3242, 1
        %v9032 = vrot.slane %v3243, 1
        %v9033 = vsel %vm8970, %v9031, %v9032
        %v9034 = vrot.slane %v3244, 1
        %v9035 = vsel %vm8970, %v9032, %v9034
        %v9036 = vrot.slane %v3245, 1
        %v9037 = vrot.slane %v3246, 1
        %v9038 = vsel %vm8970, %v9036, %v9037
        %v9039 = vrot.slane %v3247, 1
        %v9040 = vsel %vm8970, %v9037, %v9039
        %v9041 = vrot.slane %v3248, 1
        %v9042 = vrot.slane %v3249, 1
        %v9043 = vsel %vm8970, %v9041, %v9042
        %v9044 = vrot.slane %v3250, 1
        %v9045 = vsel %vm8970, %v9042, %v9044
        %v9046 = vrot.slane %v3251, 1
        %v9047 = vrot.slane %v3252, 1
        %v9048 = vsel %vm8970, %v9046, %v9047
        %v9049 = vrot.slane %v3253, 1
        %v9050 = vsel %vm8970, %v9047, %v9049
        %v9083 = vadd.f32 %v8890, %v8973
        %v9084 = vadd.f32 %v8891, %v8975
        %v9085 = vadd.f32 %v8892, %v8978
        %v9086 = vadd.f32 %v8893, %v8980
        %v9087 = vadd.f32 %v8894, %v8983
        %v9088 = vadd.f32 %v8895, %v8985
        %v9089 = vadd.f32 %v8896, %v8988
        %v9090 = vadd.f32 %v8897, %v8990
        %v9091 = vadd.f32 %v8898, %v8993
        %v9092 = vadd.f32 %v8899, %v8995
        %v9093 = vadd.f32 %v8900, %v8998
        %v9094 = vadd.f32 %v8901, %v9000
        %v9095 = vadd.f32 %v8902, %v9003
        %v9096 = vadd.f32 %v8903, %v9005
        %v9097 = vadd.f32 %v8904, %v9008
        %v9098 = vadd.f32 %v8905, %v9010
        %v9099 = vadd.f32 %v8906, %v9013
        %v9100 = vadd.f32 %v8907, %v9015
        %v9101 = vadd.f32 %v8908, %v9018
        %v9102 = vadd.f32 %v8909, %v9020
        %v9103 = vadd.f32 %v8910, %v9023
        %v9104 = vadd.f32 %v8911, %v9025
        %v9105 = vadd.f32 %v8912, %v9028
        %v9106 = vadd.f32 %v8913, %v9030
        %v9107 = vadd.f32 %v8914, %v9033
        %v9108 = vadd.f32 %v8915, %v9035
        %v9109 = vadd.f32 %v8916, %v9038
        %v9110 = vadd.f32 %v8917, %v9040
        %v9111 = vadd.f32 %v8918, %v9043
        %v9112 = vadd.f32 %v8919, %v9045
        %v9113 = vadd.f32 %v8920, %v9048
        %v9114 = vadd.f32 %v8921, %v9050
        %vm9115 = vcmp.ge.f32.partialorder %v9083, 0.0
        %vm9116 = vcmp.ge.f32.partialorder %v9084, 0.0
        %vm9117 = vcmp.ge.f32.partialorder %v9085, 0.0
        %vm9118 = vcmp.ge.f32.partialorder %v9086, 0.0
        %vm9119 = vcmp.ge.f32.partialorder %v9087, 0.0
        %vm9120 = vcmp.ge.f32.partialorder %v9088, 0.0
        %vm9121 = vcmp.ge.f32.partialorder %v9089, 0.0
        %vm9122 = vcmp.ge.f32.partialorder %v9090, 0.0
        %vm9123 = vcmp.ge.f32.partialorder %v9091, 0.0
        %vm9124 = vcmp.ge.f32.partialorder %v9092, 0.0
        %vm9125 = vcmp.ge.f32.partialorder %v9093, 0.0
        %vm9126 = vcmp.ge.f32.partialorder %v9094, 0.0
        %vm9127 = vcmp.ge.f32.partialorder %v9095, 0.0
        %vm9128 = vcmp.ge.f32.partialorder %v9096, 0.0
        %vm9129 = vcmp.ge.f32.partialorder %v9097, 0.0
        %vm9130 = vcmp.ge.f32.partialorder %v9098, 0.0
        %vm9131 = vcmp.ge.f32.partialorder %v9099, 0.0
        %vm9132 = vcmp.ge.f32.partialorder %v9100, 0.0
        %vm9133 = vcmp.ge.f32.partialorder %v9101, 0.0
        %vm9134 = vcmp.ge.f32.partialorder %v9102, 0.0
        %vm9135 = vcmp.ge.f32.partialorder %v9103, 0.0
        %vm9136 = vcmp.ge.f32.partialorder %v9104, 0.0
        %vm9137 = vcmp.ge.f32.partialorder %v9105, 0.0
        %vm9138 = vcmp.ge.f32.partialorder %v9106, 0.0
        %vm9139 = vcmp.ge.f32.partialorder %v9107, 0.0
        %vm9140 = vcmp.ge.f32.partialorder %v9108, 0.0
        %vm9141 = vcmp.ge.f32.partialorder %v9109, 0.0
        %vm9142 = vcmp.ge.f32.partialorder %v9110, 0.0
        %vm9143 = vcmp.ge.f32.partialorder %v9111, 0.0
        %vm9144 = vcmp.ge.f32.partialorder %v9112, 0.0
        %vm9145 = vcmp.ge.f32.partialorder %v9113, 0.0
        %vm9146 = vcmp.ge.f32.partialorder %v9114, 0.0
        %v9147 = vmul.f32 %v9083, 0.01
        %v9148 = vmul.f32 %v9084, 0.01
        %v9149 = vmul.f32 %v9085, 0.01
        %v9150 = vmul.f32 %v9086, 0.01
        %v9151 = vmul.f32 %v9087, 0.01
        %v9152 = vmul.f32 %v9088, 0.01
        %v9153 = vmul.f32 %v9089, 0.01
        %v9154 = vmul.f32 %v9090, 0.01
        %v9155 = vmul.f32 %v9091, 0.01
        %v9156 = vmul.f32 %v9092, 0.01
        %v9157 = vmul.f32 %v9093, 0.01
        %v9158 = vmul.f32 %v9094, 0.01
        %v9159 = vmul.f32 %v9095, 0.01
        %v9160 = vmul.f32 %v9096, 0.01
        %v9161 = vmul.f32 %v9097, 0.01
        %v9162 = vmul.f32 %v9098, 0.01
        %v9163 = vmul.f32 %v9099, 0.01
        %v9164 = vmul.f32 %v9100, 0.01
        %v9165 = vmul.f32 %v9101, 0.01
        %v9166 = vmul.f32 %v9102, 0.01
        %v9167 = vmul.f32 %v9103, 0.01
        %v9168 = vmul.f32 %v9104, 0.01
        %v9169 = vmul.f32 %v9105, 0.01
        %v9170 = vmul.f32 %v9106, 0.01
        %v9171 = vmul.f32 %v9107, 0.01
        %v9172 = vmul.f32 %v9108, 0.01
        %v9173 = vmul.f32 %v9109, 0.01
        %v9174 = vmul.f32 %v9110, 0.01
        %v9175 = vmul.f32 %v9111, 0.01
        %v9176 = vmul.f32 %v9112, 0.01
        %v9177 = vmul.f32 %v9113, 0.01
        %v9178 = vmul.f32 %v9114, 0.01
        %v9179 = vsel %vm9115, %v9083, %v9147
        %v9180 = vsel %vm9116, %v9084, %v9148
        %v9181 = vsel %vm9117, %v9085, %v9149
        %v9182 = vsel %vm9118, %v9086, %v9150
        %v9183 = vsel %vm9119, %v9087, %v9151
        %v9184 = vsel %vm9120, %v9088, %v9152
        %v9185 = vsel %vm9121, %v9089, %v9153
        %v9186 = vsel %vm9122, %v9090, %v9154
        %v9187 = vsel %vm9123, %v9091, %v9155
        %v9188 = vsel %vm9124, %v9092, %v9156
        %v9189 = vsel %vm9125, %v9093, %v9157
        %v9190 = vsel %vm9126, %v9094, %v9158
        %v9191 = vsel %vm9127, %v9095, %v9159
        %v9192 = vsel %vm9128, %v9096, %v9160
        %v9193 = vsel %vm9129, %v9097, %v9161
        %v9194 = vsel %vm9130, %v9098, %v9162
        %v9195 = vsel %vm9131, %v9099, %v9163
        %v9196 = vsel %vm9132, %v9100, %v9164
        %v9197 = vsel %vm9133, %v9101, %v9165
        %v9198 = vsel %vm9134, %v9102, %v9166
        %v9199 = vsel %vm9135, %v9103, %v9167
        %v9200 = vsel %vm9136, %v9104, %v9168
        %v9201 = vsel %vm9137, %v9105, %v9169
        %v9202 = vsel %vm9138, %v9106, %v9170
        %v9203 = vsel %vm9139, %v9107, %v9171
        %v9204 = vsel %vm9140, %v9108, %v9172
        %v9205 = vsel %vm9141, %v9109, %v9173
        %v9206 = vsel %vm9142, %v9110, %v9174
        %v9207 = vsel %vm9143, %v9111, %v9175
        %v9208 = vsel %vm9144, %v9112, %v9176
        %v9209 = vsel %vm9145, %v9113, %v9177
        %v9210 = vsel %vm9146, %v9114, %v9178
        %9211 = vst [vmem:[#allocation4] sm:$0xff] %v9179
        %9212 = vst [vmem:[#allocation4 + $0x8] sm:$0xff] %v9180
        %9213 = vst [vmem:[#allocation4 + $0x10] sm:$0xff] %v9181
        %9214 = vst [vmem:[#allocation4 + $0x18] sm:$0xff] %v9182
        %9215 = vst [vmem:[#allocation4 + $0x20] sm:$0xff] %v9183
        %9216 = vst [vmem:[#allocation4 + $0x28] sm:$0xff] %v9184
        %9217 = vst [vmem:[#allocation4 + $0x30] sm:$0xff] %v9185
        %9218 = vst [vmem:[#allocation4 + $0x38] sm:$0xff] %v9186
        %9219 = vst [vmem:[#allocation4 + $0x40] sm:$0xff] %v9187
        %9220 = vst [vmem:[#allocation4 + $0x48] sm:$0xff] %v9188
        %9221 = vst [vmem:[#allocation4 + $0x50] sm:$0xff] %v9189
        %9222 = vst [vmem:[#allocation4 + $0x58] sm:$0xff] %v9190
        %9223 = vst [vmem:[#allocation4 + $0x60] sm:$0xff] %v9191
        %9224 = vst [vmem:[#allocation4 + $0x68] sm:$0xff] %v9192
        %9225 = vst [vmem:[#allocation4 + $0x70] sm:$0xff] %v9193
        %9226 = vst [vmem:[#allocation4 + $0x78] sm:$0xff] %v9194
        %9227 = vst [vmem:[#allocation4 + $0x80] sm:$0xff] %v9195
        %9228 = vst [vmem:[#allocation4 + $0x88] sm:$0xff] %v9196
        %9229 = vst [vmem:[#allocation4 + $0x90] sm:$0xff] %v9197
        %9230 = vst [vmem:[#allocation4 + $0x98] sm:$0xff] %v9198
        %9231 = vst [vmem:[#allocation4 + $0xa0] sm:$0xff] %v9199
        %9232 = vst [vmem:[#allocation4 + $0xa8] sm:$0xff] %v9200
        %9233 = vst [vmem:[#allocation4 + $0xb0] sm:$0xff] %v9201
        %9234 = vst [vmem:[#allocation4 + $0xb8] sm:$0xff] %v9202
        %9235 = vst [vmem:[#allocation4 + $0xc0] sm:$0xff] %v9203
        %9236 = vst [vmem:[#allocation4 + $0xc8] sm:$0xff] %v9204
        %9237 = vst [vmem:[#allocation4 + $0xd0] sm:$0xff] %v9205
        %9238 = vst [vmem:[#allocation4 + $0xd8] sm:$0xff] %v9206
        %9239 = vst [vmem:[#allocation4 + $0xe0] sm:$0xff] %v9207
        %9240 = vst [vmem:[#allocation4 + $0xe8] sm:$0xff] %v9208
        %9241 = vst [vmem:[#allocation4 + $0xf0] sm:$0xff] %v9209
        %9242 = vst [vmem:[#allocation4 + $0xf8] sm:$0xff] %v9210
        %v9243 = vld [vmem:[#allocation4] sm:$0xff]
        %v9244 = vld [vmem:[#allocation4 + $0x8] sm:$0xff]
        %v9245 = vld [vmem:[#allocation4 + $0x20] sm:$0xff]
        %v9246 = vld [vmem:[#allocation4 + $0x28] sm:$0xff]
        %v9247 = vld [vmem:[#allocation4 + $0x40] sm:$0xff]
        %v9248 = vld [vmem:[#allocation4 + $0x48] sm:$0xff]
        %v9249 = vld [vmem:[#allocation4 + $0x60] sm:$0xff]
        %v9250 = vld [vmem:[#allocation4 + $0x68] sm:$0xff]
        %v9251 = vld [vmem:[#allocation4 + $0x80] sm:$0xff]
        %v9252 = vld [vmem:[#allocation4 + $0x88] sm:$0xff]
        %v9253 = vld [vmem:[#allocation4 + $0xa0] sm:$0xff]
        %v9254 = vld [vmem:[#allocation4 + $0xa8] sm:$0xff]
        %v9255 = vld [vmem:[#allocation4 + $0xc0] sm:$0xff]
        %v9256 = vld [vmem:[#allocation4 + $0xc8] sm:$0xff]
        %v9257 = vld [vmem:[#allocation4 + $0xe0] sm:$0xff]
        %v9258 = vld [vmem:[#allocation4 + $0xe8] sm:$0xff]
        %s9259 = scalar_lea.vmem [#allocation4], 16
        %v9260 = vld [vmem:[%s9259] sm:$0xff]
        %v9261 = vld [vmem:[%s9259 + $0x8] sm:$0xff]
        %v9262 = vld [vmem:[%s9259 + $0x20] sm:$0xff]
        %v9263 = vld [vmem:[%s9259 + $0x28] sm:$0xff]
        %v9264 = vld [vmem:[%s9259 + $0x40] sm:$0xff]
        %v9265 = vld [vmem:[%s9259 + $0x48] sm:$0xff]
        %v9266 = vld [vmem:[%s9259 + $0x60] sm:$0xff]
        %v9267 = vld [vmem:[%s9259 + $0x68] sm:$0xff]
        %v9268 = vld [vmem:[%s9259 + $0x80] sm:$0xff]
        %v9269 = vld [vmem:[%s9259 + $0x88] sm:$0xff]
        %v9270 = vld [vmem:[%s9259 + $0xa0] sm:$0xff]
        %v9271 = vld [vmem:[%s9259 + $0xa8] sm:$0xff]
        %v9272 = vld [vmem:[%s9259 + $0xc0] sm:$0xff]
        %v9273 = vld [vmem:[%s9259 + $0xc8] sm:$0xff]
        %v9274 = vld [vmem:[%s9259 + $0xe0] sm:$0xff]
        %v9275 = vld [vmem:[%s9259 + $0xe8] sm:$0xff]
        %v9276 = vmax.f32 %v9243, %v9260
        %v9277 = vmax.f32 %v9244, %v9261
        %v9278 = vmax.f32 %v9245, %v9262
        %v9279 = vmax.f32 %v9246, %v9263
        %v9280 = vmax.f32 %v9247, %v9264
        %v9281 = vmax.f32 %v9248, %v9265
        %v9282 = vmax.f32 %v9249, %v9266
        %v9283 = vmax.f32 %v9250, %v9267
        %v9284 = vmax.f32 %v9251, %v9268
        %v9285 = vmax.f32 %v9252, %v9269
        %v9286 = vmax.f32 %v9253, %v9270
        %v9287 = vmax.f32 %v9254, %v9271
        %v9288 = vmax.f32 %v9255, %v9272
        %v9289 = vmax.f32 %v9256, %v9273
        %v9290 = vmax.f32 %v9257, %v9274
        %v9291 = vmax.f32 %v9258, %v9275
        %9292 = vst [vmem:[#allocation5] sm:$0xff] %v9276
        %9293 = vst [vmem:[#allocation5 + $0x8] sm:$0xff] %v9277
        %9294 = vst [vmem:[#allocation5 + $0x10] sm:$0xff] %v9278
        %9295 = vst [vmem:[#allocation5 + $0x18] sm:$0xff] %v9279
        %9296 = vst [vmem:[#allocation5 + $0x20] sm:$0xff] %v9280
        %9297 = vst [vmem:[#allocation5 + $0x28] sm:$0xff] %v9281
        %9298 = vst [vmem:[#allocation5 + $0x30] sm:$0xff] %v9282
        %9299 = vst [vmem:[#allocation5 + $0x38] sm:$0xff] %v9283
        %9300 = vst [vmem:[#allocation5 + $0x40] sm:$0xff] %v9284
        %9301 = vst [vmem:[#allocation5 + $0x48] sm:$0xff] %v9285
        %9302 = vst [vmem:[#allocation5 + $0x50] sm:$0xff] %v9286
        %9303 = vst [vmem:[#allocation5 + $0x58] sm:$0xff] %v9287
        %9304 = vst [vmem:[#allocation5 + $0x60] sm:$0xff] %v9288
        %9305 = vst [vmem:[#allocation5 + $0x68] sm:$0xff] %v9289
        %9306 = vst [vmem:[#allocation5 + $0x70] sm:$0xff] %v9290
        %9307 = vst [vmem:[#allocation5 + $0x78] sm:$0xff] %v9291
        %v9308 = vld [vmem:[#allocation5] ss:$2 sm:$0xff]
        %s9309 = scalar_lea.vmem [#allocation5], 16
        %v9310 = vld [vmem:[%s9309] ss:$2 sm:$0xff]
        %s9311 = scalar_lea.vmem [#allocation5], 32
        %v9312 = vld [vmem:[%s9311] ss:$2 sm:$0xff]
        %s9313 = scalar_lea.vmem [#allocation5], 48
        %v9314 = vld [vmem:[%s9313] ss:$2 sm:$0xff]
        %s9315 = scalar_lea.vmem [#allocation5], 64
        %v9316 = vld [vmem:[%s9315] ss:$2 sm:$0xff]
        %s9317 = scalar_lea.vmem [#allocation5], 80
        %v9318 = vld [vmem:[%s9317] ss:$2 sm:$0xff]
        %s9319 = scalar_lea.vmem [#allocation5], 96
        %v9320 = vld [vmem:[%s9319] ss:$2 sm:$0xff]
        %s9321 = scalar_lea.vmem [#allocation5], 112
        %v9322 = vld [vmem:[%s9321] ss:$2 sm:$0xff]
        %s9323 = scalar_lea.vmem [#allocation5], 1
        %v9324 = vld [vmem:[%s9323] ss:$2 sm:$0xff]
        %s9325 = scalar_lea.vmem [#allocation5], 17
        %v9326 = vld [vmem:[%s9325] ss:$2 sm:$0xff]
        %s9327 = scalar_lea.vmem [#allocation5], 33
        %v9328 = vld [vmem:[%s9327] ss:$2 sm:$0xff]
        %s9329 = scalar_lea.vmem [#allocation5], 49
        %v9330 = vld [vmem:[%s9329] ss:$2 sm:$0xff]
        %s9331 = scalar_lea.vmem [#allocation5], 65
        %v9332 = vld [vmem:[%s9331] ss:$2 sm:$0xff]
        %s9333 = scalar_lea.vmem [#allocation5], 81
        %v9334 = vld [vmem:[%s9333] ss:$2 sm:$0xff]
        %s9335 = scalar_lea.vmem [#allocation5], 97
        %v9336 = vld [vmem:[%s9335] ss:$2 sm:$0xff]
        %s9337 = scalar_lea.vmem [#allocation5], 113
        %v9338 = vld [vmem:[%s9337] ss:$2 sm:$0xff]
        %v9339 = vmax.f32 %v9308, %v9324
        %v9340 = vmax.f32 %v9310, %v9326
        %v9341 = vmax.f32 %v9312, %v9328
        %v9342 = vmax.f32 %v9314, %v9330
        %v9343 = vmax.f32 %v9316, %v9332
        %v9344 = vmax.f32 %v9318, %v9334
        %v9345 = vmax.f32 %v9320, %v9336
        %v9346 = vmax.f32 %v9322, %v9338
        %9347 = vst [vmem:[%s355] sm:$0xff] %v9339
        %9348 = vst [vmem:[%s355 + $0x8] sm:$0xff] %v9340
        %9349 = vst [vmem:[%s355 + $0x10] sm:$0xff] %v9341
        %9350 = vst [vmem:[%s355 + $0x18] sm:$0xff] %v9342
        %9351 = vst [vmem:[%s355 + $0x20] sm:$0xff] %v9343
        %9352 = vst [vmem:[%s355 + $0x28] sm:$0xff] %v9344
        %9353 = vst [vmem:[%s355 + $0x30] sm:$0xff] %v9345
        %9354 = vst [vmem:[%s355 + $0x38] sm:$0xff] %v9346
        %s9355 = sand.u32 %s227, 1
        %s9356 = scalar_lea.sflag [#allocation8], %s9355
        %s9357 = sand.u32 %s227, 1
        %s9358 = smul.addr %s9357, 64
        %s9359 = scalar_lea.vmem [#allocation11], %s9358
        // Predicated region
        $region65: #{tpu_custom_call.1} parent=55 // pred_check
          %p9360 = pneg %p237
        $region66: #{tpu_custom_call.1} parent=55 // pred_check_branch
          %9362 = sbr.rel (%p9360) target = $region68
        $region67: #{tpu_custom_call.1} parent=55 // pred_region
          %s9364 = ssub.s32 1024, 1024
          %9365 = vsyncadd %s9356, %s9364
          %s9366 = smul.addr %s25, 8
          %s9367 = smul.addr %s9366, 128
          %s9368 = scalar_lea.hbm %s9, %s9367
          %s9369 = sshll.u32 %s9359, 4
          %s9370 = int_to_ptr.vmem [resolvable:$true] %s9369
          %9375 = dma.vmem_to_hbm [thread:$0]  %s9370, 1024, %s9368, %s9356, 128, 128, 8
        $region68: #{tpu_custom_call.1} parent=55 // pred_fallthru
          _
      $region56: #{tpu_custom_call.1} parent=5 // pred_fallthru
        _
      %p9376 = scmp.le.s32.totalorder 2, %s20
      // Predicated region
      $region69: #{tpu_custom_call.1} parent=5 // pred_check
        %p9377 = pneg %p9376
      $region70: #{tpu_custom_call.1} parent=5 // pred_check_branch
        %9379 = sbr.rel (%p9377) target = $region72
      $region71: #{tpu_custom_call.1} parent=5 // pred_region
        %s9380 = ssub.s32 %s20, 2
        // Predicated region
        $region73: #{tpu_custom_call.1} parent=71 // pred_check
          %p9381 = pneg %p243
        $region74: #{tpu_custom_call.1} parent=71 // pred_check_branch
          %9383 = sbr.rel (%p9381) target = $region76
        $region75: #{tpu_custom_call.1} parent=71 // pred_region
          %s9384 = sand.u32 %s228, 1
          %s9385 = scalar_lea.sflag [#allocation8], %s9384
          %s9386 = sand.u32 %s228, 1
          %s9387 = smul.addr %s9386, 64
          %s9388 = scalar_lea.vmem [#allocation11], %s9387
          %9389 = dma.done %s9385, 1024
        $region76: #{tpu_custom_call.1} parent=71 // pred_fallthru
          _
      $region72: #{tpu_custom_call.1} parent=5 // pred_fallthru
        _
    $region6: #{tpu_custom_call.1} parent=1 // loop_footer
      %s24 = sadd.s32 1, %s20
    $region7: #{tpu_custom_call.1} parent=1 // loop_footer_branch
      %19 = sbr.rel target = $region3
    $region8: #{tpu_custom_call.1} parent=1 // loop_exit
      _
    %9390 = vsyncpa [#allocation7], 1
    %s9391 = scalar_lea.sflag [#allocation7], 1
    %9392 = vsyncpa %s9391, 1
    %9393 = vsyncpa [#allocation10], 1
    %9394 = vsyncpa [#allocation8], 1
    %s9395 = scalar_lea.sflag [#allocation8], 1
    %9396 = vsyncpa %s9395, 1

</llo_original>
